<compile_context>
chip_gen: v6e
topology: v6e:2x2x1
jax: 0.10.0
libtpu: 0.0.40
codegen_flags: <defaults>
</compile_context>

<pallas_src>
import numpy as np
import jax
import jax.numpy as jnp
from jax.experimental import pallas as pl
from jax.experimental.pallas import tpu as pltpu

BN_EPS = 1e-5
POOL_OUT = 200
HALO = 128      # lane halo on each side of the folded lane axis
LANE = 128
SUB = 8


def _round_up(v, m):
    return ((v + m - 1) // m) * m


# ----------------------------------------------------------------------------
# Fused kernel: conv1+BN+ReLU -> conv2(stride-2 via even-column stats)+BN+ReLU ->
#               decimation + adaptive-avg-pool.  grid=(1,), everything in VMEM.
# ----------------------------------------------------------------------------
def _make_fused_kernel(N, Cout, L, Lp, W, PP):
    NLp = N * Lp
    NC = NLp // W
    L1 = (L - 1) // 2 + 1            # stride-2 conv output length
    inv1 = 1.0 / float(N * L)
    inv2 = 1.0 / float(N * L1)

    def conv3taps(src_ref, w_ref, col0):
        # sum_t  w_ref[t] @ src_ref[:, col0-1+t : col0-1+t+W]   (f32 accumulate)
        acc = jnp.dot(w_ref[0], src_ref[:, col0 - 1: col0 - 1 + W],
                      preferred_element_type=jnp.float32)
        acc = acc + jnp.dot(w_ref[1], src_ref[:, col0: col0 + W],
                            preferred_element_type=jnp.float32)
        acc = acc + jnp.dot(w_ref[2], src_ref[:, col0 + 1: col0 + 1 + W],
                            preferred_element_type=jnp.float32)
        return acc

    def bn_coeffs(s, q, inv, g, b):
        m = s * inv
        v = jnp.maximum(q * inv - m * m, 0.0)      # clamp one-pass variance
        a = g * jax.lax.rsqrt(v + BN_EPS)
        return a, b - m * a

    def kernel(xf_ref, w1_ref, w2_ref, g1_ref, b1_ref, g2_ref, b2_ref,
               vmask_ref, evmask_ref, pd_ref, out_ref, acc_ref, hbuf_ref):
        # zero the lane halos of the h buffer (never written by the chunk passes).
        hbuf_ref[:, 0:HALO] = jnp.zeros((Cout, HALO), jnp.bfloat16)
        hbuf_ref[:, HALO + NLp: HALO + NLp + HALO] = jnp.zeros((Cout, HALO), jnp.bfloat16)

        # ---------- stage 1: conv (3 tap matmuls / chunk) + masked BN stats ----------
        s1 = jnp.zeros((Cout, 1), jnp.float32)
        q1 = jnp.zeros((Cout, 1), jnp.float32)
        for c in range(NC):
            col = c * W
            a = conv3taps(xf_ref, w1_ref, HALO + col)
            acc_ref[:, col: col + W] = a
            am = a * vmask_ref[:, col: col + W]
            s1 = s1 + jnp.sum(am, axis=1, keepdims=True)
            q1 = q1 + jnp.sum(am * a, axis=1, keepdims=True)
        a1, c1 = bn_coeffs(s1, q1, inv1, g1_ref[...], b1_ref[...])

        # stage-1 affine + ReLU; pad columns forced to exact 0 (they feed stage-2 taps
        # across batch boundaries and must behave as "same" conv padding).
        for c in range(NC):
            col = c * W
            h = jnp.maximum(acc_ref[:, col: col + W] * a1 + c1, 0.0)
            h = h * vmask_ref[:, col: col + W]
            hbuf_ref[:, HALO + col: HALO + col + W] = h.astype(jnp.bfloat16)

        # ---------- stage 2: conv at stride 1; BN-2 stats on even+valid columns ------
        s2 = jnp.zeros((Cout, 1), jnp.float32)
        q2 = jnp.zeros((Cout, 1), jnp.float32)
        for c in range(NC):
            col = c * W
            a = conv3taps(hbuf_ref, w2_ref, HALO + col)
            acc_ref[:, col: col + W] = a
            am = a * evmask_ref[:, col: col + W]
            s2 = s2 + jnp.sum(am, axis=1, keepdims=True)
            q2 = q2 + jnp.sum(am * a, axis=1, keepdims=True)
        a2, c2 = bn_coeffs(s2, q2, inv2, g2_ref[...], b2_ref[...])

        # stage-2 affine + ReLU (odd / pad columns are killed by pd's zero rows).
        for c in range(NC):
            col = c * W
            h = jnp.maximum(acc_ref[:, col: col + W] * a2 + c2, 0.0)
            hbuf_ref[:, HALO + col: HALO + col + W] = h.astype(jnp.bfloat16)

        # -------- stride-2 decimation + AdaptiveAvgPool1d(200): one matmul / batch ---
        for n in range(N):
            seg = hbuf_ref[:, HALO + n * Lp: HALO + n * Lp + Lp]      # (Cout, Lp) bf16
            out_ref[n] = jnp.dot(seg, pd_ref[...], preferred_element_type=jnp.float32)

    return kernel


# ----------------------------------------------------------------------------
# Shared per-batch matrix: stride-2 decimation + AdaptiveAvgPool1d(L_pool) over a
# single lane-padded segment of the stride-1 stage-2 output.  Only even rows < L
# are nonzero; columns [L_pool, PP) are zero lane padding.
# ----------------------------------------------------------------------------
def _decim_pool_matrix(L, Lp, L_pool, PP):
    L1 = (L - 1) // 2 + 1
    P = np.zeros((Lp, PP), dtype=np.float32)
    for j in range(L_pool):
        s = (j * L1) // L_pool
        e = -((-(j + 1) * L1) // L_pool)   # ceil
        w = 1.0 / (e - s)
        for k in range(s, e):              # decimated index k == stride-1 column 2*k
            P[2 * k, j] = w
    return P


def _build_masks(N, L, Lp):
    NLp = N * Lp
    vm = np.zeros((1, NLp), np.float32)    # valid columns (l < L in each segment)
    em = np.zeros((1, NLp), np.float32)    # valid AND even (stride-2) columns
    for n in range(N):
        vm[0, n * Lp: n * Lp + L] = 1.0
        em[0, n * Lp: n * Lp + L: 2] = 1.0
    return vm, em


def _whole_block(a):
    nd = a.ndim
    return pl.BlockSpec(a.shape, lambda i, _nd=nd: (0,) * _nd)


# ----------------------------------------------------------------------------
# Deterministic parameter init (shapes from StartModule.__init__).
# ----------------------------------------------------------------------------
def init_params(key, c_in, c_out=32):
    ks = jax.random.split(key, 6)
    w1 = jax.random.normal(ks[0], (c_out, c_in, 3), jnp.float32) / np.sqrt(3 * c_in)
    w2 = jax.random.normal(ks[1], (c_out, c_out, 3), jnp.float32) / np.sqrt(3 * c_out)
    g1 = 1.0 + 0.1 * jax.random.normal(ks[2], (1, c_out, 1), jnp.float32)
    b1 = 0.1 * jax.random.normal(ks[3], (1, c_out, 1), jnp.float32)
    g2 = 1.0 + 0.1 * jax.random.normal(ks[4], (1, c_out, 1), jnp.float32)
    b2 = 0.1 * jax.random.normal(ks[5], (1, c_out, 1), jnp.float32)
    return dict(w1=w1, w2=w2, g1=g1, b1=b1, g2=g2, b2=b2)


# ----------------------------------------------------------------------------
# StartModule forward (single fused Pallas kernel).
# ----------------------------------------------------------------------------
@jax.jit
def start_module_forward(x, params, temperature=5.0):
    del temperature  # TODO(synk): consumed only by searchOP (not implementable here).
    N, Cin, L = x.shape
    Cout, _, K = params["w1"].shape
    assert K == 3
    CP = _round_up(Cin, SUB)                 # channels padded to a full sublane band
    Lp = _round_up(L + 1, LANE)              # >= L+1 so batch segments never touch
    NLp = N * Lp
    W = 256 if NLp % 256 == 0 else LANE      # chunk width for the BN/conv passes
    PP = _round_up(POOL_OUT, LANE)           # lane-dense padded pool width (256)

    # folded / channel-padded / halo-padded input: (CP, HALO + N*Lp + HALO), bf16.
    xp = jnp.pad(x, ((0, 0), (0, CP - Cin), (0, Lp - L)))
    xf = jnp.transpose(xp, (1, 0, 2)).reshape(CP, NLp)
    xf = jnp.pad(xf, ((0, 0), (HALO, HALO))).astype(jnp.bfloat16)

    # tap-major conv weights: w_taps[t] == w[:, :, t]
    w1t = jnp.pad(jnp.transpose(params["w1"], (2, 0, 1)),
                  ((0, 0), (0, 0), (0, CP - Cin))).astype(jnp.bfloat16)   # (3, Cout, CP)
    w2t = jnp.transpose(params["w2"], (2, 0, 1)).astype(jnp.bfloat16)     # (3, Cout, Cout)

    g1 = params["g1"].reshape(Cout, 1)
    b1 = params["b1"].reshape(Cout, 1)
    g2 = params["g2"].reshape(Cout, 1)
    b2 = params["b2"].reshape(Cout, 1)

    vm_np, em_np = _build_masks(N, L, Lp)
    vmask = jnp.asarray(vm_np)
    evmask = jnp.asarray(em_np)
    pd = jnp.asarray(_decim_pool_matrix(L, Lp, POOL_OUT, PP), dtype=jnp.bfloat16)

    args = (xf, w1t, w2t, g1, b1, g2, b2, vmask, evmask, pd)
    out = pl.pallas_call(
        _make_fused_kernel(N, Cout, L, Lp, W, PP),
        grid=(1,),
        in_specs=[_whole_block(a) for a in args],
        out_specs=pl.BlockSpec((N, Cout, PP), lambda i: (0, 0, 0)),
        out_shape=jax.ShapeDtypeStruct((N, Cout, PP), jnp.float32),
        scratch_shapes=[
            pltpu.VMEM((Cout, NLp), jnp.float32),              # f32 conv accumulator
            pltpu.VMEM((Cout, 2 * HALO + HALO * 0 + NLp + HALO), jnp.bfloat16)
            if False else
            pltpu.VMEM((Cout, 2 * HALO + NLp), jnp.bfloat16),  # halo'd h1 / h2 buffer
        ],
        compiler_params=pltpu.CompilerParams(dimension_semantics=("arbitrary",)),
    )(*args)
    return out[:, :, :POOL_OUT]


# ----------------------------------------------------------------------------
# Reference (XLA convs).  Conv operands are cast to bf16 to mirror the kernel's
# MXU input precision; accumulation, BatchNorm, ReLU and pooling stay in f32.
# ----------------------------------------------------------------------------
def _reference_forward(x, params):
    def conv1d(a, w, stride, pad):
        return jax.lax.conv_general_dilated(
            a.astype(jnp.bfloat16), w.astype(jnp.bfloat16),
            window_strides=(stride,), padding=[(pad, pad)],
            dimension_numbers=("NCH", "OIH", "NCH"),
            preferred_element_type=jnp.float32)

    def bn_relu(y, g, b):
        m = jnp.mean(y, axis=(0, 2), keepdims=True)
        v = jnp.mean(jnp.square(y - m), axis=(0, 2), keepdims=True)
        return jnp.maximum((y - m) * jax.lax.rsqrt(v + BN_EPS) * g + b, 0.0)

    y = bn_relu(conv1d(x, params["w1"], 1, 1), params["g1"], params["b1"])
    y = bn_relu(conv1d(y, params["w2"], 2, 1), params["g2"], params["b2"])
    N, C, L1 = y.shape
    return y.reshape(N, C, POOL_OUT, L1 // POOL_OUT).mean(axis=-1)


if __name__ == "__main__":
    key = jax.random.PRNGKey(0)
    k_param, k_x = jax.random.split(key)

    N, C_IN, C_OUT, L = 2, 4, 32, 800          # StartModule(inChannels=4, outChannels=32)
    params = init_params(k_param, C_IN, C_OUT)
    x = jax.random.normal(k_x, (N, C_IN, L), jnp.float32)

    out = start_module_forward(x, params, temperature=5.0)
    out = jax.block_until_ready(out)
    assert out.shape == (N, C_OUT, POOL_OUT), out.shape

    ref = _reference_forward(x, params)
    np.testing.assert_allclose(np.asarray(out), np.asarray(ref), rtol=1e-2, atol=1e-2)

    print("KERNEL_OK")
</pallas_src>

<mosaic_0001>
module attributes {stable_mosaic.version = 11 : i64} {
  func.func @kernel(%arg0: i32, %arg1: memref<8x2048xbf16, #tpu.memory_space<vmem>>, %arg2: memref<3x32x8xbf16, #tpu.memory_space<vmem>>, %arg3: memref<3x32x32xbf16, #tpu.memory_space<vmem>>, %arg4: memref<32x1xf32, #tpu.memory_space<vmem>>, %arg5: memref<32x1xf32, #tpu.memory_space<vmem>>, %arg6: memref<32x1xf32, #tpu.memory_space<vmem>>, %arg7: memref<32x1xf32, #tpu.memory_space<vmem>>, %arg8: memref<1x1792xf32, #tpu.memory_space<vmem>>, %arg9: memref<1x1792xf32, #tpu.memory_space<vmem>>, %arg10: memref<896x256xbf16, #tpu.memory_space<vmem>>, %arg11: memref<2x32x256xf32, #tpu.memory_space<vmem>>, %arg12: memref<32x1792xf32, #tpu.memory_space<vmem>>, %arg13: memref<32x2048xbf16, #tpu.memory_space<vmem>>) attributes {dimension_semantics = [#tpu.dimension_semantics<arbitrary>], iteration_bounds = array<i64: 1>, scalar_prefetch = 0 : i64, scratch_operands = 2 : i64, tpu.core_type = #tpu.core_type<tc>, window_params = [{pipeline_mode = #tpu.pipeline_mode<synchronous>, transform_indices = @transform_0, window_bounds = array<i64: 8, 2048>}, {pipeline_mode = #tpu.pipeline_mode<synchronous>, transform_indices = @transform_1, window_bounds = array<i64: 3, 32, 8>}, {pipeline_mode = #tpu.pipeline_mode<synchronous>, transform_indices = @transform_2, window_bounds = array<i64: 3, 32, 32>}, {pipeline_mode = #tpu.pipeline_mode<synchronous>, transform_indices = @transform_3, window_bounds = array<i64: 32, 1>}, {pipeline_mode = #tpu.pipeline_mode<synchronous>, transform_indices = @transform_4, window_bounds = array<i64: 32, 1>}, {pipeline_mode = #tpu.pipeline_mode<synchronous>, transform_indices = @transform_5, window_bounds = array<i64: 32, 1>}, {pipeline_mode = #tpu.pipeline_mode<synchronous>, transform_indices = @transform_6, window_bounds = array<i64: 32, 1>}, {pipeline_mode = #tpu.pipeline_mode<synchronous>, transform_indices = @transform_7, window_bounds = array<i64: 1, 1792>}, {pipeline_mode = #tpu.pipeline_mode<synchronous>, transform_indices = @transform_8, window_bounds = array<i64: 1, 1792>}, {pipeline_mode = #tpu.pipeline_mode<synchronous>, transform_indices = @transform_9, window_bounds = array<i64: 896, 256>}, {pipeline_mode = #tpu.pipeline_mode<synchronous>, transform_indices = @transform_10, window_bounds = array<i64: 2, 32, 256>}]} {
    %cst = arith.constant 0.000000e+00 : bf16
    %0 = vector.broadcast %cst : bf16 to vector<32x128xbf16>
    %c0 = arith.constant 0 : index
    %c0_0 = arith.constant 0 : index
    %1 = vector.load %arg13[%c0, %c0_0] : memref<32x2048xbf16, #tpu.memory_space<vmem>>, vector<32x128xbf16>
    tpu.vector_store %arg13[%c0, %c0_0], %0 {strides = array<i32>} : memref<32x2048xbf16, #tpu.memory_space<vmem>>, vector<32x128xbf16>,
    %cst_1 = arith.constant 0.000000e+00 : bf16
    %2 = vector.broadcast %cst_1 : bf16 to vector<32x128xbf16>
    %c0_2 = arith.constant 0 : index
    %c1920 = arith.constant 1920 : index
    %3 = vector.load %arg13[%c0_2, %c1920] : memref<32x2048xbf16, #tpu.memory_space<vmem>>, vector<32x128xbf16>
    tpu.vector_store %arg13[%c0_2, %c1920], %2 {strides = array<i32>} : memref<32x2048xbf16, #tpu.memory_space<vmem>>, vector<32x128xbf16>,
    %cst_3 = arith.constant 0.000000e+00 : f32
    %4 = vector.broadcast %cst_3 : f32 to vector<32x1xf32>
    %cst_4 = arith.constant 0.000000e+00 : f32
    %5 = vector.broadcast %cst_4 : f32 to vector<32x1xf32>
    %c0_5 = arith.constant 0 : index
    %c0_6 = arith.constant 0 : index
    %c0_7 = arith.constant 0 : index
    %6 = vector.load %arg2[%c0_5, %c0_6, %c0_7] : memref<3x32x8xbf16, #tpu.memory_space<vmem>>, vector<1x32x8xbf16>
    %7 = vector.shape_cast %6 : vector<1x32x8xbf16> to vector<32x8xbf16>
    %c0_8 = arith.constant 0 : index
    %c127 = arith.constant 127 : index
    %8 = vector.load %arg1[%c0_8, %c127] : memref<8x2048xbf16, #tpu.memory_space<vmem>>, vector<8x256xbf16>
    %cst_9 = arith.constant dense<0.000000e+00> : vector<32x256xf32>
    %9 = tpu.matmul %7, %8, %cst_9 {dimension_numbers = #tpu.dot_dimension_numbers<[1], [0], [0], [1], [0, 0, 1, 1], [], []>} : vector<32x8xbf16>, vector<8x256xbf16>, vector<32x256xf32> -> vector<32x256xf32>
    %c1 = arith.constant 1 : index
    %c0_10 = arith.constant 0 : index
    %c0_11 = arith.constant 0 : index
    %10 = vector.load %arg2[%c1, %c0_10, %c0_11] : memref<3x32x8xbf16, #tpu.memory_space<vmem>>, vector<1x32x8xbf16>
    %11 = vector.shape_cast %10 : vector<1x32x8xbf16> to vector<32x8xbf16>
    %c0_12 = arith.constant 0 : index
    %c128 = arith.constant 128 : index
    %12 = vector.load %arg1[%c0_12, %c128] : memref<8x2048xbf16, #tpu.memory_space<vmem>>, vector<8x256xbf16>
    %cst_13 = arith.constant dense<0.000000e+00> : vector<32x256xf32>
    %13 = tpu.matmul %11, %12, %cst_13 {dimension_numbers = #tpu.dot_dimension_numbers<[1], [0], [0], [1], [0, 0, 1, 1], [], []>} : vector<32x8xbf16>, vector<8x256xbf16>, vector<32x256xf32> -> vector<32x256xf32>
    %14 = arith.addf %9, %13 : vector<32x256xf32>
    %c2 = arith.constant 2 : index
    %c0_14 = arith.constant 0 : index
    %c0_15 = arith.constant 0 : index
    %15 = vector.load %arg2[%c2, %c0_14, %c0_15] : memref<3x32x8xbf16, #tpu.memory_space<vmem>>, vector<1x32x8xbf16>
    %16 = vector.shape_cast %15 : vector<1x32x8xbf16> to vector<32x8xbf16>
    %c0_16 = arith.constant 0 : index
    %c129 = arith.constant 129 : index
    %17 = vector.load %arg1[%c0_16, %c129] : memref<8x2048xbf16, #tpu.memory_space<vmem>>, vector<8x256xbf16>
    %cst_17 = arith.constant dense<0.000000e+00> : vector<32x256xf32>
    %18 = tpu.matmul %16, %17, %cst_17 {dimension_numbers = #tpu.dot_dimension_numbers<[1], [0], [0], [1], [0, 0, 1, 1], [], []>} : vector<32x8xbf16>, vector<8x256xbf16>, vector<32x256xf32> -> vector<32x256xf32>
    %19 = arith.addf %14, %18 : vector<32x256xf32>
    %c0_18 = arith.constant 0 : index
    %c0_19 = arith.constant 0 : index
    %20 = vector.load %arg12[%c0_18, %c0_19] : memref<32x1792xf32, #tpu.memory_space<vmem>>, vector<32x256xf32>
    tpu.vector_store %arg12[%c0_18, %c0_19], %19 {strides = array<i32>} : memref<32x1792xf32, #tpu.memory_space<vmem>>, vector<32x256xf32>,
    %c0_20 = arith.constant 0 : index
    %c0_21 = arith.constant 0 : index
    %21 = vector.load %arg8[%c0_20, %c0_21] : memref<1x1792xf32, #tpu.memory_space<vmem>>, vector<1x256xf32>
    %22 = vector.broadcast %21 : vector<1x256xf32> to vector<32x256xf32>
    %23 = arith.mulf %19, %22 : vector<32x256xf32>
    %cst_22 = arith.constant dense<0.000000e+00> : vector<32xf32>
    %24 = vector.multi_reduction <add>, %23, %cst_22 [1] : vector<32x256xf32> to vector<32xf32>
    %25 = vector.shape_cast %24 : vector<32xf32> to vector<32x1xf32>
    %26 = arith.addf %4, %25 : vector<32x1xf32>
    %27 = arith.mulf %23, %19 : vector<32x256xf32>
    %cst_23 = arith.constant dense<0.000000e+00> : vector<32xf32>
    %28 = vector.multi_reduction <add>, %27, %cst_23 [1] : vector<32x256xf32> to vector<32xf32>
    %29 = vector.shape_cast %28 : vector<32xf32> to vector<32x1xf32>
    %30 = arith.addf %5, %29 : vector<32x1xf32>
    %c0_24 = arith.constant 0 : index
    %c0_25 = arith.constant 0 : index
    %c0_26 = arith.constant 0 : index
    %31 = vector.load %arg2[%c0_24, %c0_25, %c0_26] : memref<3x32x8xbf16, #tpu.memory_space<vmem>>, vector<1x32x8xbf16>
    %32 = vector.shape_cast %31 : vector<1x32x8xbf16> to vector<32x8xbf16>
    %c0_27 = arith.constant 0 : index
    %c383 = arith.constant 383 : index
    %33 = vector.load %arg1[%c0_27, %c383] : memref<8x2048xbf16, #tpu.memory_space<vmem>>, vector<8x256xbf16>
    %cst_28 = arith.constant dense<0.000000e+00> : vector<32x256xf32>
    %34 = tpu.matmul %32, %33, %cst_28 {dimension_numbers = #tpu.dot_dimension_numbers<[1], [0], [0], [1], [0, 0, 1, 1], [], []>} : vector<32x8xbf16>, vector<8x256xbf16>, vector<32x256xf32> -> vector<32x256xf32>
    %c1_29 = arith.constant 1 : index
    %c0_30 = arith.constant 0 : index
    %c0_31 = arith.constant 0 : index
    %35 = vector.load %arg2[%c1_29, %c0_30, %c0_31] : memref<3x32x8xbf16, #tpu.memory_space<vmem>>, vector<1x32x8xbf16>
    %36 = vector.shape_cast %35 : vector<1x32x8xbf16> to vector<32x8xbf16>
    %c0_32 = arith.constant 0 : index
    %c384 = arith.constant 384 : index
    %37 = vector.load %arg1[%c0_32, %c384] : memref<8x2048xbf16, #tpu.memory_space<vmem>>, vector<8x256xbf16>
    %cst_33 = arith.constant dense<0.000000e+00> : vector<32x256xf32>
    %38 = tpu.matmul %36, %37, %cst_33 {dimension_numbers = #tpu.dot_dimension_numbers<[1], [0], [0], [1], [0, 0, 1, 1], [], []>} : vector<32x8xbf16>, vector<8x256xbf16>, vector<32x256xf32> -> vector<32x256xf32>
    %39 = arith.addf %34, %38 : vector<32x256xf32>
    %c2_34 = arith.constant 2 : index
    %c0_35 = arith.constant 0 : index
    %c0_36 = arith.constant 0 : index
    %40 = vector.load %arg2[%c2_34, %c0_35, %c0_36] : memref<3x32x8xbf16, #tpu.memory_space<vmem>>, vector<1x32x8xbf16>
    %41 = vector.shape_cast %40 : vector<1x32x8xbf16> to vector<32x8xbf16>
    %c0_37 = arith.constant 0 : index
    %c385 = arith.constant 385 : index
    %42 = vector.load %arg1[%c0_37, %c385] : memref<8x2048xbf16, #tpu.memory_space<vmem>>, vector<8x256xbf16>
    %cst_38 = arith.constant dense<0.000000e+00> : vector<32x256xf32>
    %43 = tpu.matmul %41, %42, %cst_38 {dimension_numbers = #tpu.dot_dimension_numbers<[1], [0], [0], [1], [0, 0, 1, 1], [], []>} : vector<32x8xbf16>, vector<8x256xbf16>, vector<32x256xf32> -> vector<32x256xf32>
    %44 = arith.addf %39, %43 : vector<32x256xf32>
    %c0_39 = arith.constant 0 : index
    %c256 = arith.constant 256 : index
    %45 = vector.load %arg12[%c0_39, %c256] : memref<32x1792xf32, #tpu.memory_space<vmem>>, vector<32x256xf32>
    tpu.vector_store %arg12[%c0_39, %c256], %44 {strides = array<i32>} : memref<32x1792xf32, #tpu.memory_space<vmem>>, vector<32x256xf32>,
    %c0_40 = arith.constant 0 : index
    %c256_41 = arith.constant 256 : index
    %46 = vector.load %arg8[%c0_40, %c256_41] : memref<1x1792xf32, #tpu.memory_space<vmem>>, vector<1x256xf32>
    %47 = vector.broadcast %46 : vector<1x256xf32> to vector<32x256xf32>
    %48 = arith.mulf %44, %47 : vector<32x256xf32>
    %cst_42 = arith.constant dense<0.000000e+00> : vector<32xf32>
    %49 = vector.multi_reduction <add>, %48, %cst_42 [1] : vector<32x256xf32> to vector<32xf32>
    %50 = vector.shape_cast %49 : vector<32xf32> to vector<32x1xf32>
    %51 = arith.addf %26, %50 : vector<32x1xf32>
    %52 = arith.mulf %48, %44 : vector<32x256xf32>
    %cst_43 = arith.constant dense<0.000000e+00> : vector<32xf32>
    %53 = vector.multi_reduction <add>, %52, %cst_43 [1] : vector<32x256xf32> to vector<32xf32>
    %54 = vector.shape_cast %53 : vector<32xf32> to vector<32x1xf32>
    %55 = arith.addf %30, %54 : vector<32x1xf32>
    %c0_44 = arith.constant 0 : index
    %c0_45 = arith.constant 0 : index
    %c0_46 = arith.constant 0 : index
    %56 = vector.load %arg2[%c0_44, %c0_45, %c0_46] : memref<3x32x8xbf16, #tpu.memory_space<vmem>>, vector<1x32x8xbf16>
    %57 = vector.shape_cast %56 : vector<1x32x8xbf16> to vector<32x8xbf16>
    %c0_47 = arith.constant 0 : index
    %c639 = arith.constant 639 : index
    %58 = vector.load %arg1[%c0_47, %c639] : memref<8x2048xbf16, #tpu.memory_space<vmem>>, vector<8x256xbf16>
    %cst_48 = arith.constant dense<0.000000e+00> : vector<32x256xf32>
    %59 = tpu.matmul %57, %58, %cst_48 {dimension_numbers = #tpu.dot_dimension_numbers<[1], [0], [0], [1], [0, 0, 1, 1], [], []>} : vector<32x8xbf16>, vector<8x256xbf16>, vector<32x256xf32> -> vector<32x256xf32>
    %c1_49 = arith.constant 1 : index
    %c0_50 = arith.constant 0 : index
    %c0_51 = arith.constant 0 : index
    %60 = vector.load %arg2[%c1_49, %c0_50, %c0_51] : memref<3x32x8xbf16, #tpu.memory_space<vmem>>, vector<1x32x8xbf16>
    %61 = vector.shape_cast %60 : vector<1x32x8xbf16> to vector<32x8xbf16>
    %c0_52 = arith.constant 0 : index
    %c640 = arith.constant 640 : index
    %62 = vector.load %arg1[%c0_52, %c640] : memref<8x2048xbf16, #tpu.memory_space<vmem>>, vector<8x256xbf16>
    %cst_53 = arith.constant dense<0.000000e+00> : vector<32x256xf32>
    %63 = tpu.matmul %61, %62, %cst_53 {dimension_numbers = #tpu.dot_dimension_numbers<[1], [0], [0], [1], [0, 0, 1, 1], [], []>} : vector<32x8xbf16>, vector<8x256xbf16>, vector<32x256xf32> -> vector<32x256xf32>
    %64 = arith.addf %59, %63 : vector<32x256xf32>
    %c2_54 = arith.constant 2 : index
    %c0_55 = arith.constant 0 : index
    %c0_56 = arith.constant 0 : index
    %65 = vector.load %arg2[%c2_54, %c0_55, %c0_56] : memref<3x32x8xbf16, #tpu.memory_space<vmem>>, vector<1x32x8xbf16>
    %66 = vector.shape_cast %65 : vector<1x32x8xbf16> to vector<32x8xbf16>
    %c0_57 = arith.constant 0 : index
    %c641 = arith.constant 641 : index
    %67 = vector.load %arg1[%c0_57, %c641] : memref<8x2048xbf16, #tpu.memory_space<vmem>>, vector<8x256xbf16>
    %cst_58 = arith.constant dense<0.000000e+00> : vector<32x256xf32>
    %68 = tpu.matmul %66, %67, %cst_58 {dimension_numbers = #tpu.dot_dimension_numbers<[1], [0], [0], [1], [0, 0, 1, 1], [], []>} : vector<32x8xbf16>, vector<8x256xbf16>, vector<32x256xf32> -> vector<32x256xf32>
    %69 = arith.addf %64, %68 : vector<32x256xf32>
    %c0_59 = arith.constant 0 : index
    %c512 = arith.constant 512 : index
    %70 = vector.load %arg12[%c0_59, %c512] : memref<32x1792xf32, #tpu.memory_space<vmem>>, vector<32x256xf32>
    tpu.vector_store %arg12[%c0_59, %c512], %69 {strides = array<i32>} : memref<32x1792xf32, #tpu.memory_space<vmem>>, vector<32x256xf32>,
    %c0_60 = arith.constant 0 : index
    %c512_61 = arith.constant 512 : index
    %71 = vector.load %arg8[%c0_60, %c512_61] : memref<1x1792xf32, #tpu.memory_space<vmem>>, vector<1x256xf32>
    %72 = vector.broadcast %71 : vector<1x256xf32> to vector<32x256xf32>
    %73 = arith.mulf %69, %72 : vector<32x256xf32>
    %cst_62 = arith.constant dense<0.000000e+00> : vector<32xf32>
    %74 = vector.multi_reduction <add>, %73, %cst_62 [1] : vector<32x256xf32> to vector<32xf32>
    %75 = vector.shape_cast %74 : vector<32xf32> to vector<32x1xf32>
    %76 = arith.addf %51, %75 : vector<32x1xf32>
    %77 = arith.mulf %73, %69 : vector<32x256xf32>
    %cst_63 = arith.constant dense<0.000000e+00> : vector<32xf32>
    %78 = vector.multi_reduction <add>, %77, %cst_63 [1] : vector<32x256xf32> to vector<32xf32>
    %79 = vector.shape_cast %78 : vector<32xf32> to vector<32x1xf32>
    %80 = arith.addf %55, %79 : vector<32x1xf32>
    %c0_64 = arith.constant 0 : index
    %c0_65 = arith.constant 0 : index
    %c0_66 = arith.constant 0 : index
    %81 = vector.load %arg2[%c0_64, %c0_65, %c0_66] : memref<3x32x8xbf16, #tpu.memory_space<vmem>>, vector<1x32x8xbf16>
    %82 = vector.shape_cast %81 : vector<1x32x8xbf16> to vector<32x8xbf16>
    %c0_67 = arith.constant 0 : index
    %c895 = arith.constant 895 : index
    %83 = vector.load %arg1[%c0_67, %c895] : memref<8x2048xbf16, #tpu.memory_space<vmem>>, vector<8x256xbf16>
    %cst_68 = arith.constant dense<0.000000e+00> : vector<32x256xf32>
    %84 = tpu.matmul %82, %83, %cst_68 {dimension_numbers = #tpu.dot_dimension_numbers<[1], [0], [0], [1], [0, 0, 1, 1], [], []>} : vector<32x8xbf16>, vector<8x256xbf16>, vector<32x256xf32> -> vector<32x256xf32>
    %c1_69 = arith.constant 1 : index
    %c0_70 = arith.constant 0 : index
    %c0_71 = arith.constant 0 : index
    %85 = vector.load %arg2[%c1_69, %c0_70, %c0_71] : memref<3x32x8xbf16, #tpu.memory_space<vmem>>, vector<1x32x8xbf16>
    %86 = vector.shape_cast %85 : vector<1x32x8xbf16> to vector<32x8xbf16>
    %c0_72 = arith.constant 0 : index
    %c896 = arith.constant 896 : index
    %87 = vector.load %arg1[%c0_72, %c896] : memref<8x2048xbf16, #tpu.memory_space<vmem>>, vector<8x256xbf16>
    %cst_73 = arith.constant dense<0.000000e+00> : vector<32x256xf32>
    %88 = tpu.matmul %86, %87, %cst_73 {dimension_numbers = #tpu.dot_dimension_numbers<[1], [0], [0], [1], [0, 0, 1, 1], [], []>} : vector<32x8xbf16>, vector<8x256xbf16>, vector<32x256xf32> -> vector<32x256xf32>
    %89 = arith.addf %84, %88 : vector<32x256xf32>
    %c2_74 = arith.constant 2 : index
    %c0_75 = arith.constant 0 : index
    %c0_76 = arith.constant 0 : index
    %90 = vector.load %arg2[%c2_74, %c0_75, %c0_76] : memref<3x32x8xbf16, #tpu.memory_space<vmem>>, vector<1x32x8xbf16>
    %91 = vector.shape_cast %90 : vector<1x32x8xbf16> to vector<32x8xbf16>
    %c0_77 = arith.constant 0 : index
    %c897 = arith.constant 897 : index
    %92 = vector.load %arg1[%c0_77, %c897] : memref<8x2048xbf16, #tpu.memory_space<vmem>>, vector<8x256xbf16>
    %cst_78 = arith.constant dense<0.000000e+00> : vector<32x256xf32>
    %93 = tpu.matmul %91, %92, %cst_78 {dimension_numbers = #tpu.dot_dimension_numbers<[1], [0], [0], [1], [0, 0, 1, 1], [], []>} : vector<32x8xbf16>, vector<8x256xbf16>, vector<32x256xf32> -> vector<32x256xf32>
    %94 = arith.addf %89, %93 : vector<32x256xf32>
    %c0_79 = arith.constant 0 : index
    %c768 = arith.constant 768 : index
    %95 = vector.load %arg12[%c0_79, %c768] : memref<32x1792xf32, #tpu.memory_space<vmem>>, vector<32x256xf32>
    tpu.vector_store %arg12[%c0_79, %c768], %94 {strides = array<i32>} : memref<32x1792xf32, #tpu.memory_space<vmem>>, vector<32x256xf32>,
    %c0_80 = arith.constant 0 : index
    %c768_81 = arith.constant 768 : index
    %96 = vector.load %arg8[%c0_80, %c768_81] : memref<1x1792xf32, #tpu.memory_space<vmem>>, vector<1x256xf32>
    %97 = vector.broadcast %96 : vector<1x256xf32> to vector<32x256xf32>
    %98 = arith.mulf %94, %97 : vector<32x256xf32>
    %cst_82 = arith.constant dense<0.000000e+00> : vector<32xf32>
    %99 = vector.multi_reduction <add>, %98, %cst_82 [1] : vector<32x256xf32> to vector<32xf32>
    %100 = vector.shape_cast %99 : vector<32xf32> to vector<32x1xf32>
    %101 = arith.addf %76, %100 : vector<32x1xf32>
    %102 = arith.mulf %98, %94 : vector<32x256xf32>
    %cst_83 = arith.constant dense<0.000000e+00> : vector<32xf32>
    %103 = vector.multi_reduction <add>, %102, %cst_83 [1] : vector<32x256xf32> to vector<32xf32>
    %104 = vector.shape_cast %103 : vector<32xf32> to vector<32x1xf32>
    %105 = arith.addf %80, %104 : vector<32x1xf32>
    %c0_84 = arith.constant 0 : index
    %c0_85 = arith.constant 0 : index
    %c0_86 = arith.constant 0 : index
    %106 = vector.load %arg2[%c0_84, %c0_85, %c0_86] : memref<3x32x8xbf16, #tpu.memory_space<vmem>>, vector<1x32x8xbf16>
    %107 = vector.shape_cast %106 : vector<1x32x8xbf16> to vector<32x8xbf16>
    %c0_87 = arith.constant 0 : index
    %c1151 = arith.constant 1151 : index
    %108 = vector.load %arg1[%c0_87, %c1151] : memref<8x2048xbf16, #tpu.memory_space<vmem>>, vector<8x256xbf16>
    %cst_88 = arith.constant dense<0.000000e+00> : vector<32x256xf32>
    %109 = tpu.matmul %107, %108, %cst_88 {dimension_numbers = #tpu.dot_dimension_numbers<[1], [0], [0], [1], [0, 0, 1, 1], [], []>} : vector<32x8xbf16>, vector<8x256xbf16>, vector<32x256xf32> -> vector<32x256xf32>
    %c1_89 = arith.constant 1 : index
    %c0_90 = arith.constant 0 : index
    %c0_91 = arith.constant 0 : index
    %110 = vector.load %arg2[%c1_89, %c0_90, %c0_91] : memref<3x32x8xbf16, #tpu.memory_space<vmem>>, vector<1x32x8xbf16>
    %111 = vector.shape_cast %110 : vector<1x32x8xbf16> to vector<32x8xbf16>
    %c0_92 = arith.constant 0 : index
    %c1152 = arith.constant 1152 : index
    %112 = vector.load %arg1[%c0_92, %c1152] : memref<8x2048xbf16, #tpu.memory_space<vmem>>, vector<8x256xbf16>
    %cst_93 = arith.constant dense<0.000000e+00> : vector<32x256xf32>
    %113 = tpu.matmul %111, %112, %cst_93 {dimension_numbers = #tpu.dot_dimension_numbers<[1], [0], [0], [1], [0, 0, 1, 1], [], []>} : vector<32x8xbf16>, vector<8x256xbf16>, vector<32x256xf32> -> vector<32x256xf32>
    %114 = arith.addf %109, %113 : vector<32x256xf32>
    %c2_94 = arith.constant 2 : index
    %c0_95 = arith.constant 0 : index
    %c0_96 = arith.constant 0 : index
    %115 = vector.load %arg2[%c2_94, %c0_95, %c0_96] : memref<3x32x8xbf16, #tpu.memory_space<vmem>>, vector<1x32x8xbf16>
    %116 = vector.shape_cast %115 : vector<1x32x8xbf16> to vector<32x8xbf16>
    %c0_97 = arith.constant 0 : index
    %c1153 = arith.constant 1153 : index
    %117 = vector.load %arg1[%c0_97, %c1153] : memref<8x2048xbf16, #tpu.memory_space<vmem>>, vector<8x256xbf16>
    %cst_98 = arith.constant dense<0.000000e+00> : vector<32x256xf32>
    %118 = tpu.matmul %116, %117, %cst_98 {dimension_numbers = #tpu.dot_dimension_numbers<[1], [0], [0], [1], [0, 0, 1, 1], [], []>} : vector<32x8xbf16>, vector<8x256xbf16>, vector<32x256xf32> -> vector<32x256xf32>
    %119 = arith.addf %114, %118 : vector<32x256xf32>
    %c0_99 = arith.constant 0 : index
    %c1024 = arith.constant 1024 : index
    %120 = vector.load %arg12[%c0_99, %c1024] : memref<32x1792xf32, #tpu.memory_space<vmem>>, vector<32x256xf32>
    tpu.vector_store %arg12[%c0_99, %c1024], %119 {strides = array<i32>} : memref<32x1792xf32, #tpu.memory_space<vmem>>, vector<32x256xf32>,
    %c0_100 = arith.constant 0 : index
    %c1024_101 = arith.constant 1024 : index
    %121 = vector.load %arg8[%c0_100, %c1024_101] : memref<1x1792xf32, #tpu.memory_space<vmem>>, vector<1x256xf32>
    %122 = vector.broadcast %121 : vector<1x256xf32> to vector<32x256xf32>
    %123 = arith.mulf %119, %122 : vector<32x256xf32>
    %cst_102 = arith.constant dense<0.000000e+00> : vector<32xf32>
    %124 = vector.multi_reduction <add>, %123, %cst_102 [1] : vector<32x256xf32> to vector<32xf32>
    %125 = vector.shape_cast %124 : vector<32xf32> to vector<32x1xf32>
    %126 = arith.addf %101, %125 : vector<32x1xf32>
    %127 = arith.mulf %123, %119 : vector<32x256xf32>
    %cst_103 = arith.constant dense<0.000000e+00> : vector<32xf32>
    %128 = vector.multi_reduction <add>, %127, %cst_103 [1] : vector<32x256xf32> to vector<32xf32>
    %129 = vector.shape_cast %128 : vector<32xf32> to vector<32x1xf32>
    %130 = arith.addf %105, %129 : vector<32x1xf32>
    %c0_104 = arith.constant 0 : index
    %c0_105 = arith.constant 0 : index
    %c0_106 = arith.constant 0 : index
    %131 = vector.load %arg2[%c0_104, %c0_105, %c0_106] : memref<3x32x8xbf16, #tpu.memory_space<vmem>>, vector<1x32x8xbf16>
    %132 = vector.shape_cast %131 : vector<1x32x8xbf16> to vector<32x8xbf16>
    %c0_107 = arith.constant 0 : index
    %c1407 = arith.constant 1407 : index
    %133 = vector.load %arg1[%c0_107, %c1407] : memref<8x2048xbf16, #tpu.memory_space<vmem>>, vector<8x256xbf16>
    %cst_108 = arith.constant dense<0.000000e+00> : vector<32x256xf32>
    %134 = tpu.matmul %132, %133, %cst_108 {dimension_numbers = #tpu.dot_dimension_numbers<[1], [0], [0], [1], [0, 0, 1, 1], [], []>} : vector<32x8xbf16>, vector<8x256xbf16>, vector<32x256xf32> -> vector<32x256xf32>
    %c1_109 = arith.constant 1 : index
    %c0_110 = arith.constant 0 : index
    %c0_111 = arith.constant 0 : index
    %135 = vector.load %arg2[%c1_109, %c0_110, %c0_111] : memref<3x32x8xbf16, #tpu.memory_space<vmem>>, vector<1x32x8xbf16>
    %136 = vector.shape_cast %135 : vector<1x32x8xbf16> to vector<32x8xbf16>
    %c0_112 = arith.constant 0 : index
    %c1408 = arith.constant 1408 : index
    %137 = vector.load %arg1[%c0_112, %c1408] : memref<8x2048xbf16, #tpu.memory_space<vmem>>, vector<8x256xbf16>
    %cst_113 = arith.constant dense<0.000000e+00> : vector<32x256xf32>
    %138 = tpu.matmul %136, %137, %cst_113 {dimension_numbers = #tpu.dot_dimension_numbers<[1], [0], [0], [1], [0, 0, 1, 1], [], []>} : vector<32x8xbf16>, vector<8x256xbf16>, vector<32x256xf32> -> vector<32x256xf32>
    %139 = arith.addf %134, %138 : vector<32x256xf32>
    %c2_114 = arith.constant 2 : index
    %c0_115 = arith.constant 0 : index
    %c0_116 = arith.constant 0 : index
    %140 = vector.load %arg2[%c2_114, %c0_115, %c0_116] : memref<3x32x8xbf16, #tpu.memory_space<vmem>>, vector<1x32x8xbf16>
    %141 = vector.shape_cast %140 : vector<1x32x8xbf16> to vector<32x8xbf16>
    %c0_117 = arith.constant 0 : index
    %c1409 = arith.constant 1409 : index
    %142 = vector.load %arg1[%c0_117, %c1409] : memref<8x2048xbf16, #tpu.memory_space<vmem>>, vector<8x256xbf16>
    %cst_118 = arith.constant dense<0.000000e+00> : vector<32x256xf32>
    %143 = tpu.matmul %141, %142, %cst_118 {dimension_numbers = #tpu.dot_dimension_numbers<[1], [0], [0], [1], [0, 0, 1, 1], [], []>} : vector<32x8xbf16>, vector<8x256xbf16>, vector<32x256xf32> -> vector<32x256xf32>
    %144 = arith.addf %139, %143 : vector<32x256xf32>
    %c0_119 = arith.constant 0 : index
    %c1280 = arith.constant 1280 : index
    %145 = vector.load %arg12[%c0_119, %c1280] : memref<32x1792xf32, #tpu.memory_space<vmem>>, vector<32x256xf32>
    tpu.vector_store %arg12[%c0_119, %c1280], %144 {strides = array<i32>} : memref<32x1792xf32, #tpu.memory_space<vmem>>, vector<32x256xf32>,
    %c0_120 = arith.constant 0 : index
    %c1280_121 = arith.constant 1280 : index
    %146 = vector.load %arg8[%c0_120, %c1280_121] : memref<1x1792xf32, #tpu.memory_space<vmem>>, vector<1x256xf32>
    %147 = vector.broadcast %146 : vector<1x256xf32> to vector<32x256xf32>
    %148 = arith.mulf %144, %147 : vector<32x256xf32>
    %cst_122 = arith.constant dense<0.000000e+00> : vector<32xf32>
    %149 = vector.multi_reduction <add>, %148, %cst_122 [1] : vector<32x256xf32> to vector<32xf32>
    %150 = vector.shape_cast %149 : vector<32xf32> to vector<32x1xf32>
    %151 = arith.addf %126, %150 : vector<32x1xf32>
    %152 = arith.mulf %148, %144 : vector<32x256xf32>
    %cst_123 = arith.constant dense<0.000000e+00> : vector<32xf32>
    %153 = vector.multi_reduction <add>, %152, %cst_123 [1] : vector<32x256xf32> to vector<32xf32>
    %154 = vector.shape_cast %153 : vector<32xf32> to vector<32x1xf32>
    %155 = arith.addf %130, %154 : vector<32x1xf32>
    %c0_124 = arith.constant 0 : index
    %c0_125 = arith.constant 0 : index
    %c0_126 = arith.constant 0 : index
    %156 = vector.load %arg2[%c0_124, %c0_125, %c0_126] : memref<3x32x8xbf16, #tpu.memory_space<vmem>>, vector<1x32x8xbf16>
    %157 = vector.shape_cast %156 : vector<1x32x8xbf16> to vector<32x8xbf16>
    %c0_127 = arith.constant 0 : index
    %c1663 = arith.constant 1663 : index
    %158 = vector.load %arg1[%c0_127, %c1663] : memref<8x2048xbf16, #tpu.memory_space<vmem>>, vector<8x256xbf16>
    %cst_128 = arith.constant dense<0.000000e+00> : vector<32x256xf32>
    %159 = tpu.matmul %157, %158, %cst_128 {dimension_numbers = #tpu.dot_dimension_numbers<[1], [0], [0], [1], [0, 0, 1, 1], [], []>} : vector<32x8xbf16>, vector<8x256xbf16>, vector<32x256xf32> -> vector<32x256xf32>
    %c1_129 = arith.constant 1 : index
    %c0_130 = arith.constant 0 : index
    %c0_131 = arith.constant 0 : index
    %160 = vector.load %arg2[%c1_129, %c0_130, %c0_131] : memref<3x32x8xbf16, #tpu.memory_space<vmem>>, vector<1x32x8xbf16>
    %161 = vector.shape_cast %160 : vector<1x32x8xbf16> to vector<32x8xbf16>
    %c0_132 = arith.constant 0 : index
    %c1664 = arith.constant 1664 : index
    %162 = vector.load %arg1[%c0_132, %c1664] : memref<8x2048xbf16, #tpu.memory_space<vmem>>, vector<8x256xbf16>
    %cst_133 = arith.constant dense<0.000000e+00> : vector<32x256xf32>
    %163 = tpu.matmul %161, %162, %cst_133 {dimension_numbers = #tpu.dot_dimension_numbers<[1], [0], [0], [1], [0, 0, 1, 1], [], []>} : vector<32x8xbf16>, vector<8x256xbf16>, vector<32x256xf32> -> vector<32x256xf32>
    %164 = arith.addf %159, %163 : vector<32x256xf32>
    %c2_134 = arith.constant 2 : index
    %c0_135 = arith.constant 0 : index
    %c0_136 = arith.constant 0 : index
    %165 = vector.load %arg2[%c2_134, %c0_135, %c0_136] : memref<3x32x8xbf16, #tpu.memory_space<vmem>>, vector<1x32x8xbf16>
    %166 = vector.shape_cast %165 : vector<1x32x8xbf16> to vector<32x8xbf16>
    %c0_137 = arith.constant 0 : index
    %c1665 = arith.constant 1665 : index
    %167 = vector.load %arg1[%c0_137, %c1665] : memref<8x2048xbf16, #tpu.memory_space<vmem>>, vector<8x256xbf16>
    %cst_138 = arith.constant dense<0.000000e+00> : vector<32x256xf32>
    %168 = tpu.matmul %166, %167, %cst_138 {dimension_numbers = #tpu.dot_dimension_numbers<[1], [0], [0], [1], [0, 0, 1, 1], [], []>} : vector<32x8xbf16>, vector<8x256xbf16>, vector<32x256xf32> -> vector<32x256xf32>
    %169 = arith.addf %164, %168 : vector<32x256xf32>
    %c0_139 = arith.constant 0 : index
    %c1536 = arith.constant 1536 : index
    %170 = vector.load %arg12[%c0_139, %c1536] : memref<32x1792xf32, #tpu.memory_space<vmem>>, vector<32x256xf32>
    tpu.vector_store %arg12[%c0_139, %c1536], %169 {strides = array<i32>} : memref<32x1792xf32, #tpu.memory_space<vmem>>, vector<32x256xf32>,
    %c0_140 = arith.constant 0 : index
    %c1536_141 = arith.constant 1536 : index
    %171 = vector.load %arg8[%c0_140, %c1536_141] : memref<1x1792xf32, #tpu.memory_space<vmem>>, vector<1x256xf32>
    %172 = vector.broadcast %171 : vector<1x256xf32> to vector<32x256xf32>
    %173 = arith.mulf %169, %172 : vector<32x256xf32>
    %cst_142 = arith.constant dense<0.000000e+00> : vector<32xf32>
    %174 = vector.multi_reduction <add>, %173, %cst_142 [1] : vector<32x256xf32> to vector<32xf32>
    %175 = vector.shape_cast %174 : vector<32xf32> to vector<32x1xf32>
    %176 = arith.addf %151, %175 : vector<32x1xf32>
    %177 = arith.mulf %173, %169 : vector<32x256xf32>
    %cst_143 = arith.constant dense<0.000000e+00> : vector<32xf32>
    %178 = vector.multi_reduction <add>, %177, %cst_143 [1] : vector<32x256xf32> to vector<32xf32>
    %179 = vector.shape_cast %178 : vector<32xf32> to vector<32x1xf32>
    %180 = arith.addf %155, %179 : vector<32x1xf32>
    %c0_144 = arith.constant 0 : index
    %c0_145 = arith.constant 0 : index
    %181 = vector.load %arg4[%c0_144, %c0_145] : memref<32x1xf32, #tpu.memory_space<vmem>>, vector<32x1xf32>
    %c0_146 = arith.constant 0 : index
    %c0_147 = arith.constant 0 : index
    %182 = vector.load %arg5[%c0_146, %c0_147] : memref<32x1xf32, #tpu.memory_space<vmem>>, vector<32x1xf32>
    %cst_148 = arith.constant 6.250000e-04 : f32
    %183 = vector.broadcast %cst_148 : f32 to vector<32x1xf32>
    %184 = arith.mulf %176, %183 : vector<32x1xf32>
    %cst_149 = arith.constant 6.250000e-04 : f32
    %185 = vector.broadcast %cst_149 : f32 to vector<32x1xf32>
    %186 = arith.mulf %180, %185 : vector<32x1xf32>
    %187 = arith.mulf %184, %184 : vector<32x1xf32>
    %188 = arith.subf %186, %187 : vector<32x1xf32>
    %cst_150 = arith.constant 0.000000e+00 : f32
    %189 = vector.broadcast %cst_150 : f32 to vector<32x1xf32>
    %190 = arith.maximumf %188, %189 : vector<32x1xf32>
    %cst_151 = arith.constant 9.99999974E-6 : f32
    %191 = vector.broadcast %cst_151 : f32 to vector<32x1xf32>
    %192 = arith.addf %190, %191 : vector<32x1xf32>
    %193 = math.rsqrt %192 : vector<32x1xf32>
    %194 = arith.mulf %181, %193 : vector<32x1xf32>
    %195 = arith.mulf %184, %194 : vector<32x1xf32>
    %196 = arith.subf %182, %195 : vector<32x1xf32>
    %c0_152 = arith.constant 0 : index
    %c0_153 = arith.constant 0 : index
    %197 = vector.load %arg12[%c0_152, %c0_153] : memref<32x1792xf32, #tpu.memory_space<vmem>>, vector<32x256xf32>
    %198 = vector.broadcast %194 : vector<32x1xf32> to vector<32x256xf32>
    %199 = arith.mulf %197, %198 : vector<32x256xf32>
    %200 = vector.broadcast %196 : vector<32x1xf32> to vector<32x256xf32>
    %201 = arith.addf %199, %200 : vector<32x256xf32>
    %cst_154 = arith.constant 0.000000e+00 : f32
    %202 = vector.broadcast %cst_154 : f32 to vector<32x256xf32>
    %203 = arith.maximumf %201, %202 : vector<32x256xf32>
    %c0_155 = arith.constant 0 : index
    %c0_156 = arith.constant 0 : index
    %204 = vector.load %arg8[%c0_155, %c0_156] : memref<1x1792xf32, #tpu.memory_space<vmem>>, vector<1x256xf32>
    %205 = vector.broadcast %204 : vector<1x256xf32> to vector<32x256xf32>
    %206 = arith.mulf %203, %205 : vector<32x256xf32>
    %207 = arith.truncf %206 : vector<32x256xf32> to vector<32x256xbf16>
    %c0_157 = arith.constant 0 : index
    %c128_158 = arith.constant 128 : index
    %208 = vector.load %arg13[%c0_157, %c128_158] : memref<32x2048xbf16, #tpu.memory_space<vmem>>, vector<32x256xbf16>
    tpu.vector_store %arg13[%c0_157, %c128_158], %207 {strides = array<i32>} : memref<32x2048xbf16, #tpu.memory_space<vmem>>, vector<32x256xbf16>,
    %c0_159 = arith.constant 0 : index
    %c256_160 = arith.constant 256 : index
    %209 = vector.load %arg12[%c0_159, %c256_160] : memref<32x1792xf32, #tpu.memory_space<vmem>>, vector<32x256xf32>
    %210 = vector.broadcast %194 : vector<32x1xf32> to vector<32x256xf32>
    %211 = arith.mulf %209, %210 : vector<32x256xf32>
    %212 = vector.broadcast %196 : vector<32x1xf32> to vector<32x256xf32>
    %213 = arith.addf %211, %212 : vector<32x256xf32>
    %cst_161 = arith.constant 0.000000e+00 : f32
    %214 = vector.broadcast %cst_161 : f32 to vector<32x256xf32>
    %215 = arith.maximumf %213, %214 : vector<32x256xf32>
    %c0_162 = arith.constant 0 : index
    %c256_163 = arith.constant 256 : index
    %216 = vector.load %arg8[%c0_162, %c256_163] : memref<1x1792xf32, #tpu.memory_space<vmem>>, vector<1x256xf32>
    %217 = vector.broadcast %216 : vector<1x256xf32> to vector<32x256xf32>
    %218 = arith.mulf %215, %217 : vector<32x256xf32>
    %219 = arith.truncf %218 : vector<32x256xf32> to vector<32x256xbf16>
    %c0_164 = arith.constant 0 : index
    %c384_165 = arith.constant 384 : index
    %220 = vector.load %arg13[%c0_164, %c384_165] : memref<32x2048xbf16, #tpu.memory_space<vmem>>, vector<32x256xbf16>
    tpu.vector_store %arg13[%c0_164, %c384_165], %219 {strides = array<i32>} : memref<32x2048xbf16, #tpu.memory_space<vmem>>, vector<32x256xbf16>,
    %c0_166 = arith.constant 0 : index
    %c512_167 = arith.constant 512 : index
    %221 = vector.load %arg12[%c0_166, %c512_167] : memref<32x1792xf32, #tpu.memory_space<vmem>>, vector<32x256xf32>
    %222 = vector.broadcast %194 : vector<32x1xf32> to vector<32x256xf32>
    %223 = arith.mulf %221, %222 : vector<32x256xf32>
    %224 = vector.broadcast %196 : vector<32x1xf32> to vector<32x256xf32>
    %225 = arith.addf %223, %224 : vector<32x256xf32>
    %cst_168 = arith.constant 0.000000e+00 : f32
    %226 = vector.broadcast %cst_168 : f32 to vector<32x256xf32>
    %227 = arith.maximumf %225, %226 : vector<32x256xf32>
    %c0_169 = arith.constant 0 : index
    %c512_170 = arith.constant 512 : index
    %228 = vector.load %arg8[%c0_169, %c512_170] : memref<1x1792xf32, #tpu.memory_space<vmem>>, vector<1x256xf32>
    %229 = vector.broadcast %228 : vector<1x256xf32> to vector<32x256xf32>
    %230 = arith.mulf %227, %229 : vector<32x256xf32>
    %231 = arith.truncf %230 : vector<32x256xf32> to vector<32x256xbf16>
    %c0_171 = arith.constant 0 : index
    %c640_172 = arith.constant 640 : index
    %232 = vector.load %arg13[%c0_171, %c640_172] : memref<32x2048xbf16, #tpu.memory_space<vmem>>, vector<32x256xbf16>
    tpu.vector_store %arg13[%c0_171, %c640_172], %231 {strides = array<i32>} : memref<32x2048xbf16, #tpu.memory_space<vmem>>, vector<32x256xbf16>,
    %c0_173 = arith.constant 0 : index
    %c768_174 = arith.constant 768 : index
    %233 = vector.load %arg12[%c0_173, %c768_174] : memref<32x1792xf32, #tpu.memory_space<vmem>>, vector<32x256xf32>
    %234 = vector.broadcast %194 : vector<32x1xf32> to vector<32x256xf32>
    %235 = arith.mulf %233, %234 : vector<32x256xf32>
    %236 = vector.broadcast %196 : vector<32x1xf32> to vector<32x256xf32>
    %237 = arith.addf %235, %236 : vector<32x256xf32>
    %cst_175 = arith.constant 0.000000e+00 : f32
    %238 = vector.broadcast %cst_175 : f32 to vector<32x256xf32>
    %239 = arith.maximumf %237, %238 : vector<32x256xf32>
    %c0_176 = arith.constant 0 : index
    %c768_177 = arith.constant 768 : index
    %240 = vector.load %arg8[%c0_176, %c768_177] : memref<1x1792xf32, #tpu.memory_space<vmem>>, vector<1x256xf32>
    %241 = vector.broadcast %240 : vector<1x256xf32> to vector<32x256xf32>
    %242 = arith.mulf %239, %241 : vector<32x256xf32>
    %243 = arith.truncf %242 : vector<32x256xf32> to vector<32x256xbf16>
    %c0_178 = arith.constant 0 : index
    %c896_179 = arith.constant 896 : index
    %244 = vector.load %arg13[%c0_178, %c896_179] : memref<32x2048xbf16, #tpu.memory_space<vmem>>, vector<32x256xbf16>
    tpu.vector_store %arg13[%c0_178, %c896_179], %243 {strides = array<i32>} : memref<32x2048xbf16, #tpu.memory_space<vmem>>, vector<32x256xbf16>,
    %c0_180 = arith.constant 0 : index
    %c1024_181 = arith.constant 1024 : index
    %245 = vector.load %arg12[%c0_180, %c1024_181] : memref<32x1792xf32, #tpu.memory_space<vmem>>, vector<32x256xf32>
    %246 = vector.broadcast %194 : vector<32x1xf32> to vector<32x256xf32>
    %247 = arith.mulf %245, %246 : vector<32x256xf32>
    %248 = vector.broadcast %196 : vector<32x1xf32> to vector<32x256xf32>
    %249 = arith.addf %247, %248 : vector<32x256xf32>
    %cst_182 = arith.constant 0.000000e+00 : f32
    %250 = vector.broadcast %cst_182 : f32 to vector<32x256xf32>
    %251 = arith.maximumf %249, %250 : vector<32x256xf32>
    %c0_183 = arith.constant 0 : index
    %c1024_184 = arith.constant 1024 : index
    %252 = vector.load %arg8[%c0_183, %c1024_184] : memref<1x1792xf32, #tpu.memory_space<vmem>>, vector<1x256xf32>
    %253 = vector.broadcast %252 : vector<1x256xf32> to vector<32x256xf32>
    %254 = arith.mulf %251, %253 : vector<32x256xf32>
    %255 = arith.truncf %254 : vector<32x256xf32> to vector<32x256xbf16>
    %c0_185 = arith.constant 0 : index
    %c1152_186 = arith.constant 1152 : index
    %256 = vector.load %arg13[%c0_185, %c1152_186] : memref<32x2048xbf16, #tpu.memory_space<vmem>>, vector<32x256xbf16>
    tpu.vector_store %arg13[%c0_185, %c1152_186], %255 {strides = array<i32>} : memref<32x2048xbf16, #tpu.memory_space<vmem>>, vector<32x256xbf16>,
    %c0_187 = arith.constant 0 : index
    %c1280_188 = arith.constant 1280 : index
    %257 = vector.load %arg12[%c0_187, %c1280_188] : memref<32x1792xf32, #tpu.memory_space<vmem>>, vector<32x256xf32>
    %258 = vector.broadcast %194 : vector<32x1xf32> to vector<32x256xf32>
    %259 = arith.mulf %257, %258 : vector<32x256xf32>
    %260 = vector.broadcast %196 : vector<32x1xf32> to vector<32x256xf32>
    %261 = arith.addf %259, %260 : vector<32x256xf32>
    %cst_189 = arith.constant 0.000000e+00 : f32
    %262 = vector.broadcast %cst_189 : f32 to vector<32x256xf32>
    %263 = arith.maximumf %261, %262 : vector<32x256xf32>
    %c0_190 = arith.constant 0 : index
    %c1280_191 = arith.constant 1280 : index
    %264 = vector.load %arg8[%c0_190, %c1280_191] : memref<1x1792xf32, #tpu.memory_space<vmem>>, vector<1x256xf32>
    %265 = vector.broadcast %264 : vector<1x256xf32> to vector<32x256xf32>
    %266 = arith.mulf %263, %265 : vector<32x256xf32>
    %267 = arith.truncf %266 : vector<32x256xf32> to vector<32x256xbf16>
    %c0_192 = arith.constant 0 : index
    %c1408_193 = arith.constant 1408 : index
    %268 = vector.load %arg13[%c0_192, %c1408_193] : memref<32x2048xbf16, #tpu.memory_space<vmem>>, vector<32x256xbf16>
    tpu.vector_store %arg13[%c0_192, %c1408_193], %267 {strides = array<i32>} : memref<32x2048xbf16, #tpu.memory_space<vmem>>, vector<32x256xbf16>,
    %c0_194 = arith.constant 0 : index
    %c1536_195 = arith.constant 1536 : index
    %269 = vector.load %arg12[%c0_194, %c1536_195] : memref<32x1792xf32, #tpu.memory_space<vmem>>, vector<32x256xf32>
    %270 = vector.broadcast %194 : vector<32x1xf32> to vector<32x256xf32>
    %271 = arith.mulf %269, %270 : vector<32x256xf32>
    %272 = vector.broadcast %196 : vector<32x1xf32> to vector<32x256xf32>
    %273 = arith.addf %271, %272 : vector<32x256xf32>
    %cst_196 = arith.constant 0.000000e+00 : f32
    %274 = vector.broadcast %cst_196 : f32 to vector<32x256xf32>
    %275 = arith.maximumf %273, %274 : vector<32x256xf32>
    %c0_197 = arith.constant 0 : index
    %c1536_198 = arith.constant 1536 : index
    %276 = vector.load %arg8[%c0_197, %c1536_198] : memref<1x1792xf32, #tpu.memory_space<vmem>>, vector<1x256xf32>
    %277 = vector.broadcast %276 : vector<1x256xf32> to vector<32x256xf32>
    %278 = arith.mulf %275, %277 : vector<32x256xf32>
    %279 = arith.truncf %278 : vector<32x256xf32> to vector<32x256xbf16>
    %c0_199 = arith.constant 0 : index
    %c1664_200 = arith.constant 1664 : index
    %280 = vector.load %arg13[%c0_199, %c1664_200] : memref<32x2048xbf16, #tpu.memory_space<vmem>>, vector<32x256xbf16>
    tpu.vector_store %arg13[%c0_199, %c1664_200], %279 {strides = array<i32>} : memref<32x2048xbf16, #tpu.memory_space<vmem>>, vector<32x256xbf16>,
    %cst_201 = arith.constant 0.000000e+00 : f32
    %281 = vector.broadcast %cst_201 : f32 to vector<32x1xf32>
    %cst_202 = arith.constant 0.000000e+00 : f32
    %282 = vector.broadcast %cst_202 : f32 to vector<32x1xf32>
    %c0_203 = arith.constant 0 : index
    %c0_204 = arith.constant 0 : index
    %c0_205 = arith.constant 0 : index
    %283 = vector.load %arg3[%c0_203, %c0_204, %c0_205] : memref<3x32x32xbf16, #tpu.memory_space<vmem>>, vector<1x32x32xbf16>
    %284 = vector.shape_cast %283 : vector<1x32x32xbf16> to vector<32x32xbf16>
    %c0_206 = arith.constant 0 : index
    %c127_207 = arith.constant 127 : index
    %285 = vector.load %arg13[%c0_206, %c127_207] : memref<32x2048xbf16, #tpu.memory_space<vmem>>, vector<32x256xbf16>
    %cst_208 = arith.constant dense<0.000000e+00> : vector<32x256xf32>
    %286 = tpu.matmul %284, %285, %cst_208 {dimension_numbers = #tpu.dot_dimension_numbers<[1], [0], [0], [1], [0, 0, 1, 1], [], []>} : vector<32x32xbf16>, vector<32x256xbf16>, vector<32x256xf32> -> vector<32x256xf32>
    %c1_209 = arith.constant 1 : index
    %c0_210 = arith.constant 0 : index
    %c0_211 = arith.constant 0 : index
    %287 = vector.load %arg3[%c1_209, %c0_210, %c0_211] : memref<3x32x32xbf16, #tpu.memory_space<vmem>>, vector<1x32x32xbf16>
    %288 = vector.shape_cast %287 : vector<1x32x32xbf16> to vector<32x32xbf16>
    %c0_212 = arith.constant 0 : index
    %c128_213 = arith.constant 128 : index
    %289 = vector.load %arg13[%c0_212, %c128_213] : memref<32x2048xbf16, #tpu.memory_space<vmem>>, vector<32x256xbf16>
    %cst_214 = arith.constant dense<0.000000e+00> : vector<32x256xf32>
    %290 = tpu.matmul %288, %289, %cst_214 {dimension_numbers = #tpu.dot_dimension_numbers<[1], [0], [0], [1], [0, 0, 1, 1], [], []>} : vector<32x32xbf16>, vector<32x256xbf16>, vector<32x256xf32> -> vector<32x256xf32>
    %291 = arith.addf %286, %290 : vector<32x256xf32>
    %c2_215 = arith.constant 2 : index
    %c0_216 = arith.constant 0 : index
    %c0_217 = arith.constant 0 : index
    %292 = vector.load %arg3[%c2_215, %c0_216, %c0_217] : memref<3x32x32xbf16, #tpu.memory_space<vmem>>, vector<1x32x32xbf16>
    %293 = vector.shape_cast %292 : vector<1x32x32xbf16> to vector<32x32xbf16>
    %c0_218 = arith.constant 0 : index
    %c129_219 = arith.constant 129 : index
    %294 = vector.load %arg13[%c0_218, %c129_219] : memref<32x2048xbf16, #tpu.memory_space<vmem>>, vector<32x256xbf16>
    %cst_220 = arith.constant dense<0.000000e+00> : vector<32x256xf32>
    %295 = tpu.matmul %293, %294, %cst_220 {dimension_numbers = #tpu.dot_dimension_numbers<[1], [0], [0], [1], [0, 0, 1, 1], [], []>} : vector<32x32xbf16>, vector<32x256xbf16>, vector<32x256xf32> -> vector<32x256xf32>
    %296 = arith.addf %291, %295 : vector<32x256xf32>
    %c0_221 = arith.constant 0 : index
    %c0_222 = arith.constant 0 : index
    %297 = vector.load %arg12[%c0_221, %c0_222] : memref<32x1792xf32, #tpu.memory_space<vmem>>, vector<32x256xf32>
    tpu.vector_store %arg12[%c0_221, %c0_222], %296 {strides = array<i32>} : memref<32x1792xf32, #tpu.memory_space<vmem>>, vector<32x256xf32>,
    %c0_223 = arith.constant 0 : index
    %c0_224 = arith.constant 0 : index
    %298 = vector.load %arg9[%c0_223, %c0_224] : memref<1x1792xf32, #tpu.memory_space<vmem>>, vector<1x256xf32>
    %299 = vector.broadcast %298 : vector<1x256xf32> to vector<32x256xf32>
    %300 = arith.mulf %296, %299 : vector<32x256xf32>
    %cst_225 = arith.constant dense<0.000000e+00> : vector<32xf32>
    %301 = vector.multi_reduction <add>, %300, %cst_225 [1] : vector<32x256xf32> to vector<32xf32>
    %302 = vector.shape_cast %301 : vector<32xf32> to vector<32x1xf32>
    %303 = arith.addf %281, %302 : vector<32x1xf32>
    %304 = arith.mulf %300, %296 : vector<32x256xf32>
    %cst_226 = arith.constant dense<0.000000e+00> : vector<32xf32>
    %305 = vector.multi_reduction <add>, %304, %cst_226 [1] : vector<32x256xf32> to vector<32xf32>
    %306 = vector.shape_cast %305 : vector<32xf32> to vector<32x1xf32>
    %307 = arith.addf %282, %306 : vector<32x1xf32>
    %c0_227 = arith.constant 0 : index
    %c0_228 = arith.constant 0 : index
    %c0_229 = arith.constant 0 : index
    %308 = vector.load %arg3[%c0_227, %c0_228, %c0_229] : memref<3x32x32xbf16, #tpu.memory_space<vmem>>, vector<1x32x32xbf16>
    %309 = vector.shape_cast %308 : vector<1x32x32xbf16> to vector<32x32xbf16>
    %c0_230 = arith.constant 0 : index
    %c383_231 = arith.constant 383 : index
    %310 = vector.load %arg13[%c0_230, %c383_231] : memref<32x2048xbf16, #tpu.memory_space<vmem>>, vector<32x256xbf16>
    %cst_232 = arith.constant dense<0.000000e+00> : vector<32x256xf32>
    %311 = tpu.matmul %309, %310, %cst_232 {dimension_numbers = #tpu.dot_dimension_numbers<[1], [0], [0], [1], [0, 0, 1, 1], [], []>} : vector<32x32xbf16>, vector<32x256xbf16>, vector<32x256xf32> -> vector<32x256xf32>
    %c1_233 = arith.constant 1 : index
    %c0_234 = arith.constant 0 : index
    %c0_235 = arith.constant 0 : index
    %312 = vector.load %arg3[%c1_233, %c0_234, %c0_235] : memref<3x32x32xbf16, #tpu.memory_space<vmem>>, vector<1x32x32xbf16>
    %313 = vector.shape_cast %312 : vector<1x32x32xbf16> to vector<32x32xbf16>
    %c0_236 = arith.constant 0 : index
    %c384_237 = arith.constant 384 : index
    %314 = vector.load %arg13[%c0_236, %c384_237] : memref<32x2048xbf16, #tpu.memory_space<vmem>>, vector<32x256xbf16>
    %cst_238 = arith.constant dense<0.000000e+00> : vector<32x256xf32>
    %315 = tpu.matmul %313, %314, %cst_238 {dimension_numbers = #tpu.dot_dimension_numbers<[1], [0], [0], [1], [0, 0, 1, 1], [], []>} : vector<32x32xbf16>, vector<32x256xbf16>, vector<32x256xf32> -> vector<32x256xf32>
    %316 = arith.addf %311, %315 : vector<32x256xf32>
    %c2_239 = arith.constant 2 : index
    %c0_240 = arith.constant 0 : index
    %c0_241 = arith.constant 0 : index
    %317 = vector.load %arg3[%c2_239, %c0_240, %c0_241] : memref<3x32x32xbf16, #tpu.memory_space<vmem>>, vector<1x32x32xbf16>
    %318 = vector.shape_cast %317 : vector<1x32x32xbf16> to vector<32x32xbf16>
    %c0_242 = arith.constant 0 : index
    %c385_243 = arith.constant 385 : index
    %319 = vector.load %arg13[%c0_242, %c385_243] : memref<32x2048xbf16, #tpu.memory_space<vmem>>, vector<32x256xbf16>
    %cst_244 = arith.constant dense<0.000000e+00> : vector<32x256xf32>
    %320 = tpu.matmul %318, %319, %cst_244 {dimension_numbers = #tpu.dot_dimension_numbers<[1], [0], [0], [1], [0, 0, 1, 1], [], []>} : vector<32x32xbf16>, vector<32x256xbf16>, vector<32x256xf32> -> vector<32x256xf32>
    %321 = arith.addf %316, %320 : vector<32x256xf32>
    %c0_245 = arith.constant 0 : index
    %c256_246 = arith.constant 256 : index
    %322 = vector.load %arg12[%c0_245, %c256_246] : memref<32x1792xf32, #tpu.memory_space<vmem>>, vector<32x256xf32>
    tpu.vector_store %arg12[%c0_245, %c256_246], %321 {strides = array<i32>} : memref<32x1792xf32, #tpu.memory_space<vmem>>, vector<32x256xf32>,
    %c0_247 = arith.constant 0 : index
    %c256_248 = arith.constant 256 : index
    %323 = vector.load %arg9[%c0_247, %c256_248] : memref<1x1792xf32, #tpu.memory_space<vmem>>, vector<1x256xf32>
    %324 = vector.broadcast %323 : vector<1x256xf32> to vector<32x256xf32>
    %325 = arith.mulf %321, %324 : vector<32x256xf32>
    %cst_249 = arith.constant dense<0.000000e+00> : vector<32xf32>
    %326 = vector.multi_reduction <add>, %325, %cst_249 [1] : vector<32x256xf32> to vector<32xf32>
    %327 = vector.shape_cast %326 : vector<32xf32> to vector<32x1xf32>
    %328 = arith.addf %303, %327 : vector<32x1xf32>
    %329 = arith.mulf %325, %321 : vector<32x256xf32>
    %cst_250 = arith.constant dense<0.000000e+00> : vector<32xf32>
    %330 = vector.multi_reduction <add>, %329, %cst_250 [1] : vector<32x256xf32> to vector<32xf32>
    %331 = vector.shape_cast %330 : vector<32xf32> to vector<32x1xf32>
    %332 = arith.addf %307, %331 : vector<32x1xf32>
    %c0_251 = arith.constant 0 : index
    %c0_252 = arith.constant 0 : index
    %c0_253 = arith.constant 0 : index
    %333 = vector.load %arg3[%c0_251, %c0_252, %c0_253] : memref<3x32x32xbf16, #tpu.memory_space<vmem>>, vector<1x32x32xbf16>
    %334 = vector.shape_cast %333 : vector<1x32x32xbf16> to vector<32x32xbf16>
    %c0_254 = arith.constant 0 : index
    %c639_255 = arith.constant 639 : index
    %335 = vector.load %arg13[%c0_254, %c639_255] : memref<32x2048xbf16, #tpu.memory_space<vmem>>, vector<32x256xbf16>
    %cst_256 = arith.constant dense<0.000000e+00> : vector<32x256xf32>
    %336 = tpu.matmul %334, %335, %cst_256 {dimension_numbers = #tpu.dot_dimension_numbers<[1], [0], [0], [1], [0, 0, 1, 1], [], []>} : vector<32x32xbf16>, vector<32x256xbf16>, vector<32x256xf32> -> vector<32x256xf32>
    %c1_257 = arith.constant 1 : index
    %c0_258 = arith.constant 0 : index
    %c0_259 = arith.constant 0 : index
    %337 = vector.load %arg3[%c1_257, %c0_258, %c0_259] : memref<3x32x32xbf16, #tpu.memory_space<vmem>>, vector<1x32x32xbf16>
    %338 = vector.shape_cast %337 : vector<1x32x32xbf16> to vector<32x32xbf16>
    %c0_260 = arith.constant 0 : index
    %c640_261 = arith.constant 640 : index
    %339 = vector.load %arg13[%c0_260, %c640_261] : memref<32x2048xbf16, #tpu.memory_space<vmem>>, vector<32x256xbf16>
    %cst_262 = arith.constant dense<0.000000e+00> : vector<32x256xf32>
    %340 = tpu.matmul %338, %339, %cst_262 {dimension_numbers = #tpu.dot_dimension_numbers<[1], [0], [0], [1], [0, 0, 1, 1], [], []>} : vector<32x32xbf16>, vector<32x256xbf16>, vector<32x256xf32> -> vector<32x256xf32>
    %341 = arith.addf %336, %340 : vector<32x256xf32>
    %c2_263 = arith.constant 2 : index
    %c0_264 = arith.constant 0 : index
    %c0_265 = arith.constant 0 : index
    %342 = vector.load %arg3[%c2_263, %c0_264, %c0_265] : memref<3x32x32xbf16, #tpu.memory_space<vmem>>, vector<1x32x32xbf16>
    %343 = vector.shape_cast %342 : vector<1x32x32xbf16> to vector<32x32xbf16>
    %c0_266 = arith.constant 0 : index
    %c641_267 = arith.constant 641 : index
    %344 = vector.load %arg13[%c0_266, %c641_267] : memref<32x2048xbf16, #tpu.memory_space<vmem>>, vector<32x256xbf16>
    %cst_268 = arith.constant dense<0.000000e+00> : vector<32x256xf32>
    %345 = tpu.matmul %343, %344, %cst_268 {dimension_numbers = #tpu.dot_dimension_numbers<[1], [0], [0], [1], [0, 0, 1, 1], [], []>} : vector<32x32xbf16>, vector<32x256xbf16>, vector<32x256xf32> -> vector<32x256xf32>
    %346 = arith.addf %341, %345 : vector<32x256xf32>
    %c0_269 = arith.constant 0 : index
    %c512_270 = arith.constant 512 : index
    %347 = vector.load %arg12[%c0_269, %c512_270] : memref<32x1792xf32, #tpu.memory_space<vmem>>, vector<32x256xf32>
    tpu.vector_store %arg12[%c0_269, %c512_270], %346 {strides = array<i32>} : memref<32x1792xf32, #tpu.memory_space<vmem>>, vector<32x256xf32>,
    %c0_271 = arith.constant 0 : index
    %c512_272 = arith.constant 512 : index
    %348 = vector.load %arg9[%c0_271, %c512_272] : memref<1x1792xf32, #tpu.memory_space<vmem>>, vector<1x256xf32>
    %349 = vector.broadcast %348 : vector<1x256xf32> to vector<32x256xf32>
    %350 = arith.mulf %346, %349 : vector<32x256xf32>
    %cst_273 = arith.constant dense<0.000000e+00> : vector<32xf32>
    %351 = vector.multi_reduction <add>, %350, %cst_273 [1] : vector<32x256xf32> to vector<32xf32>
    %352 = vector.shape_cast %351 : vector<32xf32> to vector<32x1xf32>
    %353 = arith.addf %328, %352 : vector<32x1xf32>
    %354 = arith.mulf %350, %346 : vector<32x256xf32>
    %cst_274 = arith.constant dense<0.000000e+00> : vector<32xf32>
    %355 = vector.multi_reduction <add>, %354, %cst_274 [1] : vector<32x256xf32> to vector<32xf32>
    %356 = vector.shape_cast %355 : vector<32xf32> to vector<32x1xf32>
    %357 = arith.addf %332, %356 : vector<32x1xf32>
    %c0_275 = arith.constant 0 : index
    %c0_276 = arith.constant 0 : index
    %c0_277 = arith.constant 0 : index
    %358 = vector.load %arg3[%c0_275, %c0_276, %c0_277] : memref<3x32x32xbf16, #tpu.memory_space<vmem>>, vector<1x32x32xbf16>
    %359 = vector.shape_cast %358 : vector<1x32x32xbf16> to vector<32x32xbf16>
    %c0_278 = arith.constant 0 : index
    %c895_279 = arith.constant 895 : index
    %360 = vector.load %arg13[%c0_278, %c895_279] : memref<32x2048xbf16, #tpu.memory_space<vmem>>, vector<32x256xbf16>
    %cst_280 = arith.constant dense<0.000000e+00> : vector<32x256xf32>
    %361 = tpu.matmul %359, %360, %cst_280 {dimension_numbers = #tpu.dot_dimension_numbers<[1], [0], [0], [1], [0, 0, 1, 1], [], []>} : vector<32x32xbf16>, vector<32x256xbf16>, vector<32x256xf32> -> vector<32x256xf32>
    %c1_281 = arith.constant 1 : index
    %c0_282 = arith.constant 0 : index
    %c0_283 = arith.constant 0 : index
    %362 = vector.load %arg3[%c1_281, %c0_282, %c0_283] : memref<3x32x32xbf16, #tpu.memory_space<vmem>>, vector<1x32x32xbf16>
    %363 = vector.shape_cast %362 : vector<1x32x32xbf16> to vector<32x32xbf16>
    %c0_284 = arith.constant 0 : index
    %c896_285 = arith.constant 896 : index
    %364 = vector.load %arg13[%c0_284, %c896_285] : memref<32x2048xbf16, #tpu.memory_space<vmem>>, vector<32x256xbf16>
    %cst_286 = arith.constant dense<0.000000e+00> : vector<32x256xf32>
    %365 = tpu.matmul %363, %364, %cst_286 {dimension_numbers = #tpu.dot_dimension_numbers<[1], [0], [0], [1], [0, 0, 1, 1], [], []>} : vector<32x32xbf16>, vector<32x256xbf16>, vector<32x256xf32> -> vector<32x256xf32>
    %366 = arith.addf %361, %365 : vector<32x256xf32>
    %c2_287 = arith.constant 2 : index
    %c0_288 = arith.constant 0 : index
    %c0_289 = arith.constant 0 : index
    %367 = vector.load %arg3[%c2_287, %c0_288, %c0_289] : memref<3x32x32xbf16, #tpu.memory_space<vmem>>, vector<1x32x32xbf16>
    %368 = vector.shape_cast %367 : vector<1x32x32xbf16> to vector<32x32xbf16>
    %c0_290 = arith.constant 0 : index
    %c897_291 = arith.constant 897 : index
    %369 = vector.load %arg13[%c0_290, %c897_291] : memref<32x2048xbf16, #tpu.memory_space<vmem>>, vector<32x256xbf16>
    %cst_292 = arith.constant dense<0.000000e+00> : vector<32x256xf32>
    %370 = tpu.matmul %368, %369, %cst_292 {dimension_numbers = #tpu.dot_dimension_numbers<[1], [0], [0], [1], [0, 0, 1, 1], [], []>} : vector<32x32xbf16>, vector<32x256xbf16>, vector<32x256xf32> -> vector<32x256xf32>
    %371 = arith.addf %366, %370 : vector<32x256xf32>
    %c0_293 = arith.constant 0 : index
    %c768_294 = arith.constant 768 : index
    %372 = vector.load %arg12[%c0_293, %c768_294] : memref<32x1792xf32, #tpu.memory_space<vmem>>, vector<32x256xf32>
    tpu.vector_store %arg12[%c0_293, %c768_294], %371 {strides = array<i32>} : memref<32x1792xf32, #tpu.memory_space<vmem>>, vector<32x256xf32>,
    %c0_295 = arith.constant 0 : index
    %c768_296 = arith.constant 768 : index
    %373 = vector.load %arg9[%c0_295, %c768_296] : memref<1x1792xf32, #tpu.memory_space<vmem>>, vector<1x256xf32>
    %374 = vector.broadcast %373 : vector<1x256xf32> to vector<32x256xf32>
    %375 = arith.mulf %371, %374 : vector<32x256xf32>
    %cst_297 = arith.constant dense<0.000000e+00> : vector<32xf32>
    %376 = vector.multi_reduction <add>, %375, %cst_297 [1] : vector<32x256xf32> to vector<32xf32>
    %377 = vector.shape_cast %376 : vector<32xf32> to vector<32x1xf32>
    %378 = arith.addf %353, %377 : vector<32x1xf32>
    %379 = arith.mulf %375, %371 : vector<32x256xf32>
    %cst_298 = arith.constant dense<0.000000e+00> : vector<32xf32>
    %380 = vector.multi_reduction <add>, %379, %cst_298 [1] : vector<32x256xf32> to vector<32xf32>
    %381 = vector.shape_cast %380 : vector<32xf32> to vector<32x1xf32>
    %382 = arith.addf %357, %381 : vector<32x1xf32>
    %c0_299 = arith.constant 0 : index
    %c0_300 = arith.constant 0 : index
    %c0_301 = arith.constant 0 : index
    %383 = vector.load %arg3[%c0_299, %c0_300, %c0_301] : memref<3x32x32xbf16, #tpu.memory_space<vmem>>, vector<1x32x32xbf16>
    %384 = vector.shape_cast %383 : vector<1x32x32xbf16> to vector<32x32xbf16>
    %c0_302 = arith.constant 0 : index
    %c1151_303 = arith.constant 1151 : index
    %385 = vector.load %arg13[%c0_302, %c1151_303] : memref<32x2048xbf16, #tpu.memory_space<vmem>>, vector<32x256xbf16>
    %cst_304 = arith.constant dense<0.000000e+00> : vector<32x256xf32>
    %386 = tpu.matmul %384, %385, %cst_304 {dimension_numbers = #tpu.dot_dimension_numbers<[1], [0], [0], [1], [0, 0, 1, 1], [], []>} : vector<32x32xbf16>, vector<32x256xbf16>, vector<32x256xf32> -> vector<32x256xf32>
    %c1_305 = arith.constant 1 : index
    %c0_306 = arith.constant 0 : index
    %c0_307 = arith.constant 0 : index
    %387 = vector.load %arg3[%c1_305, %c0_306, %c0_307] : memref<3x32x32xbf16, #tpu.memory_space<vmem>>, vector<1x32x32xbf16>
    %388 = vector.shape_cast %387 : vector<1x32x32xbf16> to vector<32x32xbf16>
    %c0_308 = arith.constant 0 : index
    %c1152_309 = arith.constant 1152 : index
    %389 = vector.load %arg13[%c0_308, %c1152_309] : memref<32x2048xbf16, #tpu.memory_space<vmem>>, vector<32x256xbf16>
    %cst_310 = arith.constant dense<0.000000e+00> : vector<32x256xf32>
    %390 = tpu.matmul %388, %389, %cst_310 {dimension_numbers = #tpu.dot_dimension_numbers<[1], [0], [0], [1], [0, 0, 1, 1], [], []>} : vector<32x32xbf16>, vector<32x256xbf16>, vector<32x256xf32> -> vector<32x256xf32>
    %391 = arith.addf %386, %390 : vector<32x256xf32>
    %c2_311 = arith.constant 2 : index
    %c0_312 = arith.constant 0 : index
    %c0_313 = arith.constant 0 : index
    %392 = vector.load %arg3[%c2_311, %c0_312, %c0_313] : memref<3x32x32xbf16, #tpu.memory_space<vmem>>, vector<1x32x32xbf16>
    %393 = vector.shape_cast %392 : vector<1x32x32xbf16> to vector<32x32xbf16>
    %c0_314 = arith.constant 0 : index
    %c1153_315 = arith.constant 1153 : index
    %394 = vector.load %arg13[%c0_314, %c1153_315] : memref<32x2048xbf16, #tpu.memory_space<vmem>>, vector<32x256xbf16>
    %cst_316 = arith.constant dense<0.000000e+00> : vector<32x256xf32>
    %395 = tpu.matmul %393, %394, %cst_316 {dimension_numbers = #tpu.dot_dimension_numbers<[1], [0], [0], [1], [0, 0, 1, 1], [], []>} : vector<32x32xbf16>, vector<32x256xbf16>, vector<32x256xf32> -> vector<32x256xf32>
    %396 = arith.addf %391, %395 : vector<32x256xf32>
    %c0_317 = arith.constant 0 : index
    %c1024_318 = arith.constant 1024 : index
    %397 = vector.load %arg12[%c0_317, %c1024_318] : memref<32x1792xf32, #tpu.memory_space<vmem>>, vector<32x256xf32>
    tpu.vector_store %arg12[%c0_317, %c1024_318], %396 {strides = array<i32>} : memref<32x1792xf32, #tpu.memory_space<vmem>>, vector<32x256xf32>,
    %c0_319 = arith.constant 0 : index
    %c1024_320 = arith.constant 1024 : index
    %398 = vector.load %arg9[%c0_319, %c1024_320] : memref<1x1792xf32, #tpu.memory_space<vmem>>, vector<1x256xf32>
    %399 = vector.broadcast %398 : vector<1x256xf32> to vector<32x256xf32>
    %400 = arith.mulf %396, %399 : vector<32x256xf32>
    %cst_321 = arith.constant dense<0.000000e+00> : vector<32xf32>
    %401 = vector.multi_reduction <add>, %400, %cst_321 [1] : vector<32x256xf32> to vector<32xf32>
    %402 = vector.shape_cast %401 : vector<32xf32> to vector<32x1xf32>
    %403 = arith.addf %378, %402 : vector<32x1xf32>
    %404 = arith.mulf %400, %396 : vector<32x256xf32>
    %cst_322 = arith.constant dense<0.000000e+00> : vector<32xf32>
    %405 = vector.multi_reduction <add>, %404, %cst_322 [1] : vector<32x256xf32> to vector<32xf32>
    %406 = vector.shape_cast %405 : vector<32xf32> to vector<32x1xf32>
    %407 = arith.addf %382, %406 : vector<32x1xf32>
    %c0_323 = arith.constant 0 : index
    %c0_324 = arith.constant 0 : index
    %c0_325 = arith.constant 0 : index
    %408 = vector.load %arg3[%c0_323, %c0_324, %c0_325] : memref<3x32x32xbf16, #tpu.memory_space<vmem>>, vector<1x32x32xbf16>
    %409 = vector.shape_cast %408 : vector<1x32x32xbf16> to vector<32x32xbf16>
    %c0_326 = arith.constant 0 : index
    %c1407_327 = arith.constant 1407 : index
    %410 = vector.load %arg13[%c0_326, %c1407_327] : memref<32x2048xbf16, #tpu.memory_space<vmem>>, vector<32x256xbf16>
    %cst_328 = arith.constant dense<0.000000e+00> : vector<32x256xf32>
    %411 = tpu.matmul %409, %410, %cst_328 {dimension_numbers = #tpu.dot_dimension_numbers<[1], [0], [0], [1], [0, 0, 1, 1], [], []>} : vector<32x32xbf16>, vector<32x256xbf16>, vector<32x256xf32> -> vector<32x256xf32>
    %c1_329 = arith.constant 1 : index
    %c0_330 = arith.constant 0 : index
    %c0_331 = arith.constant 0 : index
    %412 = vector.load %arg3[%c1_329, %c0_330, %c0_331] : memref<3x32x32xbf16, #tpu.memory_space<vmem>>, vector<1x32x32xbf16>
    %413 = vector.shape_cast %412 : vector<1x32x32xbf16> to vector<32x32xbf16>
    %c0_332 = arith.constant 0 : index
    %c1408_333 = arith.constant 1408 : index
    %414 = vector.load %arg13[%c0_332, %c1408_333] : memref<32x2048xbf16, #tpu.memory_space<vmem>>, vector<32x256xbf16>
    %cst_334 = arith.constant dense<0.000000e+00> : vector<32x256xf32>
    %415 = tpu.matmul %413, %414, %cst_334 {dimension_numbers = #tpu.dot_dimension_numbers<[1], [0], [0], [1], [0, 0, 1, 1], [], []>} : vector<32x32xbf16>, vector<32x256xbf16>, vector<32x256xf32> -> vector<32x256xf32>
    %416 = arith.addf %411, %415 : vector<32x256xf32>
    %c2_335 = arith.constant 2 : index
    %c0_336 = arith.constant 0 : index
    %c0_337 = arith.constant 0 : index
    %417 = vector.load %arg3[%c2_335, %c0_336, %c0_337] : memref<3x32x32xbf16, #tpu.memory_space<vmem>>, vector<1x32x32xbf16>
    %418 = vector.shape_cast %417 : vector<1x32x32xbf16> to vector<32x32xbf16>
    %c0_338 = arith.constant 0 : index
    %c1409_339 = arith.constant 1409 : index
    %419 = vector.load %arg13[%c0_338, %c1409_339] : memref<32x2048xbf16, #tpu.memory_space<vmem>>, vector<32x256xbf16>
    %cst_340 = arith.constant dense<0.000000e+00> : vector<32x256xf32>
    %420 = tpu.matmul %418, %419, %cst_340 {dimension_numbers = #tpu.dot_dimension_numbers<[1], [0], [0], [1], [0, 0, 1, 1], [], []>} : vector<32x32xbf16>, vector<32x256xbf16>, vector<32x256xf32> -> vector<32x256xf32>
    %421 = arith.addf %416, %420 : vector<32x256xf32>
    %c0_341 = arith.constant 0 : index
    %c1280_342 = arith.constant 1280 : index
    %422 = vector.load %arg12[%c0_341, %c1280_342] : memref<32x1792xf32, #tpu.memory_space<vmem>>, vector<32x256xf32>
    tpu.vector_store %arg12[%c0_341, %c1280_342], %421 {strides = array<i32>} : memref<32x1792xf32, #tpu.memory_space<vmem>>, vector<32x256xf32>,
    %c0_343 = arith.constant 0 : index
    %c1280_344 = arith.constant 1280 : index
    %423 = vector.load %arg9[%c0_343, %c1280_344] : memref<1x1792xf32, #tpu.memory_space<vmem>>, vector<1x256xf32>
    %424 = vector.broadcast %423 : vector<1x256xf32> to vector<32x256xf32>
    %425 = arith.mulf %421, %424 : vector<32x256xf32>
    %cst_345 = arith.constant dense<0.000000e+00> : vector<32xf32>
    %426 = vector.multi_reduction <add>, %425, %cst_345 [1] : vector<32x256xf32> to vector<32xf32>
    %427 = vector.shape_cast %426 : vector<32xf32> to vector<32x1xf32>
    %428 = arith.addf %403, %427 : vector<32x1xf32>
    %429 = arith.mulf %425, %421 : vector<32x256xf32>
    %cst_346 = arith.constant dense<0.000000e+00> : vector<32xf32>
    %430 = vector.multi_reduction <add>, %429, %cst_346 [1] : vector<32x256xf32> to vector<32xf32>
    %431 = vector.shape_cast %430 : vector<32xf32> to vector<32x1xf32>
    %432 = arith.addf %407, %431 : vector<32x1xf32>
    %c0_347 = arith.constant 0 : index
    %c0_348 = arith.constant 0 : index
    %c0_349 = arith.constant 0 : index
    %433 = vector.load %arg3[%c0_347, %c0_348, %c0_349] : memref<3x32x32xbf16, #tpu.memory_space<vmem>>, vector<1x32x32xbf16>
    %434 = vector.shape_cast %433 : vector<1x32x32xbf16> to vector<32x32xbf16>
    %c0_350 = arith.constant 0 : index
    %c1663_351 = arith.constant 1663 : index
    %435 = vector.load %arg13[%c0_350, %c1663_351] : memref<32x2048xbf16, #tpu.memory_space<vmem>>, vector<32x256xbf16>
    %cst_352 = arith.constant dense<0.000000e+00> : vector<32x256xf32>
    %436 = tpu.matmul %434, %435, %cst_352 {dimension_numbers = #tpu.dot_dimension_numbers<[1], [0], [0], [1], [0, 0, 1, 1], [], []>} : vector<32x32xbf16>, vector<32x256xbf16>, vector<32x256xf32> -> vector<32x256xf32>
    %c1_353 = arith.constant 1 : index
    %c0_354 = arith.constant 0 : index
    %c0_355 = arith.constant 0 : index
    %437 = vector.load %arg3[%c1_353, %c0_354, %c0_355] : memref<3x32x32xbf16, #tpu.memory_space<vmem>>, vector<1x32x32xbf16>
    %438 = vector.shape_cast %437 : vector<1x32x32xbf16> to vector<32x32xbf16>
    %c0_356 = arith.constant 0 : index
    %c1664_357 = arith.constant 1664 : index
    %439 = vector.load %arg13[%c0_356, %c1664_357] : memref<32x2048xbf16, #tpu.memory_space<vmem>>, vector<32x256xbf16>
    %cst_358 = arith.constant dense<0.000000e+00> : vector<32x256xf32>
    %440 = tpu.matmul %438, %439, %cst_358 {dimension_numbers = #tpu.dot_dimension_numbers<[1], [0], [0], [1], [0, 0, 1, 1], [], []>} : vector<32x32xbf16>, vector<32x256xbf16>, vector<32x256xf32> -> vector<32x256xf32>
    %441 = arith.addf %436, %440 : vector<32x256xf32>
    %c2_359 = arith.constant 2 : index
    %c0_360 = arith.constant 0 : index
    %c0_361 = arith.constant 0 : index
    %442 = vector.load %arg3[%c2_359, %c0_360, %c0_361] : memref<3x32x32xbf16, #tpu.memory_space<vmem>>, vector<1x32x32xbf16>
    %443 = vector.shape_cast %442 : vector<1x32x32xbf16> to vector<32x32xbf16>
    %c0_362 = arith.constant 0 : index
    %c1665_363 = arith.constant 1665 : index
    %444 = vector.load %arg13[%c0_362, %c1665_363] : memref<32x2048xbf16, #tpu.memory_space<vmem>>, vector<32x256xbf16>
    %cst_364 = arith.constant dense<0.000000e+00> : vector<32x256xf32>
    %445 = tpu.matmul %443, %444, %cst_364 {dimension_numbers = #tpu.dot_dimension_numbers<[1], [0], [0], [1], [0, 0, 1, 1], [], []>} : vector<32x32xbf16>, vector<32x256xbf16>, vector<32x256xf32> -> vector<32x256xf32>
    %446 = arith.addf %441, %445 : vector<32x256xf32>
    %c0_365 = arith.constant 0 : index
    %c1536_366 = arith.constant 1536 : index
    %447 = vector.load %arg12[%c0_365, %c1536_366] : memref<32x1792xf32, #tpu.memory_space<vmem>>, vector<32x256xf32>
    tpu.vector_store %arg12[%c0_365, %c1536_366], %446 {strides = array<i32>} : memref<32x1792xf32, #tpu.memory_space<vmem>>, vector<32x256xf32>,
    %c0_367 = arith.constant 0 : index
    %c1536_368 = arith.constant 1536 : index
    %448 = vector.load %arg9[%c0_367, %c1536_368] : memref<1x1792xf32, #tpu.memory_space<vmem>>, vector<1x256xf32>
    %449 = vector.broadcast %448 : vector<1x256xf32> to vector<32x256xf32>
    %450 = arith.mulf %446, %449 : vector<32x256xf32>
    %cst_369 = arith.constant dense<0.000000e+00> : vector<32xf32>
    %451 = vector.multi_reduction <add>, %450, %cst_369 [1] : vector<32x256xf32> to vector<32xf32>
    %452 = vector.shape_cast %451 : vector<32xf32> to vector<32x1xf32>
    %453 = arith.addf %428, %452 : vector<32x1xf32>
    %454 = arith.mulf %450, %446 : vector<32x256xf32>
    %cst_370 = arith.constant dense<0.000000e+00> : vector<32xf32>
    %455 = vector.multi_reduction <add>, %454, %cst_370 [1] : vector<32x256xf32> to vector<32xf32>
    %456 = vector.shape_cast %455 : vector<32xf32> to vector<32x1xf32>
    %457 = arith.addf %432, %456 : vector<32x1xf32>
    %c0_371 = arith.constant 0 : index
    %c0_372 = arith.constant 0 : index
    %458 = vector.load %arg6[%c0_371, %c0_372] : memref<32x1xf32, #tpu.memory_space<vmem>>, vector<32x1xf32>
    %c0_373 = arith.constant 0 : index
    %c0_374 = arith.constant 0 : index
    %459 = vector.load %arg7[%c0_373, %c0_374] : memref<32x1xf32, #tpu.memory_space<vmem>>, vector<32x1xf32>
    %cst_375 = arith.constant 1.250000e-03 : f32
    %460 = vector.broadcast %cst_375 : f32 to vector<32x1xf32>
    %461 = arith.mulf %453, %460 : vector<32x1xf32>
    %cst_376 = arith.constant 1.250000e-03 : f32
    %462 = vector.broadcast %cst_376 : f32 to vector<32x1xf32>
    %463 = arith.mulf %457, %462 : vector<32x1xf32>
    %464 = arith.mulf %461, %461 : vector<32x1xf32>
    %465 = arith.subf %463, %464 : vector<32x1xf32>
    %cst_377 = arith.constant 0.000000e+00 : f32
    %466 = vector.broadcast %cst_377 : f32 to vector<32x1xf32>
    %467 = arith.maximumf %465, %466 : vector<32x1xf32>
    %cst_378 = arith.constant 9.99999974E-6 : f32
    %468 = vector.broadcast %cst_378 : f32 to vector<32x1xf32>
    %469 = arith.addf %467, %468 : vector<32x1xf32>
    %470 = math.rsqrt %469 : vector<32x1xf32>
    %471 = arith.mulf %458, %470 : vector<32x1xf32>
    %472 = arith.mulf %461, %471 : vector<32x1xf32>
    %473 = arith.subf %459, %472 : vector<32x1xf32>
    %c0_379 = arith.constant 0 : index
    %c0_380 = arith.constant 0 : index
    %474 = vector.load %arg12[%c0_379, %c0_380] : memref<32x1792xf32, #tpu.memory_space<vmem>>, vector<32x256xf32>
    %475 = vector.broadcast %471 : vector<32x1xf32> to vector<32x256xf32>
    %476 = arith.mulf %474, %475 : vector<32x256xf32>
    %477 = vector.broadcast %473 : vector<32x1xf32> to vector<32x256xf32>
    %478 = arith.addf %476, %477 : vector<32x256xf32>
    %cst_381 = arith.constant 0.000000e+00 : f32
    %479 = vector.broadcast %cst_381 : f32 to vector<32x256xf32>
    %480 = arith.maximumf %478, %479 : vector<32x256xf32>
    %481 = arith.truncf %480 : vector<32x256xf32> to vector<32x256xbf16>
    %c0_382 = arith.constant 0 : index
    %c128_383 = arith.constant 128 : index
    %482 = vector.load %arg13[%c0_382, %c128_383] : memref<32x2048xbf16, #tpu.memory_space<vmem>>, vector<32x256xbf16>
    tpu.vector_store %arg13[%c0_382, %c128_383], %481 {strides = array<i32>} : memref<32x2048xbf16, #tpu.memory_space<vmem>>, vector<32x256xbf16>,
    %c0_384 = arith.constant 0 : index
    %c256_385 = arith.constant 256 : index
    %483 = vector.load %arg12[%c0_384, %c256_385] : memref<32x1792xf32, #tpu.memory_space<vmem>>, vector<32x256xf32>
    %484 = vector.broadcast %471 : vector<32x1xf32> to vector<32x256xf32>
    %485 = arith.mulf %483, %484 : vector<32x256xf32>
    %486 = vector.broadcast %473 : vector<32x1xf32> to vector<32x256xf32>
    %487 = arith.addf %485, %486 : vector<32x256xf32>
    %cst_386 = arith.constant 0.000000e+00 : f32
    %488 = vector.broadcast %cst_386 : f32 to vector<32x256xf32>
    %489 = arith.maximumf %487, %488 : vector<32x256xf32>
    %490 = arith.truncf %489 : vector<32x256xf32> to vector<32x256xbf16>
    %c0_387 = arith.constant 0 : index
    %c384_388 = arith.constant 384 : index
    %491 = vector.load %arg13[%c0_387, %c384_388] : memref<32x2048xbf16, #tpu.memory_space<vmem>>, vector<32x256xbf16>
    tpu.vector_store %arg13[%c0_387, %c384_388], %490 {strides = array<i32>} : memref<32x2048xbf16, #tpu.memory_space<vmem>>, vector<32x256xbf16>,
    %c0_389 = arith.constant 0 : index
    %c512_390 = arith.constant 512 : index
    %492 = vector.load %arg12[%c0_389, %c512_390] : memref<32x1792xf32, #tpu.memory_space<vmem>>, vector<32x256xf32>
    %493 = vector.broadcast %471 : vector<32x1xf32> to vector<32x256xf32>
    %494 = arith.mulf %492, %493 : vector<32x256xf32>
    %495 = vector.broadcast %473 : vector<32x1xf32> to vector<32x256xf32>
    %496 = arith.addf %494, %495 : vector<32x256xf32>
    %cst_391 = arith.constant 0.000000e+00 : f32
    %497 = vector.broadcast %cst_391 : f32 to vector<32x256xf32>
    %498 = arith.maximumf %496, %497 : vector<32x256xf32>
    %499 = arith.truncf %498 : vector<32x256xf32> to vector<32x256xbf16>
    %c0_392 = arith.constant 0 : index
    %c640_393 = arith.constant 640 : index
    %500 = vector.load %arg13[%c0_392, %c640_393] : memref<32x2048xbf16, #tpu.memory_space<vmem>>, vector<32x256xbf16>
    tpu.vector_store %arg13[%c0_392, %c640_393], %499 {strides = array<i32>} : memref<32x2048xbf16, #tpu.memory_space<vmem>>, vector<32x256xbf16>,
    %c0_394 = arith.constant 0 : index
    %c768_395 = arith.constant 768 : index
    %501 = vector.load %arg12[%c0_394, %c768_395] : memref<32x1792xf32, #tpu.memory_space<vmem>>, vector<32x256xf32>
    %502 = vector.broadcast %471 : vector<32x1xf32> to vector<32x256xf32>
    %503 = arith.mulf %501, %502 : vector<32x256xf32>
    %504 = vector.broadcast %473 : vector<32x1xf32> to vector<32x256xf32>
    %505 = arith.addf %503, %504 : vector<32x256xf32>
    %cst_396 = arith.constant 0.000000e+00 : f32
    %506 = vector.broadcast %cst_396 : f32 to vector<32x256xf32>
    %507 = arith.maximumf %505, %506 : vector<32x256xf32>
    %508 = arith.truncf %507 : vector<32x256xf32> to vector<32x256xbf16>
    %c0_397 = arith.constant 0 : index
    %c896_398 = arith.constant 896 : index
    %509 = vector.load %arg13[%c0_397, %c896_398] : memref<32x2048xbf16, #tpu.memory_space<vmem>>, vector<32x256xbf16>
    tpu.vector_store %arg13[%c0_397, %c896_398], %508 {strides = array<i32>} : memref<32x2048xbf16, #tpu.memory_space<vmem>>, vector<32x256xbf16>,
    %c0_399 = arith.constant 0 : index
    %c1024_400 = arith.constant 1024 : index
    %510 = vector.load %arg12[%c0_399, %c1024_400] : memref<32x1792xf32, #tpu.memory_space<vmem>>, vector<32x256xf32>
    %511 = vector.broadcast %471 : vector<32x1xf32> to vector<32x256xf32>
    %512 = arith.mulf %510, %511 : vector<32x256xf32>
    %513 = vector.broadcast %473 : vector<32x1xf32> to vector<32x256xf32>
    %514 = arith.addf %512, %513 : vector<32x256xf32>
    %cst_401 = arith.constant 0.000000e+00 : f32
    %515 = vector.broadcast %cst_401 : f32 to vector<32x256xf32>
    %516 = arith.maximumf %514, %515 : vector<32x256xf32>
    %517 = arith.truncf %516 : vector<32x256xf32> to vector<32x256xbf16>
    %c0_402 = arith.constant 0 : index
    %c1152_403 = arith.constant 1152 : index
    %518 = vector.load %arg13[%c0_402, %c1152_403] : memref<32x2048xbf16, #tpu.memory_space<vmem>>, vector<32x256xbf16>
    tpu.vector_store %arg13[%c0_402, %c1152_403], %517 {strides = array<i32>} : memref<32x2048xbf16, #tpu.memory_space<vmem>>, vector<32x256xbf16>,
    %c0_404 = arith.constant 0 : index
    %c1280_405 = arith.constant 1280 : index
    %519 = vector.load %arg12[%c0_404, %c1280_405] : memref<32x1792xf32, #tpu.memory_space<vmem>>, vector<32x256xf32>
    %520 = vector.broadcast %471 : vector<32x1xf32> to vector<32x256xf32>
    %521 = arith.mulf %519, %520 : vector<32x256xf32>
    %522 = vector.broadcast %473 : vector<32x1xf32> to vector<32x256xf32>
    %523 = arith.addf %521, %522 : vector<32x256xf32>
    %cst_406 = arith.constant 0.000000e+00 : f32
    %524 = vector.broadcast %cst_406 : f32 to vector<32x256xf32>
    %525 = arith.maximumf %523, %524 : vector<32x256xf32>
    %526 = arith.truncf %525 : vector<32x256xf32> to vector<32x256xbf16>
    %c0_407 = arith.constant 0 : index
    %c1408_408 = arith.constant 1408 : index
    %527 = vector.load %arg13[%c0_407, %c1408_408] : memref<32x2048xbf16, #tpu.memory_space<vmem>>, vector<32x256xbf16>
    tpu.vector_store %arg13[%c0_407, %c1408_408], %526 {strides = array<i32>} : memref<32x2048xbf16, #tpu.memory_space<vmem>>, vector<32x256xbf16>,
    %c0_409 = arith.constant 0 : index
    %c1536_410 = arith.constant 1536 : index
    %528 = vector.load %arg12[%c0_409, %c1536_410] : memref<32x1792xf32, #tpu.memory_space<vmem>>, vector<32x256xf32>
    %529 = vector.broadcast %471 : vector<32x1xf32> to vector<32x256xf32>
    %530 = arith.mulf %528, %529 : vector<32x256xf32>
    %531 = vector.broadcast %473 : vector<32x1xf32> to vector<32x256xf32>
    %532 = arith.addf %530, %531 : vector<32x256xf32>
    %cst_411 = arith.constant 0.000000e+00 : f32
    %533 = vector.broadcast %cst_411 : f32 to vector<32x256xf32>
    %534 = arith.maximumf %532, %533 : vector<32x256xf32>
    %535 = arith.truncf %534 : vector<32x256xf32> to vector<32x256xbf16>
    %c0_412 = arith.constant 0 : index
    %c1664_413 = arith.constant 1664 : index
    %536 = vector.load %arg13[%c0_412, %c1664_413] : memref<32x2048xbf16, #tpu.memory_space<vmem>>, vector<32x256xbf16>
    tpu.vector_store %arg13[%c0_412, %c1664_413], %535 {strides = array<i32>} : memref<32x2048xbf16, #tpu.memory_space<vmem>>, vector<32x256xbf16>,
    %c0_414 = arith.constant 0 : index
    %c128_415 = arith.constant 128 : index
    %537 = vector.load %arg13[%c0_414, %c128_415] : memref<32x2048xbf16, #tpu.memory_space<vmem>>, vector<32x896xbf16>
    %c0_416 = arith.constant 0 : index
    %c0_417 = arith.constant 0 : index
    %538 = vector.load %arg10[%c0_416, %c0_417] : memref<896x256xbf16, #tpu.memory_space<vmem>>, vector<896x256xbf16>
    %cst_418 = arith.constant dense<0.000000e+00> : vector<32x256xf32>
    %539 = tpu.matmul %537, %538, %cst_418 {dimension_numbers = #tpu.dot_dimension_numbers<[1], [0], [0], [1], [0, 0, 1, 1], [], []>} : vector<32x896xbf16>, vector<896x256xbf16>, vector<32x256xf32> -> vector<32x256xf32>
    %c0_419 = arith.constant 0 : index
    %c0_420 = arith.constant 0 : index
    %c0_421 = arith.constant 0 : index
    %540 = vector.load %arg11[%c0_419, %c0_420, %c0_421] : memref<2x32x256xf32, #tpu.memory_space<vmem>>, vector<1x32x256xf32>
    %541 = vector.shape_cast %540 : vector<1x32x256xf32> to vector<32x256xf32>
    %542 = vector.shape_cast %539 : vector<32x256xf32> to vector<1x32x256xf32>
    tpu.vector_store %arg11[%c0_419, %c0_420, %c0_421], %542 {strides = array<i32>} : memref<2x32x256xf32, #tpu.memory_space<vmem>>, vector<1x32x256xf32>,
    %c0_422 = arith.constant 0 : index
    %c1024_423 = arith.constant 1024 : index
    %543 = vector.load %arg13[%c0_422, %c1024_423] : memref<32x2048xbf16, #tpu.memory_space<vmem>>, vector<32x896xbf16>
    %c0_424 = arith.constant 0 : index
    %c0_425 = arith.constant 0 : index
    %544 = vector.load %arg10[%c0_424, %c0_425] : memref<896x256xbf16, #tpu.memory_space<vmem>>, vector<896x256xbf16>
    %cst_426 = arith.constant dense<0.000000e+00> : vector<32x256xf32>
    %545 = tpu.matmul %543, %544, %cst_426 {dimension_numbers = #tpu.dot_dimension_numbers<[1], [0], [0], [1], [0, 0, 1, 1], [], []>} : vector<32x896xbf16>, vector<896x256xbf16>, vector<32x256xf32> -> vector<32x256xf32>
    %c1_427 = arith.constant 1 : index
    %c0_428 = arith.constant 0 : index
    %c0_429 = arith.constant 0 : index
    %546 = vector.load %arg11[%c1_427, %c0_428, %c0_429] : memref<2x32x256xf32, #tpu.memory_space<vmem>>, vector<1x32x256xf32>
    %547 = vector.shape_cast %546 : vector<1x32x256xf32> to vector<32x256xf32>
    %548 = vector.shape_cast %545 : vector<32x256xf32> to vector<1x32x256xf32>
    tpu.vector_store %arg11[%c1_427, %c0_428, %c0_429], %548 {strides = array<i32>} : memref<2x32x256xf32, #tpu.memory_space<vmem>>, vector<1x32x256xf32>,
    return
  }
  func.func @transform_0(%arg0: i32) -> (i32, i32) {
    %c0_i32 = arith.constant 0 : i32
    %c0_i32_0 = arith.constant 0 : i32
    %c0_i32_1 = arith.constant 0 : i32
    return %c0_i32, %c0_i32_0 : i32, i32
  }
  func.func @transform_1(%arg0: i32) -> (i32, i32, i32) {
    %c0_i32 = arith.constant 0 : i32
    %c0_i32_0 = arith.constant 0 : i32
    %c0_i32_1 = arith.constant 0 : i32
    %c0_i32_2 = arith.constant 0 : i32
    return %c0_i32, %c0_i32_0, %c0_i32_1 : i32, i32, i32
  }
  func.func @transform_2(%arg0: i32) -> (i32, i32, i32) {
    %c0_i32 = arith.constant 0 : i32
    %c0_i32_0 = arith.constant 0 : i32
    %c0_i32_1 = arith.constant 0 : i32
    %c0_i32_2 = arith.constant 0 : i32
    return %c0_i32, %c0_i32_0, %c0_i32_1 : i32, i32, i32
  }
  func.func @transform_3(%arg0: i32) -> (i32, i32) {
    %c0_i32 = arith.constant 0 : i32
    %c0_i32_0 = arith.constant 0 : i32
    %c0_i32_1 = arith.constant 0 : i32
    return %c0_i32, %c0_i32_0 : i32, i32
  }
  func.func @transform_4(%arg0: i32) -> (i32, i32) {
    %c0_i32 = arith.constant 0 : i32
    %c0_i32_0 = arith.constant 0 : i32
    %c0_i32_1 = arith.constant 0 : i32
    return %c0_i32, %c0_i32_0 : i32, i32
  }
  func.func @transform_5(%arg0: i32) -> (i32, i32) {
    %c0_i32 = arith.constant 0 : i32
    %c0_i32_0 = arith.constant 0 : i32
    %c0_i32_1 = arith.constant 0 : i32
    return %c0_i32, %c0_i32_0 : i32, i32
  }
  func.func @transform_6(%arg0: i32) -> (i32, i32) {
    %c0_i32 = arith.constant 0 : i32
    %c0_i32_0 = arith.constant 0 : i32
    %c0_i32_1 = arith.constant 0 : i32
    return %c0_i32, %c0_i32_0 : i32, i32
  }
  func.func @transform_7(%arg0: i32) -> (i32, i32) {
    %c0_i32 = arith.constant 0 : i32
    %c0_i32_0 = arith.constant 0 : i32
    %c0_i32_1 = arith.constant 0 : i32
    return %c0_i32, %c0_i32_0 : i32, i32
  }
  func.func @transform_8(%arg0: i32) -> (i32, i32) {
    %c0_i32 = arith.constant 0 : i32
    %c0_i32_0 = arith.constant 0 : i32
    %c0_i32_1 = arith.constant 0 : i32
    return %c0_i32, %c0_i32_0 : i32, i32
  }
  func.func @transform_9(%arg0: i32) -> (i32, i32) {
    %c0_i32 = arith.constant 0 : i32
    %c0_i32_0 = arith.constant 0 : i32
    %c0_i32_1 = arith.constant 0 : i32
    return %c0_i32, %c0_i32_0 : i32, i32
  }
  func.func @transform_10(%arg0: i32) -> (i32, i32, i32) {
    %c0_i32 = arith.constant 0 : i32
    %c0_i32_0 = arith.constant 0 : i32
    %c0_i32_1 = arith.constant 0 : i32
    %c0_i32_2 = arith.constant 0 : i32
    return %c0_i32, %c0_i32_0, %c0_i32_1 : i32, i32, i32
  }
}

</mosaic_0001>

<llo_original>
// kernel: start_module_forward.1
$region0: #{start_module_forward.1}
  #allocation0 [shape = 'u32[]', space=smem, size = 0x4, offset = 0x4, fixed_abs, tag = 'smem constant byte address 0x4 - core index']
  #allocation1 [shape = 'u32[144,128]{1,0:T(1,128)}', space=vmem, size = 0x12000, scoped, tag = 'internal scratch']
  #allocation2 [shape = 'f32[32,1792]{1,0:T(8,128)}', space=vmem, size = 0x38000, scoped, tag = 'scratch operand']
  #allocation3 [shape = 'bf16[32,2048]{1,0:T(8,128)(2,1)}', space=vmem, size = 0x20000, scoped, tag = 'scratch operand']
  %s0 = inlined_call_operand.vmem [shape: bf16[8,2048], index: 0, kind: input, shape index: {}]
  %s1 = inlined_call_operand.vmem [shape: bf16[3,32,8], index: 1, kind: input, shape index: {}]
  %s2 = inlined_call_operand.vmem [shape: bf16[3,32,32], index: 2, kind: input, shape index: {}]
  %s3 = inlined_call_operand.vmem [shape: f32[32,1], index: 3, kind: input, shape index: {}]
  %s4 = inlined_call_operand.vmem [shape: f32[32,1], index: 4, kind: input, shape index: {}]
  %s5 = inlined_call_operand.vmem [shape: f32[32,1], index: 5, kind: input, shape index: {}]
  %s6 = inlined_call_operand.vmem [shape: f32[32,1], index: 6, kind: input, shape index: {}]
  %s7 = inlined_call_operand.vmem [shape: f32[1,1792], index: 7, kind: input, shape index: {}]
  %s8 = inlined_call_operand.vmem [shape: f32[1,1792], index: 8, kind: input, shape index: {}]
  %s9 = inlined_call_operand.hbm [shape: bf16[896,256], index: 9, kind: input, shape index: {}]
  %s10 = inlined_call_operand.hbm [shape: f32[2,32,256], index: 10, kind: output, shape index: {}]
  %s11 = sld [smem:[#allocation0]]
  $region54: #{start_module_forward.1} parent=0
    _
  %s13 = ssub.s32 1, %s11
  %s14 = scalar_select 0, %s13, %s11
  $region1: #{start_module_forward.1} parent=0
    #allocation4 [shape = 'u8[458752]{0}', space=vmem, size = 0x70000, scoped, tag = 'input window, operand 9, single buffered']
    #allocation5 [shape = 's32[1]{0}', space=sflag, size = 0x4, scoped, tag = 'scoped memory for start_module_forward.1']
    #allocation6 [shape = 's32[1]{0}', space=sflag, size = 0x4, scoped, tag = 'scoped memory for start_module_forward.1']
    #allocation7 [shape = 'u8[65536]{0}', space=vmem, size = 0x10000, scoped, tag = 'output window, operand 0, single buffered']
    %15 = vsyncpa [#allocation5], 0
    %16 = vsyncpa [#allocation6], 0
    // Predicated region
    $region2: #{start_module_forward.1} parent=1 // pred_check
      _
    $region3: #{start_module_forward.1} parent=1 // pred_check_branch
      %18 = sbr.rel (0) target = $region5
    $region4: #{start_module_forward.1} parent=1 // pred_region
      _
    $region5: #{start_module_forward.1} parent=1 // pred_fallthru
      _
    // Predicated region
    $region6: #{start_module_forward.1} parent=1 // pred_check
      _
    $region7: #{start_module_forward.1} parent=1 // pred_check_branch
      %20 = sbr.rel (0) target = $region9
    $region8: #{start_module_forward.1} parent=1 // pred_region
      _
    $region9: #{start_module_forward.1} parent=1 // pred_fallthru
      _
    // Predicated region
    $region10: #{start_module_forward.1} parent=1 // pred_check
      _
    $region11: #{start_module_forward.1} parent=1 // pred_check_branch
      %22 = sbr.rel (0) target = $region13
    $region12: #{start_module_forward.1} parent=1 // pred_region
      _
    $region13: #{start_module_forward.1} parent=1 // pred_fallthru
      _
    // Predicated region
    $region14: #{start_module_forward.1} parent=1 // pred_check
      _
    $region15: #{start_module_forward.1} parent=1 // pred_check_branch
      %24 = sbr.rel (0) target = $region17
    $region16: #{start_module_forward.1} parent=1 // pred_region
      _
    $region17: #{start_module_forward.1} parent=1 // pred_fallthru
      _
    // Predicated region
    $region18: #{start_module_forward.1} parent=1 // pred_check
      _
    $region19: #{start_module_forward.1} parent=1 // pred_check_branch
      %26 = sbr.rel (0) target = $region21
    $region20: #{start_module_forward.1} parent=1 // pred_region
      _
    $region21: #{start_module_forward.1} parent=1 // pred_fallthru
      _
    // Predicated region
    $region22: #{start_module_forward.1} parent=1 // pred_check
      _
    $region23: #{start_module_forward.1} parent=1 // pred_check_branch
      %28 = sbr.rel (0) target = $region25
    $region24: #{start_module_forward.1} parent=1 // pred_region
      _
    $region25: #{start_module_forward.1} parent=1 // pred_fallthru
      _
    // Predicated region
    $region26: #{start_module_forward.1} parent=1 // pred_check
      _
    $region27: #{start_module_forward.1} parent=1 // pred_check_branch
      %30 = sbr.rel (0) target = $region29
    $region28: #{start_module_forward.1} parent=1 // pred_region
      _
    $region29: #{start_module_forward.1} parent=1 // pred_fallthru
      _
    // Predicated region
    $region30: #{start_module_forward.1} parent=1 // pred_check
      _
    $region31: #{start_module_forward.1} parent=1 // pred_check_branch
      %32 = sbr.rel (0) target = $region33
    $region32: #{start_module_forward.1} parent=1 // pred_region
      _
    $region33: #{start_module_forward.1} parent=1 // pred_fallthru
      _
    // Predicated region
    $region34: #{start_module_forward.1} parent=1 // pred_check
      _
    $region35: #{start_module_forward.1} parent=1 // pred_check_branch
      %34 = sbr.rel (0) target = $region37
    $region36: #{start_module_forward.1} parent=1 // pred_region
      _
    $region37: #{start_module_forward.1} parent=1 // pred_fallthru
      _
    // Predicated region
    $region38: #{start_module_forward.1} parent=1 // pred_check
      _
    $region39: #{start_module_forward.1} parent=1 // pred_check_branch
      %36 = sbr.rel (0) target = $region41
    $region40: #{start_module_forward.1} parent=1 // pred_region
      %s38 = ssub.s32 14336, 14336
      %39 = vsyncadd [#allocation5], %s38
      %s40 = sshll.u32 [#allocation4], 4
      %s41 = int_to_ptr.vmem [resolvable:$true] %s40
      %46 = dma.hbm_to_vmem [thread:$0]  %s9, 14336, %s41, [#allocation5], 128, 128, 8
    $region41: #{start_module_forward.1} parent=1 // pred_fallthru
      _
    // Predicated region
    $region42: #{start_module_forward.1} parent=1 // pred_check
      _
    $region43: #{start_module_forward.1} parent=1 // pred_check_branch
      %48 = sbr.rel (0) target = $region45
    $region44: #{start_module_forward.1} parent=1 // pred_region
      %49 = dma.done [#allocation5], 14336
    $region45: #{start_module_forward.1} parent=1 // pred_fallthru
      _
    %51 = vst [vmem:[#allocation3] sm:$0xf] 0
    %52 = vst [vmem:[#allocation3 + $0x40] sm:$0xf] 0
    %53 = vst [vmem:[#allocation3 + $0x80] sm:$0xf] 0
    %54 = vst [vmem:[#allocation3 + $0xc0] sm:$0xf] 0
    %55 = vst [vmem:[#allocation3 + $0x3c] sm:$0xf] 0
    %56 = vst [vmem:[#allocation3 + $0x7c] sm:$0xf] 0
    %57 = vst [vmem:[#allocation3 + $0xbc] sm:$0xf] 0
    %58 = vst [vmem:[#allocation3 + $0xfc] sm:$0xf] 0
    %v59 = vld [vmem:[%s1] sm:$0xf]
    %v60 = vld [vmem:[%s1 + $0x4] sm:$0xf]
    %v61 = vld [vmem:[%s1 + $0x8] sm:$0xf]
    %v62 = vld [vmem:[%s1 + $0xc] sm:$0xf]
    %v63 = vld [vmem:[%s0] sm:$0xff]
    %v64 = vld [vmem:[%s0 + $0x8] sm:$0xf]
    %s65 = scalar_lea.vmem %s1, 16
    %v66 = vld [vmem:[%s65] sm:$0xf]
    %v67 = vld [vmem:[%s65 + $0x4] sm:$0xf]
    %v68 = vld [vmem:[%s65 + $0x8] sm:$0xf]
    %v69 = vld [vmem:[%s65 + $0xc] sm:$0xf]
    %v70 = vld [vmem:[%s0 + $0x4] sm:$0xff]
    %v75 = vunpack.c.l.b16 %v66
    %v76 = vunpack.c.l.b16 %v67
    %v77 = vunpack.c.l.b16 %v68
    %v78 = vunpack.c.l.b16 %v69
    %v79 = vpack.c.b16 %v76, %v75
    %v80 = vpack.c.b16 %v78, %v77
    %v82 = vunpack.c.l.b16 %v70
    %v83 = vunpack.c.h.b16 %v70
    %v84 = vpack.c.b16 %v82, %v82
    %v85 = vpack.c.b16 %v83, %v83
    %vm86 = vcmask 64512
    %v88 = vsel %vm86, %v79, 0
    %v91 = vsel %vm86, %v80, 0
    %vm93 = vcmask 1043456
    %v95 = vsel %vm93, %v84, 0
    %v98 = vsel %vm93, %v85, 0
    %100 = vmatprep.subr.bf16.mxu0 0
    %101 = vmatpush1.bf16.msra.mxu0 0
    %102 = vmatprep.subr.bf16.mxu0 0
    %103 = vmatpush1.bf16.msra.mxu0 0
    %104 = vmatprep.subr.bf16.mxu0 0
    %105 = vmatpush1.bf16.msra.mxu0 0
    %106 = vmatprep.subr.bf16.mxu0 0
    %107 = vmatpush1.bf16.msra.mxu0 0
    %108 = vmatprep.subr.bf16.mxu0 0
    %109 = vmatpush1.bf16.msra.mxu0 0
    %110 = vmatprep.subr.bf16.mxu0 0
    %111 = vmatpush1.bf16.msra.mxu0 0
    %112 = vmatprep.subr.bf16.mxu0 0
    %113 = vmatpush1.bf16.msra.mxu0 0
    %114 = vmatprep.subr.bf16.mxu0 %v98
    %115 = vmatpush1.bf16.msra.mxu0 %v95
    %116 = vmatprep.subr.bf16.mxu0 0
    %117 = vmatpush2.bf16.msra.mxu0 0
    %118 = vmatprep.subr.bf16.mxu0 0
    %119 = vmatpush2.bf16.msra.mxu0 0
    %120 = vmatprep.subr.bf16.mxu0 0
    %121 = vmatpush2.bf16.msra.mxu0 0
    %122 = vmatprep.subr.bf16.mxu0 0
    %123 = vmatpush2.bf16.msra.mxu0 0
    %124 = vmatprep.subr.bf16.mxu0 0
    %125 = vmatpush2.bf16.msra.mxu0 0
    %126 = vmatprep.subr.bf16.mxu0 0
    %127 = vmatpush2.bf16.msra.mxu0 0
    %128 = vmatprep.subr.bf16.mxu0 0
    %129 = vmatpush2.bf16.msra.mxu0 0
    %130 = vmatprep.subr.bf16.mxu0 0
    %131 = vmatpush2.bf16.msra.mxu0 0
    %132 = vmatprep.mubr.bf16.mxu0 0
    %133 = vmatmul.mubr.bf16.gmra.mxu0 %v88
    %v134 = vpop.f32.mrf.mxu0
    %v135 = vadd.f32 0.0, %v134
    %v136 = vpop.f32.mrf.mxu0
    %v137 = vadd.f32 0.0, %v136
    %v138 = vpop.f32.mrf.mxu0
    %v139 = vadd.f32 0.0, %v138
    %v140 = vpop.f32.mrf.mxu0
    %v141 = vadd.f32 0.0, %v140
    %142 = vmatprep.mubr.bf16.mxu0 0
    %143 = vmatmul.mubr.bf16.gmra.mxu0 %v91
    %v144 = vpop.f32.mrf.mxu0
    %v145 = vadd.f32 0.0, %v144
    %v146 = vpop.f32.mrf.mxu0
    %v147 = vadd.f32 0.0, %v146
    %v148 = vpop.f32.mrf.mxu0
    %v149 = vadd.f32 0.0, %v148
    %v150 = vpop.f32.mrf.mxu0
    %v151 = vadd.f32 0.0, %v150
    %152 = vdwg.mxu0
    %v157 = vunpack.c.l.b16 %v59
    %v158 = vunpack.c.l.b16 %v60
    %v159 = vunpack.c.l.b16 %v61
    %v160 = vunpack.c.l.b16 %v62
    %v161 = vpack.c.b16 %v158, %v157
    %v162 = vpack.c.b16 %v160, %v159
    %v165 = vunpack.c.l.b16 %v63
    %v166 = vunpack.c.h.b16 %v63
    %v167 = vunpack.c.l.b16 %v64
    %v168 = vpack.c.b16 %v165, %v165
    %v169 = vpack.c.b16 %v166, %v166
    %v170 = vpack.c.b16 %v167, %v167
    %171 = vrot.lane.b32.xlu0 %v168, 1
    %v172 = vpop.permute.xlu0 %171
    %173 = vrot.lane.b32.xlu0 %v169, 1
    %v174 = vpop.permute.xlu0 %173
    %175 = vrot.lane.b32.xlu0 %v170, 1
    %v176 = vpop.permute.xlu0 %175
    %vm177 = vcmask 7168
    %v178 = vsel %vm177, %v172, %v174
    %v179 = vsel %vm177, %v174, %v176
    %v181 = vsel %vm86, %v161, 0
    %v184 = vsel %vm86, %v162, 0
    %v187 = vsel %vm93, %v178, 0
    %v190 = vsel %vm93, %v179, 0
    %192 = vmatprep.subr.bf16.mxu0 0
    %193 = vmatpush1.bf16.msra.mxu0 0
    %194 = vmatprep.subr.bf16.mxu0 0
    %195 = vmatpush1.bf16.msra.mxu0 0
    %196 = vmatprep.subr.bf16.mxu0 0
    %197 = vmatpush1.bf16.msra.mxu0 0
    %198 = vmatprep.subr.bf16.mxu0 0
    %199 = vmatpush1.bf16.msra.mxu0 0
    %200 = vmatprep.subr.bf16.mxu0 0
    %201 = vmatpush1.bf16.msra.mxu0 0
    %202 = vmatprep.subr.bf16.mxu0 0
    %203 = vmatpush1.bf16.msra.mxu0 0
    %204 = vmatprep.subr.bf16.mxu0 0
    %205 = vmatpush1.bf16.msra.mxu0 0
    %206 = vmatprep.subr.bf16.mxu0 %v190
    %207 = vmatpush1.bf16.msra.mxu0 %v187
    %208 = vmatprep.subr.bf16.mxu0 0
    %209 = vmatpush2.bf16.msra.mxu0 0
    %210 = vmatprep.subr.bf16.mxu0 0
    %211 = vmatpush2.bf16.msra.mxu0 0
    %212 = vmatprep.subr.bf16.mxu0 0
    %213 = vmatpush2.bf16.msra.mxu0 0
    %214 = vmatprep.subr.bf16.mxu0 0
    %215 = vmatpush2.bf16.msra.mxu0 0
    %216 = vmatprep.subr.bf16.mxu0 0
    %217 = vmatpush2.bf16.msra.mxu0 0
    %218 = vmatprep.subr.bf16.mxu0 0
    %219 = vmatpush2.bf16.msra.mxu0 0
    %220 = vmatprep.subr.bf16.mxu0 0
    %221 = vmatpush2.bf16.msra.mxu0 0
    %222 = vmatprep.subr.bf16.mxu0 0
    %223 = vmatpush2.bf16.msra.mxu0 0
    %224 = vmatprep.mubr.bf16.mxu0 0
    %225 = vmatmul.mubr.bf16.gmra.mxu0 %v181
    %v226 = vpop.f32.mrf.mxu0
    %v227 = vadd.f32 %v135, %v226
    %v228 = vpop.f32.mrf.mxu0
    %v229 = vadd.f32 %v137, %v228
    %v230 = vpop.f32.mrf.mxu0
    %v231 = vadd.f32 %v139, %v230
    %v232 = vpop.f32.mrf.mxu0
    %v233 = vadd.f32 %v141, %v232
    %234 = vmatprep.mubr.bf16.mxu0 0
    %235 = vmatmul.mubr.bf16.gmra.mxu0 %v184
    %v236 = vpop.f32.mrf.mxu0
    %v237 = vadd.f32 %v145, %v236
    %v238 = vpop.f32.mrf.mxu0
    %v239 = vadd.f32 %v147, %v238
    %v240 = vpop.f32.mrf.mxu0
    %v241 = vadd.f32 %v149, %v240
    %v242 = vpop.f32.mrf.mxu0
    %v243 = vadd.f32 %v151, %v242
    %244 = vdwg.mxu0
    %s245 = scalar_lea.vmem %s1, 32
    %v246 = vld [vmem:[%s245] sm:$0xf]
    %v247 = vld [vmem:[%s245 + $0x4] sm:$0xf]
    %v248 = vld [vmem:[%s245 + $0x8] sm:$0xf]
    %v249 = vld [vmem:[%s245 + $0xc] sm:$0xf]
    %v250 = vld [vmem:[%s0 + $0x4] sm:$0xff]
    %v251 = vld [vmem:[%s0 + $0xc] sm:$0xf]
    %v256 = vunpack.c.l.b16 %v246
    %v257 = vunpack.c.l.b16 %v247
    %v258 = vunpack.c.l.b16 %v248
    %v259 = vunpack.c.l.b16 %v249
    %v260 = vpack.c.b16 %v257, %v256
    %v261 = vpack.c.b16 %v259, %v258
    %v264 = vunpack.c.l.b16 %v250
    %v265 = vunpack.c.h.b16 %v250
    %v266 = vunpack.c.l.b16 %v251
    %v267 = vpack.c.b16 %v264, %v264
    %v268 = vpack.c.b16 %v265, %v265
    %v269 = vpack.c.b16 %v266, %v266
    %270 = vrot.lane.b32.xlu0 %v267, 127
    %v271 = vpop.permute.xlu0 %270
    %272 = vrot.lane.b32.xlu0 %v268, 127
    %v273 = vpop.permute.xlu0 %272
    %274 = vrot.lane.b32.xlu0 %v269, 127
    %v275 = vpop.permute.xlu0 %274
    %vm276 = vcmask 1039360
    %v277 = vsel %vm276, %v271, %v273
    %v278 = vsel %vm276, %v273, %v275
    %v280 = vsel %vm86, %v260, 0
    %v283 = vsel %vm86, %v261, 0
    %v286 = vsel %vm93, %v277, 0
    %v289 = vsel %vm93, %v278, 0
    %291 = vmatprep.subr.bf16.mxu0 0
    %292 = vmatpush1.bf16.msra.mxu0 0
    %293 = vmatprep.subr.bf16.mxu0 0
    %294 = vmatpush1.bf16.msra.mxu0 0
    %295 = vmatprep.subr.bf16.mxu0 0
    %296 = vmatpush1.bf16.msra.mxu0 0
    %297 = vmatprep.subr.bf16.mxu0 0
    %298 = vmatpush1.bf16.msra.mxu0 0
    %299 = vmatprep.subr.bf16.mxu0 0
    %300 = vmatpush1.bf16.msra.mxu0 0
    %301 = vmatprep.subr.bf16.mxu0 0
    %302 = vmatpush1.bf16.msra.mxu0 0
    %303 = vmatprep.subr.bf16.mxu0 0
    %304 = vmatpush1.bf16.msra.mxu0 0
    %305 = vmatprep.subr.bf16.mxu0 %v289
    %306 = vmatpush1.bf16.msra.mxu0 %v286
    %307 = vmatprep.subr.bf16.mxu0 0
    %308 = vmatpush2.bf16.msra.mxu0 0
    %309 = vmatprep.subr.bf16.mxu0 0
    %310 = vmatpush2.bf16.msra.mxu0 0
    %311 = vmatprep.subr.bf16.mxu0 0
    %312 = vmatpush2.bf16.msra.mxu0 0
    %313 = vmatprep.subr.bf16.mxu0 0
    %314 = vmatpush2.bf16.msra.mxu0 0
    %315 = vmatprep.subr.bf16.mxu0 0
    %316 = vmatpush2.bf16.msra.mxu0 0
    %317 = vmatprep.subr.bf16.mxu0 0
    %318 = vmatpush2.bf16.msra.mxu0 0
    %319 = vmatprep.subr.bf16.mxu0 0
    %320 = vmatpush2.bf16.msra.mxu0 0
    %321 = vmatprep.subr.bf16.mxu0 0
    %322 = vmatpush2.bf16.msra.mxu0 0
    %323 = vmatprep.mubr.bf16.mxu0 0
    %324 = vmatmul.mubr.bf16.gmra.mxu0 %v280
    %v325 = vpop.f32.mrf.mxu0
    %v326 = vadd.f32 0.0, %v325
    %v327 = vpop.f32.mrf.mxu0
    %v328 = vadd.f32 0.0, %v327
    %v329 = vpop.f32.mrf.mxu0
    %v330 = vadd.f32 0.0, %v329
    %v331 = vpop.f32.mrf.mxu0
    %v332 = vadd.f32 0.0, %v331
    %333 = vmatprep.mubr.bf16.mxu0 0
    %334 = vmatmul.mubr.bf16.gmra.mxu0 %v283
    %v335 = vpop.f32.mrf.mxu0
    %v336 = vadd.f32 0.0, %v335
    %v337 = vpop.f32.mrf.mxu0
    %v338 = vadd.f32 0.0, %v337
    %v339 = vpop.f32.mrf.mxu0
    %v340 = vadd.f32 0.0, %v339
    %v341 = vpop.f32.mrf.mxu0
    %v342 = vadd.f32 0.0, %v341
    %343 = vdwg.mxu0
    %v344 = vadd.f32 %v227, %v326
    %v345 = vadd.f32 %v229, %v328
    %v346 = vadd.f32 %v231, %v330
    %v347 = vadd.f32 %v233, %v332
    %v348 = vadd.f32 %v237, %v336
    %v349 = vadd.f32 %v239, %v338
    %v350 = vadd.f32 %v241, %v340
    %v351 = vadd.f32 %v243, %v342
    %352 = vst [vmem:[#allocation2] sm:$0xff] %v344
    %353 = vst [vmem:[#allocation2 + $0x8] sm:$0xff] %v345
    %354 = vst [vmem:[#allocation2 + $0x70] sm:$0xff] %v346
    %355 = vst [vmem:[#allocation2 + $0x78] sm:$0xff] %v347
    %356 = vst [vmem:[#allocation2 + $0xe0] sm:$0xff] %v348
    %357 = vst [vmem:[#allocation2 + $0xe8] sm:$0xff] %v349
    %358 = vst [vmem:[#allocation2 + $0x150] sm:$0xff] %v350
    %359 = vst [vmem:[#allocation2 + $0x158] sm:$0xff] %v351
    %v360 = vld [vmem:[%s7] sm:$0x3]
    %v362 = vlaneseq
    %v363 = vshrl.u32 %v362, 7
    %v364 = vsub.s32 0, %v363
    %v365 = vrot.slane %v360, %v364
    %v366 = vlaneseq
    %v367 = vshrl.u32 %v366, 7
    %v368 = vsub.s32 1, %v367
    %v369 = vrot.slane %v360, %v368
    %v372 = vmul.f32 %v344, %v365
    %v373 = vmul.f32 %v345, %v369
    %v374 = vmul.f32 %v346, %v365
    %v375 = vmul.f32 %v347, %v369
    %v376 = vmul.f32 %v348, %v365
    %v377 = vmul.f32 %v349, %v369
    %v378 = vmul.f32 %v350, %v365
    %v379 = vmul.f32 %v351, %v369
    %v380 = vadd.f32 %v372, %v373
    %381 = vadd.xlane.f32.xlu0 %v380
    %v382 = vpop.xlane.xlu0 %381
    %v383 = vadd.f32 %v374, %v375
    %384 = vadd.xlane.f32.xlu0 %v383
    %v385 = vpop.xlane.xlu0 %384
    %v386 = vadd.f32 %v376, %v377
    %387 = vadd.xlane.f32.xlu0 %v386
    %v388 = vpop.xlane.xlu0 %387
    %v389 = vadd.f32 %v378, %v379
    %390 = vadd.xlane.f32.xlu0 %v389
    %v391 = vpop.xlane.xlu0 %390
    %v392 = vadd.f32 %v382, 0.0
    %v393 = vadd.f32 %v385, 0.0
    %v394 = vadd.f32 %v388, 0.0
    %v395 = vadd.f32 %v391, 0.0
    %v396 = vmul.f32 %v372, %v344
    %v397 = vmul.f32 %v373, %v345
    %v398 = vmul.f32 %v374, %v346
    %v399 = vmul.f32 %v375, %v347
    %v400 = vmul.f32 %v376, %v348
    %v401 = vmul.f32 %v377, %v349
    %v402 = vmul.f32 %v378, %v350
    %v403 = vmul.f32 %v379, %v351
    %v404 = vadd.f32 %v396, %v397
    %405 = vadd.xlane.f32.xlu0 %v404
    %v406 = vpop.xlane.xlu0 %405
    %v407 = vadd.f32 %v398, %v399
    %408 = vadd.xlane.f32.xlu0 %v407
    %v409 = vpop.xlane.xlu0 %408
    %v410 = vadd.f32 %v400, %v401
    %411 = vadd.xlane.f32.xlu0 %v410
    %v412 = vpop.xlane.xlu0 %411
    %v413 = vadd.f32 %v402, %v403
    %414 = vadd.xlane.f32.xlu0 %v413
    %v415 = vpop.xlane.xlu0 %414
    %v416 = vadd.f32 %v406, 0.0
    %v417 = vadd.f32 %v409, 0.0
    %v418 = vadd.f32 %v412, 0.0
    %v419 = vadd.f32 %v415, 0.0
    %v420 = vld [vmem:[%s1] sm:$0xf]
    %v421 = vld [vmem:[%s1 + $0x4] sm:$0xf]
    %v422 = vld [vmem:[%s1 + $0x8] sm:$0xf]
    %v423 = vld [vmem:[%s1 + $0xc] sm:$0xf]
    %v424 = vld [vmem:[%s0 + $0x8] sm:$0xff]
    %v425 = vld [vmem:[%s0 + $0x10] sm:$0xf]
    %v426 = vld [vmem:[%s65] sm:$0xf]
    %v427 = vld [vmem:[%s65 + $0x4] sm:$0xf]
    %v428 = vld [vmem:[%s65 + $0x8] sm:$0xf]
    %v429 = vld [vmem:[%s65 + $0xc] sm:$0xf]
    %v430 = vld [vmem:[%s0 + $0xc] sm:$0xff]
    %v435 = vunpack.c.l.b16 %v426
    %v436 = vunpack.c.l.b16 %v427
    %v437 = vunpack.c.l.b16 %v428
    %v438 = vunpack.c.l.b16 %v429
    %v439 = vpack.c.b16 %v436, %v435
    %v440 = vpack.c.b16 %v438, %v437
    %v442 = vunpack.c.l.b16 %v430
    %v443 = vunpack.c.h.b16 %v430
    %v444 = vpack.c.b16 %v442, %v442
    %v445 = vpack.c.b16 %v443, %v443
    %v447 = vsel %vm86, %v439, 0
    %v450 = vsel %vm86, %v440, 0
    %v453 = vsel %vm93, %v444, 0
    %v456 = vsel %vm93, %v445, 0
    %458 = vmatprep.subr.bf16.mxu0 0
    %459 = vmatpush1.bf16.msra.mxu0 0
    %460 = vmatprep.subr.bf16.mxu0 0
    %461 = vmatpush1.bf16.msra.mxu0 0
    %462 = vmatprep.subr.bf16.mxu0 0
    %463 = vmatpush1.bf16.msra.mxu0 0
    %464 = vmatprep.subr.bf16.mxu0 0
    %465 = vmatpush1.bf16.msra.mxu0 0
    %466 = vmatprep.subr.bf16.mxu0 0
    %467 = vmatpush1.bf16.msra.mxu0 0
    %468 = vmatprep.subr.bf16.mxu0 0
    %469 = vmatpush1.bf16.msra.mxu0 0
    %470 = vmatprep.subr.bf16.mxu0 0
    %471 = vmatpush1.bf16.msra.mxu0 0
    %472 = vmatprep.subr.bf16.mxu0 %v456
    %473 = vmatpush1.bf16.msra.mxu0 %v453
    %474 = vmatprep.subr.bf16.mxu0 0
    %475 = vmatpush2.bf16.msra.mxu0 0
    %476 = vmatprep.subr.bf16.mxu0 0
    %477 = vmatpush2.bf16.msra.mxu0 0
    %478 = vmatprep.subr.bf16.mxu0 0
    %479 = vmatpush2.bf16.msra.mxu0 0
    %480 = vmatprep.subr.bf16.mxu0 0
    %481 = vmatpush2.bf16.msra.mxu0 0
    %482 = vmatprep.subr.bf16.mxu0 0
    %483 = vmatpush2.bf16.msra.mxu0 0
    %484 = vmatprep.subr.bf16.mxu0 0
    %485 = vmatpush2.bf16.msra.mxu0 0
    %486 = vmatprep.subr.bf16.mxu0 0
    %487 = vmatpush2.bf16.msra.mxu0 0
    %488 = vmatprep.subr.bf16.mxu0 0
    %489 = vmatpush2.bf16.msra.mxu0 0
    %490 = vmatprep.mubr.bf16.mxu0 0
    %491 = vmatmul.mubr.bf16.gmra.mxu0 %v447
    %v492 = vpop.f32.mrf.mxu0
    %v493 = vadd.f32 0.0, %v492
    %v494 = vpop.f32.mrf.mxu0
    %v495 = vadd.f32 0.0, %v494
    %v496 = vpop.f32.mrf.mxu0
    %v497 = vadd.f32 0.0, %v496
    %v498 = vpop.f32.mrf.mxu0
    %v499 = vadd.f32 0.0, %v498
    %500 = vmatprep.mubr.bf16.mxu0 0
    %501 = vmatmul.mubr.bf16.gmra.mxu0 %v450
    %v502 = vpop.f32.mrf.mxu0
    %v503 = vadd.f32 0.0, %v502
    %v504 = vpop.f32.mrf.mxu0
    %v505 = vadd.f32 0.0, %v504
    %v506 = vpop.f32.mrf.mxu0
    %v507 = vadd.f32 0.0, %v506
    %v508 = vpop.f32.mrf.mxu0
    %v509 = vadd.f32 0.0, %v508
    %510 = vdwg.mxu0
    %v515 = vunpack.c.l.b16 %v420
    %v516 = vunpack.c.l.b16 %v421
    %v517 = vunpack.c.l.b16 %v422
    %v518 = vunpack.c.l.b16 %v423
    %v519 = vpack.c.b16 %v516, %v515
    %v520 = vpack.c.b16 %v518, %v517
    %v523 = vunpack.c.l.b16 %v424
    %v524 = vunpack.c.h.b16 %v424
    %v525 = vunpack.c.l.b16 %v425
    %v526 = vpack.c.b16 %v523, %v523
    %v527 = vpack.c.b16 %v524, %v524
    %v528 = vpack.c.b16 %v525, %v525
    %529 = vrot.lane.b32.xlu0 %v526, 1
    %v530 = vpop.permute.xlu0 %529
    %531 = vrot.lane.b32.xlu0 %v527, 1
    %v532 = vpop.permute.xlu0 %531
    %533 = vrot.lane.b32.xlu0 %v528, 1
    %v534 = vpop.permute.xlu0 %533
    %v535 = vsel %vm177, %v530, %v532
    %v536 = vsel %vm177, %v532, %v534
    %v538 = vsel %vm86, %v519, 0
    %v541 = vsel %vm86, %v520, 0
    %v544 = vsel %vm93, %v535, 0
    %v547 = vsel %vm93, %v536, 0
    %549 = vmatprep.subr.bf16.mxu0 0
    %550 = vmatpush1.bf16.msra.mxu0 0
    %551 = vmatprep.subr.bf16.mxu0 0
    %552 = vmatpush1.bf16.msra.mxu0 0
    %553 = vmatprep.subr.bf16.mxu0 0
    %554 = vmatpush1.bf16.msra.mxu0 0
    %555 = vmatprep.subr.bf16.mxu0 0
    %556 = vmatpush1.bf16.msra.mxu0 0
    %557 = vmatprep.subr.bf16.mxu0 0
    %558 = vmatpush1.bf16.msra.mxu0 0
    %559 = vmatprep.subr.bf16.mxu0 0
    %560 = vmatpush1.bf16.msra.mxu0 0
    %561 = vmatprep.subr.bf16.mxu0 0
    %562 = vmatpush1.bf16.msra.mxu0 0
    %563 = vmatprep.subr.bf16.mxu0 %v547
    %564 = vmatpush1.bf16.msra.mxu0 %v544
    %565 = vmatprep.subr.bf16.mxu0 0
    %566 = vmatpush2.bf16.msra.mxu0 0
    %567 = vmatprep.subr.bf16.mxu0 0
    %568 = vmatpush2.bf16.msra.mxu0 0
    %569 = vmatprep.subr.bf16.mxu0 0
    %570 = vmatpush2.bf16.msra.mxu0 0
    %571 = vmatprep.subr.bf16.mxu0 0
    %572 = vmatpush2.bf16.msra.mxu0 0
    %573 = vmatprep.subr.bf16.mxu0 0
    %574 = vmatpush2.bf16.msra.mxu0 0
    %575 = vmatprep.subr.bf16.mxu0 0
    %576 = vmatpush2.bf16.msra.mxu0 0
    %577 = vmatprep.subr.bf16.mxu0 0
    %578 = vmatpush2.bf16.msra.mxu0 0
    %579 = vmatprep.subr.bf16.mxu0 0
    %580 = vmatpush2.bf16.msra.mxu0 0
    %581 = vmatprep.mubr.bf16.mxu0 0
    %582 = vmatmul.mubr.bf16.gmra.mxu0 %v538
    %v583 = vpop.f32.mrf.mxu0
    %v584 = vadd.f32 %v493, %v583
    %v585 = vpop.f32.mrf.mxu0
    %v586 = vadd.f32 %v495, %v585
    %v587 = vpop.f32.mrf.mxu0
    %v588 = vadd.f32 %v497, %v587
    %v589 = vpop.f32.mrf.mxu0
    %v590 = vadd.f32 %v499, %v589
    %591 = vmatprep.mubr.bf16.mxu0 0
    %592 = vmatmul.mubr.bf16.gmra.mxu0 %v541
    %v593 = vpop.f32.mrf.mxu0
    %v594 = vadd.f32 %v503, %v593
    %v595 = vpop.f32.mrf.mxu0
    %v596 = vadd.f32 %v505, %v595
    %v597 = vpop.f32.mrf.mxu0
    %v598 = vadd.f32 %v507, %v597
    %v599 = vpop.f32.mrf.mxu0
    %v600 = vadd.f32 %v509, %v599
    %601 = vdwg.mxu0
    %v602 = vld [vmem:[%s245] sm:$0xf]
    %v603 = vld [vmem:[%s245 + $0x4] sm:$0xf]
    %v604 = vld [vmem:[%s245 + $0x8] sm:$0xf]
    %v605 = vld [vmem:[%s245 + $0xc] sm:$0xf]
    %v606 = vld [vmem:[%s0 + $0xc] sm:$0xff]
    %v607 = vld [vmem:[%s0 + $0x14] sm:$0xf]
    %v612 = vunpack.c.l.b16 %v602
    %v613 = vunpack.c.l.b16 %v603
    %v614 = vunpack.c.l.b16 %v604
    %v615 = vunpack.c.l.b16 %v605
    %v616 = vpack.c.b16 %v613, %v612
    %v617 = vpack.c.b16 %v615, %v614
    %v620 = vunpack.c.l.b16 %v606
    %v621 = vunpack.c.h.b16 %v606
    %v622 = vunpack.c.l.b16 %v607
    %v623 = vpack.c.b16 %v620, %v620
    %v624 = vpack.c.b16 %v621, %v621
    %v625 = vpack.c.b16 %v622, %v622
    %626 = vrot.lane.b32.xlu0 %v623, 127
    %v627 = vpop.permute.xlu0 %626
    %628 = vrot.lane.b32.xlu0 %v624, 127
    %v629 = vpop.permute.xlu0 %628
    %630 = vrot.lane.b32.xlu0 %v625, 127
    %v631 = vpop.permute.xlu0 %630
    %v632 = vsel %vm276, %v627, %v629
    %v633 = vsel %vm276, %v629, %v631
    %v635 = vsel %vm86, %v616, 0
    %v638 = vsel %vm86, %v617, 0
    %v641 = vsel %vm93, %v632, 0
    %v644 = vsel %vm93, %v633, 0
    %646 = vmatprep.subr.bf16.mxu0 0
    %647 = vmatpush1.bf16.msra.mxu0 0
    %648 = vmatprep.subr.bf16.mxu0 0
    %649 = vmatpush1.bf16.msra.mxu0 0
    %650 = vmatprep.subr.bf16.mxu0 0
    %651 = vmatpush1.bf16.msra.mxu0 0
    %652 = vmatprep.subr.bf16.mxu0 0
    %653 = vmatpush1.bf16.msra.mxu0 0
    %654 = vmatprep.subr.bf16.mxu0 0
    %655 = vmatpush1.bf16.msra.mxu0 0
    %656 = vmatprep.subr.bf16.mxu0 0
    %657 = vmatpush1.bf16.msra.mxu0 0
    %658 = vmatprep.subr.bf16.mxu0 0
    %659 = vmatpush1.bf16.msra.mxu0 0
    %660 = vmatprep.subr.bf16.mxu0 %v644
    %661 = vmatpush1.bf16.msra.mxu0 %v641
    %662 = vmatprep.subr.bf16.mxu0 0
    %663 = vmatpush2.bf16.msra.mxu0 0
    %664 = vmatprep.subr.bf16.mxu0 0
    %665 = vmatpush2.bf16.msra.mxu0 0
    %666 = vmatprep.subr.bf16.mxu0 0
    %667 = vmatpush2.bf16.msra.mxu0 0
    %668 = vmatprep.subr.bf16.mxu0 0
    %669 = vmatpush2.bf16.msra.mxu0 0
    %670 = vmatprep.subr.bf16.mxu0 0
    %671 = vmatpush2.bf16.msra.mxu0 0
    %672 = vmatprep.subr.bf16.mxu0 0
    %673 = vmatpush2.bf16.msra.mxu0 0
    %674 = vmatprep.subr.bf16.mxu0 0
    %675 = vmatpush2.bf16.msra.mxu0 0
    %676 = vmatprep.subr.bf16.mxu0 0
    %677 = vmatpush2.bf16.msra.mxu0 0
    %678 = vmatprep.mubr.bf16.mxu0 0
    %679 = vmatmul.mubr.bf16.gmra.mxu0 %v635
    %v680 = vpop.f32.mrf.mxu0
    %v681 = vadd.f32 0.0, %v680
    %v682 = vpop.f32.mrf.mxu0
    %v683 = vadd.f32 0.0, %v682
    %v684 = vpop.f32.mrf.mxu0
    %v685 = vadd.f32 0.0, %v684
    %v686 = vpop.f32.mrf.mxu0
    %v687 = vadd.f32 0.0, %v686
    %688 = vmatprep.mubr.bf16.mxu0 0
    %689 = vmatmul.mubr.bf16.gmra.mxu0 %v638
    %v690 = vpop.f32.mrf.mxu0
    %v691 = vadd.f32 0.0, %v690
    %v692 = vpop.f32.mrf.mxu0
    %v693 = vadd.f32 0.0, %v692
    %v694 = vpop.f32.mrf.mxu0
    %v695 = vadd.f32 0.0, %v694
    %v696 = vpop.f32.mrf.mxu0
    %v697 = vadd.f32 0.0, %v696
    %698 = vdwg.mxu0
    %v699 = vadd.f32 %v584, %v681
    %v700 = vadd.f32 %v586, %v683
    %v701 = vadd.f32 %v588, %v685
    %v702 = vadd.f32 %v590, %v687
    %v703 = vadd.f32 %v594, %v691
    %v704 = vadd.f32 %v596, %v693
    %v705 = vadd.f32 %v598, %v695
    %v706 = vadd.f32 %v600, %v697
    %707 = vst [vmem:[#allocation2 + $0x10] sm:$0xff] %v699
    %708 = vst [vmem:[#allocation2 + $0x18] sm:$0xff] %v700
    %709 = vst [vmem:[#allocation2 + $0x80] sm:$0xff] %v701
    %710 = vst [vmem:[#allocation2 + $0x88] sm:$0xff] %v702
    %711 = vst [vmem:[#allocation2 + $0xf0] sm:$0xff] %v703
    %712 = vst [vmem:[#allocation2 + $0xf8] sm:$0xff] %v704
    %713 = vst [vmem:[#allocation2 + $0x160] sm:$0xff] %v705
    %714 = vst [vmem:[#allocation2 + $0x168] sm:$0xff] %v706
    %v715 = vld [vmem:[%s7 + $0x2] sm:$0x3]
    %v717 = vlaneseq
    %v718 = vshrl.u32 %v717, 7
    %v719 = vsub.s32 0, %v718
    %v720 = vrot.slane %v715, %v719
    %v721 = vlaneseq
    %v722 = vshrl.u32 %v721, 7
    %v723 = vsub.s32 1, %v722
    %v724 = vrot.slane %v715, %v723
    %v727 = vmul.f32 %v699, %v720
    %v728 = vmul.f32 %v700, %v724
    %v729 = vmul.f32 %v701, %v720
    %v730 = vmul.f32 %v702, %v724
    %v731 = vmul.f32 %v703, %v720
    %v732 = vmul.f32 %v704, %v724
    %v733 = vmul.f32 %v705, %v720
    %v734 = vmul.f32 %v706, %v724
    %v735 = vadd.f32 %v727, %v728
    %736 = vadd.xlane.f32.xlu0 %v735
    %v737 = vpop.xlane.xlu0 %736
    %v738 = vadd.f32 %v729, %v730
    %739 = vadd.xlane.f32.xlu0 %v738
    %v740 = vpop.xlane.xlu0 %739
    %v741 = vadd.f32 %v731, %v732
    %742 = vadd.xlane.f32.xlu0 %v741
    %v743 = vpop.xlane.xlu0 %742
    %v744 = vadd.f32 %v733, %v734
    %745 = vadd.xlane.f32.xlu0 %v744
    %v746 = vpop.xlane.xlu0 %745
    %v747 = vadd.f32 %v392, %v737
    %v748 = vadd.f32 %v393, %v740
    %v749 = vadd.f32 %v394, %v743
    %v750 = vadd.f32 %v395, %v746
    %v751 = vmul.f32 %v727, %v699
    %v752 = vmul.f32 %v728, %v700
    %v753 = vmul.f32 %v729, %v701
    %v754 = vmul.f32 %v730, %v702
    %v755 = vmul.f32 %v731, %v703
    %v756 = vmul.f32 %v732, %v704
    %v757 = vmul.f32 %v733, %v705
    %v758 = vmul.f32 %v734, %v706
    %v759 = vadd.f32 %v751, %v752
    %760 = vadd.xlane.f32.xlu0 %v759
    %v761 = vpop.xlane.xlu0 %760
    %v762 = vadd.f32 %v753, %v754
    %763 = vadd.xlane.f32.xlu0 %v762
    %v764 = vpop.xlane.xlu0 %763
    %v765 = vadd.f32 %v755, %v756
    %766 = vadd.xlane.f32.xlu0 %v765
    %v767 = vpop.xlane.xlu0 %766
    %v768 = vadd.f32 %v757, %v758
    %769 = vadd.xlane.f32.xlu0 %v768
    %v770 = vpop.xlane.xlu0 %769
    %v771 = vadd.f32 %v416, %v761
    %v772 = vadd.f32 %v417, %v764
    %v773 = vadd.f32 %v418, %v767
    %v774 = vadd.f32 %v419, %v770
    %v775 = vld [vmem:[%s1] sm:$0xf]
    %v776 = vld [vmem:[%s1 + $0x4] sm:$0xf]
    %v777 = vld [vmem:[%s1 + $0x8] sm:$0xf]
    %v778 = vld [vmem:[%s1 + $0xc] sm:$0xf]
    %v779 = vld [vmem:[%s0 + $0x10] sm:$0xff]
    %v780 = vld [vmem:[%s0 + $0x18] sm:$0xf]
    %v781 = vld [vmem:[%s65] sm:$0xf]
    %v782 = vld [vmem:[%s65 + $0x4] sm:$0xf]
    %v783 = vld [vmem:[%s65 + $0x8] sm:$0xf]
    %v784 = vld [vmem:[%s65 + $0xc] sm:$0xf]
    %v785 = vld [vmem:[%s0 + $0x14] sm:$0xff]
    %v790 = vunpack.c.l.b16 %v781
    %v791 = vunpack.c.l.b16 %v782
    %v792 = vunpack.c.l.b16 %v783
    %v793 = vunpack.c.l.b16 %v784
    %v794 = vpack.c.b16 %v791, %v790
    %v795 = vpack.c.b16 %v793, %v792
    %v797 = vunpack.c.l.b16 %v785
    %v798 = vunpack.c.h.b16 %v785
    %v799 = vpack.c.b16 %v797, %v797
    %v800 = vpack.c.b16 %v798, %v798
    %v802 = vsel %vm86, %v794, 0
    %v805 = vsel %vm86, %v795, 0
    %v808 = vsel %vm93, %v799, 0
    %v811 = vsel %vm93, %v800, 0
    %813 = vmatprep.subr.bf16.mxu0 0
    %814 = vmatpush1.bf16.msra.mxu0 0
    %815 = vmatprep.subr.bf16.mxu0 0
    %816 = vmatpush1.bf16.msra.mxu0 0
    %817 = vmatprep.subr.bf16.mxu0 0
    %818 = vmatpush1.bf16.msra.mxu0 0
    %819 = vmatprep.subr.bf16.mxu0 0
    %820 = vmatpush1.bf16.msra.mxu0 0
    %821 = vmatprep.subr.bf16.mxu0 0
    %822 = vmatpush1.bf16.msra.mxu0 0
    %823 = vmatprep.subr.bf16.mxu0 0
    %824 = vmatpush1.bf16.msra.mxu0 0
    %825 = vmatprep.subr.bf16.mxu0 0
    %826 = vmatpush1.bf16.msra.mxu0 0
    %827 = vmatprep.subr.bf16.mxu0 %v811
    %828 = vmatpush1.bf16.msra.mxu0 %v808
    %829 = vmatprep.subr.bf16.mxu0 0
    %830 = vmatpush2.bf16.msra.mxu0 0
    %831 = vmatprep.subr.bf16.mxu0 0
    %832 = vmatpush2.bf16.msra.mxu0 0
    %833 = vmatprep.subr.bf16.mxu0 0
    %834 = vmatpush2.bf16.msra.mxu0 0
    %835 = vmatprep.subr.bf16.mxu0 0
    %836 = vmatpush2.bf16.msra.mxu0 0
    %837 = vmatprep.subr.bf16.mxu0 0
    %838 = vmatpush2.bf16.msra.mxu0 0
    %839 = vmatprep.subr.bf16.mxu0 0
    %840 = vmatpush2.bf16.msra.mxu0 0
    %841 = vmatprep.subr.bf16.mxu0 0
    %842 = vmatpush2.bf16.msra.mxu0 0
    %843 = vmatprep.subr.bf16.mxu0 0
    %844 = vmatpush2.bf16.msra.mxu0 0
    %845 = vmatprep.mubr.bf16.mxu0 0
    %846 = vmatmul.mubr.bf16.gmra.mxu0 %v802
    %v847 = vpop.f32.mrf.mxu0
    %v848 = vadd.f32 0.0, %v847
    %v849 = vpop.f32.mrf.mxu0
    %v850 = vadd.f32 0.0, %v849
    %v851 = vpop.f32.mrf.mxu0
    %v852 = vadd.f32 0.0, %v851
    %v853 = vpop.f32.mrf.mxu0
    %v854 = vadd.f32 0.0, %v853
    %855 = vmatprep.mubr.bf16.mxu0 0
    %856 = vmatmul.mubr.bf16.gmra.mxu0 %v805
    %v857 = vpop.f32.mrf.mxu0
    %v858 = vadd.f32 0.0, %v857
    %v859 = vpop.f32.mrf.mxu0
    %v860 = vadd.f32 0.0, %v859
    %v861 = vpop.f32.mrf.mxu0
    %v862 = vadd.f32 0.0, %v861
    %v863 = vpop.f32.mrf.mxu0
    %v864 = vadd.f32 0.0, %v863
    %865 = vdwg.mxu0
    %v870 = vunpack.c.l.b16 %v775
    %v871 = vunpack.c.l.b16 %v776
    %v872 = vunpack.c.l.b16 %v777
    %v873 = vunpack.c.l.b16 %v778
    %v874 = vpack.c.b16 %v871, %v870
    %v875 = vpack.c.b16 %v873, %v872
    %v878 = vunpack.c.l.b16 %v779
    %v879 = vunpack.c.h.b16 %v779
    %v880 = vunpack.c.l.b16 %v780
    %v881 = vpack.c.b16 %v878, %v878
    %v882 = vpack.c.b16 %v879, %v879
    %v883 = vpack.c.b16 %v880, %v880
    %884 = vrot.lane.b32.xlu0 %v881, 1
    %v885 = vpop.permute.xlu0 %884
    %886 = vrot.lane.b32.xlu0 %v882, 1
    %v887 = vpop.permute.xlu0 %886
    %888 = vrot.lane.b32.xlu0 %v883, 1
    %v889 = vpop.permute.xlu0 %888
    %v890 = vsel %vm177, %v885, %v887
    %v891 = vsel %vm177, %v887, %v889
    %v893 = vsel %vm86, %v874, 0
    %v896 = vsel %vm86, %v875, 0
    %v899 = vsel %vm93, %v890, 0
    %v902 = vsel %vm93, %v891, 0
    %904 = vmatprep.subr.bf16.mxu0 0
    %905 = vmatpush1.bf16.msra.mxu0 0
    %906 = vmatprep.subr.bf16.mxu0 0
    %907 = vmatpush1.bf16.msra.mxu0 0
    %908 = vmatprep.subr.bf16.mxu0 0
    %909 = vmatpush1.bf16.msra.mxu0 0
    %910 = vmatprep.subr.bf16.mxu0 0
    %911 = vmatpush1.bf16.msra.mxu0 0
    %912 = vmatprep.subr.bf16.mxu0 0
    %913 = vmatpush1.bf16.msra.mxu0 0
    %914 = vmatprep.subr.bf16.mxu0 0
    %915 = vmatpush1.bf16.msra.mxu0 0
    %916 = vmatprep.subr.bf16.mxu0 0
    %917 = vmatpush1.bf16.msra.mxu0 0
    %918 = vmatprep.subr.bf16.mxu0 %v902
    %919 = vmatpush1.bf16.msra.mxu0 %v899
    %920 = vmatprep.subr.bf16.mxu0 0
    %921 = vmatpush2.bf16.msra.mxu0 0
    %922 = vmatprep.subr.bf16.mxu0 0
    %923 = vmatpush2.bf16.msra.mxu0 0
    %924 = vmatprep.subr.bf16.mxu0 0
    %925 = vmatpush2.bf16.msra.mxu0 0
    %926 = vmatprep.subr.bf16.mxu0 0
    %927 = vmatpush2.bf16.msra.mxu0 0
    %928 = vmatprep.subr.bf16.mxu0 0
    %929 = vmatpush2.bf16.msra.mxu0 0
    %930 = vmatprep.subr.bf16.mxu0 0
    %931 = vmatpush2.bf16.msra.mxu0 0
    %932 = vmatprep.subr.bf16.mxu0 0
    %933 = vmatpush2.bf16.msra.mxu0 0
    %934 = vmatprep.subr.bf16.mxu0 0
    %935 = vmatpush2.bf16.msra.mxu0 0
    %936 = vmatprep.mubr.bf16.mxu0 0
    %937 = vmatmul.mubr.bf16.gmra.mxu0 %v893
    %v938 = vpop.f32.mrf.mxu0
    %v939 = vadd.f32 %v848, %v938
    %v940 = vpop.f32.mrf.mxu0
    %v941 = vadd.f32 %v850, %v940
    %v942 = vpop.f32.mrf.mxu0
    %v943 = vadd.f32 %v852, %v942
    %v944 = vpop.f32.mrf.mxu0
    %v945 = vadd.f32 %v854, %v944
    %946 = vmatprep.mubr.bf16.mxu0 0
    %947 = vmatmul.mubr.bf16.gmra.mxu0 %v896
    %v948 = vpop.f32.mrf.mxu0
    %v949 = vadd.f32 %v858, %v948
    %v950 = vpop.f32.mrf.mxu0
    %v951 = vadd.f32 %v860, %v950
    %v952 = vpop.f32.mrf.mxu0
    %v953 = vadd.f32 %v862, %v952
    %v954 = vpop.f32.mrf.mxu0
    %v955 = vadd.f32 %v864, %v954
    %956 = vdwg.mxu0
    %v957 = vld [vmem:[%s245] sm:$0xf]
    %v958 = vld [vmem:[%s245 + $0x4] sm:$0xf]
    %v959 = vld [vmem:[%s245 + $0x8] sm:$0xf]
    %v960 = vld [vmem:[%s245 + $0xc] sm:$0xf]
    %v961 = vld [vmem:[%s0 + $0x14] sm:$0xff]
    %v962 = vld [vmem:[%s0 + $0x1c] sm:$0xf]
    %v967 = vunpack.c.l.b16 %v957
    %v968 = vunpack.c.l.b16 %v958
    %v969 = vunpack.c.l.b16 %v959
    %v970 = vunpack.c.l.b16 %v960
    %v971 = vpack.c.b16 %v968, %v967
    %v972 = vpack.c.b16 %v970, %v969
    %v975 = vunpack.c.l.b16 %v961
    %v976 = vunpack.c.h.b16 %v961
    %v977 = vunpack.c.l.b16 %v962
    %v978 = vpack.c.b16 %v975, %v975
    %v979 = vpack.c.b16 %v976, %v976
    %v980 = vpack.c.b16 %v977, %v977
    %981 = vrot.lane.b32.xlu0 %v978, 127
    %v982 = vpop.permute.xlu0 %981
    %983 = vrot.lane.b32.xlu0 %v979, 127
    %v984 = vpop.permute.xlu0 %983
    %985 = vrot.lane.b32.xlu0 %v980, 127
    %v986 = vpop.permute.xlu0 %985
    %v987 = vsel %vm276, %v982, %v984
    %v988 = vsel %vm276, %v984, %v986
    %v990 = vsel %vm86, %v971, 0
    %v993 = vsel %vm86, %v972, 0
    %v996 = vsel %vm93, %v987, 0
    %v999 = vsel %vm93, %v988, 0
    %1001 = vmatprep.subr.bf16.mxu0 0
    %1002 = vmatpush1.bf16.msra.mxu0 0
    %1003 = vmatprep.subr.bf16.mxu0 0
    %1004 = vmatpush1.bf16.msra.mxu0 0
    %1005 = vmatprep.subr.bf16.mxu0 0
    %1006 = vmatpush1.bf16.msra.mxu0 0
    %1007 = vmatprep.subr.bf16.mxu0 0
    %1008 = vmatpush1.bf16.msra.mxu0 0
    %1009 = vmatprep.subr.bf16.mxu0 0
    %1010 = vmatpush1.bf16.msra.mxu0 0
    %1011 = vmatprep.subr.bf16.mxu0 0
    %1012 = vmatpush1.bf16.msra.mxu0 0
    %1013 = vmatprep.subr.bf16.mxu0 0
    %1014 = vmatpush1.bf16.msra.mxu0 0
    %1015 = vmatprep.subr.bf16.mxu0 %v999
    %1016 = vmatpush1.bf16.msra.mxu0 %v996
    %1017 = vmatprep.subr.bf16.mxu0 0
    %1018 = vmatpush2.bf16.msra.mxu0 0
    %1019 = vmatprep.subr.bf16.mxu0 0
    %1020 = vmatpush2.bf16.msra.mxu0 0
    %1021 = vmatprep.subr.bf16.mxu0 0
    %1022 = vmatpush2.bf16.msra.mxu0 0
    %1023 = vmatprep.subr.bf16.mxu0 0
    %1024 = vmatpush2.bf16.msra.mxu0 0
    %1025 = vmatprep.subr.bf16.mxu0 0
    %1026 = vmatpush2.bf16.msra.mxu0 0
    %1027 = vmatprep.subr.bf16.mxu0 0
    %1028 = vmatpush2.bf16.msra.mxu0 0
    %1029 = vmatprep.subr.bf16.mxu0 0
    %1030 = vmatpush2.bf16.msra.mxu0 0
    %1031 = vmatprep.subr.bf16.mxu0 0
    %1032 = vmatpush2.bf16.msra.mxu0 0
    %1033 = vmatprep.mubr.bf16.mxu0 0
    %1034 = vmatmul.mubr.bf16.gmra.mxu0 %v990
    %v1035 = vpop.f32.mrf.mxu0
    %v1036 = vadd.f32 0.0, %v1035
    %v1037 = vpop.f32.mrf.mxu0
    %v1038 = vadd.f32 0.0, %v1037
    %v1039 = vpop.f32.mrf.mxu0
    %v1040 = vadd.f32 0.0, %v1039
    %v1041 = vpop.f32.mrf.mxu0
    %v1042 = vadd.f32 0.0, %v1041
    %1043 = vmatprep.mubr.bf16.mxu0 0
    %1044 = vmatmul.mubr.bf16.gmra.mxu0 %v993
    %v1045 = vpop.f32.mrf.mxu0
    %v1046 = vadd.f32 0.0, %v1045
    %v1047 = vpop.f32.mrf.mxu0
    %v1048 = vadd.f32 0.0, %v1047
    %v1049 = vpop.f32.mrf.mxu0
    %v1050 = vadd.f32 0.0, %v1049
    %v1051 = vpop.f32.mrf.mxu0
    %v1052 = vadd.f32 0.0, %v1051
    %1053 = vdwg.mxu0
    %v1054 = vadd.f32 %v939, %v1036
    %v1055 = vadd.f32 %v941, %v1038
    %v1056 = vadd.f32 %v943, %v1040
    %v1057 = vadd.f32 %v945, %v1042
    %v1058 = vadd.f32 %v949, %v1046
    %v1059 = vadd.f32 %v951, %v1048
    %v1060 = vadd.f32 %v953, %v1050
    %v1061 = vadd.f32 %v955, %v1052
    %1062 = vst [vmem:[#allocation2 + $0x20] sm:$0xff] %v1054
    %1063 = vst [vmem:[#allocation2 + $0x28] sm:$0xff] %v1055
    %1064 = vst [vmem:[#allocation2 + $0x90] sm:$0xff] %v1056
    %1065 = vst [vmem:[#allocation2 + $0x98] sm:$0xff] %v1057
    %1066 = vst [vmem:[#allocation2 + $0x100] sm:$0xff] %v1058
    %1067 = vst [vmem:[#allocation2 + $0x108] sm:$0xff] %v1059
    %1068 = vst [vmem:[#allocation2 + $0x170] sm:$0xff] %v1060
    %1069 = vst [vmem:[#allocation2 + $0x178] sm:$0xff] %v1061
    %v1070 = vld [vmem:[%s7 + $0x4] sm:$0x3]
    %v1072 = vlaneseq
    %v1073 = vshrl.u32 %v1072, 7
    %v1074 = vsub.s32 0, %v1073
    %v1075 = vrot.slane %v1070, %v1074
    %v1076 = vlaneseq
    %v1077 = vshrl.u32 %v1076, 7
    %v1078 = vsub.s32 1, %v1077
    %v1079 = vrot.slane %v1070, %v1078
    %v1082 = vmul.f32 %v1054, %v1075
    %v1083 = vmul.f32 %v1055, %v1079
    %v1084 = vmul.f32 %v1056, %v1075
    %v1085 = vmul.f32 %v1057, %v1079
    %v1086 = vmul.f32 %v1058, %v1075
    %v1087 = vmul.f32 %v1059, %v1079
    %v1088 = vmul.f32 %v1060, %v1075
    %v1089 = vmul.f32 %v1061, %v1079
    %v1090 = vadd.f32 %v1082, %v1083
    %1091 = vadd.xlane.f32.xlu0 %v1090
    %v1092 = vpop.xlane.xlu0 %1091
    %v1093 = vadd.f32 %v1084, %v1085
    %1094 = vadd.xlane.f32.xlu0 %v1093
    %v1095 = vpop.xlane.xlu0 %1094
    %v1096 = vadd.f32 %v1086, %v1087
    %1097 = vadd.xlane.f32.xlu0 %v1096
    %v1098 = vpop.xlane.xlu0 %1097
    %v1099 = vadd.f32 %v1088, %v1089
    %1100 = vadd.xlane.f32.xlu0 %v1099
    %v1101 = vpop.xlane.xlu0 %1100
    %v1102 = vadd.f32 %v747, %v1092
    %v1103 = vadd.f32 %v748, %v1095
    %v1104 = vadd.f32 %v749, %v1098
    %v1105 = vadd.f32 %v750, %v1101
    %v1106 = vmul.f32 %v1082, %v1054
    %v1107 = vmul.f32 %v1083, %v1055
    %v1108 = vmul.f32 %v1084, %v1056
    %v1109 = vmul.f32 %v1085, %v1057
    %v1110 = vmul.f32 %v1086, %v1058
    %v1111 = vmul.f32 %v1087, %v1059
    %v1112 = vmul.f32 %v1088, %v1060
    %v1113 = vmul.f32 %v1089, %v1061
    %v1114 = vadd.f32 %v1106, %v1107
    %1115 = vadd.xlane.f32.xlu0 %v1114
    %v1116 = vpop.xlane.xlu0 %1115
    %v1117 = vadd.f32 %v1108, %v1109
    %1118 = vadd.xlane.f32.xlu0 %v1117
    %v1119 = vpop.xlane.xlu0 %1118
    %v1120 = vadd.f32 %v1110, %v1111
    %1121 = vadd.xlane.f32.xlu0 %v1120
    %v1122 = vpop.xlane.xlu0 %1121
    %v1123 = vadd.f32 %v1112, %v1113
    %1124 = vadd.xlane.f32.xlu0 %v1123
    %v1125 = vpop.xlane.xlu0 %1124
    %v1126 = vadd.f32 %v771, %v1116
    %v1127 = vadd.f32 %v772, %v1119
    %v1128 = vadd.f32 %v773, %v1122
    %v1129 = vadd.f32 %v774, %v1125
    %v1130 = vld [vmem:[%s1] sm:$0xf]
    %v1131 = vld [vmem:[%s1 + $0x4] sm:$0xf]
    %v1132 = vld [vmem:[%s1 + $0x8] sm:$0xf]
    %v1133 = vld [vmem:[%s1 + $0xc] sm:$0xf]
    %v1134 = vld [vmem:[%s0 + $0x18] sm:$0xff]
    %v1135 = vld [vmem:[%s0 + $0x20] sm:$0xf]
    %v1136 = vld [vmem:[%s65] sm:$0xf]
    %v1137 = vld [vmem:[%s65 + $0x4] sm:$0xf]
    %v1138 = vld [vmem:[%s65 + $0x8] sm:$0xf]
    %v1139 = vld [vmem:[%s65 + $0xc] sm:$0xf]
    %v1140 = vld [vmem:[%s0 + $0x1c] sm:$0xff]
    %v1145 = vunpack.c.l.b16 %v1136
    %v1146 = vunpack.c.l.b16 %v1137
    %v1147 = vunpack.c.l.b16 %v1138
    %v1148 = vunpack.c.l.b16 %v1139
    %v1149 = vpack.c.b16 %v1146, %v1145
    %v1150 = vpack.c.b16 %v1148, %v1147
    %v1152 = vunpack.c.l.b16 %v1140
    %v1153 = vunpack.c.h.b16 %v1140
    %v1154 = vpack.c.b16 %v1152, %v1152
    %v1155 = vpack.c.b16 %v1153, %v1153
    %v1157 = vsel %vm86, %v1149, 0
    %v1160 = vsel %vm86, %v1150, 0
    %v1163 = vsel %vm93, %v1154, 0
    %v1166 = vsel %vm93, %v1155, 0
    %1168 = vmatprep.subr.bf16.mxu0 0
    %1169 = vmatpush1.bf16.msra.mxu0 0
    %1170 = vmatprep.subr.bf16.mxu0 0
    %1171 = vmatpush1.bf16.msra.mxu0 0
    %1172 = vmatprep.subr.bf16.mxu0 0
    %1173 = vmatpush1.bf16.msra.mxu0 0
    %1174 = vmatprep.subr.bf16.mxu0 0
    %1175 = vmatpush1.bf16.msra.mxu0 0
    %1176 = vmatprep.subr.bf16.mxu0 0
    %1177 = vmatpush1.bf16.msra.mxu0 0
    %1178 = vmatprep.subr.bf16.mxu0 0
    %1179 = vmatpush1.bf16.msra.mxu0 0
    %1180 = vmatprep.subr.bf16.mxu0 0
    %1181 = vmatpush1.bf16.msra.mxu0 0
    %1182 = vmatprep.subr.bf16.mxu0 %v1166
    %1183 = vmatpush1.bf16.msra.mxu0 %v1163
    %1184 = vmatprep.subr.bf16.mxu0 0
    %1185 = vmatpush2.bf16.msra.mxu0 0
    %1186 = vmatprep.subr.bf16.mxu0 0
    %1187 = vmatpush2.bf16.msra.mxu0 0
    %1188 = vmatprep.subr.bf16.mxu0 0
    %1189 = vmatpush2.bf16.msra.mxu0 0
    %1190 = vmatprep.subr.bf16.mxu0 0
    %1191 = vmatpush2.bf16.msra.mxu0 0
    %1192 = vmatprep.subr.bf16.mxu0 0
    %1193 = vmatpush2.bf16.msra.mxu0 0
    %1194 = vmatprep.subr.bf16.mxu0 0
    %1195 = vmatpush2.bf16.msra.mxu0 0
    %1196 = vmatprep.subr.bf16.mxu0 0
    %1197 = vmatpush2.bf16.msra.mxu0 0
    %1198 = vmatprep.subr.bf16.mxu0 0
    %1199 = vmatpush2.bf16.msra.mxu0 0
    %1200 = vmatprep.mubr.bf16.mxu0 0
    %1201 = vmatmul.mubr.bf16.gmra.mxu0 %v1157
    %v1202 = vpop.f32.mrf.mxu0
    %v1203 = vadd.f32 0.0, %v1202
    %v1204 = vpop.f32.mrf.mxu0
    %v1205 = vadd.f32 0.0, %v1204
    %v1206 = vpop.f32.mrf.mxu0
    %v1207 = vadd.f32 0.0, %v1206
    %v1208 = vpop.f32.mrf.mxu0
    %v1209 = vadd.f32 0.0, %v1208
    %1210 = vmatprep.mubr.bf16.mxu0 0
    %1211 = vmatmul.mubr.bf16.gmra.mxu0 %v1160
    %v1212 = vpop.f32.mrf.mxu0
    %v1213 = vadd.f32 0.0, %v1212
    %v1214 = vpop.f32.mrf.mxu0
    %v1215 = vadd.f32 0.0, %v1214
    %v1216 = vpop.f32.mrf.mxu0
    %v1217 = vadd.f32 0.0, %v1216
    %v1218 = vpop.f32.mrf.mxu0
    %v1219 = vadd.f32 0.0, %v1218
    %1220 = vdwg.mxu0
    %v1225 = vunpack.c.l.b16 %v1130
    %v1226 = vunpack.c.l.b16 %v1131
    %v1227 = vunpack.c.l.b16 %v1132
    %v1228 = vunpack.c.l.b16 %v1133
    %v1229 = vpack.c.b16 %v1226, %v1225
    %v1230 = vpack.c.b16 %v1228, %v1227
    %v1233 = vunpack.c.l.b16 %v1134
    %v1234 = vunpack.c.h.b16 %v1134
    %v1235 = vunpack.c.l.b16 %v1135
    %v1236 = vpack.c.b16 %v1233, %v1233
    %v1237 = vpack.c.b16 %v1234, %v1234
    %v1238 = vpack.c.b16 %v1235, %v1235
    %1239 = vrot.lane.b32.xlu0 %v1236, 1
    %v1240 = vpop.permute.xlu0 %1239
    %1241 = vrot.lane.b32.xlu0 %v1237, 1
    %v1242 = vpop.permute.xlu0 %1241
    %1243 = vrot.lane.b32.xlu0 %v1238, 1
    %v1244 = vpop.permute.xlu0 %1243
    %v1245 = vsel %vm177, %v1240, %v1242
    %v1246 = vsel %vm177, %v1242, %v1244
    %v1248 = vsel %vm86, %v1229, 0
    %v1251 = vsel %vm86, %v1230, 0
    %v1254 = vsel %vm93, %v1245, 0
    %v1257 = vsel %vm93, %v1246, 0
    %1259 = vmatprep.subr.bf16.mxu0 0
    %1260 = vmatpush1.bf16.msra.mxu0 0
    %1261 = vmatprep.subr.bf16.mxu0 0
    %1262 = vmatpush1.bf16.msra.mxu0 0
    %1263 = vmatprep.subr.bf16.mxu0 0
    %1264 = vmatpush1.bf16.msra.mxu0 0
    %1265 = vmatprep.subr.bf16.mxu0 0
    %1266 = vmatpush1.bf16.msra.mxu0 0
    %1267 = vmatprep.subr.bf16.mxu0 0
    %1268 = vmatpush1.bf16.msra.mxu0 0
    %1269 = vmatprep.subr.bf16.mxu0 0
    %1270 = vmatpush1.bf16.msra.mxu0 0
    %1271 = vmatprep.subr.bf16.mxu0 0
    %1272 = vmatpush1.bf16.msra.mxu0 0
    %1273 = vmatprep.subr.bf16.mxu0 %v1257
    %1274 = vmatpush1.bf16.msra.mxu0 %v1254
    %1275 = vmatprep.subr.bf16.mxu0 0
    %1276 = vmatpush2.bf16.msra.mxu0 0
    %1277 = vmatprep.subr.bf16.mxu0 0
    %1278 = vmatpush2.bf16.msra.mxu0 0
    %1279 = vmatprep.subr.bf16.mxu0 0
    %1280 = vmatpush2.bf16.msra.mxu0 0
    %1281 = vmatprep.subr.bf16.mxu0 0
    %1282 = vmatpush2.bf16.msra.mxu0 0
    %1283 = vmatprep.subr.bf16.mxu0 0
    %1284 = vmatpush2.bf16.msra.mxu0 0
    %1285 = vmatprep.subr.bf16.mxu0 0
    %1286 = vmatpush2.bf16.msra.mxu0 0
    %1287 = vmatprep.subr.bf16.mxu0 0
    %1288 = vmatpush2.bf16.msra.mxu0 0
    %1289 = vmatprep.subr.bf16.mxu0 0
    %1290 = vmatpush2.bf16.msra.mxu0 0
    %1291 = vmatprep.mubr.bf16.mxu0 0
    %1292 = vmatmul.mubr.bf16.gmra.mxu0 %v1248
    %v1293 = vpop.f32.mrf.mxu0
    %v1294 = vadd.f32 %v1203, %v1293
    %v1295 = vpop.f32.mrf.mxu0
    %v1296 = vadd.f32 %v1205, %v1295
    %v1297 = vpop.f32.mrf.mxu0
    %v1298 = vadd.f32 %v1207, %v1297
    %v1299 = vpop.f32.mrf.mxu0
    %v1300 = vadd.f32 %v1209, %v1299
    %1301 = vmatprep.mubr.bf16.mxu0 0
    %1302 = vmatmul.mubr.bf16.gmra.mxu0 %v1251
    %v1303 = vpop.f32.mrf.mxu0
    %v1304 = vadd.f32 %v1213, %v1303
    %v1305 = vpop.f32.mrf.mxu0
    %v1306 = vadd.f32 %v1215, %v1305
    %v1307 = vpop.f32.mrf.mxu0
    %v1308 = vadd.f32 %v1217, %v1307
    %v1309 = vpop.f32.mrf.mxu0
    %v1310 = vadd.f32 %v1219, %v1309
    %1311 = vdwg.mxu0
    %v1312 = vld [vmem:[%s245] sm:$0xf]
    %v1313 = vld [vmem:[%s245 + $0x4] sm:$0xf]
    %v1314 = vld [vmem:[%s245 + $0x8] sm:$0xf]
    %v1315 = vld [vmem:[%s245 + $0xc] sm:$0xf]
    %v1316 = vld [vmem:[%s0 + $0x1c] sm:$0xff]
    %v1317 = vld [vmem:[%s0 + $0x24] sm:$0xf]
    %v1322 = vunpack.c.l.b16 %v1312
    %v1323 = vunpack.c.l.b16 %v1313
    %v1324 = vunpack.c.l.b16 %v1314
    %v1325 = vunpack.c.l.b16 %v1315
    %v1326 = vpack.c.b16 %v1323, %v1322
    %v1327 = vpack.c.b16 %v1325, %v1324
    %v1330 = vunpack.c.l.b16 %v1316
    %v1331 = vunpack.c.h.b16 %v1316
    %v1332 = vunpack.c.l.b16 %v1317
    %v1333 = vpack.c.b16 %v1330, %v1330
    %v1334 = vpack.c.b16 %v1331, %v1331
    %v1335 = vpack.c.b16 %v1332, %v1332
    %1336 = vrot.lane.b32.xlu0 %v1333, 127
    %v1337 = vpop.permute.xlu0 %1336
    %1338 = vrot.lane.b32.xlu0 %v1334, 127
    %v1339 = vpop.permute.xlu0 %1338
    %1340 = vrot.lane.b32.xlu0 %v1335, 127
    %v1341 = vpop.permute.xlu0 %1340
    %v1342 = vsel %vm276, %v1337, %v1339
    %v1343 = vsel %vm276, %v1339, %v1341
    %v1345 = vsel %vm86, %v1326, 0
    %v1348 = vsel %vm86, %v1327, 0
    %v1351 = vsel %vm93, %v1342, 0
    %v1354 = vsel %vm93, %v1343, 0
    %1356 = vmatprep.subr.bf16.mxu0 0
    %1357 = vmatpush1.bf16.msra.mxu0 0
    %1358 = vmatprep.subr.bf16.mxu0 0
    %1359 = vmatpush1.bf16.msra.mxu0 0
    %1360 = vmatprep.subr.bf16.mxu0 0
    %1361 = vmatpush1.bf16.msra.mxu0 0
    %1362 = vmatprep.subr.bf16.mxu0 0
    %1363 = vmatpush1.bf16.msra.mxu0 0
    %1364 = vmatprep.subr.bf16.mxu0 0
    %1365 = vmatpush1.bf16.msra.mxu0 0
    %1366 = vmatprep.subr.bf16.mxu0 0
    %1367 = vmatpush1.bf16.msra.mxu0 0
    %1368 = vmatprep.subr.bf16.mxu0 0
    %1369 = vmatpush1.bf16.msra.mxu0 0
    %1370 = vmatprep.subr.bf16.mxu0 %v1354
    %1371 = vmatpush1.bf16.msra.mxu0 %v1351
    %1372 = vmatprep.subr.bf16.mxu0 0
    %1373 = vmatpush2.bf16.msra.mxu0 0
    %1374 = vmatprep.subr.bf16.mxu0 0
    %1375 = vmatpush2.bf16.msra.mxu0 0
    %1376 = vmatprep.subr.bf16.mxu0 0
    %1377 = vmatpush2.bf16.msra.mxu0 0
    %1378 = vmatprep.subr.bf16.mxu0 0
    %1379 = vmatpush2.bf16.msra.mxu0 0
    %1380 = vmatprep.subr.bf16.mxu0 0
    %1381 = vmatpush2.bf16.msra.mxu0 0
    %1382 = vmatprep.subr.bf16.mxu0 0
    %1383 = vmatpush2.bf16.msra.mxu0 0
    %1384 = vmatprep.subr.bf16.mxu0 0
    %1385 = vmatpush2.bf16.msra.mxu0 0
    %1386 = vmatprep.subr.bf16.mxu0 0
    %1387 = vmatpush2.bf16.msra.mxu0 0
    %1388 = vmatprep.mubr.bf16.mxu0 0
    %1389 = vmatmul.mubr.bf16.gmra.mxu0 %v1345
    %v1390 = vpop.f32.mrf.mxu0
    %v1391 = vadd.f32 0.0, %v1390
    %v1392 = vpop.f32.mrf.mxu0
    %v1393 = vadd.f32 0.0, %v1392
    %v1394 = vpop.f32.mrf.mxu0
    %v1395 = vadd.f32 0.0, %v1394
    %v1396 = vpop.f32.mrf.mxu0
    %v1397 = vadd.f32 0.0, %v1396
    %1398 = vmatprep.mubr.bf16.mxu0 0
    %1399 = vmatmul.mubr.bf16.gmra.mxu0 %v1348
    %v1400 = vpop.f32.mrf.mxu0
    %v1401 = vadd.f32 0.0, %v1400
    %v1402 = vpop.f32.mrf.mxu0
    %v1403 = vadd.f32 0.0, %v1402
    %v1404 = vpop.f32.mrf.mxu0
    %v1405 = vadd.f32 0.0, %v1404
    %v1406 = vpop.f32.mrf.mxu0
    %v1407 = vadd.f32 0.0, %v1406
    %1408 = vdwg.mxu0
    %v1409 = vadd.f32 %v1294, %v1391
    %v1410 = vadd.f32 %v1296, %v1393
    %v1411 = vadd.f32 %v1298, %v1395
    %v1412 = vadd.f32 %v1300, %v1397
    %v1413 = vadd.f32 %v1304, %v1401
    %v1414 = vadd.f32 %v1306, %v1403
    %v1415 = vadd.f32 %v1308, %v1405
    %v1416 = vadd.f32 %v1310, %v1407
    %1417 = vst [vmem:[#allocation2 + $0x30] sm:$0xff] %v1409
    %1418 = vst [vmem:[#allocation2 + $0x38] sm:$0xff] %v1410
    %1419 = vst [vmem:[#allocation2 + $0xa0] sm:$0xff] %v1411
    %1420 = vst [vmem:[#allocation2 + $0xa8] sm:$0xff] %v1412
    %1421 = vst [vmem:[#allocation2 + $0x110] sm:$0xff] %v1413
    %1422 = vst [vmem:[#allocation2 + $0x118] sm:$0xff] %v1414
    %1423 = vst [vmem:[#allocation2 + $0x180] sm:$0xff] %v1415
    %1424 = vst [vmem:[#allocation2 + $0x188] sm:$0xff] %v1416
    %v1425 = vld [vmem:[%s7 + $0x6] sm:$0x3]
    %v1427 = vlaneseq
    %v1428 = vshrl.u32 %v1427, 7
    %v1429 = vsub.s32 0, %v1428
    %v1430 = vrot.slane %v1425, %v1429
    %v1431 = vlaneseq
    %v1432 = vshrl.u32 %v1431, 7
    %v1433 = vsub.s32 1, %v1432
    %v1434 = vrot.slane %v1425, %v1433
    %v1437 = vmul.f32 %v1409, %v1430
    %v1438 = vmul.f32 %v1410, %v1434
    %v1439 = vmul.f32 %v1411, %v1430
    %v1440 = vmul.f32 %v1412, %v1434
    %v1441 = vmul.f32 %v1413, %v1430
    %v1442 = vmul.f32 %v1414, %v1434
    %v1443 = vmul.f32 %v1415, %v1430
    %v1444 = vmul.f32 %v1416, %v1434
    %v1445 = vadd.f32 %v1437, %v1438
    %1446 = vadd.xlane.f32.xlu0 %v1445
    %v1447 = vpop.xlane.xlu0 %1446
    %v1448 = vadd.f32 %v1439, %v1440
    %1449 = vadd.xlane.f32.xlu0 %v1448
    %v1450 = vpop.xlane.xlu0 %1449
    %v1451 = vadd.f32 %v1441, %v1442
    %1452 = vadd.xlane.f32.xlu0 %v1451
    %v1453 = vpop.xlane.xlu0 %1452
    %v1454 = vadd.f32 %v1443, %v1444
    %1455 = vadd.xlane.f32.xlu0 %v1454
    %v1456 = vpop.xlane.xlu0 %1455
    %v1457 = vadd.f32 %v1102, %v1447
    %v1458 = vadd.f32 %v1103, %v1450
    %v1459 = vadd.f32 %v1104, %v1453
    %v1460 = vadd.f32 %v1105, %v1456
    %v1461 = vmul.f32 %v1437, %v1409
    %v1462 = vmul.f32 %v1438, %v1410
    %v1463 = vmul.f32 %v1439, %v1411
    %v1464 = vmul.f32 %v1440, %v1412
    %v1465 = vmul.f32 %v1441, %v1413
    %v1466 = vmul.f32 %v1442, %v1414
    %v1467 = vmul.f32 %v1443, %v1415
    %v1468 = vmul.f32 %v1444, %v1416
    %v1469 = vadd.f32 %v1461, %v1462
    %1470 = vadd.xlane.f32.xlu0 %v1469
    %v1471 = vpop.xlane.xlu0 %1470
    %v1472 = vadd.f32 %v1463, %v1464
    %1473 = vadd.xlane.f32.xlu0 %v1472
    %v1474 = vpop.xlane.xlu0 %1473
    %v1475 = vadd.f32 %v1465, %v1466
    %1476 = vadd.xlane.f32.xlu0 %v1475
    %v1477 = vpop.xlane.xlu0 %1476
    %v1478 = vadd.f32 %v1467, %v1468
    %1479 = vadd.xlane.f32.xlu0 %v1478
    %v1480 = vpop.xlane.xlu0 %1479
    %v1481 = vadd.f32 %v1126, %v1471
    %v1482 = vadd.f32 %v1127, %v1474
    %v1483 = vadd.f32 %v1128, %v1477
    %v1484 = vadd.f32 %v1129, %v1480
    %v1485 = vld [vmem:[%s1] sm:$0xf]
    %v1486 = vld [vmem:[%s1 + $0x4] sm:$0xf]
    %v1487 = vld [vmem:[%s1 + $0x8] sm:$0xf]
    %v1488 = vld [vmem:[%s1 + $0xc] sm:$0xf]
    %v1489 = vld [vmem:[%s0 + $0x20] sm:$0xff]
    %v1490 = vld [vmem:[%s0 + $0x28] sm:$0xf]
    %v1491 = vld [vmem:[%s65] sm:$0xf]
    %v1492 = vld [vmem:[%s65 + $0x4] sm:$0xf]
    %v1493 = vld [vmem:[%s65 + $0x8] sm:$0xf]
    %v1494 = vld [vmem:[%s65 + $0xc] sm:$0xf]
    %v1495 = vld [vmem:[%s0 + $0x24] sm:$0xff]
    %v1500 = vunpack.c.l.b16 %v1491
    %v1501 = vunpack.c.l.b16 %v1492
    %v1502 = vunpack.c.l.b16 %v1493
    %v1503 = vunpack.c.l.b16 %v1494
    %v1504 = vpack.c.b16 %v1501, %v1500
    %v1505 = vpack.c.b16 %v1503, %v1502
    %v1507 = vunpack.c.l.b16 %v1495
    %v1508 = vunpack.c.h.b16 %v1495
    %v1509 = vpack.c.b16 %v1507, %v1507
    %v1510 = vpack.c.b16 %v1508, %v1508
    %v1512 = vsel %vm86, %v1504, 0
    %v1515 = vsel %vm86, %v1505, 0
    %v1518 = vsel %vm93, %v1509, 0
    %v1521 = vsel %vm93, %v1510, 0
    %1523 = vmatprep.subr.bf16.mxu0 0
    %1524 = vmatpush1.bf16.msra.mxu0 0
    %1525 = vmatprep.subr.bf16.mxu0 0
    %1526 = vmatpush1.bf16.msra.mxu0 0
    %1527 = vmatprep.subr.bf16.mxu0 0
    %1528 = vmatpush1.bf16.msra.mxu0 0
    %1529 = vmatprep.subr.bf16.mxu0 0
    %1530 = vmatpush1.bf16.msra.mxu0 0
    %1531 = vmatprep.subr.bf16.mxu0 0
    %1532 = vmatpush1.bf16.msra.mxu0 0
    %1533 = vmatprep.subr.bf16.mxu0 0
    %1534 = vmatpush1.bf16.msra.mxu0 0
    %1535 = vmatprep.subr.bf16.mxu0 0
    %1536 = vmatpush1.bf16.msra.mxu0 0
    %1537 = vmatprep.subr.bf16.mxu0 %v1521
    %1538 = vmatpush1.bf16.msra.mxu0 %v1518
    %1539 = vmatprep.subr.bf16.mxu0 0
    %1540 = vmatpush2.bf16.msra.mxu0 0
    %1541 = vmatprep.subr.bf16.mxu0 0
    %1542 = vmatpush2.bf16.msra.mxu0 0
    %1543 = vmatprep.subr.bf16.mxu0 0
    %1544 = vmatpush2.bf16.msra.mxu0 0
    %1545 = vmatprep.subr.bf16.mxu0 0
    %1546 = vmatpush2.bf16.msra.mxu0 0
    %1547 = vmatprep.subr.bf16.mxu0 0
    %1548 = vmatpush2.bf16.msra.mxu0 0
    %1549 = vmatprep.subr.bf16.mxu0 0
    %1550 = vmatpush2.bf16.msra.mxu0 0
    %1551 = vmatprep.subr.bf16.mxu0 0
    %1552 = vmatpush2.bf16.msra.mxu0 0
    %1553 = vmatprep.subr.bf16.mxu0 0
    %1554 = vmatpush2.bf16.msra.mxu0 0
    %1555 = vmatprep.mubr.bf16.mxu0 0
    %1556 = vmatmul.mubr.bf16.gmra.mxu0 %v1512
    %v1557 = vpop.f32.mrf.mxu0
    %v1558 = vadd.f32 0.0, %v1557
    %v1559 = vpop.f32.mrf.mxu0
    %v1560 = vadd.f32 0.0, %v1559
    %v1561 = vpop.f32.mrf.mxu0
    %v1562 = vadd.f32 0.0, %v1561
    %v1563 = vpop.f32.mrf.mxu0
    %v1564 = vadd.f32 0.0, %v1563
    %1565 = vmatprep.mubr.bf16.mxu0 0
    %1566 = vmatmul.mubr.bf16.gmra.mxu0 %v1515
    %v1567 = vpop.f32.mrf.mxu0
    %v1568 = vadd.f32 0.0, %v1567
    %v1569 = vpop.f32.mrf.mxu0
    %v1570 = vadd.f32 0.0, %v1569
    %v1571 = vpop.f32.mrf.mxu0
    %v1572 = vadd.f32 0.0, %v1571
    %v1573 = vpop.f32.mrf.mxu0
    %v1574 = vadd.f32 0.0, %v1573
    %1575 = vdwg.mxu0
    %v1580 = vunpack.c.l.b16 %v1485
    %v1581 = vunpack.c.l.b16 %v1486
    %v1582 = vunpack.c.l.b16 %v1487
    %v1583 = vunpack.c.l.b16 %v1488
    %v1584 = vpack.c.b16 %v1581, %v1580
    %v1585 = vpack.c.b16 %v1583, %v1582
    %v1588 = vunpack.c.l.b16 %v1489
    %v1589 = vunpack.c.h.b16 %v1489
    %v1590 = vunpack.c.l.b16 %v1490
    %v1591 = vpack.c.b16 %v1588, %v1588
    %v1592 = vpack.c.b16 %v1589, %v1589
    %v1593 = vpack.c.b16 %v1590, %v1590
    %1594 = vrot.lane.b32.xlu0 %v1591, 1
    %v1595 = vpop.permute.xlu0 %1594
    %1596 = vrot.lane.b32.xlu0 %v1592, 1
    %v1597 = vpop.permute.xlu0 %1596
    %1598 = vrot.lane.b32.xlu0 %v1593, 1
    %v1599 = vpop.permute.xlu0 %1598
    %v1600 = vsel %vm177, %v1595, %v1597
    %v1601 = vsel %vm177, %v1597, %v1599
    %v1603 = vsel %vm86, %v1584, 0
    %v1606 = vsel %vm86, %v1585, 0
    %v1609 = vsel %vm93, %v1600, 0
    %v1612 = vsel %vm93, %v1601, 0
    %1614 = vmatprep.subr.bf16.mxu0 0
    %1615 = vmatpush1.bf16.msra.mxu0 0
    %1616 = vmatprep.subr.bf16.mxu0 0
    %1617 = vmatpush1.bf16.msra.mxu0 0
    %1618 = vmatprep.subr.bf16.mxu0 0
    %1619 = vmatpush1.bf16.msra.mxu0 0
    %1620 = vmatprep.subr.bf16.mxu0 0
    %1621 = vmatpush1.bf16.msra.mxu0 0
    %1622 = vmatprep.subr.bf16.mxu0 0
    %1623 = vmatpush1.bf16.msra.mxu0 0
    %1624 = vmatprep.subr.bf16.mxu0 0
    %1625 = vmatpush1.bf16.msra.mxu0 0
    %1626 = vmatprep.subr.bf16.mxu0 0
    %1627 = vmatpush1.bf16.msra.mxu0 0
    %1628 = vmatprep.subr.bf16.mxu0 %v1612
    %1629 = vmatpush1.bf16.msra.mxu0 %v1609
    %1630 = vmatprep.subr.bf16.mxu0 0
    %1631 = vmatpush2.bf16.msra.mxu0 0
    %1632 = vmatprep.subr.bf16.mxu0 0
    %1633 = vmatpush2.bf16.msra.mxu0 0
    %1634 = vmatprep.subr.bf16.mxu0 0
    %1635 = vmatpush2.bf16.msra.mxu0 0
    %1636 = vmatprep.subr.bf16.mxu0 0
    %1637 = vmatpush2.bf16.msra.mxu0 0
    %1638 = vmatprep.subr.bf16.mxu0 0
    %1639 = vmatpush2.bf16.msra.mxu0 0
    %1640 = vmatprep.subr.bf16.mxu0 0
    %1641 = vmatpush2.bf16.msra.mxu0 0
    %1642 = vmatprep.subr.bf16.mxu0 0
    %1643 = vmatpush2.bf16.msra.mxu0 0
    %1644 = vmatprep.subr.bf16.mxu0 0
    %1645 = vmatpush2.bf16.msra.mxu0 0
    %1646 = vmatprep.mubr.bf16.mxu0 0
    %1647 = vmatmul.mubr.bf16.gmra.mxu0 %v1603
    %v1648 = vpop.f32.mrf.mxu0
    %v1649 = vadd.f32 %v1558, %v1648
    %v1650 = vpop.f32.mrf.mxu0
    %v1651 = vadd.f32 %v1560, %v1650
    %v1652 = vpop.f32.mrf.mxu0
    %v1653 = vadd.f32 %v1562, %v1652
    %v1654 = vpop.f32.mrf.mxu0
    %v1655 = vadd.f32 %v1564, %v1654
    %1656 = vmatprep.mubr.bf16.mxu0 0
    %1657 = vmatmul.mubr.bf16.gmra.mxu0 %v1606
    %v1658 = vpop.f32.mrf.mxu0
    %v1659 = vadd.f32 %v1568, %v1658
    %v1660 = vpop.f32.mrf.mxu0
    %v1661 = vadd.f32 %v1570, %v1660
    %v1662 = vpop.f32.mrf.mxu0
    %v1663 = vadd.f32 %v1572, %v1662
    %v1664 = vpop.f32.mrf.mxu0
    %v1665 = vadd.f32 %v1574, %v1664
    %1666 = vdwg.mxu0
    %v1667 = vld [vmem:[%s245] sm:$0xf]
    %v1668 = vld [vmem:[%s245 + $0x4] sm:$0xf]
    %v1669 = vld [vmem:[%s245 + $0x8] sm:$0xf]
    %v1670 = vld [vmem:[%s245 + $0xc] sm:$0xf]
    %v1671 = vld [vmem:[%s0 + $0x24] sm:$0xff]
    %v1672 = vld [vmem:[%s0 + $0x2c] sm:$0xf]
    %v1677 = vunpack.c.l.b16 %v1667
    %v1678 = vunpack.c.l.b16 %v1668
    %v1679 = vunpack.c.l.b16 %v1669
    %v1680 = vunpack.c.l.b16 %v1670
    %v1681 = vpack.c.b16 %v1678, %v1677
    %v1682 = vpack.c.b16 %v1680, %v1679
    %v1685 = vunpack.c.l.b16 %v1671
    %v1686 = vunpack.c.h.b16 %v1671
    %v1687 = vunpack.c.l.b16 %v1672
    %v1688 = vpack.c.b16 %v1685, %v1685
    %v1689 = vpack.c.b16 %v1686, %v1686
    %v1690 = vpack.c.b16 %v1687, %v1687
    %1691 = vrot.lane.b32.xlu0 %v1688, 127
    %v1692 = vpop.permute.xlu0 %1691
    %1693 = vrot.lane.b32.xlu0 %v1689, 127
    %v1694 = vpop.permute.xlu0 %1693
    %1695 = vrot.lane.b32.xlu0 %v1690, 127
    %v1696 = vpop.permute.xlu0 %1695
    %v1697 = vsel %vm276, %v1692, %v1694
    %v1698 = vsel %vm276, %v1694, %v1696
    %v1700 = vsel %vm86, %v1681, 0
    %v1703 = vsel %vm86, %v1682, 0
    %v1706 = vsel %vm93, %v1697, 0
    %v1709 = vsel %vm93, %v1698, 0
    %1711 = vmatprep.subr.bf16.mxu0 0
    %1712 = vmatpush1.bf16.msra.mxu0 0
    %1713 = vmatprep.subr.bf16.mxu0 0
    %1714 = vmatpush1.bf16.msra.mxu0 0
    %1715 = vmatprep.subr.bf16.mxu0 0
    %1716 = vmatpush1.bf16.msra.mxu0 0
    %1717 = vmatprep.subr.bf16.mxu0 0
    %1718 = vmatpush1.bf16.msra.mxu0 0
    %1719 = vmatprep.subr.bf16.mxu0 0
    %1720 = vmatpush1.bf16.msra.mxu0 0
    %1721 = vmatprep.subr.bf16.mxu0 0
    %1722 = vmatpush1.bf16.msra.mxu0 0
    %1723 = vmatprep.subr.bf16.mxu0 0
    %1724 = vmatpush1.bf16.msra.mxu0 0
    %1725 = vmatprep.subr.bf16.mxu0 %v1709
    %1726 = vmatpush1.bf16.msra.mxu0 %v1706
    %1727 = vmatprep.subr.bf16.mxu0 0
    %1728 = vmatpush2.bf16.msra.mxu0 0
    %1729 = vmatprep.subr.bf16.mxu0 0
    %1730 = vmatpush2.bf16.msra.mxu0 0
    %1731 = vmatprep.subr.bf16.mxu0 0
    %1732 = vmatpush2.bf16.msra.mxu0 0
    %1733 = vmatprep.subr.bf16.mxu0 0
    %1734 = vmatpush2.bf16.msra.mxu0 0
    %1735 = vmatprep.subr.bf16.mxu0 0
    %1736 = vmatpush2.bf16.msra.mxu0 0
    %1737 = vmatprep.subr.bf16.mxu0 0
    %1738 = vmatpush2.bf16.msra.mxu0 0
    %1739 = vmatprep.subr.bf16.mxu0 0
    %1740 = vmatpush2.bf16.msra.mxu0 0
    %1741 = vmatprep.subr.bf16.mxu0 0
    %1742 = vmatpush2.bf16.msra.mxu0 0
    %1743 = vmatprep.mubr.bf16.mxu0 0
    %1744 = vmatmul.mubr.bf16.gmra.mxu0 %v1700
    %v1745 = vpop.f32.mrf.mxu0
    %v1746 = vadd.f32 0.0, %v1745
    %v1747 = vpop.f32.mrf.mxu0
    %v1748 = vadd.f32 0.0, %v1747
    %v1749 = vpop.f32.mrf.mxu0
    %v1750 = vadd.f32 0.0, %v1749
    %v1751 = vpop.f32.mrf.mxu0
    %v1752 = vadd.f32 0.0, %v1751
    %1753 = vmatprep.mubr.bf16.mxu0 0
    %1754 = vmatmul.mubr.bf16.gmra.mxu0 %v1703
    %v1755 = vpop.f32.mrf.mxu0
    %v1756 = vadd.f32 0.0, %v1755
    %v1757 = vpop.f32.mrf.mxu0
    %v1758 = vadd.f32 0.0, %v1757
    %v1759 = vpop.f32.mrf.mxu0
    %v1760 = vadd.f32 0.0, %v1759
    %v1761 = vpop.f32.mrf.mxu0
    %v1762 = vadd.f32 0.0, %v1761
    %1763 = vdwg.mxu0
    %v1764 = vadd.f32 %v1649, %v1746
    %v1765 = vadd.f32 %v1651, %v1748
    %v1766 = vadd.f32 %v1653, %v1750
    %v1767 = vadd.f32 %v1655, %v1752
    %v1768 = vadd.f32 %v1659, %v1756
    %v1769 = vadd.f32 %v1661, %v1758
    %v1770 = vadd.f32 %v1663, %v1760
    %v1771 = vadd.f32 %v1665, %v1762
    %1772 = vst [vmem:[#allocation2 + $0x40] sm:$0xff] %v1764
    %1773 = vst [vmem:[#allocation2 + $0x48] sm:$0xff] %v1765
    %1774 = vst [vmem:[#allocation2 + $0xb0] sm:$0xff] %v1766
    %1775 = vst [vmem:[#allocation2 + $0xb8] sm:$0xff] %v1767
    %1776 = vst [vmem:[#allocation2 + $0x120] sm:$0xff] %v1768
    %1777 = vst [vmem:[#allocation2 + $0x128] sm:$0xff] %v1769
    %1778 = vst [vmem:[#allocation2 + $0x190] sm:$0xff] %v1770
    %1779 = vst [vmem:[#allocation2 + $0x198] sm:$0xff] %v1771
    %v1780 = vld [vmem:[%s7 + $0x8] sm:$0x3]
    %v1782 = vlaneseq
    %v1783 = vshrl.u32 %v1782, 7
    %v1784 = vsub.s32 0, %v1783
    %v1785 = vrot.slane %v1780, %v1784
    %v1786 = vlaneseq
    %v1787 = vshrl.u32 %v1786, 7
    %v1788 = vsub.s32 1, %v1787
    %v1789 = vrot.slane %v1780, %v1788
    %v1792 = vmul.f32 %v1764, %v1785
    %v1793 = vmul.f32 %v1765, %v1789
    %v1794 = vmul.f32 %v1766, %v1785
    %v1795 = vmul.f32 %v1767, %v1789
    %v1796 = vmul.f32 %v1768, %v1785
    %v1797 = vmul.f32 %v1769, %v1789
    %v1798 = vmul.f32 %v1770, %v1785
    %v1799 = vmul.f32 %v1771, %v1789
    %v1800 = vadd.f32 %v1792, %v1793
    %1801 = vadd.xlane.f32.xlu0 %v1800
    %v1802 = vpop.xlane.xlu0 %1801
    %v1803 = vadd.f32 %v1794, %v1795
    %1804 = vadd.xlane.f32.xlu0 %v1803
    %v1805 = vpop.xlane.xlu0 %1804
    %v1806 = vadd.f32 %v1796, %v1797
    %1807 = vadd.xlane.f32.xlu0 %v1806
    %v1808 = vpop.xlane.xlu0 %1807
    %v1809 = vadd.f32 %v1798, %v1799
    %1810 = vadd.xlane.f32.xlu0 %v1809
    %v1811 = vpop.xlane.xlu0 %1810
    %v1812 = vadd.f32 %v1457, %v1802
    %v1813 = vadd.f32 %v1458, %v1805
    %v1814 = vadd.f32 %v1459, %v1808
    %v1815 = vadd.f32 %v1460, %v1811
    %v1816 = vmul.f32 %v1792, %v1764
    %v1817 = vmul.f32 %v1793, %v1765
    %v1818 = vmul.f32 %v1794, %v1766
    %v1819 = vmul.f32 %v1795, %v1767
    %v1820 = vmul.f32 %v1796, %v1768
    %v1821 = vmul.f32 %v1797, %v1769
    %v1822 = vmul.f32 %v1798, %v1770
    %v1823 = vmul.f32 %v1799, %v1771
    %v1824 = vadd.f32 %v1816, %v1817
    %1825 = vadd.xlane.f32.xlu0 %v1824
    %v1826 = vpop.xlane.xlu0 %1825
    %v1827 = vadd.f32 %v1818, %v1819
    %1828 = vadd.xlane.f32.xlu0 %v1827
    %v1829 = vpop.xlane.xlu0 %1828
    %v1830 = vadd.f32 %v1820, %v1821
    %1831 = vadd.xlane.f32.xlu0 %v1830
    %v1832 = vpop.xlane.xlu0 %1831
    %v1833 = vadd.f32 %v1822, %v1823
    %1834 = vadd.xlane.f32.xlu0 %v1833
    %v1835 = vpop.xlane.xlu0 %1834
    %v1836 = vadd.f32 %v1481, %v1826
    %v1837 = vadd.f32 %v1482, %v1829
    %v1838 = vadd.f32 %v1483, %v1832
    %v1839 = vadd.f32 %v1484, %v1835
    %v1840 = vld [vmem:[%s1] sm:$0xf]
    %v1841 = vld [vmem:[%s1 + $0x4] sm:$0xf]
    %v1842 = vld [vmem:[%s1 + $0x8] sm:$0xf]
    %v1843 = vld [vmem:[%s1 + $0xc] sm:$0xf]
    %v1844 = vld [vmem:[%s0 + $0x28] sm:$0xff]
    %v1845 = vld [vmem:[%s0 + $0x30] sm:$0xf]
    %v1846 = vld [vmem:[%s65] sm:$0xf]
    %v1847 = vld [vmem:[%s65 + $0x4] sm:$0xf]
    %v1848 = vld [vmem:[%s65 + $0x8] sm:$0xf]
    %v1849 = vld [vmem:[%s65 + $0xc] sm:$0xf]
    %v1850 = vld [vmem:[%s0 + $0x2c] sm:$0xff]
    %v1855 = vunpack.c.l.b16 %v1846
    %v1856 = vunpack.c.l.b16 %v1847
    %v1857 = vunpack.c.l.b16 %v1848
    %v1858 = vunpack.c.l.b16 %v1849
    %v1859 = vpack.c.b16 %v1856, %v1855
    %v1860 = vpack.c.b16 %v1858, %v1857
    %v1862 = vunpack.c.l.b16 %v1850
    %v1863 = vunpack.c.h.b16 %v1850
    %v1864 = vpack.c.b16 %v1862, %v1862
    %v1865 = vpack.c.b16 %v1863, %v1863
    %v1867 = vsel %vm86, %v1859, 0
    %v1870 = vsel %vm86, %v1860, 0
    %v1873 = vsel %vm93, %v1864, 0
    %v1876 = vsel %vm93, %v1865, 0
    %1878 = vmatprep.subr.bf16.mxu0 0
    %1879 = vmatpush1.bf16.msra.mxu0 0
    %1880 = vmatprep.subr.bf16.mxu0 0
    %1881 = vmatpush1.bf16.msra.mxu0 0
    %1882 = vmatprep.subr.bf16.mxu0 0
    %1883 = vmatpush1.bf16.msra.mxu0 0
    %1884 = vmatprep.subr.bf16.mxu0 0
    %1885 = vmatpush1.bf16.msra.mxu0 0
    %1886 = vmatprep.subr.bf16.mxu0 0
    %1887 = vmatpush1.bf16.msra.mxu0 0
    %1888 = vmatprep.subr.bf16.mxu0 0
    %1889 = vmatpush1.bf16.msra.mxu0 0
    %1890 = vmatprep.subr.bf16.mxu0 0
    %1891 = vmatpush1.bf16.msra.mxu0 0
    %1892 = vmatprep.subr.bf16.mxu0 %v1876
    %1893 = vmatpush1.bf16.msra.mxu0 %v1873
    %1894 = vmatprep.subr.bf16.mxu0 0
    %1895 = vmatpush2.bf16.msra.mxu0 0
    %1896 = vmatprep.subr.bf16.mxu0 0
    %1897 = vmatpush2.bf16.msra.mxu0 0
    %1898 = vmatprep.subr.bf16.mxu0 0
    %1899 = vmatpush2.bf16.msra.mxu0 0
    %1900 = vmatprep.subr.bf16.mxu0 0
    %1901 = vmatpush2.bf16.msra.mxu0 0
    %1902 = vmatprep.subr.bf16.mxu0 0
    %1903 = vmatpush2.bf16.msra.mxu0 0
    %1904 = vmatprep.subr.bf16.mxu0 0
    %1905 = vmatpush2.bf16.msra.mxu0 0
    %1906 = vmatprep.subr.bf16.mxu0 0
    %1907 = vmatpush2.bf16.msra.mxu0 0
    %1908 = vmatprep.subr.bf16.mxu0 0
    %1909 = vmatpush2.bf16.msra.mxu0 0
    %1910 = vmatprep.mubr.bf16.mxu0 0
    %1911 = vmatmul.mubr.bf16.gmra.mxu0 %v1867
    %v1912 = vpop.f32.mrf.mxu0
    %v1913 = vadd.f32 0.0, %v1912
    %v1914 = vpop.f32.mrf.mxu0
    %v1915 = vadd.f32 0.0, %v1914
    %v1916 = vpop.f32.mrf.mxu0
    %v1917 = vadd.f32 0.0, %v1916
    %v1918 = vpop.f32.mrf.mxu0
    %v1919 = vadd.f32 0.0, %v1918
    %1920 = vmatprep.mubr.bf16.mxu0 0
    %1921 = vmatmul.mubr.bf16.gmra.mxu0 %v1870
    %v1922 = vpop.f32.mrf.mxu0
    %v1923 = vadd.f32 0.0, %v1922
    %v1924 = vpop.f32.mrf.mxu0
    %v1925 = vadd.f32 0.0, %v1924
    %v1926 = vpop.f32.mrf.mxu0
    %v1927 = vadd.f32 0.0, %v1926
    %v1928 = vpop.f32.mrf.mxu0
    %v1929 = vadd.f32 0.0, %v1928
    %1930 = vdwg.mxu0
    %v1935 = vunpack.c.l.b16 %v1840
    %v1936 = vunpack.c.l.b16 %v1841
    %v1937 = vunpack.c.l.b16 %v1842
    %v1938 = vunpack.c.l.b16 %v1843
    %v1939 = vpack.c.b16 %v1936, %v1935
    %v1940 = vpack.c.b16 %v1938, %v1937
    %v1943 = vunpack.c.l.b16 %v1844
    %v1944 = vunpack.c.h.b16 %v1844
    %v1945 = vunpack.c.l.b16 %v1845
    %v1946 = vpack.c.b16 %v1943, %v1943
    %v1947 = vpack.c.b16 %v1944, %v1944
    %v1948 = vpack.c.b16 %v1945, %v1945
    %1949 = vrot.lane.b32.xlu0 %v1946, 1
    %v1950 = vpop.permute.xlu0 %1949
    %1951 = vrot.lane.b32.xlu0 %v1947, 1
    %v1952 = vpop.permute.xlu0 %1951
    %1953 = vrot.lane.b32.xlu0 %v1948, 1
    %v1954 = vpop.permute.xlu0 %1953
    %v1955 = vsel %vm177, %v1950, %v1952
    %v1956 = vsel %vm177, %v1952, %v1954
    %v1958 = vsel %vm86, %v1939, 0
    %v1961 = vsel %vm86, %v1940, 0
    %v1964 = vsel %vm93, %v1955, 0
    %v1967 = vsel %vm93, %v1956, 0
    %1969 = vmatprep.subr.bf16.mxu0 0
    %1970 = vmatpush1.bf16.msra.mxu0 0
    %1971 = vmatprep.subr.bf16.mxu0 0
    %1972 = vmatpush1.bf16.msra.mxu0 0
    %1973 = vmatprep.subr.bf16.mxu0 0
    %1974 = vmatpush1.bf16.msra.mxu0 0
    %1975 = vmatprep.subr.bf16.mxu0 0
    %1976 = vmatpush1.bf16.msra.mxu0 0
    %1977 = vmatprep.subr.bf16.mxu0 0
    %1978 = vmatpush1.bf16.msra.mxu0 0
    %1979 = vmatprep.subr.bf16.mxu0 0
    %1980 = vmatpush1.bf16.msra.mxu0 0
    %1981 = vmatprep.subr.bf16.mxu0 0
    %1982 = vmatpush1.bf16.msra.mxu0 0
    %1983 = vmatprep.subr.bf16.mxu0 %v1967
    %1984 = vmatpush1.bf16.msra.mxu0 %v1964
    %1985 = vmatprep.subr.bf16.mxu0 0
    %1986 = vmatpush2.bf16.msra.mxu0 0
    %1987 = vmatprep.subr.bf16.mxu0 0
    %1988 = vmatpush2.bf16.msra.mxu0 0
    %1989 = vmatprep.subr.bf16.mxu0 0
    %1990 = vmatpush2.bf16.msra.mxu0 0
    %1991 = vmatprep.subr.bf16.mxu0 0
    %1992 = vmatpush2.bf16.msra.mxu0 0
    %1993 = vmatprep.subr.bf16.mxu0 0
    %1994 = vmatpush2.bf16.msra.mxu0 0
    %1995 = vmatprep.subr.bf16.mxu0 0
    %1996 = vmatpush2.bf16.msra.mxu0 0
    %1997 = vmatprep.subr.bf16.mxu0 0
    %1998 = vmatpush2.bf16.msra.mxu0 0
    %1999 = vmatprep.subr.bf16.mxu0 0
    %2000 = vmatpush2.bf16.msra.mxu0 0
    %2001 = vmatprep.mubr.bf16.mxu0 0
    %2002 = vmatmul.mubr.bf16.gmra.mxu0 %v1958
    %v2003 = vpop.f32.mrf.mxu0
    %v2004 = vadd.f32 %v1913, %v2003
    %v2005 = vpop.f32.mrf.mxu0
    %v2006 = vadd.f32 %v1915, %v2005
    %v2007 = vpop.f32.mrf.mxu0
    %v2008 = vadd.f32 %v1917, %v2007
    %v2009 = vpop.f32.mrf.mxu0
    %v2010 = vadd.f32 %v1919, %v2009
    %2011 = vmatprep.mubr.bf16.mxu0 0
    %2012 = vmatmul.mubr.bf16.gmra.mxu0 %v1961
    %v2013 = vpop.f32.mrf.mxu0
    %v2014 = vadd.f32 %v1923, %v2013
    %v2015 = vpop.f32.mrf.mxu0
    %v2016 = vadd.f32 %v1925, %v2015
    %v2017 = vpop.f32.mrf.mxu0
    %v2018 = vadd.f32 %v1927, %v2017
    %v2019 = vpop.f32.mrf.mxu0
    %v2020 = vadd.f32 %v1929, %v2019
    %2021 = vdwg.mxu0
    %v2022 = vld [vmem:[%s245] sm:$0xf]
    %v2023 = vld [vmem:[%s245 + $0x4] sm:$0xf]
    %v2024 = vld [vmem:[%s245 + $0x8] sm:$0xf]
    %v2025 = vld [vmem:[%s245 + $0xc] sm:$0xf]
    %v2026 = vld [vmem:[%s0 + $0x2c] sm:$0xff]
    %v2027 = vld [vmem:[%s0 + $0x34] sm:$0xf]
    %v2032 = vunpack.c.l.b16 %v2022
    %v2033 = vunpack.c.l.b16 %v2023
    %v2034 = vunpack.c.l.b16 %v2024
    %v2035 = vunpack.c.l.b16 %v2025
    %v2036 = vpack.c.b16 %v2033, %v2032
    %v2037 = vpack.c.b16 %v2035, %v2034
    %v2040 = vunpack.c.l.b16 %v2026
    %v2041 = vunpack.c.h.b16 %v2026
    %v2042 = vunpack.c.l.b16 %v2027
    %v2043 = vpack.c.b16 %v2040, %v2040
    %v2044 = vpack.c.b16 %v2041, %v2041
    %v2045 = vpack.c.b16 %v2042, %v2042
    %2046 = vrot.lane.b32.xlu0 %v2043, 127
    %v2047 = vpop.permute.xlu0 %2046
    %2048 = vrot.lane.b32.xlu0 %v2044, 127
    %v2049 = vpop.permute.xlu0 %2048
    %2050 = vrot.lane.b32.xlu0 %v2045, 127
    %v2051 = vpop.permute.xlu0 %2050
    %v2052 = vsel %vm276, %v2047, %v2049
    %v2053 = vsel %vm276, %v2049, %v2051
    %v2055 = vsel %vm86, %v2036, 0
    %v2058 = vsel %vm86, %v2037, 0
    %v2061 = vsel %vm93, %v2052, 0
    %v2064 = vsel %vm93, %v2053, 0
    %2066 = vmatprep.subr.bf16.mxu0 0
    %2067 = vmatpush1.bf16.msra.mxu0 0
    %2068 = vmatprep.subr.bf16.mxu0 0
    %2069 = vmatpush1.bf16.msra.mxu0 0
    %2070 = vmatprep.subr.bf16.mxu0 0
    %2071 = vmatpush1.bf16.msra.mxu0 0
    %2072 = vmatprep.subr.bf16.mxu0 0
    %2073 = vmatpush1.bf16.msra.mxu0 0
    %2074 = vmatprep.subr.bf16.mxu0 0
    %2075 = vmatpush1.bf16.msra.mxu0 0
    %2076 = vmatprep.subr.bf16.mxu0 0
    %2077 = vmatpush1.bf16.msra.mxu0 0
    %2078 = vmatprep.subr.bf16.mxu0 0
    %2079 = vmatpush1.bf16.msra.mxu0 0
    %2080 = vmatprep.subr.bf16.mxu0 %v2064
    %2081 = vmatpush1.bf16.msra.mxu0 %v2061
    %2082 = vmatprep.subr.bf16.mxu0 0
    %2083 = vmatpush2.bf16.msra.mxu0 0
    %2084 = vmatprep.subr.bf16.mxu0 0
    %2085 = vmatpush2.bf16.msra.mxu0 0
    %2086 = vmatprep.subr.bf16.mxu0 0
    %2087 = vmatpush2.bf16.msra.mxu0 0
    %2088 = vmatprep.subr.bf16.mxu0 0
    %2089 = vmatpush2.bf16.msra.mxu0 0
    %2090 = vmatprep.subr.bf16.mxu0 0
    %2091 = vmatpush2.bf16.msra.mxu0 0
    %2092 = vmatprep.subr.bf16.mxu0 0
    %2093 = vmatpush2.bf16.msra.mxu0 0
    %2094 = vmatprep.subr.bf16.mxu0 0
    %2095 = vmatpush2.bf16.msra.mxu0 0
    %2096 = vmatprep.subr.bf16.mxu0 0
    %2097 = vmatpush2.bf16.msra.mxu0 0
    %2098 = vmatprep.mubr.bf16.mxu0 0
    %2099 = vmatmul.mubr.bf16.gmra.mxu0 %v2055
    %v2100 = vpop.f32.mrf.mxu0
    %v2101 = vadd.f32 0.0, %v2100
    %v2102 = vpop.f32.mrf.mxu0
    %v2103 = vadd.f32 0.0, %v2102
    %v2104 = vpop.f32.mrf.mxu0
    %v2105 = vadd.f32 0.0, %v2104
    %v2106 = vpop.f32.mrf.mxu0
    %v2107 = vadd.f32 0.0, %v2106
    %2108 = vmatprep.mubr.bf16.mxu0 0
    %2109 = vmatmul.mubr.bf16.gmra.mxu0 %v2058
    %v2110 = vpop.f32.mrf.mxu0
    %v2111 = vadd.f32 0.0, %v2110
    %v2112 = vpop.f32.mrf.mxu0
    %v2113 = vadd.f32 0.0, %v2112
    %v2114 = vpop.f32.mrf.mxu0
    %v2115 = vadd.f32 0.0, %v2114
    %v2116 = vpop.f32.mrf.mxu0
    %v2117 = vadd.f32 0.0, %v2116
    %2118 = vdwg.mxu0
    %v2119 = vadd.f32 %v2004, %v2101
    %v2120 = vadd.f32 %v2006, %v2103
    %v2121 = vadd.f32 %v2008, %v2105
    %v2122 = vadd.f32 %v2010, %v2107
    %v2123 = vadd.f32 %v2014, %v2111
    %v2124 = vadd.f32 %v2016, %v2113
    %v2125 = vadd.f32 %v2018, %v2115
    %v2126 = vadd.f32 %v2020, %v2117
    %2127 = vst [vmem:[#allocation2 + $0x50] sm:$0xff] %v2119
    %2128 = vst [vmem:[#allocation2 + $0x58] sm:$0xff] %v2120
    %2129 = vst [vmem:[#allocation2 + $0xc0] sm:$0xff] %v2121
    %2130 = vst [vmem:[#allocation2 + $0xc8] sm:$0xff] %v2122
    %2131 = vst [vmem:[#allocation2 + $0x130] sm:$0xff] %v2123
    %2132 = vst [vmem:[#allocation2 + $0x138] sm:$0xff] %v2124
    %2133 = vst [vmem:[#allocation2 + $0x1a0] sm:$0xff] %v2125
    %2134 = vst [vmem:[#allocation2 + $0x1a8] sm:$0xff] %v2126
    %v2135 = vld [vmem:[%s7 + $0xa] sm:$0x3]
    %v2137 = vlaneseq
    %v2138 = vshrl.u32 %v2137, 7
    %v2139 = vsub.s32 0, %v2138
    %v2140 = vrot.slane %v2135, %v2139
    %v2141 = vlaneseq
    %v2142 = vshrl.u32 %v2141, 7
    %v2143 = vsub.s32 1, %v2142
    %v2144 = vrot.slane %v2135, %v2143
    %v2147 = vmul.f32 %v2119, %v2140
    %v2148 = vmul.f32 %v2120, %v2144
    %v2149 = vmul.f32 %v2121, %v2140
    %v2150 = vmul.f32 %v2122, %v2144
    %v2151 = vmul.f32 %v2123, %v2140
    %v2152 = vmul.f32 %v2124, %v2144
    %v2153 = vmul.f32 %v2125, %v2140
    %v2154 = vmul.f32 %v2126, %v2144
    %v2155 = vadd.f32 %v2147, %v2148
    %2156 = vadd.xlane.f32.xlu0 %v2155
    %v2157 = vpop.xlane.xlu0 %2156
    %v2158 = vadd.f32 %v2149, %v2150
    %2159 = vadd.xlane.f32.xlu0 %v2158
    %v2160 = vpop.xlane.xlu0 %2159
    %v2161 = vadd.f32 %v2151, %v2152
    %2162 = vadd.xlane.f32.xlu0 %v2161
    %v2163 = vpop.xlane.xlu0 %2162
    %v2164 = vadd.f32 %v2153, %v2154
    %2165 = vadd.xlane.f32.xlu0 %v2164
    %v2166 = vpop.xlane.xlu0 %2165
    %v2167 = vadd.f32 %v1812, %v2157
    %v2168 = vadd.f32 %v1813, %v2160
    %v2169 = vadd.f32 %v1814, %v2163
    %v2170 = vadd.f32 %v1815, %v2166
    %v2171 = vmul.f32 %v2147, %v2119
    %v2172 = vmul.f32 %v2148, %v2120
    %v2173 = vmul.f32 %v2149, %v2121
    %v2174 = vmul.f32 %v2150, %v2122
    %v2175 = vmul.f32 %v2151, %v2123
    %v2176 = vmul.f32 %v2152, %v2124
    %v2177 = vmul.f32 %v2153, %v2125
    %v2178 = vmul.f32 %v2154, %v2126
    %v2179 = vadd.f32 %v2171, %v2172
    %2180 = vadd.xlane.f32.xlu0 %v2179
    %v2181 = vpop.xlane.xlu0 %2180
    %v2182 = vadd.f32 %v2173, %v2174
    %2183 = vadd.xlane.f32.xlu0 %v2182
    %v2184 = vpop.xlane.xlu0 %2183
    %v2185 = vadd.f32 %v2175, %v2176
    %2186 = vadd.xlane.f32.xlu0 %v2185
    %v2187 = vpop.xlane.xlu0 %2186
    %v2188 = vadd.f32 %v2177, %v2178
    %2189 = vadd.xlane.f32.xlu0 %v2188
    %v2190 = vpop.xlane.xlu0 %2189
    %v2191 = vadd.f32 %v1836, %v2181
    %v2192 = vadd.f32 %v1837, %v2184
    %v2193 = vadd.f32 %v1838, %v2187
    %v2194 = vadd.f32 %v1839, %v2190
    %v2195 = vld [vmem:[%s1] sm:$0xf]
    %v2196 = vld [vmem:[%s1 + $0x4] sm:$0xf]
    %v2197 = vld [vmem:[%s1 + $0x8] sm:$0xf]
    %v2198 = vld [vmem:[%s1 + $0xc] sm:$0xf]
    %v2199 = vld [vmem:[%s0 + $0x30] sm:$0xff]
    %v2200 = vld [vmem:[%s0 + $0x38] sm:$0xf]
    %v2201 = vld [vmem:[%s65] sm:$0xf]
    %v2202 = vld [vmem:[%s65 + $0x4] sm:$0xf]
    %v2203 = vld [vmem:[%s65 + $0x8] sm:$0xf]
    %v2204 = vld [vmem:[%s65 + $0xc] sm:$0xf]
    %v2205 = vld [vmem:[%s0 + $0x34] sm:$0xff]
    %v2210 = vunpack.c.l.b16 %v2201
    %v2211 = vunpack.c.l.b16 %v2202
    %v2212 = vunpack.c.l.b16 %v2203
    %v2213 = vunpack.c.l.b16 %v2204
    %v2214 = vpack.c.b16 %v2211, %v2210
    %v2215 = vpack.c.b16 %v2213, %v2212
    %v2217 = vunpack.c.l.b16 %v2205
    %v2218 = vunpack.c.h.b16 %v2205
    %v2219 = vpack.c.b16 %v2217, %v2217
    %v2220 = vpack.c.b16 %v2218, %v2218
    %v2222 = vsel %vm86, %v2214, 0
    %v2225 = vsel %vm86, %v2215, 0
    %v2228 = vsel %vm93, %v2219, 0
    %v2231 = vsel %vm93, %v2220, 0
    %2233 = vmatprep.subr.bf16.mxu0 0
    %2234 = vmatpush1.bf16.msra.mxu0 0
    %2235 = vmatprep.subr.bf16.mxu0 0
    %2236 = vmatpush1.bf16.msra.mxu0 0
    %2237 = vmatprep.subr.bf16.mxu0 0
    %2238 = vmatpush1.bf16.msra.mxu0 0
    %2239 = vmatprep.subr.bf16.mxu0 0
    %2240 = vmatpush1.bf16.msra.mxu0 0
    %2241 = vmatprep.subr.bf16.mxu0 0
    %2242 = vmatpush1.bf16.msra.mxu0 0
    %2243 = vmatprep.subr.bf16.mxu0 0
    %2244 = vmatpush1.bf16.msra.mxu0 0
    %2245 = vmatprep.subr.bf16.mxu0 0
    %2246 = vmatpush1.bf16.msra.mxu0 0
    %2247 = vmatprep.subr.bf16.mxu0 %v2231
    %2248 = vmatpush1.bf16.msra.mxu0 %v2228
    %2249 = vmatprep.subr.bf16.mxu0 0
    %2250 = vmatpush2.bf16.msra.mxu0 0
    %2251 = vmatprep.subr.bf16.mxu0 0
    %2252 = vmatpush2.bf16.msra.mxu0 0
    %2253 = vmatprep.subr.bf16.mxu0 0
    %2254 = vmatpush2.bf16.msra.mxu0 0
    %2255 = vmatprep.subr.bf16.mxu0 0
    %2256 = vmatpush2.bf16.msra.mxu0 0
    %2257 = vmatprep.subr.bf16.mxu0 0
    %2258 = vmatpush2.bf16.msra.mxu0 0
    %2259 = vmatprep.subr.bf16.mxu0 0
    %2260 = vmatpush2.bf16.msra.mxu0 0
    %2261 = vmatprep.subr.bf16.mxu0 0
    %2262 = vmatpush2.bf16.msra.mxu0 0
    %2263 = vmatprep.subr.bf16.mxu0 0
    %2264 = vmatpush2.bf16.msra.mxu0 0
    %2265 = vmatprep.mubr.bf16.mxu0 0
    %2266 = vmatmul.mubr.bf16.gmra.mxu0 %v2222
    %v2267 = vpop.f32.mrf.mxu0
    %v2268 = vadd.f32 0.0, %v2267
    %v2269 = vpop.f32.mrf.mxu0
    %v2270 = vadd.f32 0.0, %v2269
    %v2271 = vpop.f32.mrf.mxu0
    %v2272 = vadd.f32 0.0, %v2271
    %v2273 = vpop.f32.mrf.mxu0
    %v2274 = vadd.f32 0.0, %v2273
    %2275 = vmatprep.mubr.bf16.mxu0 0
    %2276 = vmatmul.mubr.bf16.gmra.mxu0 %v2225
    %v2277 = vpop.f32.mrf.mxu0
    %v2278 = vadd.f32 0.0, %v2277
    %v2279 = vpop.f32.mrf.mxu0
    %v2280 = vadd.f32 0.0, %v2279
    %v2281 = vpop.f32.mrf.mxu0
    %v2282 = vadd.f32 0.0, %v2281
    %v2283 = vpop.f32.mrf.mxu0
    %v2284 = vadd.f32 0.0, %v2283
    %2285 = vdwg.mxu0
    %v2290 = vunpack.c.l.b16 %v2195
    %v2291 = vunpack.c.l.b16 %v2196
    %v2292 = vunpack.c.l.b16 %v2197
    %v2293 = vunpack.c.l.b16 %v2198
    %v2294 = vpack.c.b16 %v2291, %v2290
    %v2295 = vpack.c.b16 %v2293, %v2292
    %v2298 = vunpack.c.l.b16 %v2199
    %v2299 = vunpack.c.h.b16 %v2199
    %v2300 = vunpack.c.l.b16 %v2200
    %v2301 = vpack.c.b16 %v2298, %v2298
    %v2302 = vpack.c.b16 %v2299, %v2299
    %v2303 = vpack.c.b16 %v2300, %v2300
    %2304 = vrot.lane.b32.xlu0 %v2301, 1
    %v2305 = vpop.permute.xlu0 %2304
    %2306 = vrot.lane.b32.xlu0 %v2302, 1
    %v2307 = vpop.permute.xlu0 %2306
    %2308 = vrot.lane.b32.xlu0 %v2303, 1
    %v2309 = vpop.permute.xlu0 %2308
    %v2310 = vsel %vm177, %v2305, %v2307
    %v2311 = vsel %vm177, %v2307, %v2309
    %v2313 = vsel %vm86, %v2294, 0
    %v2316 = vsel %vm86, %v2295, 0
    %v2319 = vsel %vm93, %v2310, 0
    %v2322 = vsel %vm93, %v2311, 0
    %2324 = vmatprep.subr.bf16.mxu0 0
    %2325 = vmatpush1.bf16.msra.mxu0 0
    %2326 = vmatprep.subr.bf16.mxu0 0
    %2327 = vmatpush1.bf16.msra.mxu0 0
    %2328 = vmatprep.subr.bf16.mxu0 0
    %2329 = vmatpush1.bf16.msra.mxu0 0
    %2330 = vmatprep.subr.bf16.mxu0 0
    %2331 = vmatpush1.bf16.msra.mxu0 0
    %2332 = vmatprep.subr.bf16.mxu0 0
    %2333 = vmatpush1.bf16.msra.mxu0 0
    %2334 = vmatprep.subr.bf16.mxu0 0
    %2335 = vmatpush1.bf16.msra.mxu0 0
    %2336 = vmatprep.subr.bf16.mxu0 0
    %2337 = vmatpush1.bf16.msra.mxu0 0
    %2338 = vmatprep.subr.bf16.mxu0 %v2322
    %2339 = vmatpush1.bf16.msra.mxu0 %v2319
    %2340 = vmatprep.subr.bf16.mxu0 0
    %2341 = vmatpush2.bf16.msra.mxu0 0
    %2342 = vmatprep.subr.bf16.mxu0 0
    %2343 = vmatpush2.bf16.msra.mxu0 0
    %2344 = vmatprep.subr.bf16.mxu0 0
    %2345 = vmatpush2.bf16.msra.mxu0 0
    %2346 = vmatprep.subr.bf16.mxu0 0
    %2347 = vmatpush2.bf16.msra.mxu0 0
    %2348 = vmatprep.subr.bf16.mxu0 0
    %2349 = vmatpush2.bf16.msra.mxu0 0
    %2350 = vmatprep.subr.bf16.mxu0 0
    %2351 = vmatpush2.bf16.msra.mxu0 0
    %2352 = vmatprep.subr.bf16.mxu0 0
    %2353 = vmatpush2.bf16.msra.mxu0 0
    %2354 = vmatprep.subr.bf16.mxu0 0
    %2355 = vmatpush2.bf16.msra.mxu0 0
    %2356 = vmatprep.mubr.bf16.mxu0 0
    %2357 = vmatmul.mubr.bf16.gmra.mxu0 %v2313
    %v2358 = vpop.f32.mrf.mxu0
    %v2359 = vadd.f32 %v2268, %v2358
    %v2360 = vpop.f32.mrf.mxu0
    %v2361 = vadd.f32 %v2270, %v2360
    %v2362 = vpop.f32.mrf.mxu0
    %v2363 = vadd.f32 %v2272, %v2362
    %v2364 = vpop.f32.mrf.mxu0
    %v2365 = vadd.f32 %v2274, %v2364
    %2366 = vmatprep.mubr.bf16.mxu0 0
    %2367 = vmatmul.mubr.bf16.gmra.mxu0 %v2316
    %v2368 = vpop.f32.mrf.mxu0
    %v2369 = vadd.f32 %v2278, %v2368
    %v2370 = vpop.f32.mrf.mxu0
    %v2371 = vadd.f32 %v2280, %v2370
    %v2372 = vpop.f32.mrf.mxu0
    %v2373 = vadd.f32 %v2282, %v2372
    %v2374 = vpop.f32.mrf.mxu0
    %v2375 = vadd.f32 %v2284, %v2374
    %2376 = vdwg.mxu0
    %v2377 = vld [vmem:[%s245] sm:$0xf]
    %v2378 = vld [vmem:[%s245 + $0x4] sm:$0xf]
    %v2379 = vld [vmem:[%s245 + $0x8] sm:$0xf]
    %v2380 = vld [vmem:[%s245 + $0xc] sm:$0xf]
    %v2381 = vld [vmem:[%s0 + $0x34] sm:$0xff]
    %v2382 = vld [vmem:[%s0 + $0x3c] sm:$0xf]
    %v2387 = vunpack.c.l.b16 %v2377
    %v2388 = vunpack.c.l.b16 %v2378
    %v2389 = vunpack.c.l.b16 %v2379
    %v2390 = vunpack.c.l.b16 %v2380
    %v2391 = vpack.c.b16 %v2388, %v2387
    %v2392 = vpack.c.b16 %v2390, %v2389
    %v2395 = vunpack.c.l.b16 %v2381
    %v2396 = vunpack.c.h.b16 %v2381
    %v2397 = vunpack.c.l.b16 %v2382
    %v2398 = vpack.c.b16 %v2395, %v2395
    %v2399 = vpack.c.b16 %v2396, %v2396
    %v2400 = vpack.c.b16 %v2397, %v2397
    %2401 = vrot.lane.b32.xlu0 %v2398, 127
    %v2402 = vpop.permute.xlu0 %2401
    %2403 = vrot.lane.b32.xlu0 %v2399, 127
    %v2404 = vpop.permute.xlu0 %2403
    %2405 = vrot.lane.b32.xlu0 %v2400, 127
    %v2406 = vpop.permute.xlu0 %2405
    %v2407 = vsel %vm276, %v2402, %v2404
    %v2408 = vsel %vm276, %v2404, %v2406
    %v2410 = vsel %vm86, %v2391, 0
    %v2413 = vsel %vm86, %v2392, 0
    %v2416 = vsel %vm93, %v2407, 0
    %v2419 = vsel %vm93, %v2408, 0
    %2421 = vmatprep.subr.bf16.mxu0 0
    %2422 = vmatpush1.bf16.msra.mxu0 0
    %2423 = vmatprep.subr.bf16.mxu0 0
    %2424 = vmatpush1.bf16.msra.mxu0 0
    %2425 = vmatprep.subr.bf16.mxu0 0
    %2426 = vmatpush1.bf16.msra.mxu0 0
    %2427 = vmatprep.subr.bf16.mxu0 0
    %2428 = vmatpush1.bf16.msra.mxu0 0
    %2429 = vmatprep.subr.bf16.mxu0 0
    %2430 = vmatpush1.bf16.msra.mxu0 0
    %2431 = vmatprep.subr.bf16.mxu0 0
    %2432 = vmatpush1.bf16.msra.mxu0 0
    %2433 = vmatprep.subr.bf16.mxu0 0
    %2434 = vmatpush1.bf16.msra.mxu0 0
    %2435 = vmatprep.subr.bf16.mxu0 %v2419
    %2436 = vmatpush1.bf16.msra.mxu0 %v2416
    %2437 = vmatprep.subr.bf16.mxu0 0
    %2438 = vmatpush2.bf16.msra.mxu0 0
    %2439 = vmatprep.subr.bf16.mxu0 0
    %2440 = vmatpush2.bf16.msra.mxu0 0
    %2441 = vmatprep.subr.bf16.mxu0 0
    %2442 = vmatpush2.bf16.msra.mxu0 0
    %2443 = vmatprep.subr.bf16.mxu0 0
    %2444 = vmatpush2.bf16.msra.mxu0 0
    %2445 = vmatprep.subr.bf16.mxu0 0
    %2446 = vmatpush2.bf16.msra.mxu0 0
    %2447 = vmatprep.subr.bf16.mxu0 0
    %2448 = vmatpush2.bf16.msra.mxu0 0
    %2449 = vmatprep.subr.bf16.mxu0 0
    %2450 = vmatpush2.bf16.msra.mxu0 0
    %2451 = vmatprep.subr.bf16.mxu0 0
    %2452 = vmatpush2.bf16.msra.mxu0 0
    %2453 = vmatprep.mubr.bf16.mxu0 0
    %2454 = vmatmul.mubr.bf16.gmra.mxu0 %v2410
    %v2455 = vpop.f32.mrf.mxu0
    %v2456 = vadd.f32 0.0, %v2455
    %v2457 = vpop.f32.mrf.mxu0
    %v2458 = vadd.f32 0.0, %v2457
    %v2459 = vpop.f32.mrf.mxu0
    %v2460 = vadd.f32 0.0, %v2459
    %v2461 = vpop.f32.mrf.mxu0
    %v2462 = vadd.f32 0.0, %v2461
    %2463 = vmatprep.mubr.bf16.mxu0 0
    %2464 = vmatmul.mubr.bf16.gmra.mxu0 %v2413
    %v2465 = vpop.f32.mrf.mxu0
    %v2466 = vadd.f32 0.0, %v2465
    %v2467 = vpop.f32.mrf.mxu0
    %v2468 = vadd.f32 0.0, %v2467
    %v2469 = vpop.f32.mrf.mxu0
    %v2470 = vadd.f32 0.0, %v2469
    %v2471 = vpop.f32.mrf.mxu0
    %v2472 = vadd.f32 0.0, %v2471
    %2473 = vdwg.mxu0
    %v2474 = vadd.f32 %v2359, %v2456
    %v2475 = vadd.f32 %v2361, %v2458
    %v2476 = vadd.f32 %v2363, %v2460
    %v2477 = vadd.f32 %v2365, %v2462
    %v2478 = vadd.f32 %v2369, %v2466
    %v2479 = vadd.f32 %v2371, %v2468
    %v2480 = vadd.f32 %v2373, %v2470
    %v2481 = vadd.f32 %v2375, %v2472
    %2482 = vst [vmem:[#allocation2 + $0x60] sm:$0xff] %v2474
    %2483 = vst [vmem:[#allocation2 + $0x68] sm:$0xff] %v2475
    %2484 = vst [vmem:[#allocation2 + $0xd0] sm:$0xff] %v2476
    %2485 = vst [vmem:[#allocation2 + $0xd8] sm:$0xff] %v2477
    %2486 = vst [vmem:[#allocation2 + $0x140] sm:$0xff] %v2478
    %2487 = vst [vmem:[#allocation2 + $0x148] sm:$0xff] %v2479
    %2488 = vst [vmem:[#allocation2 + $0x1b0] sm:$0xff] %v2480
    %2489 = vst [vmem:[#allocation2 + $0x1b8] sm:$0xff] %v2481
    %v2490 = vld [vmem:[%s7 + $0xc] sm:$0x3]
    %v2492 = vlaneseq
    %v2493 = vshrl.u32 %v2492, 7
    %v2494 = vsub.s32 0, %v2493
    %v2495 = vrot.slane %v2490, %v2494
    %v2496 = vlaneseq
    %v2497 = vshrl.u32 %v2496, 7
    %v2498 = vsub.s32 1, %v2497
    %v2499 = vrot.slane %v2490, %v2498
    %v2502 = vmul.f32 %v2474, %v2495
    %v2503 = vmul.f32 %v2475, %v2499
    %v2504 = vmul.f32 %v2476, %v2495
    %v2505 = vmul.f32 %v2477, %v2499
    %v2506 = vmul.f32 %v2478, %v2495
    %v2507 = vmul.f32 %v2479, %v2499
    %v2508 = vmul.f32 %v2480, %v2495
    %v2509 = vmul.f32 %v2481, %v2499
    %v2510 = vadd.f32 %v2502, %v2503
    %2511 = vadd.xlane.f32.xlu0 %v2510
    %v2512 = vpop.xlane.xlu0 %2511
    %v2513 = vadd.f32 %v2504, %v2505
    %2514 = vadd.xlane.f32.xlu0 %v2513
    %v2515 = vpop.xlane.xlu0 %2514
    %v2516 = vadd.f32 %v2506, %v2507
    %2517 = vadd.xlane.f32.xlu0 %v2516
    %v2518 = vpop.xlane.xlu0 %2517
    %v2519 = vadd.f32 %v2508, %v2509
    %2520 = vadd.xlane.f32.xlu0 %v2519
    %v2521 = vpop.xlane.xlu0 %2520
    %v2522 = vadd.f32 %v2167, %v2512
    %v2523 = vadd.f32 %v2168, %v2515
    %v2524 = vadd.f32 %v2169, %v2518
    %v2525 = vadd.f32 %v2170, %v2521
    %v2526 = vmul.f32 %v2502, %v2474
    %v2527 = vmul.f32 %v2503, %v2475
    %v2528 = vmul.f32 %v2504, %v2476
    %v2529 = vmul.f32 %v2505, %v2477
    %v2530 = vmul.f32 %v2506, %v2478
    %v2531 = vmul.f32 %v2507, %v2479
    %v2532 = vmul.f32 %v2508, %v2480
    %v2533 = vmul.f32 %v2509, %v2481
    %v2534 = vadd.f32 %v2526, %v2527
    %2535 = vadd.xlane.f32.xlu0 %v2534
    %v2536 = vpop.xlane.xlu0 %2535
    %v2537 = vadd.f32 %v2528, %v2529
    %2538 = vadd.xlane.f32.xlu0 %v2537
    %v2539 = vpop.xlane.xlu0 %2538
    %v2540 = vadd.f32 %v2530, %v2531
    %2541 = vadd.xlane.f32.xlu0 %v2540
    %v2542 = vpop.xlane.xlu0 %2541
    %v2543 = vadd.f32 %v2532, %v2533
    %2544 = vadd.xlane.f32.xlu0 %v2543
    %v2545 = vpop.xlane.xlu0 %2544
    %v2546 = vadd.f32 %v2191, %v2536
    %v2547 = vadd.f32 %v2192, %v2539
    %v2548 = vadd.f32 %v2193, %v2542
    %v2549 = vadd.f32 %v2194, %v2545
    %v2550 = vld [vmem:[%s3] sm:$0xff]
    %v2551 = vld [vmem:[%s3 + $0x8] sm:$0xff]
    %v2552 = vld [vmem:[%s3 + $0x10] sm:$0xff]
    %v2553 = vld [vmem:[%s3 + $0x18] sm:$0xff]
    %v2554 = vld [vmem:[%s4] sm:$0xff]
    %v2555 = vld [vmem:[%s4 + $0x8] sm:$0xff]
    %v2556 = vld [vmem:[%s4 + $0x10] sm:$0xff]
    %v2557 = vld [vmem:[%s4 + $0x18] sm:$0xff]
    %v2558 = vmul.f32 %v2522, 0.000625
    %v2559 = vmul.f32 %v2523, 0.000625
    %v2560 = vmul.f32 %v2524, 0.000625
    %v2561 = vmul.f32 %v2525, 0.000625
    %v2562 = vmul.f32 %v2546, 0.000625
    %v2563 = vmul.f32 %v2547, 0.000625
    %v2564 = vmul.f32 %v2548, 0.000625
    %v2565 = vmul.f32 %v2549, 0.000625
    %v2566 = vmul.f32 %v2558, %v2558
    %v2567 = vmul.f32 %v2559, %v2559
    %v2568 = vmul.f32 %v2560, %v2560
    %v2569 = vmul.f32 %v2561, %v2561
    %v2570 = vsub.f32 %v2562, %v2566
    %v2571 = vsub.f32 %v2563, %v2567
    %v2572 = vsub.f32 %v2564, %v2568
    %v2573 = vsub.f32 %v2565, %v2569
    %v2574 = vmax.f32 %v2570, 0.0
    %v2575 = vmax.f32 %v2571, 0.0
    %v2576 = vmax.f32 %v2572, 0.0
    %v2577 = vmax.f32 %v2573, 0.0
    %v2578 = vadd.f32 %v2574, 1e-05
    %v2579 = vadd.f32 %v2575, 1e-05
    %v2580 = vadd.f32 %v2576, 1e-05
    %v2581 = vadd.f32 %v2577, 1e-05
    %v2582 = vrsqrt.pop %v2578
    %v2583 = vrsqrt.pop %v2579
    %v2584 = vrsqrt.pop %v2580
    %v2585 = vrsqrt.pop %v2581
    %v2586 = vmul.f32 %v2550, %v2582
    %v2587 = vmul.f32 %v2551, %v2583
    %v2588 = vmul.f32 %v2552, %v2584
    %v2589 = vmul.f32 %v2553, %v2585
    %v2590 = vmul.f32 %v2558, %v2586
    %v2591 = vmul.f32 %v2559, %v2587
    %v2592 = vmul.f32 %v2560, %v2588
    %v2593 = vmul.f32 %v2561, %v2589
    %v2594 = vsub.f32 %v2554, %v2590
    %v2595 = vsub.f32 %v2555, %v2591
    %v2596 = vsub.f32 %v2556, %v2592
    %v2597 = vsub.f32 %v2557, %v2593
    %v2598 = vld [vmem:[#allocation2] sm:$0xff]
    %v2599 = vld [vmem:[#allocation2 + $0x8] sm:$0xff]
    %v2600 = vld [vmem:[#allocation2 + $0x70] sm:$0xff]
    %v2601 = vld [vmem:[#allocation2 + $0x78] sm:$0xff]
    %v2602 = vld [vmem:[#allocation2 + $0xe0] sm:$0xff]
    %v2603 = vld [vmem:[#allocation2 + $0xe8] sm:$0xff]
    %v2604 = vld [vmem:[#allocation2 + $0x150] sm:$0xff]
    %v2605 = vld [vmem:[#allocation2 + $0x158] sm:$0xff]
    %2607 = vset.pattern.permute.xlu0 0
    %2608 = vperm.xlu0 %2607, %v2586
    %v2609 = vpop.permute.xlu0 %2608
    %2612 = vset.pattern.permute.xlu0 0
    %2613 = vperm.xlu0 %2612, %v2587
    %v2614 = vpop.permute.xlu0 %2613
    %2617 = vset.pattern.permute.xlu0 0
    %2618 = vperm.xlu0 %2617, %v2588
    %v2619 = vpop.permute.xlu0 %2618
    %2622 = vset.pattern.permute.xlu0 0
    %2623 = vperm.xlu0 %2622, %v2589
    %v2624 = vpop.permute.xlu0 %2623
    %v2626 = vmul.f32 %v2598, %v2609
    %v2627 = vmul.f32 %v2599, %v2609
    %v2628 = vmul.f32 %v2600, %v2614
    %v2629 = vmul.f32 %v2601, %v2614
    %v2630 = vmul.f32 %v2602, %v2619
    %v2631 = vmul.f32 %v2603, %v2619
    %v2632 = vmul.f32 %v2604, %v2624
    %v2633 = vmul.f32 %v2605, %v2624
    %2635 = vset.pattern.permute.xlu0 0
    %2636 = vperm.xlu0 %2635, %v2594
    %v2637 = vpop.permute.xlu0 %2636
    %2640 = vset.pattern.permute.xlu0 0
    %2641 = vperm.xlu0 %2640, %v2595
    %v2642 = vpop.permute.xlu0 %2641
    %2645 = vset.pattern.permute.xlu0 0
    %2646 = vperm.xlu0 %2645, %v2596
    %v2647 = vpop.permute.xlu0 %2646
    %2650 = vset.pattern.permute.xlu0 0
    %2651 = vperm.xlu0 %2650, %v2597
    %v2652 = vpop.permute.xlu0 %2651
    %v2654 = vadd.f32 %v2626, %v2637
    %v2655 = vadd.f32 %v2627, %v2637
    %v2656 = vadd.f32 %v2628, %v2642
    %v2657 = vadd.f32 %v2629, %v2642
    %v2658 = vadd.f32 %v2630, %v2647
    %v2659 = vadd.f32 %v2631, %v2647
    %v2660 = vadd.f32 %v2632, %v2652
    %v2661 = vadd.f32 %v2633, %v2652
    %v2662 = vmax.f32 %v2654, 0.0
    %v2663 = vmax.f32 %v2655, 0.0
    %v2664 = vmax.f32 %v2656, 0.0
    %v2665 = vmax.f32 %v2657, 0.0
    %v2666 = vmax.f32 %v2658, 0.0
    %v2667 = vmax.f32 %v2659, 0.0
    %v2668 = vmax.f32 %v2660, 0.0
    %v2669 = vmax.f32 %v2661, 0.0
    %v2670 = vld [vmem:[%s7] sm:$0x3]
    %v2672 = vlaneseq
    %v2673 = vshrl.u32 %v2672, 7
    %v2674 = vsub.s32 0, %v2673
    %v2675 = vrot.slane %v2670, %v2674
    %v2676 = vlaneseq
    %v2677 = vshrl.u32 %v2676, 7
    %v2678 = vsub.s32 1, %v2677
    %v2679 = vrot.slane %v2670, %v2678
    %v2682 = vmul.f32 %v2662, %v2675
    %v2683 = vmul.f32 %v2663, %v2679
    %v2684 = vmul.f32 %v2664, %v2675
    %v2685 = vmul.f32 %v2665, %v2679
    %v2686 = vmul.f32 %v2666, %v2675
    %v2687 = vmul.f32 %v2667, %v2679
    %v2688 = vmul.f32 %v2668, %v2675
    %v2689 = vmul.f32 %v2669, %v2679
    %v2690 = vpack.c.bf16 %v2684, %v2682
    %v2691 = vpack.c.bf16 %v2685, %v2683
    %v2692 = vpack.c.bf16 %v2688, %v2686
    %v2693 = vpack.c.bf16 %v2689, %v2687
    %v2698 = vunpack.c.l.b16 %v2690
    %v2699 = vunpack.c.l.b16 %v2691
    %v2700 = vunpack.c.h.b16 %v2690
    %v2701 = vunpack.c.h.b16 %v2691
    %v2702 = vunpack.c.l.b16 %v2692
    %v2703 = vunpack.c.l.b16 %v2693
    %v2704 = vunpack.c.h.b16 %v2692
    %v2705 = vunpack.c.h.b16 %v2693
    %v2706 = vpack.c.b16 %v2699, %v2698
    %v2707 = vpack.c.b16 %v2701, %v2700
    %v2708 = vpack.c.b16 %v2703, %v2702
    %v2709 = vpack.c.b16 %v2705, %v2704
    %2714 = vst [vmem:[#allocation3 + $0x4] sm:$0xff] %v2706
    %2715 = vst [vmem:[#allocation3 + $0x44] sm:$0xff] %v2707
    %2716 = vst [vmem:[#allocation3 + $0x84] sm:$0xff] %v2708
    %2717 = vst [vmem:[#allocation3 + $0xc4] sm:$0xff] %v2709
    %v2718 = vld [vmem:[#allocation2 + $0x10] sm:$0xff]
    %v2719 = vld [vmem:[#allocation2 + $0x18] sm:$0xff]
    %v2720 = vld [vmem:[#allocation2 + $0x80] sm:$0xff]
    %v2721 = vld [vmem:[#allocation2 + $0x88] sm:$0xff]
    %v2722 = vld [vmem:[#allocation2 + $0xf0] sm:$0xff]
    %v2723 = vld [vmem:[#allocation2 + $0xf8] sm:$0xff]
    %v2724 = vld [vmem:[#allocation2 + $0x160] sm:$0xff]
    %v2725 = vld [vmem:[#allocation2 + $0x168] sm:$0xff]
    %v2726 = vmul.f32 %v2718, %v2609
    %v2727 = vmul.f32 %v2719, %v2609
    %v2728 = vmul.f32 %v2720, %v2614
    %v2729 = vmul.f32 %v2721, %v2614
    %v2730 = vmul.f32 %v2722, %v2619
    %v2731 = vmul.f32 %v2723, %v2619
    %v2732 = vmul.f32 %v2724, %v2624
    %v2733 = vmul.f32 %v2725, %v2624
    %v2734 = vadd.f32 %v2726, %v2637
    %v2735 = vadd.f32 %v2727, %v2637
    %v2736 = vadd.f32 %v2728, %v2642
    %v2737 = vadd.f32 %v2729, %v2642
    %v2738 = vadd.f32 %v2730, %v2647
    %v2739 = vadd.f32 %v2731, %v2647
    %v2740 = vadd.f32 %v2732, %v2652
    %v2741 = vadd.f32 %v2733, %v2652
    %v2742 = vmax.f32 %v2734, 0.0
    %v2743 = vmax.f32 %v2735, 0.0
    %v2744 = vmax.f32 %v2736, 0.0
    %v2745 = vmax.f32 %v2737, 0.0
    %v2746 = vmax.f32 %v2738, 0.0
    %v2747 = vmax.f32 %v2739, 0.0
    %v2748 = vmax.f32 %v2740, 0.0
    %v2749 = vmax.f32 %v2741, 0.0
    %v2750 = vld [vmem:[%s7 + $0x2] sm:$0x3]
    %v2752 = vlaneseq
    %v2753 = vshrl.u32 %v2752, 7
    %v2754 = vsub.s32 0, %v2753
    %v2755 = vrot.slane %v2750, %v2754
    %v2756 = vlaneseq
    %v2757 = vshrl.u32 %v2756, 7
    %v2758 = vsub.s32 1, %v2757
    %v2759 = vrot.slane %v2750, %v2758
    %v2762 = vmul.f32 %v2742, %v2755
    %v2763 = vmul.f32 %v2743, %v2759
    %v2764 = vmul.f32 %v2744, %v2755
    %v2765 = vmul.f32 %v2745, %v2759
    %v2766 = vmul.f32 %v2746, %v2755
    %v2767 = vmul.f32 %v2747, %v2759
    %v2768 = vmul.f32 %v2748, %v2755
    %v2769 = vmul.f32 %v2749, %v2759
    %v2770 = vpack.c.bf16 %v2764, %v2762
    %v2771 = vpack.c.bf16 %v2765, %v2763
    %v2772 = vpack.c.bf16 %v2768, %v2766
    %v2773 = vpack.c.bf16 %v2769, %v2767
    %v2778 = vunpack.c.l.b16 %v2770
    %v2779 = vunpack.c.l.b16 %v2771
    %v2780 = vunpack.c.h.b16 %v2770
    %v2781 = vunpack.c.h.b16 %v2771
    %v2782 = vunpack.c.l.b16 %v2772
    %v2783 = vunpack.c.l.b16 %v2773
    %v2784 = vunpack.c.h.b16 %v2772
    %v2785 = vunpack.c.h.b16 %v2773
    %v2786 = vpack.c.b16 %v2779, %v2778
    %v2787 = vpack.c.b16 %v2781, %v2780
    %v2788 = vpack.c.b16 %v2783, %v2782
    %v2789 = vpack.c.b16 %v2785, %v2784
    %2794 = vst [vmem:[#allocation3 + $0xc] sm:$0xff] %v2786
    %2795 = vst [vmem:[#allocation3 + $0x4c] sm:$0xff] %v2787
    %2796 = vst [vmem:[#allocation3 + $0x8c] sm:$0xff] %v2788
    %2797 = vst [vmem:[#allocation3 + $0xcc] sm:$0xff] %v2789
    %v2798 = vld [vmem:[#allocation2 + $0x20] sm:$0xff]
    %v2799 = vld [vmem:[#allocation2 + $0x28] sm:$0xff]
    %v2800 = vld [vmem:[#allocation2 + $0x90] sm:$0xff]
    %v2801 = vld [vmem:[#allocation2 + $0x98] sm:$0xff]
    %v2802 = vld [vmem:[#allocation2 + $0x100] sm:$0xff]
    %v2803 = vld [vmem:[#allocation2 + $0x108] sm:$0xff]
    %v2804 = vld [vmem:[#allocation2 + $0x170] sm:$0xff]
    %v2805 = vld [vmem:[#allocation2 + $0x178] sm:$0xff]
    %v2806 = vmul.f32 %v2798, %v2609
    %v2807 = vmul.f32 %v2799, %v2609
    %v2808 = vmul.f32 %v2800, %v2614
    %v2809 = vmul.f32 %v2801, %v2614
    %v2810 = vmul.f32 %v2802, %v2619
    %v2811 = vmul.f32 %v2803, %v2619
    %v2812 = vmul.f32 %v2804, %v2624
    %v2813 = vmul.f32 %v2805, %v2624
    %v2814 = vadd.f32 %v2806, %v2637
    %v2815 = vadd.f32 %v2807, %v2637
    %v2816 = vadd.f32 %v2808, %v2642
    %v2817 = vadd.f32 %v2809, %v2642
    %v2818 = vadd.f32 %v2810, %v2647
    %v2819 = vadd.f32 %v2811, %v2647
    %v2820 = vadd.f32 %v2812, %v2652
    %v2821 = vadd.f32 %v2813, %v2652
    %v2822 = vmax.f32 %v2814, 0.0
    %v2823 = vmax.f32 %v2815, 0.0
    %v2824 = vmax.f32 %v2816, 0.0
    %v2825 = vmax.f32 %v2817, 0.0
    %v2826 = vmax.f32 %v2818, 0.0
    %v2827 = vmax.f32 %v2819, 0.0
    %v2828 = vmax.f32 %v2820, 0.0
    %v2829 = vmax.f32 %v2821, 0.0
    %v2830 = vld [vmem:[%s7 + $0x4] sm:$0x3]
    %v2832 = vlaneseq
    %v2833 = vshrl.u32 %v2832, 7
    %v2834 = vsub.s32 0, %v2833
    %v2835 = vrot.slane %v2830, %v2834
    %v2836 = vlaneseq
    %v2837 = vshrl.u32 %v2836, 7
    %v2838 = vsub.s32 1, %v2837
    %v2839 = vrot.slane %v2830, %v2838
    %v2842 = vmul.f32 %v2822, %v2835
    %v2843 = vmul.f32 %v2823, %v2839
    %v2844 = vmul.f32 %v2824, %v2835
    %v2845 = vmul.f32 %v2825, %v2839
    %v2846 = vmul.f32 %v2826, %v2835
    %v2847 = vmul.f32 %v2827, %v2839
    %v2848 = vmul.f32 %v2828, %v2835
    %v2849 = vmul.f32 %v2829, %v2839
    %v2850 = vpack.c.bf16 %v2844, %v2842
    %v2851 = vpack.c.bf16 %v2845, %v2843
    %v2852 = vpack.c.bf16 %v2848, %v2846
    %v2853 = vpack.c.bf16 %v2849, %v2847
    %v2858 = vunpack.c.l.b16 %v2850
    %v2859 = vunpack.c.l.b16 %v2851
    %v2860 = vunpack.c.h.b16 %v2850
    %v2861 = vunpack.c.h.b16 %v2851
    %v2862 = vunpack.c.l.b16 %v2852
    %v2863 = vunpack.c.l.b16 %v2853
    %v2864 = vunpack.c.h.b16 %v2852
    %v2865 = vunpack.c.h.b16 %v2853
    %v2866 = vpack.c.b16 %v2859, %v2858
    %v2867 = vpack.c.b16 %v2861, %v2860
    %v2868 = vpack.c.b16 %v2863, %v2862
    %v2869 = vpack.c.b16 %v2865, %v2864
    %2874 = vst [vmem:[#allocation3 + $0x14] sm:$0xff] %v2866
    %2875 = vst [vmem:[#allocation3 + $0x54] sm:$0xff] %v2867
    %2876 = vst [vmem:[#allocation3 + $0x94] sm:$0xff] %v2868
    %2877 = vst [vmem:[#allocation3 + $0xd4] sm:$0xff] %v2869
    %v2878 = vld [vmem:[#allocation2 + $0x30] sm:$0xff]
    %v2879 = vld [vmem:[#allocation2 + $0x38] sm:$0xff]
    %v2880 = vld [vmem:[#allocation2 + $0xa0] sm:$0xff]
    %v2881 = vld [vmem:[#allocation2 + $0xa8] sm:$0xff]
    %v2882 = vld [vmem:[#allocation2 + $0x110] sm:$0xff]
    %v2883 = vld [vmem:[#allocation2 + $0x118] sm:$0xff]
    %v2884 = vld [vmem:[#allocation2 + $0x180] sm:$0xff]
    %v2885 = vld [vmem:[#allocation2 + $0x188] sm:$0xff]
    %v2886 = vmul.f32 %v2878, %v2609
    %v2887 = vmul.f32 %v2879, %v2609
    %v2888 = vmul.f32 %v2880, %v2614
    %v2889 = vmul.f32 %v2881, %v2614
    %v2890 = vmul.f32 %v2882, %v2619
    %v2891 = vmul.f32 %v2883, %v2619
    %v2892 = vmul.f32 %v2884, %v2624
    %v2893 = vmul.f32 %v2885, %v2624
    %v2894 = vadd.f32 %v2886, %v2637
    %v2895 = vadd.f32 %v2887, %v2637
    %v2896 = vadd.f32 %v2888, %v2642
    %v2897 = vadd.f32 %v2889, %v2642
    %v2898 = vadd.f32 %v2890, %v2647
    %v2899 = vadd.f32 %v2891, %v2647
    %v2900 = vadd.f32 %v2892, %v2652
    %v2901 = vadd.f32 %v2893, %v2652
    %v2902 = vmax.f32 %v2894, 0.0
    %v2903 = vmax.f32 %v2895, 0.0
    %v2904 = vmax.f32 %v2896, 0.0
    %v2905 = vmax.f32 %v2897, 0.0
    %v2906 = vmax.f32 %v2898, 0.0
    %v2907 = vmax.f32 %v2899, 0.0
    %v2908 = vmax.f32 %v2900, 0.0
    %v2909 = vmax.f32 %v2901, 0.0
    %v2910 = vld [vmem:[%s7 + $0x6] sm:$0x3]
    %v2912 = vlaneseq
    %v2913 = vshrl.u32 %v2912, 7
    %v2914 = vsub.s32 0, %v2913
    %v2915 = vrot.slane %v2910, %v2914
    %v2916 = vlaneseq
    %v2917 = vshrl.u32 %v2916, 7
    %v2918 = vsub.s32 1, %v2917
    %v2919 = vrot.slane %v2910, %v2918
    %v2922 = vmul.f32 %v2902, %v2915
    %v2923 = vmul.f32 %v2903, %v2919
    %v2924 = vmul.f32 %v2904, %v2915
    %v2925 = vmul.f32 %v2905, %v2919
    %v2926 = vmul.f32 %v2906, %v2915
    %v2927 = vmul.f32 %v2907, %v2919
    %v2928 = vmul.f32 %v2908, %v2915
    %v2929 = vmul.f32 %v2909, %v2919
    %v2930 = vpack.c.bf16 %v2924, %v2922
    %v2931 = vpack.c.bf16 %v2925, %v2923
    %v2932 = vpack.c.bf16 %v2928, %v2926
    %v2933 = vpack.c.bf16 %v2929, %v2927
    %v2938 = vunpack.c.l.b16 %v2930
    %v2939 = vunpack.c.l.b16 %v2931
    %v2940 = vunpack.c.h.b16 %v2930
    %v2941 = vunpack.c.h.b16 %v2931
    %v2942 = vunpack.c.l.b16 %v2932
    %v2943 = vunpack.c.l.b16 %v2933
    %v2944 = vunpack.c.h.b16 %v2932
    %v2945 = vunpack.c.h.b16 %v2933
    %v2946 = vpack.c.b16 %v2939, %v2938
    %v2947 = vpack.c.b16 %v2941, %v2940
    %v2948 = vpack.c.b16 %v2943, %v2942
    %v2949 = vpack.c.b16 %v2945, %v2944
    %2954 = vst [vmem:[#allocation3 + $0x1c] sm:$0xff] %v2946
    %2955 = vst [vmem:[#allocation3 + $0x5c] sm:$0xff] %v2947
    %2956 = vst [vmem:[#allocation3 + $0x9c] sm:$0xff] %v2948
    %2957 = vst [vmem:[#allocation3 + $0xdc] sm:$0xff] %v2949
    %v2958 = vld [vmem:[#allocation2 + $0x40] sm:$0xff]
    %v2959 = vld [vmem:[#allocation2 + $0x48] sm:$0xff]
    %v2960 = vld [vmem:[#allocation2 + $0xb0] sm:$0xff]
    %v2961 = vld [vmem:[#allocation2 + $0xb8] sm:$0xff]
    %v2962 = vld [vmem:[#allocation2 + $0x120] sm:$0xff]
    %v2963 = vld [vmem:[#allocation2 + $0x128] sm:$0xff]
    %v2964 = vld [vmem:[#allocation2 + $0x190] sm:$0xff]
    %v2965 = vld [vmem:[#allocation2 + $0x198] sm:$0xff]
    %v2966 = vmul.f32 %v2958, %v2609
    %v2967 = vmul.f32 %v2959, %v2609
    %v2968 = vmul.f32 %v2960, %v2614
    %v2969 = vmul.f32 %v2961, %v2614
    %v2970 = vmul.f32 %v2962, %v2619
    %v2971 = vmul.f32 %v2963, %v2619
    %v2972 = vmul.f32 %v2964, %v2624
    %v2973 = vmul.f32 %v2965, %v2624
    %v2974 = vadd.f32 %v2966, %v2637
    %v2975 = vadd.f32 %v2967, %v2637
    %v2976 = vadd.f32 %v2968, %v2642
    %v2977 = vadd.f32 %v2969, %v2642
    %v2978 = vadd.f32 %v2970, %v2647
    %v2979 = vadd.f32 %v2971, %v2647
    %v2980 = vadd.f32 %v2972, %v2652
    %v2981 = vadd.f32 %v2973, %v2652
    %v2982 = vmax.f32 %v2974, 0.0
    %v2983 = vmax.f32 %v2975, 0.0
    %v2984 = vmax.f32 %v2976, 0.0
    %v2985 = vmax.f32 %v2977, 0.0
    %v2986 = vmax.f32 %v2978, 0.0
    %v2987 = vmax.f32 %v2979, 0.0
    %v2988 = vmax.f32 %v2980, 0.0
    %v2989 = vmax.f32 %v2981, 0.0
    %v2990 = vld [vmem:[%s7 + $0x8] sm:$0x3]
    %v2992 = vlaneseq
    %v2993 = vshrl.u32 %v2992, 7
    %v2994 = vsub.s32 0, %v2993
    %v2995 = vrot.slane %v2990, %v2994
    %v2996 = vlaneseq
    %v2997 = vshrl.u32 %v2996, 7
    %v2998 = vsub.s32 1, %v2997
    %v2999 = vrot.slane %v2990, %v2998
    %v3002 = vmul.f32 %v2982, %v2995
    %v3003 = vmul.f32 %v2983, %v2999
    %v3004 = vmul.f32 %v2984, %v2995
    %v3005 = vmul.f32 %v2985, %v2999
    %v3006 = vmul.f32 %v2986, %v2995
    %v3007 = vmul.f32 %v2987, %v2999
    %v3008 = vmul.f32 %v2988, %v2995
    %v3009 = vmul.f32 %v2989, %v2999
    %v3010 = vpack.c.bf16 %v3004, %v3002
    %v3011 = vpack.c.bf16 %v3005, %v3003
    %v3012 = vpack.c.bf16 %v3008, %v3006
    %v3013 = vpack.c.bf16 %v3009, %v3007
    %v3018 = vunpack.c.l.b16 %v3010
    %v3019 = vunpack.c.l.b16 %v3011
    %v3020 = vunpack.c.h.b16 %v3010
    %v3021 = vunpack.c.h.b16 %v3011
    %v3022 = vunpack.c.l.b16 %v3012
    %v3023 = vunpack.c.l.b16 %v3013
    %v3024 = vunpack.c.h.b16 %v3012
    %v3025 = vunpack.c.h.b16 %v3013
    %v3026 = vpack.c.b16 %v3019, %v3018
    %v3027 = vpack.c.b16 %v3021, %v3020
    %v3028 = vpack.c.b16 %v3023, %v3022
    %v3029 = vpack.c.b16 %v3025, %v3024
    %3034 = vst [vmem:[#allocation3 + $0x24] sm:$0xff] %v3026
    %3035 = vst [vmem:[#allocation3 + $0x64] sm:$0xff] %v3027
    %3036 = vst [vmem:[#allocation3 + $0xa4] sm:$0xff] %v3028
    %3037 = vst [vmem:[#allocation3 + $0xe4] sm:$0xff] %v3029
    %v3038 = vld [vmem:[#allocation2 + $0x50] sm:$0xff]
    %v3039 = vld [vmem:[#allocation2 + $0x58] sm:$0xff]
    %v3040 = vld [vmem:[#allocation2 + $0xc0] sm:$0xff]
    %v3041 = vld [vmem:[#allocation2 + $0xc8] sm:$0xff]
    %v3042 = vld [vmem:[#allocation2 + $0x130] sm:$0xff]
    %v3043 = vld [vmem:[#allocation2 + $0x138] sm:$0xff]
    %v3044 = vld [vmem:[#allocation2 + $0x1a0] sm:$0xff]
    %v3045 = vld [vmem:[#allocation2 + $0x1a8] sm:$0xff]
    %v3046 = vmul.f32 %v3038, %v2609
    %v3047 = vmul.f32 %v3039, %v2609
    %v3048 = vmul.f32 %v3040, %v2614
    %v3049 = vmul.f32 %v3041, %v2614
    %v3050 = vmul.f32 %v3042, %v2619
    %v3051 = vmul.f32 %v3043, %v2619
    %v3052 = vmul.f32 %v3044, %v2624
    %v3053 = vmul.f32 %v3045, %v2624
    %v3054 = vadd.f32 %v3046, %v2637
    %v3055 = vadd.f32 %v3047, %v2637
    %v3056 = vadd.f32 %v3048, %v2642
    %v3057 = vadd.f32 %v3049, %v2642
    %v3058 = vadd.f32 %v3050, %v2647
    %v3059 = vadd.f32 %v3051, %v2647
    %v3060 = vadd.f32 %v3052, %v2652
    %v3061 = vadd.f32 %v3053, %v2652
    %v3062 = vmax.f32 %v3054, 0.0
    %v3063 = vmax.f32 %v3055, 0.0
    %v3064 = vmax.f32 %v3056, 0.0
    %v3065 = vmax.f32 %v3057, 0.0
    %v3066 = vmax.f32 %v3058, 0.0
    %v3067 = vmax.f32 %v3059, 0.0
    %v3068 = vmax.f32 %v3060, 0.0
    %v3069 = vmax.f32 %v3061, 0.0
    %v3070 = vld [vmem:[%s7 + $0xa] sm:$0x3]
    %v3072 = vlaneseq
    %v3073 = vshrl.u32 %v3072, 7
    %v3074 = vsub.s32 0, %v3073
    %v3075 = vrot.slane %v3070, %v3074
    %v3076 = vlaneseq
    %v3077 = vshrl.u32 %v3076, 7
    %v3078 = vsub.s32 1, %v3077
    %v3079 = vrot.slane %v3070, %v3078
    %v3082 = vmul.f32 %v3062, %v3075
    %v3083 = vmul.f32 %v3063, %v3079
    %v3084 = vmul.f32 %v3064, %v3075
    %v3085 = vmul.f32 %v3065, %v3079
    %v3086 = vmul.f32 %v3066, %v3075
    %v3087 = vmul.f32 %v3067, %v3079
    %v3088 = vmul.f32 %v3068, %v3075
    %v3089 = vmul.f32 %v3069, %v3079
    %v3090 = vpack.c.bf16 %v3084, %v3082
    %v3091 = vpack.c.bf16 %v3085, %v3083
    %v3092 = vpack.c.bf16 %v3088, %v3086
    %v3093 = vpack.c.bf16 %v3089, %v3087
    %v3098 = vunpack.c.l.b16 %v3090
    %v3099 = vunpack.c.l.b16 %v3091
    %v3100 = vunpack.c.h.b16 %v3090
    %v3101 = vunpack.c.h.b16 %v3091
    %v3102 = vunpack.c.l.b16 %v3092
    %v3103 = vunpack.c.l.b16 %v3093
    %v3104 = vunpack.c.h.b16 %v3092
    %v3105 = vunpack.c.h.b16 %v3093
    %v3106 = vpack.c.b16 %v3099, %v3098
    %v3107 = vpack.c.b16 %v3101, %v3100
    %v3108 = vpack.c.b16 %v3103, %v3102
    %v3109 = vpack.c.b16 %v3105, %v3104
    %3114 = vst [vmem:[#allocation3 + $0x2c] sm:$0xff] %v3106
    %3115 = vst [vmem:[#allocation3 + $0x6c] sm:$0xff] %v3107
    %3116 = vst [vmem:[#allocation3 + $0xac] sm:$0xff] %v3108
    %3117 = vst [vmem:[#allocation3 + $0xec] sm:$0xff] %v3109
    %v3118 = vld [vmem:[#allocation2 + $0x60] sm:$0xff]
    %v3119 = vld [vmem:[#allocation2 + $0x68] sm:$0xff]
    %v3120 = vld [vmem:[#allocation2 + $0xd0] sm:$0xff]
    %v3121 = vld [vmem:[#allocation2 + $0xd8] sm:$0xff]
    %v3122 = vld [vmem:[#allocation2 + $0x140] sm:$0xff]
    %v3123 = vld [vmem:[#allocation2 + $0x148] sm:$0xff]
    %v3124 = vld [vmem:[#allocation2 + $0x1b0] sm:$0xff]
    %v3125 = vld [vmem:[#allocation2 + $0x1b8] sm:$0xff]
    %v3126 = vmul.f32 %v3118, %v2609
    %v3127 = vmul.f32 %v3119, %v2609
    %v3128 = vmul.f32 %v3120, %v2614
    %v3129 = vmul.f32 %v3121, %v2614
    %v3130 = vmul.f32 %v3122, %v2619
    %v3131 = vmul.f32 %v3123, %v2619
    %v3132 = vmul.f32 %v3124, %v2624
    %v3133 = vmul.f32 %v3125, %v2624
    %v3134 = vadd.f32 %v3126, %v2637
    %v3135 = vadd.f32 %v3127, %v2637
    %v3136 = vadd.f32 %v3128, %v2642
    %v3137 = vadd.f32 %v3129, %v2642
    %v3138 = vadd.f32 %v3130, %v2647
    %v3139 = vadd.f32 %v3131, %v2647
    %v3140 = vadd.f32 %v3132, %v2652
    %v3141 = vadd.f32 %v3133, %v2652
    %v3142 = vmax.f32 %v3134, 0.0
    %v3143 = vmax.f32 %v3135, 0.0
    %v3144 = vmax.f32 %v3136, 0.0
    %v3145 = vmax.f32 %v3137, 0.0
    %v3146 = vmax.f32 %v3138, 0.0
    %v3147 = vmax.f32 %v3139, 0.0
    %v3148 = vmax.f32 %v3140, 0.0
    %v3149 = vmax.f32 %v3141, 0.0
    %v3150 = vld [vmem:[%s7 + $0xc] sm:$0x3]
    %v3152 = vlaneseq
    %v3153 = vshrl.u32 %v3152, 7
    %v3154 = vsub.s32 0, %v3153
    %v3155 = vrot.slane %v3150, %v3154
    %v3156 = vlaneseq
    %v3157 = vshrl.u32 %v3156, 7
    %v3158 = vsub.s32 1, %v3157
    %v3159 = vrot.slane %v3150, %v3158
    %v3162 = vmul.f32 %v3142, %v3155
    %v3163 = vmul.f32 %v3143, %v3159
    %v3164 = vmul.f32 %v3144, %v3155
    %v3165 = vmul.f32 %v3145, %v3159
    %v3166 = vmul.f32 %v3146, %v3155
    %v3167 = vmul.f32 %v3147, %v3159
    %v3168 = vmul.f32 %v3148, %v3155
    %v3169 = vmul.f32 %v3149, %v3159
    %v3170 = vpack.c.bf16 %v3164, %v3162
    %v3171 = vpack.c.bf16 %v3165, %v3163
    %v3172 = vpack.c.bf16 %v3168, %v3166
    %v3173 = vpack.c.bf16 %v3169, %v3167
    %v3178 = vunpack.c.l.b16 %v3170
    %v3179 = vunpack.c.l.b16 %v3171
    %v3180 = vunpack.c.h.b16 %v3170
    %v3181 = vunpack.c.h.b16 %v3171
    %v3182 = vunpack.c.l.b16 %v3172
    %v3183 = vunpack.c.l.b16 %v3173
    %v3184 = vunpack.c.h.b16 %v3172
    %v3185 = vunpack.c.h.b16 %v3173
    %v3186 = vpack.c.b16 %v3179, %v3178
    %v3187 = vpack.c.b16 %v3181, %v3180
    %v3188 = vpack.c.b16 %v3183, %v3182
    %v3189 = vpack.c.b16 %v3185, %v3184
    %3194 = vst [vmem:[#allocation3 + $0x34] sm:$0xff] %v3186
    %3195 = vst [vmem:[#allocation3 + $0x74] sm:$0xff] %v3187
    %3196 = vst [vmem:[#allocation3 + $0xb4] sm:$0xff] %v3188
    %3197 = vst [vmem:[#allocation3 + $0xf4] sm:$0xff] %v3189
    %v3198 = vld [vmem:[%s2] sm:$0xf]
    %v3199 = vld [vmem:[%s2 + $0x4] sm:$0xf]
    %v3200 = vld [vmem:[%s2 + $0x8] sm:$0xf]
    %v3201 = vld [vmem:[%s2 + $0xc] sm:$0xf]
    %v3202 = vld [vmem:[#allocation3] sm:$0xff]
    %v3203 = vld [vmem:[#allocation3 + $0x8] sm:$0xf]
    %v3204 = vld [vmem:[#allocation3 + $0x40] sm:$0xff]
    %v3205 = vld [vmem:[#allocation3 + $0x48] sm:$0xf]
    %v3206 = vld [vmem:[#allocation3 + $0x80] sm:$0xff]
    %v3207 = vld [vmem:[#allocation3 + $0x88] sm:$0xf]
    %v3208 = vld [vmem:[#allocation3 + $0xc0] sm:$0xff]
    %v3209 = vld [vmem:[#allocation3 + $0xc8] sm:$0xf]
    %s3210 = scalar_lea.vmem %s2, 16
    %v3211 = vld [vmem:[%s3210] sm:$0xf]
    %v3212 = vld [vmem:[%s3210 + $0x4] sm:$0xf]
    %v3213 = vld [vmem:[%s3210 + $0x8] sm:$0xf]
    %v3214 = vld [vmem:[%s3210 + $0xc] sm:$0xf]
    %v3215 = vld [vmem:[#allocation3 + $0x4] sm:$0xff]
    %v3216 = vld [vmem:[#allocation3 + $0x44] sm:$0xff]
    %v3217 = vld [vmem:[#allocation3 + $0x84] sm:$0xff]
    %v3218 = vld [vmem:[#allocation3 + $0xc4] sm:$0xff]
    %v3223 = vunpack.c.l.b16 %v3211
    %v3224 = vunpack.c.l.b16 %v3212
    %v3225 = vunpack.c.l.b16 %v3213
    %v3226 = vunpack.c.l.b16 %v3214
    %v3227 = vpack.c.b16 %v3224, %v3223
    %v3228 = vpack.c.b16 %v3226, %v3225
    %v3233 = vunpack.c.l.b16 %v3215
    %v3234 = vunpack.c.h.b16 %v3215
    %v3235 = vunpack.c.l.b16 %v3216
    %v3236 = vunpack.c.h.b16 %v3216
    %v3237 = vunpack.c.l.b16 %v3217
    %v3238 = vunpack.c.h.b16 %v3217
    %v3239 = vunpack.c.l.b16 %v3218
    %v3240 = vunpack.c.h.b16 %v3218
    %v3241 = vpack.c.b16 %v3235, %v3233
    %v3242 = vpack.c.b16 %v3236, %v3234
    %v3243 = vpack.c.b16 %v3239, %v3237
    %v3244 = vpack.c.b16 %v3240, %v3238
    %vm3249 = vcmask 261120
    %v3251 = vsel %vm3249, %v3227, 0
    %v3254 = vsel %vm3249, %v3228, 0
    %3256 = vmatprep.subr.bf16.mxu0 0
    %3257 = vmatpush1.bf16.msra.mxu0 0
    %3258 = vmatprep.subr.bf16.mxu0 0
    %3259 = vmatpush1.bf16.msra.mxu0 0
    %3260 = vmatprep.subr.bf16.mxu0 0
    %3261 = vmatpush1.bf16.msra.mxu0 0
    %3262 = vmatprep.subr.bf16.mxu0 0
    %3263 = vmatpush1.bf16.msra.mxu0 0
    %3264 = vmatprep.subr.bf16.mxu0 0
    %3265 = vmatpush1.bf16.msra.mxu0 0
    %3266 = vmatprep.subr.bf16.mxu0 0
    %3267 = vmatpush1.bf16.msra.mxu0 0
    %3268 = vmatprep.subr.bf16.mxu0 %v3244
    %3269 = vmatpush1.bf16.msra.mxu0 %v3243
    %3270 = vmatprep.subr.bf16.mxu0 %v3242
    %3271 = vmatpush1.bf16.msra.mxu0 %v3241
    %3272 = vmatprep.subr.bf16.mxu0 0
    %3273 = vmatpush2.bf16.msra.mxu0 0
    %3274 = vmatprep.subr.bf16.mxu0 0
    %3275 = vmatpush2.bf16.msra.mxu0 0
    %3276 = vmatprep.subr.bf16.mxu0 0
    %3277 = vmatpush2.bf16.msra.mxu0 0
    %3278 = vmatprep.subr.bf16.mxu0 0
    %3279 = vmatpush2.bf16.msra.mxu0 0
    %3280 = vmatprep.subr.bf16.mxu0 0
    %3281 = vmatpush2.bf16.msra.mxu0 0
    %3282 = vmatprep.subr.bf16.mxu0 0
    %3283 = vmatpush2.bf16.msra.mxu0 0
    %3284 = vmatprep.subr.bf16.mxu0 0
    %3285 = vmatpush2.bf16.msra.mxu0 0
    %3286 = vmatprep.subr.bf16.mxu0 0
    %3287 = vmatpush2.bf16.msra.mxu0 0
    %3288 = vmatprep.mubr.bf16.mxu0 0
    %3289 = vmatmul.mubr.bf16.gmra.mxu0 %v3251
    %v3290 = vpop.f32.mrf.mxu0
    %v3291 = vadd.f32 0.0, %v3290
    %v3292 = vpop.f32.mrf.mxu0
    %v3293 = vadd.f32 0.0, %v3292
    %v3294 = vpop.f32.mrf.mxu0
    %v3295 = vadd.f32 0.0, %v3294
    %v3296 = vpop.f32.mrf.mxu0
    %v3297 = vadd.f32 0.0, %v3296
    %3298 = vmatprep.mubr.bf16.mxu0 0
    %3299 = vmatmul.mubr.bf16.gmra.mxu0 %v3254
    %v3300 = vpop.f32.mrf.mxu0
    %v3301 = vadd.f32 0.0, %v3300
    %v3302 = vpop.f32.mrf.mxu0
    %v3303 = vadd.f32 0.0, %v3302
    %v3304 = vpop.f32.mrf.mxu0
    %v3305 = vadd.f32 0.0, %v3304
    %v3306 = vpop.f32.mrf.mxu0
    %v3307 = vadd.f32 0.0, %v3306
    %3308 = vdwg.mxu0
    %v3313 = vunpack.c.l.b16 %v3198
    %v3314 = vunpack.c.l.b16 %v3199
    %v3315 = vunpack.c.l.b16 %v3200
    %v3316 = vunpack.c.l.b16 %v3201
    %v3317 = vpack.c.b16 %v3314, %v3313
    %v3318 = vpack.c.b16 %v3316, %v3315
    %v3327 = vunpack.c.l.b16 %v3202
    %v3328 = vunpack.c.h.b16 %v3202
    %v3329 = vunpack.c.l.b16 %v3203
    %v3330 = vunpack.c.l.b16 %v3204
    %v3331 = vunpack.c.h.b16 %v3204
    %v3332 = vunpack.c.l.b16 %v3205
    %v3333 = vunpack.c.l.b16 %v3206
    %v3334 = vunpack.c.h.b16 %v3206
    %v3335 = vunpack.c.l.b16 %v3207
    %v3336 = vunpack.c.l.b16 %v3208
    %v3337 = vunpack.c.h.b16 %v3208
    %v3338 = vunpack.c.l.b16 %v3209
    %v3339 = vpack.c.b16 %v3330, %v3327
    %v3340 = vpack.c.b16 %v3331, %v3328
    %v3341 = vpack.c.b16 %v3332, %v3329
    %v3342 = vpack.c.b16 %v3336, %v3333
    %v3343 = vpack.c.b16 %v3337, %v3334
    %v3344 = vpack.c.b16 %v3338, %v3335
    %3345 = vrot.lane.b32.xlu0 %v3339, 1
    %v3346 = vpop.permute.xlu0 %3345
    %3347 = vrot.lane.b32.xlu0 %v3340, 1
    %v3348 = vpop.permute.xlu0 %3347
    %3349 = vrot.lane.b32.xlu0 %v3341, 1
    %v3350 = vpop.permute.xlu0 %3349
    %3351 = vrot.lane.b32.xlu0 %v3342, 1
    %v3352 = vpop.permute.xlu0 %3351
    %3353 = vrot.lane.b32.xlu0 %v3343, 1
    %v3354 = vpop.permute.xlu0 %3353
    %3355 = vrot.lane.b32.xlu0 %v3344, 1
    %v3356 = vpop.permute.xlu0 %3355
    %v3357 = vsel %vm177, %v3346, %v3348
    %v3358 = vsel %vm177, %v3348, %v3350
    %v3359 = vsel %vm177, %v3352, %v3354
    %v3360 = vsel %vm177, %v3354, %v3356
    %v3366 = vsel %vm3249, %v3317, 0
    %v3369 = vsel %vm3249, %v3318, 0
    %3371 = vmatprep.subr.bf16.mxu0 0
    %3372 = vmatpush1.bf16.msra.mxu0 0
    %3373 = vmatprep.subr.bf16.mxu0 0
    %3374 = vmatpush1.bf16.msra.mxu0 0
    %3375 = vmatprep.subr.bf16.mxu0 0
    %3376 = vmatpush1.bf16.msra.mxu0 0
    %3377 = vmatprep.subr.bf16.mxu0 0
    %3378 = vmatpush1.bf16.msra.mxu0 0
    %3379 = vmatprep.subr.bf16.mxu0 0
    %3380 = vmatpush1.bf16.msra.mxu0 0
    %3381 = vmatprep.subr.bf16.mxu0 0
    %3382 = vmatpush1.bf16.msra.mxu0 0
    %3383 = vmatprep.subr.bf16.mxu0 %v3360
    %3384 = vmatpush1.bf16.msra.mxu0 %v3359
    %3385 = vmatprep.subr.bf16.mxu0 %v3358
    %3386 = vmatpush1.bf16.msra.mxu0 %v3357
    %3387 = vmatprep.subr.bf16.mxu0 0
    %3388 = vmatpush2.bf16.msra.mxu0 0
    %3389 = vmatprep.subr.bf16.mxu0 0
    %3390 = vmatpush2.bf16.msra.mxu0 0
    %3391 = vmatprep.subr.bf16.mxu0 0
    %3392 = vmatpush2.bf16.msra.mxu0 0
    %3393 = vmatprep.subr.bf16.mxu0 0
    %3394 = vmatpush2.bf16.msra.mxu0 0
    %3395 = vmatprep.subr.bf16.mxu0 0
    %3396 = vmatpush2.bf16.msra.mxu0 0
    %3397 = vmatprep.subr.bf16.mxu0 0
    %3398 = vmatpush2.bf16.msra.mxu0 0
    %3399 = vmatprep.subr.bf16.mxu0 0
    %3400 = vmatpush2.bf16.msra.mxu0 0
    %3401 = vmatprep.subr.bf16.mxu0 0
    %3402 = vmatpush2.bf16.msra.mxu0 0
    %3403 = vmatprep.mubr.bf16.mxu0 0
    %3404 = vmatmul.mubr.bf16.gmra.mxu0 %v3366
    %v3405 = vpop.f32.mrf.mxu0
    %v3406 = vadd.f32 %v3291, %v3405
    %v3407 = vpop.f32.mrf.mxu0
    %v3408 = vadd.f32 %v3293, %v3407
    %v3409 = vpop.f32.mrf.mxu0
    %v3410 = vadd.f32 %v3295, %v3409
    %v3411 = vpop.f32.mrf.mxu0
    %v3412 = vadd.f32 %v3297, %v3411
    %3413 = vmatprep.mubr.bf16.mxu0 0
    %3414 = vmatmul.mubr.bf16.gmra.mxu0 %v3369
    %v3415 = vpop.f32.mrf.mxu0
    %v3416 = vadd.f32 %v3301, %v3415
    %v3417 = vpop.f32.mrf.mxu0
    %v3418 = vadd.f32 %v3303, %v3417
    %v3419 = vpop.f32.mrf.mxu0
    %v3420 = vadd.f32 %v3305, %v3419
    %v3421 = vpop.f32.mrf.mxu0
    %v3422 = vadd.f32 %v3307, %v3421
    %3423 = vdwg.mxu0
    %s3424 = scalar_lea.vmem %s2, 32
    %v3425 = vld [vmem:[%s3424] sm:$0xf]
    %v3426 = vld [vmem:[%s3424 + $0x4] sm:$0xf]
    %v3427 = vld [vmem:[%s3424 + $0x8] sm:$0xf]
    %v3428 = vld [vmem:[%s3424 + $0xc] sm:$0xf]
    %v3429 = vld [vmem:[#allocation3 + $0x4] sm:$0xff]
    %v3430 = vld [vmem:[#allocation3 + $0xc] sm:$0xf]
    %v3431 = vld [vmem:[#allocation3 + $0x44] sm:$0xff]
    %v3432 = vld [vmem:[#allocation3 + $0x4c] sm:$0xf]
    %v3433 = vld [vmem:[#allocation3 + $0x84] sm:$0xff]
    %v3434 = vld [vmem:[#allocation3 + $0x8c] sm:$0xf]
    %v3435 = vld [vmem:[#allocation3 + $0xc4] sm:$0xff]
    %v3436 = vld [vmem:[#allocation3 + $0xcc] sm:$0xf]
    %v3441 = vunpack.c.l.b16 %v3425
    %v3442 = vunpack.c.l.b16 %v3426
    %v3443 = vunpack.c.l.b16 %v3427
    %v3444 = vunpack.c.l.b16 %v3428
    %v3445 = vpack.c.b16 %v3442, %v3441
    %v3446 = vpack.c.b16 %v3444, %v3443
    %v3455 = vunpack.c.l.b16 %v3429
    %v3456 = vunpack.c.h.b16 %v3429
    %v3457 = vunpack.c.l.b16 %v3430
    %v3458 = vunpack.c.l.b16 %v3431
    %v3459 = vunpack.c.h.b16 %v3431
    %v3460 = vunpack.c.l.b16 %v3432
    %v3461 = vunpack.c.l.b16 %v3433
    %v3462 = vunpack.c.h.b16 %v3433
    %v3463 = vunpack.c.l.b16 %v3434
    %v3464 = vunpack.c.l.b16 %v3435
    %v3465 = vunpack.c.h.b16 %v3435
    %v3466 = vunpack.c.l.b16 %v3436
    %v3467 = vpack.c.b16 %v3458, %v3455
    %v3468 = vpack.c.b16 %v3459, %v3456
    %v3469 = vpack.c.b16 %v3460, %v3457
    %v3470 = vpack.c.b16 %v3464, %v3461
    %v3471 = vpack.c.b16 %v3465, %v3462
    %v3472 = vpack.c.b16 %v3466, %v3463
    %3473 = vrot.lane.b32.xlu0 %v3467, 127
    %v3474 = vpop.permute.xlu0 %3473
    %3475 = vrot.lane.b32.xlu0 %v3468, 127
    %v3476 = vpop.permute.xlu0 %3475
    %3477 = vrot.lane.b32.xlu0 %v3469, 127
    %v3478 = vpop.permute.xlu0 %3477
    %3479 = vrot.lane.b32.xlu0 %v3470, 127
    %v3480 = vpop.permute.xlu0 %3479
    %3481 = vrot.lane.b32.xlu0 %v3471, 127
    %v3482 = vpop.permute.xlu0 %3481
    %3483 = vrot.lane.b32.xlu0 %v3472, 127
    %v3484 = vpop.permute.xlu0 %3483
    %v3485 = vsel %vm276, %v3474, %v3476
    %v3486 = vsel %vm276, %v3476, %v3478
    %v3487 = vsel %vm276, %v3480, %v3482
    %v3488 = vsel %vm276, %v3482, %v3484
    %v3494 = vsel %vm3249, %v3445, 0
    %v3497 = vsel %vm3249, %v3446, 0
    %3499 = vmatprep.subr.bf16.mxu0 0
    %3500 = vmatpush1.bf16.msra.mxu0 0
    %3501 = vmatprep.subr.bf16.mxu0 0
    %3502 = vmatpush1.bf16.msra.mxu0 0
    %3503 = vmatprep.subr.bf16.mxu0 0
    %3504 = vmatpush1.bf16.msra.mxu0 0
    %3505 = vmatprep.subr.bf16.mxu0 0
    %3506 = vmatpush1.bf16.msra.mxu0 0
    %3507 = vmatprep.subr.bf16.mxu0 0
    %3508 = vmatpush1.bf16.msra.mxu0 0
    %3509 = vmatprep.subr.bf16.mxu0 0
    %3510 = vmatpush1.bf16.msra.mxu0 0
    %3511 = vmatprep.subr.bf16.mxu0 %v3488
    %3512 = vmatpush1.bf16.msra.mxu0 %v3487
    %3513 = vmatprep.subr.bf16.mxu0 %v3486
    %3514 = vmatpush1.bf16.msra.mxu0 %v3485
    %3515 = vmatprep.subr.bf16.mxu0 0
    %3516 = vmatpush2.bf16.msra.mxu0 0
    %3517 = vmatprep.subr.bf16.mxu0 0
    %3518 = vmatpush2.bf16.msra.mxu0 0
    %3519 = vmatprep.subr.bf16.mxu0 0
    %3520 = vmatpush2.bf16.msra.mxu0 0
    %3521 = vmatprep.subr.bf16.mxu0 0
    %3522 = vmatpush2.bf16.msra.mxu0 0
    %3523 = vmatprep.subr.bf16.mxu0 0
    %3524 = vmatpush2.bf16.msra.mxu0 0
    %3525 = vmatprep.subr.bf16.mxu0 0
    %3526 = vmatpush2.bf16.msra.mxu0 0
    %3527 = vmatprep.subr.bf16.mxu0 0
    %3528 = vmatpush2.bf16.msra.mxu0 0
    %3529 = vmatprep.subr.bf16.mxu0 0
    %3530 = vmatpush2.bf16.msra.mxu0 0
    %3531 = vmatprep.mubr.bf16.mxu0 0
    %3532 = vmatmul.mubr.bf16.gmra.mxu0 %v3494
    %v3533 = vpop.f32.mrf.mxu0
    %v3534 = vadd.f32 0.0, %v3533
    %v3535 = vpop.f32.mrf.mxu0
    %v3536 = vadd.f32 0.0, %v3535
    %v3537 = vpop.f32.mrf.mxu0
    %v3538 = vadd.f32 0.0, %v3537
    %v3539 = vpop.f32.mrf.mxu0
    %v3540 = vadd.f32 0.0, %v3539
    %3541 = vmatprep.mubr.bf16.mxu0 0
    %3542 = vmatmul.mubr.bf16.gmra.mxu0 %v3497
    %v3543 = vpop.f32.mrf.mxu0
    %v3544 = vadd.f32 0.0, %v3543
    %v3545 = vpop.f32.mrf.mxu0
    %v3546 = vadd.f32 0.0, %v3545
    %v3547 = vpop.f32.mrf.mxu0
    %v3548 = vadd.f32 0.0, %v3547
    %v3549 = vpop.f32.mrf.mxu0
    %v3550 = vadd.f32 0.0, %v3549
    %3551 = vdwg.mxu0
    %v3552 = vadd.f32 %v3406, %v3534
    %v3553 = vadd.f32 %v3408, %v3536
    %v3554 = vadd.f32 %v3410, %v3538
    %v3555 = vadd.f32 %v3412, %v3540
    %v3556 = vadd.f32 %v3416, %v3544
    %v3557 = vadd.f32 %v3418, %v3546
    %v3558 = vadd.f32 %v3420, %v3548
    %v3559 = vadd.f32 %v3422, %v3550
    %3560 = vst [vmem:[#allocation2] sm:$0xff] %v3552
    %3561 = vst [vmem:[#allocation2 + $0x8] sm:$0xff] %v3553
    %3562 = vst [vmem:[#allocation2 + $0x70] sm:$0xff] %v3554
    %3563 = vst [vmem:[#allocation2 + $0x78] sm:$0xff] %v3555
    %3564 = vst [vmem:[#allocation2 + $0xe0] sm:$0xff] %v3556
    %3565 = vst [vmem:[#allocation2 + $0xe8] sm:$0xff] %v3557
    %3566 = vst [vmem:[#allocation2 + $0x150] sm:$0xff] %v3558
    %3567 = vst [vmem:[#allocation2 + $0x158] sm:$0xff] %v3559
    %v3568 = vld [vmem:[%s8] sm:$0x3]
    %v3570 = vlaneseq
    %v3571 = vshrl.u32 %v3570, 7
    %v3572 = vsub.s32 0, %v3571
    %v3573 = vrot.slane %v3568, %v3572
    %v3574 = vlaneseq
    %v3575 = vshrl.u32 %v3574, 7
    %v3576 = vsub.s32 1, %v3575
    %v3577 = vrot.slane %v3568, %v3576
    %v3580 = vmul.f32 %v3552, %v3573
    %v3581 = vmul.f32 %v3553, %v3577
    %v3582 = vmul.f32 %v3554, %v3573
    %v3583 = vmul.f32 %v3555, %v3577
    %v3584 = vmul.f32 %v3556, %v3573
    %v3585 = vmul.f32 %v3557, %v3577
    %v3586 = vmul.f32 %v3558, %v3573
    %v3587 = vmul.f32 %v3559, %v3577
    %v3588 = vadd.f32 %v3580, %v3581
    %3589 = vadd.xlane.f32.xlu0 %v3588
    %v3590 = vpop.xlane.xlu0 %3589
    %v3591 = vadd.f32 %v3582, %v3583
    %3592 = vadd.xlane.f32.xlu0 %v3591
    %v3593 = vpop.xlane.xlu0 %3592
    %v3594 = vadd.f32 %v3584, %v3585
    %3595 = vadd.xlane.f32.xlu0 %v3594
    %v3596 = vpop.xlane.xlu0 %3595
    %v3597 = vadd.f32 %v3586, %v3587
    %3598 = vadd.xlane.f32.xlu0 %v3597
    %v3599 = vpop.xlane.xlu0 %3598
    %v3600 = vadd.f32 %v3590, 0.0
    %v3601 = vadd.f32 %v3593, 0.0
    %v3602 = vadd.f32 %v3596, 0.0
    %v3603 = vadd.f32 %v3599, 0.0
    %v3604 = vmul.f32 %v3580, %v3552
    %v3605 = vmul.f32 %v3581, %v3553
    %v3606 = vmul.f32 %v3582, %v3554
    %v3607 = vmul.f32 %v3583, %v3555
    %v3608 = vmul.f32 %v3584, %v3556
    %v3609 = vmul.f32 %v3585, %v3557
    %v3610 = vmul.f32 %v3586, %v3558
    %v3611 = vmul.f32 %v3587, %v3559
    %v3612 = vadd.f32 %v3604, %v3605
    %3613 = vadd.xlane.f32.xlu0 %v3612
    %v3614 = vpop.xlane.xlu0 %3613
    %v3615 = vadd.f32 %v3606, %v3607
    %3616 = vadd.xlane.f32.xlu0 %v3615
    %v3617 = vpop.xlane.xlu0 %3616
    %v3618 = vadd.f32 %v3608, %v3609
    %3619 = vadd.xlane.f32.xlu0 %v3618
    %v3620 = vpop.xlane.xlu0 %3619
    %v3621 = vadd.f32 %v3610, %v3611
    %3622 = vadd.xlane.f32.xlu0 %v3621
    %v3623 = vpop.xlane.xlu0 %3622
    %v3624 = vadd.f32 %v3614, 0.0
    %v3625 = vadd.f32 %v3617, 0.0
    %v3626 = vadd.f32 %v3620, 0.0
    %v3627 = vadd.f32 %v3623, 0.0
    %v3628 = vld [vmem:[%s2] sm:$0xf]
    %v3629 = vld [vmem:[%s2 + $0x4] sm:$0xf]
    %v3630 = vld [vmem:[%s2 + $0x8] sm:$0xf]
    %v3631 = vld [vmem:[%s2 + $0xc] sm:$0xf]
    %v3632 = vld [vmem:[#allocation3 + $0x8] sm:$0xff]
    %v3633 = vld [vmem:[#allocation3 + $0x10] sm:$0xf]
    %v3634 = vld [vmem:[#allocation3 + $0x48] sm:$0xff]
    %v3635 = vld [vmem:[#allocation3 + $0x50] sm:$0xf]
    %v3636 = vld [vmem:[#allocation3 + $0x88] sm:$0xff]
    %v3637 = vld [vmem:[#allocation3 + $0x90] sm:$0xf]
    %v3638 = vld [vmem:[#allocation3 + $0xc8] sm:$0xff]
    %v3639 = vld [vmem:[#allocation3 + $0xd0] sm:$0xf]
    %v3640 = vld [vmem:[%s3210] sm:$0xf]
    %v3641 = vld [vmem:[%s3210 + $0x4] sm:$0xf]
    %v3642 = vld [vmem:[%s3210 + $0x8] sm:$0xf]
    %v3643 = vld [vmem:[%s3210 + $0xc] sm:$0xf]
    %v3644 = vld [vmem:[#allocation3 + $0xc] sm:$0xff]
    %v3645 = vld [vmem:[#allocation3 + $0x4c] sm:$0xff]
    %v3646 = vld [vmem:[#allocation3 + $0x8c] sm:$0xff]
    %v3647 = vld [vmem:[#allocation3 + $0xcc] sm:$0xff]
    %v3652 = vunpack.c.l.b16 %v3640
    %v3653 = vunpack.c.l.b16 %v3641
    %v3654 = vunpack.c.l.b16 %v3642
    %v3655 = vunpack.c.l.b16 %v3643
    %v3656 = vpack.c.b16 %v3653, %v3652
    %v3657 = vpack.c.b16 %v3655, %v3654
    %v3662 = vunpack.c.l.b16 %v3644
    %v3663 = vunpack.c.h.b16 %v3644
    %v3664 = vunpack.c.l.b16 %v3645
    %v3665 = vunpack.c.h.b16 %v3645
    %v3666 = vunpack.c.l.b16 %v3646
    %v3667 = vunpack.c.h.b16 %v3646
    %v3668 = vunpack.c.l.b16 %v3647
    %v3669 = vunpack.c.h.b16 %v3647
    %v3670 = vpack.c.b16 %v3664, %v3662
    %v3671 = vpack.c.b16 %v3665, %v3663
    %v3672 = vpack.c.b16 %v3668, %v3666
    %v3673 = vpack.c.b16 %v3669, %v3667
    %v3679 = vsel %vm3249, %v3656, 0
    %v3682 = vsel %vm3249, %v3657, 0
    %3684 = vmatprep.subr.bf16.mxu0 0
    %3685 = vmatpush1.bf16.msra.mxu0 0
    %3686 = vmatprep.subr.bf16.mxu0 0
    %3687 = vmatpush1.bf16.msra.mxu0 0
    %3688 = vmatprep.subr.bf16.mxu0 0
    %3689 = vmatpush1.bf16.msra.mxu0 0
    %3690 = vmatprep.subr.bf16.mxu0 0
    %3691 = vmatpush1.bf16.msra.mxu0 0
    %3692 = vmatprep.subr.bf16.mxu0 0
    %3693 = vmatpush1.bf16.msra.mxu0 0
    %3694 = vmatprep.subr.bf16.mxu0 0
    %3695 = vmatpush1.bf16.msra.mxu0 0
    %3696 = vmatprep.subr.bf16.mxu0 %v3673
    %3697 = vmatpush1.bf16.msra.mxu0 %v3672
    %3698 = vmatprep.subr.bf16.mxu0 %v3671
    %3699 = vmatpush1.bf16.msra.mxu0 %v3670
    %3700 = vmatprep.subr.bf16.mxu0 0
    %3701 = vmatpush2.bf16.msra.mxu0 0
    %3702 = vmatprep.subr.bf16.mxu0 0
    %3703 = vmatpush2.bf16.msra.mxu0 0
    %3704 = vmatprep.subr.bf16.mxu0 0
    %3705 = vmatpush2.bf16.msra.mxu0 0
    %3706 = vmatprep.subr.bf16.mxu0 0
    %3707 = vmatpush2.bf16.msra.mxu0 0
    %3708 = vmatprep.subr.bf16.mxu0 0
    %3709 = vmatpush2.bf16.msra.mxu0 0
    %3710 = vmatprep.subr.bf16.mxu0 0
    %3711 = vmatpush2.bf16.msra.mxu0 0
    %3712 = vmatprep.subr.bf16.mxu0 0
    %3713 = vmatpush2.bf16.msra.mxu0 0
    %3714 = vmatprep.subr.bf16.mxu0 0
    %3715 = vmatpush2.bf16.msra.mxu0 0
    %3716 = vmatprep.mubr.bf16.mxu0 0
    %3717 = vmatmul.mubr.bf16.gmra.mxu0 %v3679
    %v3718 = vpop.f32.mrf.mxu0
    %v3719 = vadd.f32 0.0, %v3718
    %v3720 = vpop.f32.mrf.mxu0
    %v3721 = vadd.f32 0.0, %v3720
    %v3722 = vpop.f32.mrf.mxu0
    %v3723 = vadd.f32 0.0, %v3722
    %v3724 = vpop.f32.mrf.mxu0
    %v3725 = vadd.f32 0.0, %v3724
    %3726 = vmatprep.mubr.bf16.mxu0 0
    %3727 = vmatmul.mubr.bf16.gmra.mxu0 %v3682
    %v3728 = vpop.f32.mrf.mxu0
    %v3729 = vadd.f32 0.0, %v3728
    %v3730 = vpop.f32.mrf.mxu0
    %v3731 = vadd.f32 0.0, %v3730
    %v3732 = vpop.f32.mrf.mxu0
    %v3733 = vadd.f32 0.0, %v3732
    %v3734 = vpop.f32.mrf.mxu0
    %v3735 = vadd.f32 0.0, %v3734
    %3736 = vdwg.mxu0
    %v3741 = vunpack.c.l.b16 %v3628
    %v3742 = vunpack.c.l.b16 %v3629
    %v3743 = vunpack.c.l.b16 %v3630
    %v3744 = vunpack.c.l.b16 %v3631
    %v3745 = vpack.c.b16 %v3742, %v3741
    %v3746 = vpack.c.b16 %v3744, %v3743
    %v3755 = vunpack.c.l.b16 %v3632
    %v3756 = vunpack.c.h.b16 %v3632
    %v3757 = vunpack.c.l.b16 %v3633
    %v3758 = vunpack.c.l.b16 %v3634
    %v3759 = vunpack.c.h.b16 %v3634
    %v3760 = vunpack.c.l.b16 %v3635
    %v3761 = vunpack.c.l.b16 %v3636
    %v3762 = vunpack.c.h.b16 %v3636
    %v3763 = vunpack.c.l.b16 %v3637
    %v3764 = vunpack.c.l.b16 %v3638
    %v3765 = vunpack.c.h.b16 %v3638
    %v3766 = vunpack.c.l.b16 %v3639
    %v3767 = vpack.c.b16 %v3758, %v3755
    %v3768 = vpack.c.b16 %v3759, %v3756
    %v3769 = vpack.c.b16 %v3760, %v3757
    %v3770 = vpack.c.b16 %v3764, %v3761
    %v3771 = vpack.c.b16 %v3765, %v3762
    %v3772 = vpack.c.b16 %v3766, %v3763
    %3773 = vrot.lane.b32.xlu0 %v3767, 1
    %v3774 = vpop.permute.xlu0 %3773
    %3775 = vrot.lane.b32.xlu0 %v3768, 1
    %v3776 = vpop.permute.xlu0 %3775
    %3777 = vrot.lane.b32.xlu0 %v3769, 1
    %v3778 = vpop.permute.xlu0 %3777
    %3779 = vrot.lane.b32.xlu0 %v3770, 1
    %v3780 = vpop.permute.xlu0 %3779
    %3781 = vrot.lane.b32.xlu0 %v3771, 1
    %v3782 = vpop.permute.xlu0 %3781
    %3783 = vrot.lane.b32.xlu0 %v3772, 1
    %v3784 = vpop.permute.xlu0 %3783
    %v3785 = vsel %vm177, %v3774, %v3776
    %v3786 = vsel %vm177, %v3776, %v3778
    %v3787 = vsel %vm177, %v3780, %v3782
    %v3788 = vsel %vm177, %v3782, %v3784
    %v3794 = vsel %vm3249, %v3745, 0
    %v3797 = vsel %vm3249, %v3746, 0
    %3799 = vmatprep.subr.bf16.mxu0 0
    %3800 = vmatpush1.bf16.msra.mxu0 0
    %3801 = vmatprep.subr.bf16.mxu0 0
    %3802 = vmatpush1.bf16.msra.mxu0 0
    %3803 = vmatprep.subr.bf16.mxu0 0
    %3804 = vmatpush1.bf16.msra.mxu0 0
    %3805 = vmatprep.subr.bf16.mxu0 0
    %3806 = vmatpush1.bf16.msra.mxu0 0
    %3807 = vmatprep.subr.bf16.mxu0 0
    %3808 = vmatpush1.bf16.msra.mxu0 0
    %3809 = vmatprep.subr.bf16.mxu0 0
    %3810 = vmatpush1.bf16.msra.mxu0 0
    %3811 = vmatprep.subr.bf16.mxu0 %v3788
    %3812 = vmatpush1.bf16.msra.mxu0 %v3787
    %3813 = vmatprep.subr.bf16.mxu0 %v3786
    %3814 = vmatpush1.bf16.msra.mxu0 %v3785
    %3815 = vmatprep.subr.bf16.mxu0 0
    %3816 = vmatpush2.bf16.msra.mxu0 0
    %3817 = vmatprep.subr.bf16.mxu0 0
    %3818 = vmatpush2.bf16.msra.mxu0 0
    %3819 = vmatprep.subr.bf16.mxu0 0
    %3820 = vmatpush2.bf16.msra.mxu0 0
    %3821 = vmatprep.subr.bf16.mxu0 0
    %3822 = vmatpush2.bf16.msra.mxu0 0
    %3823 = vmatprep.subr.bf16.mxu0 0
    %3824 = vmatpush2.bf16.msra.mxu0 0
    %3825 = vmatprep.subr.bf16.mxu0 0
    %3826 = vmatpush2.bf16.msra.mxu0 0
    %3827 = vmatprep.subr.bf16.mxu0 0
    %3828 = vmatpush2.bf16.msra.mxu0 0
    %3829 = vmatprep.subr.bf16.mxu0 0
    %3830 = vmatpush2.bf16.msra.mxu0 0
    %3831 = vmatprep.mubr.bf16.mxu0 0
    %3832 = vmatmul.mubr.bf16.gmra.mxu0 %v3794
    %v3833 = vpop.f32.mrf.mxu0
    %v3834 = vadd.f32 %v3719, %v3833
    %v3835 = vpop.f32.mrf.mxu0
    %v3836 = vadd.f32 %v3721, %v3835
    %v3837 = vpop.f32.mrf.mxu0
    %v3838 = vadd.f32 %v3723, %v3837
    %v3839 = vpop.f32.mrf.mxu0
    %v3840 = vadd.f32 %v3725, %v3839
    %3841 = vmatprep.mubr.bf16.mxu0 0
    %3842 = vmatmul.mubr.bf16.gmra.mxu0 %v3797
    %v3843 = vpop.f32.mrf.mxu0
    %v3844 = vadd.f32 %v3729, %v3843
    %v3845 = vpop.f32.mrf.mxu0
    %v3846 = vadd.f32 %v3731, %v3845
    %v3847 = vpop.f32.mrf.mxu0
    %v3848 = vadd.f32 %v3733, %v3847
    %v3849 = vpop.f32.mrf.mxu0
    %v3850 = vadd.f32 %v3735, %v3849
    %3851 = vdwg.mxu0
    %v3852 = vld [vmem:[%s3424] sm:$0xf]
    %v3853 = vld [vmem:[%s3424 + $0x4] sm:$0xf]
    %v3854 = vld [vmem:[%s3424 + $0x8] sm:$0xf]
    %v3855 = vld [vmem:[%s3424 + $0xc] sm:$0xf]
    %v3856 = vld [vmem:[#allocation3 + $0xc] sm:$0xff]
    %v3857 = vld [vmem:[#allocation3 + $0x14] sm:$0xf]
    %v3858 = vld [vmem:[#allocation3 + $0x4c] sm:$0xff]
    %v3859 = vld [vmem:[#allocation3 + $0x54] sm:$0xf]
    %v3860 = vld [vmem:[#allocation3 + $0x8c] sm:$0xff]
    %v3861 = vld [vmem:[#allocation3 + $0x94] sm:$0xf]
    %v3862 = vld [vmem:[#allocation3 + $0xcc] sm:$0xff]
    %v3863 = vld [vmem:[#allocation3 + $0xd4] sm:$0xf]
    %v3868 = vunpack.c.l.b16 %v3852
    %v3869 = vunpack.c.l.b16 %v3853
    %v3870 = vunpack.c.l.b16 %v3854
    %v3871 = vunpack.c.l.b16 %v3855
    %v3872 = vpack.c.b16 %v3869, %v3868
    %v3873 = vpack.c.b16 %v3871, %v3870
    %v3882 = vunpack.c.l.b16 %v3856
    %v3883 = vunpack.c.h.b16 %v3856
    %v3884 = vunpack.c.l.b16 %v3857
    %v3885 = vunpack.c.l.b16 %v3858
    %v3886 = vunpack.c.h.b16 %v3858
    %v3887 = vunpack.c.l.b16 %v3859
    %v3888 = vunpack.c.l.b16 %v3860
    %v3889 = vunpack.c.h.b16 %v3860
    %v3890 = vunpack.c.l.b16 %v3861
    %v3891 = vunpack.c.l.b16 %v3862
    %v3892 = vunpack.c.h.b16 %v3862
    %v3893 = vunpack.c.l.b16 %v3863
    %v3894 = vpack.c.b16 %v3885, %v3882
    %v3895 = vpack.c.b16 %v3886, %v3883
    %v3896 = vpack.c.b16 %v3887, %v3884
    %v3897 = vpack.c.b16 %v3891, %v3888
    %v3898 = vpack.c.b16 %v3892, %v3889
    %v3899 = vpack.c.b16 %v3893, %v3890
    %3900 = vrot.lane.b32.xlu0 %v3894, 127
    %v3901 = vpop.permute.xlu0 %3900
    %3902 = vrot.lane.b32.xlu0 %v3895, 127
    %v3903 = vpop.permute.xlu0 %3902
    %3904 = vrot.lane.b32.xlu0 %v3896, 127
    %v3905 = vpop.permute.xlu0 %3904
    %3906 = vrot.lane.b32.xlu0 %v3897, 127
    %v3907 = vpop.permute.xlu0 %3906
    %3908 = vrot.lane.b32.xlu0 %v3898, 127
    %v3909 = vpop.permute.xlu0 %3908
    %3910 = vrot.lane.b32.xlu0 %v3899, 127
    %v3911 = vpop.permute.xlu0 %3910
    %v3912 = vsel %vm276, %v3901, %v3903
    %v3913 = vsel %vm276, %v3903, %v3905
    %v3914 = vsel %vm276, %v3907, %v3909
    %v3915 = vsel %vm276, %v3909, %v3911
    %v3921 = vsel %vm3249, %v3872, 0
    %v3924 = vsel %vm3249, %v3873, 0
    %3926 = vmatprep.subr.bf16.mxu0 0
    %3927 = vmatpush1.bf16.msra.mxu0 0
    %3928 = vmatprep.subr.bf16.mxu0 0
    %3929 = vmatpush1.bf16.msra.mxu0 0
    %3930 = vmatprep.subr.bf16.mxu0 0
    %3931 = vmatpush1.bf16.msra.mxu0 0
    %3932 = vmatprep.subr.bf16.mxu0 0
    %3933 = vmatpush1.bf16.msra.mxu0 0
    %3934 = vmatprep.subr.bf16.mxu0 0
    %3935 = vmatpush1.bf16.msra.mxu0 0
    %3936 = vmatprep.subr.bf16.mxu0 0
    %3937 = vmatpush1.bf16.msra.mxu0 0
    %3938 = vmatprep.subr.bf16.mxu0 %v3915
    %3939 = vmatpush1.bf16.msra.mxu0 %v3914
    %3940 = vmatprep.subr.bf16.mxu0 %v3913
    %3941 = vmatpush1.bf16.msra.mxu0 %v3912
    %3942 = vmatprep.subr.bf16.mxu0 0
    %3943 = vmatpush2.bf16.msra.mxu0 0
    %3944 = vmatprep.subr.bf16.mxu0 0
    %3945 = vmatpush2.bf16.msra.mxu0 0
    %3946 = vmatprep.subr.bf16.mxu0 0
    %3947 = vmatpush2.bf16.msra.mxu0 0
    %3948 = vmatprep.subr.bf16.mxu0 0
    %3949 = vmatpush2.bf16.msra.mxu0 0
    %3950 = vmatprep.subr.bf16.mxu0 0
    %3951 = vmatpush2.bf16.msra.mxu0 0
    %3952 = vmatprep.subr.bf16.mxu0 0
    %3953 = vmatpush2.bf16.msra.mxu0 0
    %3954 = vmatprep.subr.bf16.mxu0 0
    %3955 = vmatpush2.bf16.msra.mxu0 0
    %3956 = vmatprep.subr.bf16.mxu0 0
    %3957 = vmatpush2.bf16.msra.mxu0 0
    %3958 = vmatprep.mubr.bf16.mxu0 0
    %3959 = vmatmul.mubr.bf16.gmra.mxu0 %v3921
    %v3960 = vpop.f32.mrf.mxu0
    %v3961 = vadd.f32 0.0, %v3960
    %v3962 = vpop.f32.mrf.mxu0
    %v3963 = vadd.f32 0.0, %v3962
    %v3964 = vpop.f32.mrf.mxu0
    %v3965 = vadd.f32 0.0, %v3964
    %v3966 = vpop.f32.mrf.mxu0
    %v3967 = vadd.f32 0.0, %v3966
    %3968 = vmatprep.mubr.bf16.mxu0 0
    %3969 = vmatmul.mubr.bf16.gmra.mxu0 %v3924
    %v3970 = vpop.f32.mrf.mxu0
    %v3971 = vadd.f32 0.0, %v3970
    %v3972 = vpop.f32.mrf.mxu0
    %v3973 = vadd.f32 0.0, %v3972
    %v3974 = vpop.f32.mrf.mxu0
    %v3975 = vadd.f32 0.0, %v3974
    %v3976 = vpop.f32.mrf.mxu0
    %v3977 = vadd.f32 0.0, %v3976
    %3978 = vdwg.mxu0
    %v3979 = vadd.f32 %v3834, %v3961
    %v3980 = vadd.f32 %v3836, %v3963
    %v3981 = vadd.f32 %v3838, %v3965
    %v3982 = vadd.f32 %v3840, %v3967
    %v3983 = vadd.f32 %v3844, %v3971
    %v3984 = vadd.f32 %v3846, %v3973
    %v3985 = vadd.f32 %v3848, %v3975
    %v3986 = vadd.f32 %v3850, %v3977
    %3987 = vst [vmem:[#allocation2 + $0x10] sm:$0xff] %v3979
    %3988 = vst [vmem:[#allocation2 + $0x18] sm:$0xff] %v3980
    %3989 = vst [vmem:[#allocation2 + $0x80] sm:$0xff] %v3981
    %3990 = vst [vmem:[#allocation2 + $0x88] sm:$0xff] %v3982
    %3991 = vst [vmem:[#allocation2 + $0xf0] sm:$0xff] %v3983
    %3992 = vst [vmem:[#allocation2 + $0xf8] sm:$0xff] %v3984
    %3993 = vst [vmem:[#allocation2 + $0x160] sm:$0xff] %v3985
    %3994 = vst [vmem:[#allocation2 + $0x168] sm:$0xff] %v3986
    %v3995 = vld [vmem:[%s8 + $0x2] sm:$0x3]
    %v3997 = vlaneseq
    %v3998 = vshrl.u32 %v3997, 7
    %v3999 = vsub.s32 0, %v3998
    %v4000 = vrot.slane %v3995, %v3999
    %v4001 = vlaneseq
    %v4002 = vshrl.u32 %v4001, 7
    %v4003 = vsub.s32 1, %v4002
    %v4004 = vrot.slane %v3995, %v4003
    %v4007 = vmul.f32 %v3979, %v4000
    %v4008 = vmul.f32 %v3980, %v4004
    %v4009 = vmul.f32 %v3981, %v4000
    %v4010 = vmul.f32 %v3982, %v4004
    %v4011 = vmul.f32 %v3983, %v4000
    %v4012 = vmul.f32 %v3984, %v4004
    %v4013 = vmul.f32 %v3985, %v4000
    %v4014 = vmul.f32 %v3986, %v4004
    %v4015 = vadd.f32 %v4007, %v4008
    %4016 = vadd.xlane.f32.xlu0 %v4015
    %v4017 = vpop.xlane.xlu0 %4016
    %v4018 = vadd.f32 %v4009, %v4010
    %4019 = vadd.xlane.f32.xlu0 %v4018
    %v4020 = vpop.xlane.xlu0 %4019
    %v4021 = vadd.f32 %v4011, %v4012
    %4022 = vadd.xlane.f32.xlu0 %v4021
    %v4023 = vpop.xlane.xlu0 %4022
    %v4024 = vadd.f32 %v4013, %v4014
    %4025 = vadd.xlane.f32.xlu0 %v4024
    %v4026 = vpop.xlane.xlu0 %4025
    %v4027 = vadd.f32 %v3600, %v4017
    %v4028 = vadd.f32 %v3601, %v4020
    %v4029 = vadd.f32 %v3602, %v4023
    %v4030 = vadd.f32 %v3603, %v4026
    %v4031 = vmul.f32 %v4007, %v3979
    %v4032 = vmul.f32 %v4008, %v3980
    %v4033 = vmul.f32 %v4009, %v3981
    %v4034 = vmul.f32 %v4010, %v3982
    %v4035 = vmul.f32 %v4011, %v3983
    %v4036 = vmul.f32 %v4012, %v3984
    %v4037 = vmul.f32 %v4013, %v3985
    %v4038 = vmul.f32 %v4014, %v3986
    %v4039 = vadd.f32 %v4031, %v4032
    %4040 = vadd.xlane.f32.xlu0 %v4039
    %v4041 = vpop.xlane.xlu0 %4040
    %v4042 = vadd.f32 %v4033, %v4034
    %4043 = vadd.xlane.f32.xlu0 %v4042
    %v4044 = vpop.xlane.xlu0 %4043
    %v4045 = vadd.f32 %v4035, %v4036
    %4046 = vadd.xlane.f32.xlu0 %v4045
    %v4047 = vpop.xlane.xlu0 %4046
    %v4048 = vadd.f32 %v4037, %v4038
    %4049 = vadd.xlane.f32.xlu0 %v4048
    %v4050 = vpop.xlane.xlu0 %4049
    %v4051 = vadd.f32 %v3624, %v4041
    %v4052 = vadd.f32 %v3625, %v4044
    %v4053 = vadd.f32 %v3626, %v4047
    %v4054 = vadd.f32 %v3627, %v4050
    %v4055 = vld [vmem:[%s2] sm:$0xf]
    %v4056 = vld [vmem:[%s2 + $0x4] sm:$0xf]
    %v4057 = vld [vmem:[%s2 + $0x8] sm:$0xf]
    %v4058 = vld [vmem:[%s2 + $0xc] sm:$0xf]
    %v4059 = vld [vmem:[#allocation3 + $0x10] sm:$0xff]
    %v4060 = vld [vmem:[#allocation3 + $0x18] sm:$0xf]
    %v4061 = vld [vmem:[#allocation3 + $0x50] sm:$0xff]
    %v4062 = vld [vmem:[#allocation3 + $0x58] sm:$0xf]
    %v4063 = vld [vmem:[#allocation3 + $0x90] sm:$0xff]
    %v4064 = vld [vmem:[#allocation3 + $0x98] sm:$0xf]
    %v4065 = vld [vmem:[#allocation3 + $0xd0] sm:$0xff]
    %v4066 = vld [vmem:[#allocation3 + $0xd8] sm:$0xf]
    %v4067 = vld [vmem:[%s3210] sm:$0xf]
    %v4068 = vld [vmem:[%s3210 + $0x4] sm:$0xf]
    %v4069 = vld [vmem:[%s3210 + $0x8] sm:$0xf]
    %v4070 = vld [vmem:[%s3210 + $0xc] sm:$0xf]
    %v4071 = vld [vmem:[#allocation3 + $0x14] sm:$0xff]
    %v4072 = vld [vmem:[#allocation3 + $0x54] sm:$0xff]
    %v4073 = vld [vmem:[#allocation3 + $0x94] sm:$0xff]
    %v4074 = vld [vmem:[#allocation3 + $0xd4] sm:$0xff]
    %v4079 = vunpack.c.l.b16 %v4067
    %v4080 = vunpack.c.l.b16 %v4068
    %v4081 = vunpack.c.l.b16 %v4069
    %v4082 = vunpack.c.l.b16 %v4070
    %v4083 = vpack.c.b16 %v4080, %v4079
    %v4084 = vpack.c.b16 %v4082, %v4081
    %v4089 = vunpack.c.l.b16 %v4071
    %v4090 = vunpack.c.h.b16 %v4071
    %v4091 = vunpack.c.l.b16 %v4072
    %v4092 = vunpack.c.h.b16 %v4072
    %v4093 = vunpack.c.l.b16 %v4073
    %v4094 = vunpack.c.h.b16 %v4073
    %v4095 = vunpack.c.l.b16 %v4074
    %v4096 = vunpack.c.h.b16 %v4074
    %v4097 = vpack.c.b16 %v4091, %v4089
    %v4098 = vpack.c.b16 %v4092, %v4090
    %v4099 = vpack.c.b16 %v4095, %v4093
    %v4100 = vpack.c.b16 %v4096, %v4094
    %v4106 = vsel %vm3249, %v4083, 0
    %v4109 = vsel %vm3249, %v4084, 0
    %4111 = vmatprep.subr.bf16.mxu0 0
    %4112 = vmatpush1.bf16.msra.mxu0 0
    %4113 = vmatprep.subr.bf16.mxu0 0
    %4114 = vmatpush1.bf16.msra.mxu0 0
    %4115 = vmatprep.subr.bf16.mxu0 0
    %4116 = vmatpush1.bf16.msra.mxu0 0
    %4117 = vmatprep.subr.bf16.mxu0 0
    %4118 = vmatpush1.bf16.msra.mxu0 0
    %4119 = vmatprep.subr.bf16.mxu0 0
    %4120 = vmatpush1.bf16.msra.mxu0 0
    %4121 = vmatprep.subr.bf16.mxu0 0
    %4122 = vmatpush1.bf16.msra.mxu0 0
    %4123 = vmatprep.subr.bf16.mxu0 %v4100
    %4124 = vmatpush1.bf16.msra.mxu0 %v4099
    %4125 = vmatprep.subr.bf16.mxu0 %v4098
    %4126 = vmatpush1.bf16.msra.mxu0 %v4097
    %4127 = vmatprep.subr.bf16.mxu0 0
    %4128 = vmatpush2.bf16.msra.mxu0 0
    %4129 = vmatprep.subr.bf16.mxu0 0
    %4130 = vmatpush2.bf16.msra.mxu0 0
    %4131 = vmatprep.subr.bf16.mxu0 0
    %4132 = vmatpush2.bf16.msra.mxu0 0
    %4133 = vmatprep.subr.bf16.mxu0 0
    %4134 = vmatpush2.bf16.msra.mxu0 0
    %4135 = vmatprep.subr.bf16.mxu0 0
    %4136 = vmatpush2.bf16.msra.mxu0 0
    %4137 = vmatprep.subr.bf16.mxu0 0
    %4138 = vmatpush2.bf16.msra.mxu0 0
    %4139 = vmatprep.subr.bf16.mxu0 0
    %4140 = vmatpush2.bf16.msra.mxu0 0
    %4141 = vmatprep.subr.bf16.mxu0 0
    %4142 = vmatpush2.bf16.msra.mxu0 0
    %4143 = vmatprep.mubr.bf16.mxu0 0
    %4144 = vmatmul.mubr.bf16.gmra.mxu0 %v4106
    %v4145 = vpop.f32.mrf.mxu0
    %v4146 = vadd.f32 0.0, %v4145
    %v4147 = vpop.f32.mrf.mxu0
    %v4148 = vadd.f32 0.0, %v4147
    %v4149 = vpop.f32.mrf.mxu0
    %v4150 = vadd.f32 0.0, %v4149
    %v4151 = vpop.f32.mrf.mxu0
    %v4152 = vadd.f32 0.0, %v4151
    %4153 = vmatprep.mubr.bf16.mxu0 0
    %4154 = vmatmul.mubr.bf16.gmra.mxu0 %v4109
    %v4155 = vpop.f32.mrf.mxu0
    %v4156 = vadd.f32 0.0, %v4155
    %v4157 = vpop.f32.mrf.mxu0
    %v4158 = vadd.f32 0.0, %v4157
    %v4159 = vpop.f32.mrf.mxu0
    %v4160 = vadd.f32 0.0, %v4159
    %v4161 = vpop.f32.mrf.mxu0
    %v4162 = vadd.f32 0.0, %v4161
    %4163 = vdwg.mxu0
    %v4168 = vunpack.c.l.b16 %v4055
    %v4169 = vunpack.c.l.b16 %v4056
    %v4170 = vunpack.c.l.b16 %v4057
    %v4171 = vunpack.c.l.b16 %v4058
    %v4172 = vpack.c.b16 %v4169, %v4168
    %v4173 = vpack.c.b16 %v4171, %v4170
    %v4182 = vunpack.c.l.b16 %v4059
    %v4183 = vunpack.c.h.b16 %v4059
    %v4184 = vunpack.c.l.b16 %v4060
    %v4185 = vunpack.c.l.b16 %v4061
    %v4186 = vunpack.c.h.b16 %v4061
    %v4187 = vunpack.c.l.b16 %v4062
    %v4188 = vunpack.c.l.b16 %v4063
    %v4189 = vunpack.c.h.b16 %v4063
    %v4190 = vunpack.c.l.b16 %v4064
    %v4191 = vunpack.c.l.b16 %v4065
    %v4192 = vunpack.c.h.b16 %v4065
    %v4193 = vunpack.c.l.b16 %v4066
    %v4194 = vpack.c.b16 %v4185, %v4182
    %v4195 = vpack.c.b16 %v4186, %v4183
    %v4196 = vpack.c.b16 %v4187, %v4184
    %v4197 = vpack.c.b16 %v4191, %v4188
    %v4198 = vpack.c.b16 %v4192, %v4189
    %v4199 = vpack.c.b16 %v4193, %v4190
    %4200 = vrot.lane.b32.xlu0 %v4194, 1
    %v4201 = vpop.permute.xlu0 %4200
    %4202 = vrot.lane.b32.xlu0 %v4195, 1
    %v4203 = vpop.permute.xlu0 %4202
    %4204 = vrot.lane.b32.xlu0 %v4196, 1
    %v4205 = vpop.permute.xlu0 %4204
    %4206 = vrot.lane.b32.xlu0 %v4197, 1
    %v4207 = vpop.permute.xlu0 %4206
    %4208 = vrot.lane.b32.xlu0 %v4198, 1
    %v4209 = vpop.permute.xlu0 %4208
    %4210 = vrot.lane.b32.xlu0 %v4199, 1
    %v4211 = vpop.permute.xlu0 %4210
    %v4212 = vsel %vm177, %v4201, %v4203
    %v4213 = vsel %vm177, %v4203, %v4205
    %v4214 = vsel %vm177, %v4207, %v4209
    %v4215 = vsel %vm177, %v4209, %v4211
    %v4221 = vsel %vm3249, %v4172, 0
    %v4224 = vsel %vm3249, %v4173, 0
    %4226 = vmatprep.subr.bf16.mxu0 0
    %4227 = vmatpush1.bf16.msra.mxu0 0
    %4228 = vmatprep.subr.bf16.mxu0 0
    %4229 = vmatpush1.bf16.msra.mxu0 0
    %4230 = vmatprep.subr.bf16.mxu0 0
    %4231 = vmatpush1.bf16.msra.mxu0 0
    %4232 = vmatprep.subr.bf16.mxu0 0
    %4233 = vmatpush1.bf16.msra.mxu0 0
    %4234 = vmatprep.subr.bf16.mxu0 0
    %4235 = vmatpush1.bf16.msra.mxu0 0
    %4236 = vmatprep.subr.bf16.mxu0 0
    %4237 = vmatpush1.bf16.msra.mxu0 0
    %4238 = vmatprep.subr.bf16.mxu0 %v4215
    %4239 = vmatpush1.bf16.msra.mxu0 %v4214
    %4240 = vmatprep.subr.bf16.mxu0 %v4213
    %4241 = vmatpush1.bf16.msra.mxu0 %v4212
    %4242 = vmatprep.subr.bf16.mxu0 0
    %4243 = vmatpush2.bf16.msra.mxu0 0
    %4244 = vmatprep.subr.bf16.mxu0 0
    %4245 = vmatpush2.bf16.msra.mxu0 0
    %4246 = vmatprep.subr.bf16.mxu0 0
    %4247 = vmatpush2.bf16.msra.mxu0 0
    %4248 = vmatprep.subr.bf16.mxu0 0
    %4249 = vmatpush2.bf16.msra.mxu0 0
    %4250 = vmatprep.subr.bf16.mxu0 0
    %4251 = vmatpush2.bf16.msra.mxu0 0
    %4252 = vmatprep.subr.bf16.mxu0 0
    %4253 = vmatpush2.bf16.msra.mxu0 0
    %4254 = vmatprep.subr.bf16.mxu0 0
    %4255 = vmatpush2.bf16.msra.mxu0 0
    %4256 = vmatprep.subr.bf16.mxu0 0
    %4257 = vmatpush2.bf16.msra.mxu0 0
    %4258 = vmatprep.mubr.bf16.mxu0 0
    %4259 = vmatmul.mubr.bf16.gmra.mxu0 %v4221
    %v4260 = vpop.f32.mrf.mxu0
    %v4261 = vadd.f32 %v4146, %v4260
    %v4262 = vpop.f32.mrf.mxu0
    %v4263 = vadd.f32 %v4148, %v4262
    %v4264 = vpop.f32.mrf.mxu0
    %v4265 = vadd.f32 %v4150, %v4264
    %v4266 = vpop.f32.mrf.mxu0
    %v4267 = vadd.f32 %v4152, %v4266
    %4268 = vmatprep.mubr.bf16.mxu0 0
    %4269 = vmatmul.mubr.bf16.gmra.mxu0 %v4224
    %v4270 = vpop.f32.mrf.mxu0
    %v4271 = vadd.f32 %v4156, %v4270
    %v4272 = vpop.f32.mrf.mxu0
    %v4273 = vadd.f32 %v4158, %v4272
    %v4274 = vpop.f32.mrf.mxu0
    %v4275 = vadd.f32 %v4160, %v4274
    %v4276 = vpop.f32.mrf.mxu0
    %v4277 = vadd.f32 %v4162, %v4276
    %4278 = vdwg.mxu0
    %v4279 = vld [vmem:[%s3424] sm:$0xf]
    %v4280 = vld [vmem:[%s3424 + $0x4] sm:$0xf]
    %v4281 = vld [vmem:[%s3424 + $0x8] sm:$0xf]
    %v4282 = vld [vmem:[%s3424 + $0xc] sm:$0xf]
    %v4283 = vld [vmem:[#allocation3 + $0x14] sm:$0xff]
    %v4284 = vld [vmem:[#allocation3 + $0x1c] sm:$0xf]
    %v4285 = vld [vmem:[#allocation3 + $0x54] sm:$0xff]
    %v4286 = vld [vmem:[#allocation3 + $0x5c] sm:$0xf]
    %v4287 = vld [vmem:[#allocation3 + $0x94] sm:$0xff]
    %v4288 = vld [vmem:[#allocation3 + $0x9c] sm:$0xf]
    %v4289 = vld [vmem:[#allocation3 + $0xd4] sm:$0xff]
    %v4290 = vld [vmem:[#allocation3 + $0xdc] sm:$0xf]
    %v4295 = vunpack.c.l.b16 %v4279
    %v4296 = vunpack.c.l.b16 %v4280
    %v4297 = vunpack.c.l.b16 %v4281
    %v4298 = vunpack.c.l.b16 %v4282
    %v4299 = vpack.c.b16 %v4296, %v4295
    %v4300 = vpack.c.b16 %v4298, %v4297
    %v4309 = vunpack.c.l.b16 %v4283
    %v4310 = vunpack.c.h.b16 %v4283
    %v4311 = vunpack.c.l.b16 %v4284
    %v4312 = vunpack.c.l.b16 %v4285
    %v4313 = vunpack.c.h.b16 %v4285
    %v4314 = vunpack.c.l.b16 %v4286
    %v4315 = vunpack.c.l.b16 %v4287
    %v4316 = vunpack.c.h.b16 %v4287
    %v4317 = vunpack.c.l.b16 %v4288
    %v4318 = vunpack.c.l.b16 %v4289
    %v4319 = vunpack.c.h.b16 %v4289
    %v4320 = vunpack.c.l.b16 %v4290
    %v4321 = vpack.c.b16 %v4312, %v4309
    %v4322 = vpack.c.b16 %v4313, %v4310
    %v4323 = vpack.c.b16 %v4314, %v4311
    %v4324 = vpack.c.b16 %v4318, %v4315
    %v4325 = vpack.c.b16 %v4319, %v4316
    %v4326 = vpack.c.b16 %v4320, %v4317
    %4327 = vrot.lane.b32.xlu0 %v4321, 127
    %v4328 = vpop.permute.xlu0 %4327
    %4329 = vrot.lane.b32.xlu0 %v4322, 127
    %v4330 = vpop.permute.xlu0 %4329
    %4331 = vrot.lane.b32.xlu0 %v4323, 127
    %v4332 = vpop.permute.xlu0 %4331
    %4333 = vrot.lane.b32.xlu0 %v4324, 127
    %v4334 = vpop.permute.xlu0 %4333
    %4335 = vrot.lane.b32.xlu0 %v4325, 127
    %v4336 = vpop.permute.xlu0 %4335
    %4337 = vrot.lane.b32.xlu0 %v4326, 127
    %v4338 = vpop.permute.xlu0 %4337
    %v4339 = vsel %vm276, %v4328, %v4330
    %v4340 = vsel %vm276, %v4330, %v4332
    %v4341 = vsel %vm276, %v4334, %v4336
    %v4342 = vsel %vm276, %v4336, %v4338
    %v4348 = vsel %vm3249, %v4299, 0
    %v4351 = vsel %vm3249, %v4300, 0
    %4353 = vmatprep.subr.bf16.mxu0 0
    %4354 = vmatpush1.bf16.msra.mxu0 0
    %4355 = vmatprep.subr.bf16.mxu0 0
    %4356 = vmatpush1.bf16.msra.mxu0 0
    %4357 = vmatprep.subr.bf16.mxu0 0
    %4358 = vmatpush1.bf16.msra.mxu0 0
    %4359 = vmatprep.subr.bf16.mxu0 0
    %4360 = vmatpush1.bf16.msra.mxu0 0
    %4361 = vmatprep.subr.bf16.mxu0 0
    %4362 = vmatpush1.bf16.msra.mxu0 0
    %4363 = vmatprep.subr.bf16.mxu0 0
    %4364 = vmatpush1.bf16.msra.mxu0 0
    %4365 = vmatprep.subr.bf16.mxu0 %v4342
    %4366 = vmatpush1.bf16.msra.mxu0 %v4341
    %4367 = vmatprep.subr.bf16.mxu0 %v4340
    %4368 = vmatpush1.bf16.msra.mxu0 %v4339
    %4369 = vmatprep.subr.bf16.mxu0 0
    %4370 = vmatpush2.bf16.msra.mxu0 0
    %4371 = vmatprep.subr.bf16.mxu0 0
    %4372 = vmatpush2.bf16.msra.mxu0 0
    %4373 = vmatprep.subr.bf16.mxu0 0
    %4374 = vmatpush2.bf16.msra.mxu0 0
    %4375 = vmatprep.subr.bf16.mxu0 0
    %4376 = vmatpush2.bf16.msra.mxu0 0
    %4377 = vmatprep.subr.bf16.mxu0 0
    %4378 = vmatpush2.bf16.msra.mxu0 0
    %4379 = vmatprep.subr.bf16.mxu0 0
    %4380 = vmatpush2.bf16.msra.mxu0 0
    %4381 = vmatprep.subr.bf16.mxu0 0
    %4382 = vmatpush2.bf16.msra.mxu0 0
    %4383 = vmatprep.subr.bf16.mxu0 0
    %4384 = vmatpush2.bf16.msra.mxu0 0
    %4385 = vmatprep.mubr.bf16.mxu0 0
    %4386 = vmatmul.mubr.bf16.gmra.mxu0 %v4348
    %v4387 = vpop.f32.mrf.mxu0
    %v4388 = vadd.f32 0.0, %v4387
    %v4389 = vpop.f32.mrf.mxu0
    %v4390 = vadd.f32 0.0, %v4389
    %v4391 = vpop.f32.mrf.mxu0
    %v4392 = vadd.f32 0.0, %v4391
    %v4393 = vpop.f32.mrf.mxu0
    %v4394 = vadd.f32 0.0, %v4393
    %4395 = vmatprep.mubr.bf16.mxu0 0
    %4396 = vmatmul.mubr.bf16.gmra.mxu0 %v4351
    %v4397 = vpop.f32.mrf.mxu0
    %v4398 = vadd.f32 0.0, %v4397
    %v4399 = vpop.f32.mrf.mxu0
    %v4400 = vadd.f32 0.0, %v4399
    %v4401 = vpop.f32.mrf.mxu0
    %v4402 = vadd.f32 0.0, %v4401
    %v4403 = vpop.f32.mrf.mxu0
    %v4404 = vadd.f32 0.0, %v4403
    %4405 = vdwg.mxu0
    %v4406 = vadd.f32 %v4261, %v4388
    %v4407 = vadd.f32 %v4263, %v4390
    %v4408 = vadd.f32 %v4265, %v4392
    %v4409 = vadd.f32 %v4267, %v4394
    %v4410 = vadd.f32 %v4271, %v4398
    %v4411 = vadd.f32 %v4273, %v4400
    %v4412 = vadd.f32 %v4275, %v4402
    %v4413 = vadd.f32 %v4277, %v4404
    %4414 = vst [vmem:[#allocation2 + $0x20] sm:$0xff] %v4406
    %4415 = vst [vmem:[#allocation2 + $0x28] sm:$0xff] %v4407
    %4416 = vst [vmem:[#allocation2 + $0x90] sm:$0xff] %v4408
    %4417 = vst [vmem:[#allocation2 + $0x98] sm:$0xff] %v4409
    %4418 = vst [vmem:[#allocation2 + $0x100] sm:$0xff] %v4410
    %4419 = vst [vmem:[#allocation2 + $0x108] sm:$0xff] %v4411
    %4420 = vst [vmem:[#allocation2 + $0x170] sm:$0xff] %v4412
    %4421 = vst [vmem:[#allocation2 + $0x178] sm:$0xff] %v4413
    %v4422 = vld [vmem:[%s8 + $0x4] sm:$0x3]
    %v4424 = vlaneseq
    %v4425 = vshrl.u32 %v4424, 7
    %v4426 = vsub.s32 0, %v4425
    %v4427 = vrot.slane %v4422, %v4426
    %v4428 = vlaneseq
    %v4429 = vshrl.u32 %v4428, 7
    %v4430 = vsub.s32 1, %v4429
    %v4431 = vrot.slane %v4422, %v4430
    %v4434 = vmul.f32 %v4406, %v4427
    %v4435 = vmul.f32 %v4407, %v4431
    %v4436 = vmul.f32 %v4408, %v4427
    %v4437 = vmul.f32 %v4409, %v4431
    %v4438 = vmul.f32 %v4410, %v4427
    %v4439 = vmul.f32 %v4411, %v4431
    %v4440 = vmul.f32 %v4412, %v4427
    %v4441 = vmul.f32 %v4413, %v4431
    %v4442 = vadd.f32 %v4434, %v4435
    %4443 = vadd.xlane.f32.xlu0 %v4442
    %v4444 = vpop.xlane.xlu0 %4443
    %v4445 = vadd.f32 %v4436, %v4437
    %4446 = vadd.xlane.f32.xlu0 %v4445
    %v4447 = vpop.xlane.xlu0 %4446
    %v4448 = vadd.f32 %v4438, %v4439
    %4449 = vadd.xlane.f32.xlu0 %v4448
    %v4450 = vpop.xlane.xlu0 %4449
    %v4451 = vadd.f32 %v4440, %v4441
    %4452 = vadd.xlane.f32.xlu0 %v4451
    %v4453 = vpop.xlane.xlu0 %4452
    %v4454 = vadd.f32 %v4027, %v4444
    %v4455 = vadd.f32 %v4028, %v4447
    %v4456 = vadd.f32 %v4029, %v4450
    %v4457 = vadd.f32 %v4030, %v4453
    %v4458 = vmul.f32 %v4434, %v4406
    %v4459 = vmul.f32 %v4435, %v4407
    %v4460 = vmul.f32 %v4436, %v4408
    %v4461 = vmul.f32 %v4437, %v4409
    %v4462 = vmul.f32 %v4438, %v4410
    %v4463 = vmul.f32 %v4439, %v4411
    %v4464 = vmul.f32 %v4440, %v4412
    %v4465 = vmul.f32 %v4441, %v4413
    %v4466 = vadd.f32 %v4458, %v4459
    %4467 = vadd.xlane.f32.xlu0 %v4466
    %v4468 = vpop.xlane.xlu0 %4467
    %v4469 = vadd.f32 %v4460, %v4461
    %4470 = vadd.xlane.f32.xlu0 %v4469
    %v4471 = vpop.xlane.xlu0 %4470
    %v4472 = vadd.f32 %v4462, %v4463
    %4473 = vadd.xlane.f32.xlu0 %v4472
    %v4474 = vpop.xlane.xlu0 %4473
    %v4475 = vadd.f32 %v4464, %v4465
    %4476 = vadd.xlane.f32.xlu0 %v4475
    %v4477 = vpop.xlane.xlu0 %4476
    %v4478 = vadd.f32 %v4051, %v4468
    %v4479 = vadd.f32 %v4052, %v4471
    %v4480 = vadd.f32 %v4053, %v4474
    %v4481 = vadd.f32 %v4054, %v4477
    %v4482 = vld [vmem:[%s2] sm:$0xf]
    %v4483 = vld [vmem:[%s2 + $0x4] sm:$0xf]
    %v4484 = vld [vmem:[%s2 + $0x8] sm:$0xf]
    %v4485 = vld [vmem:[%s2 + $0xc] sm:$0xf]
    %v4486 = vld [vmem:[#allocation3 + $0x18] sm:$0xff]
    %v4487 = vld [vmem:[#allocation3 + $0x20] sm:$0xf]
    %v4488 = vld [vmem:[#allocation3 + $0x58] sm:$0xff]
    %v4489 = vld [vmem:[#allocation3 + $0x60] sm:$0xf]
    %v4490 = vld [vmem:[#allocation3 + $0x98] sm:$0xff]
    %v4491 = vld [vmem:[#allocation3 + $0xa0] sm:$0xf]
    %v4492 = vld [vmem:[#allocation3 + $0xd8] sm:$0xff]
    %v4493 = vld [vmem:[#allocation3 + $0xe0] sm:$0xf]
    %v4494 = vld [vmem:[%s3210] sm:$0xf]
    %v4495 = vld [vmem:[%s3210 + $0x4] sm:$0xf]
    %v4496 = vld [vmem:[%s3210 + $0x8] sm:$0xf]
    %v4497 = vld [vmem:[%s3210 + $0xc] sm:$0xf]
    %v4498 = vld [vmem:[#allocation3 + $0x1c] sm:$0xff]
    %v4499 = vld [vmem:[#allocation3 + $0x5c] sm:$0xff]
    %v4500 = vld [vmem:[#allocation3 + $0x9c] sm:$0xff]
    %v4501 = vld [vmem:[#allocation3 + $0xdc] sm:$0xff]
    %v4506 = vunpack.c.l.b16 %v4494
    %v4507 = vunpack.c.l.b16 %v4495
    %v4508 = vunpack.c.l.b16 %v4496
    %v4509 = vunpack.c.l.b16 %v4497
    %v4510 = vpack.c.b16 %v4507, %v4506
    %v4511 = vpack.c.b16 %v4509, %v4508
    %v4516 = vunpack.c.l.b16 %v4498
    %v4517 = vunpack.c.h.b16 %v4498
    %v4518 = vunpack.c.l.b16 %v4499
    %v4519 = vunpack.c.h.b16 %v4499
    %v4520 = vunpack.c.l.b16 %v4500
    %v4521 = vunpack.c.h.b16 %v4500
    %v4522 = vunpack.c.l.b16 %v4501
    %v4523 = vunpack.c.h.b16 %v4501
    %v4524 = vpack.c.b16 %v4518, %v4516
    %v4525 = vpack.c.b16 %v4519, %v4517
    %v4526 = vpack.c.b16 %v4522, %v4520
    %v4527 = vpack.c.b16 %v4523, %v4521
    %v4533 = vsel %vm3249, %v4510, 0
    %v4536 = vsel %vm3249, %v4511, 0
    %4538 = vmatprep.subr.bf16.mxu0 0
    %4539 = vmatpush1.bf16.msra.mxu0 0
    %4540 = vmatprep.subr.bf16.mxu0 0
    %4541 = vmatpush1.bf16.msra.mxu0 0
    %4542 = vmatprep.subr.bf16.mxu0 0
    %4543 = vmatpush1.bf16.msra.mxu0 0
    %4544 = vmatprep.subr.bf16.mxu0 0
    %4545 = vmatpush1.bf16.msra.mxu0 0
    %4546 = vmatprep.subr.bf16.mxu0 0
    %4547 = vmatpush1.bf16.msra.mxu0 0
    %4548 = vmatprep.subr.bf16.mxu0 0
    %4549 = vmatpush1.bf16.msra.mxu0 0
    %4550 = vmatprep.subr.bf16.mxu0 %v4527
    %4551 = vmatpush1.bf16.msra.mxu0 %v4526
    %4552 = vmatprep.subr.bf16.mxu0 %v4525
    %4553 = vmatpush1.bf16.msra.mxu0 %v4524
    %4554 = vmatprep.subr.bf16.mxu0 0
    %4555 = vmatpush2.bf16.msra.mxu0 0
    %4556 = vmatprep.subr.bf16.mxu0 0
    %4557 = vmatpush2.bf16.msra.mxu0 0
    %4558 = vmatprep.subr.bf16.mxu0 0
    %4559 = vmatpush2.bf16.msra.mxu0 0
    %4560 = vmatprep.subr.bf16.mxu0 0
    %4561 = vmatpush2.bf16.msra.mxu0 0
    %4562 = vmatprep.subr.bf16.mxu0 0
    %4563 = vmatpush2.bf16.msra.mxu0 0
    %4564 = vmatprep.subr.bf16.mxu0 0
    %4565 = vmatpush2.bf16.msra.mxu0 0
    %4566 = vmatprep.subr.bf16.mxu0 0
    %4567 = vmatpush2.bf16.msra.mxu0 0
    %4568 = vmatprep.subr.bf16.mxu0 0
    %4569 = vmatpush2.bf16.msra.mxu0 0
    %4570 = vmatprep.mubr.bf16.mxu0 0
    %4571 = vmatmul.mubr.bf16.gmra.mxu0 %v4533
    %v4572 = vpop.f32.mrf.mxu0
    %v4573 = vadd.f32 0.0, %v4572
    %v4574 = vpop.f32.mrf.mxu0
    %v4575 = vadd.f32 0.0, %v4574
    %v4576 = vpop.f32.mrf.mxu0
    %v4577 = vadd.f32 0.0, %v4576
    %v4578 = vpop.f32.mrf.mxu0
    %v4579 = vadd.f32 0.0, %v4578
    %4580 = vmatprep.mubr.bf16.mxu0 0
    %4581 = vmatmul.mubr.bf16.gmra.mxu0 %v4536
    %v4582 = vpop.f32.mrf.mxu0
    %v4583 = vadd.f32 0.0, %v4582
    %v4584 = vpop.f32.mrf.mxu0
    %v4585 = vadd.f32 0.0, %v4584
    %v4586 = vpop.f32.mrf.mxu0
    %v4587 = vadd.f32 0.0, %v4586
    %v4588 = vpop.f32.mrf.mxu0
    %v4589 = vadd.f32 0.0, %v4588
    %4590 = vdwg.mxu0
    %v4595 = vunpack.c.l.b16 %v4482
    %v4596 = vunpack.c.l.b16 %v4483
    %v4597 = vunpack.c.l.b16 %v4484
    %v4598 = vunpack.c.l.b16 %v4485
    %v4599 = vpack.c.b16 %v4596, %v4595
    %v4600 = vpack.c.b16 %v4598, %v4597
    %v4609 = vunpack.c.l.b16 %v4486
    %v4610 = vunpack.c.h.b16 %v4486
    %v4611 = vunpack.c.l.b16 %v4487
    %v4612 = vunpack.c.l.b16 %v4488
    %v4613 = vunpack.c.h.b16 %v4488
    %v4614 = vunpack.c.l.b16 %v4489
    %v4615 = vunpack.c.l.b16 %v4490
    %v4616 = vunpack.c.h.b16 %v4490
    %v4617 = vunpack.c.l.b16 %v4491
    %v4618 = vunpack.c.l.b16 %v4492
    %v4619 = vunpack.c.h.b16 %v4492
    %v4620 = vunpack.c.l.b16 %v4493
    %v4621 = vpack.c.b16 %v4612, %v4609
    %v4622 = vpack.c.b16 %v4613, %v4610
    %v4623 = vpack.c.b16 %v4614, %v4611
    %v4624 = vpack.c.b16 %v4618, %v4615
    %v4625 = vpack.c.b16 %v4619, %v4616
    %v4626 = vpack.c.b16 %v4620, %v4617
    %4627 = vrot.lane.b32.xlu0 %v4621, 1
    %v4628 = vpop.permute.xlu0 %4627
    %4629 = vrot.lane.b32.xlu0 %v4622, 1
    %v4630 = vpop.permute.xlu0 %4629
    %4631 = vrot.lane.b32.xlu0 %v4623, 1
    %v4632 = vpop.permute.xlu0 %4631
    %4633 = vrot.lane.b32.xlu0 %v4624, 1
    %v4634 = vpop.permute.xlu0 %4633
    %4635 = vrot.lane.b32.xlu0 %v4625, 1
    %v4636 = vpop.permute.xlu0 %4635
    %4637 = vrot.lane.b32.xlu0 %v4626, 1
    %v4638 = vpop.permute.xlu0 %4637
    %v4639 = vsel %vm177, %v4628, %v4630
    %v4640 = vsel %vm177, %v4630, %v4632
    %v4641 = vsel %vm177, %v4634, %v4636
    %v4642 = vsel %vm177, %v4636, %v4638
    %v4648 = vsel %vm3249, %v4599, 0
    %v4651 = vsel %vm3249, %v4600, 0
    %4653 = vmatprep.subr.bf16.mxu0 0
    %4654 = vmatpush1.bf16.msra.mxu0 0
    %4655 = vmatprep.subr.bf16.mxu0 0
    %4656 = vmatpush1.bf16.msra.mxu0 0
    %4657 = vmatprep.subr.bf16.mxu0 0
    %4658 = vmatpush1.bf16.msra.mxu0 0
    %4659 = vmatprep.subr.bf16.mxu0 0
    %4660 = vmatpush1.bf16.msra.mxu0 0
    %4661 = vmatprep.subr.bf16.mxu0 0
    %4662 = vmatpush1.bf16.msra.mxu0 0
    %4663 = vmatprep.subr.bf16.mxu0 0
    %4664 = vmatpush1.bf16.msra.mxu0 0
    %4665 = vmatprep.subr.bf16.mxu0 %v4642
    %4666 = vmatpush1.bf16.msra.mxu0 %v4641
    %4667 = vmatprep.subr.bf16.mxu0 %v4640
    %4668 = vmatpush1.bf16.msra.mxu0 %v4639
    %4669 = vmatprep.subr.bf16.mxu0 0
    %4670 = vmatpush2.bf16.msra.mxu0 0
    %4671 = vmatprep.subr.bf16.mxu0 0
    %4672 = vmatpush2.bf16.msra.mxu0 0
    %4673 = vmatprep.subr.bf16.mxu0 0
    %4674 = vmatpush2.bf16.msra.mxu0 0
    %4675 = vmatprep.subr.bf16.mxu0 0
    %4676 = vmatpush2.bf16.msra.mxu0 0
    %4677 = vmatprep.subr.bf16.mxu0 0
    %4678 = vmatpush2.bf16.msra.mxu0 0
    %4679 = vmatprep.subr.bf16.mxu0 0
    %4680 = vmatpush2.bf16.msra.mxu0 0
    %4681 = vmatprep.subr.bf16.mxu0 0
    %4682 = vmatpush2.bf16.msra.mxu0 0
    %4683 = vmatprep.subr.bf16.mxu0 0
    %4684 = vmatpush2.bf16.msra.mxu0 0
    %4685 = vmatprep.mubr.bf16.mxu0 0
    %4686 = vmatmul.mubr.bf16.gmra.mxu0 %v4648
    %v4687 = vpop.f32.mrf.mxu0
    %v4688 = vadd.f32 %v4573, %v4687
    %v4689 = vpop.f32.mrf.mxu0
    %v4690 = vadd.f32 %v4575, %v4689
    %v4691 = vpop.f32.mrf.mxu0
    %v4692 = vadd.f32 %v4577, %v4691
    %v4693 = vpop.f32.mrf.mxu0
    %v4694 = vadd.f32 %v4579, %v4693
    %4695 = vmatprep.mubr.bf16.mxu0 0
    %4696 = vmatmul.mubr.bf16.gmra.mxu0 %v4651
    %v4697 = vpop.f32.mrf.mxu0
    %v4698 = vadd.f32 %v4583, %v4697
    %v4699 = vpop.f32.mrf.mxu0
    %v4700 = vadd.f32 %v4585, %v4699
    %v4701 = vpop.f32.mrf.mxu0
    %v4702 = vadd.f32 %v4587, %v4701
    %v4703 = vpop.f32.mrf.mxu0
    %v4704 = vadd.f32 %v4589, %v4703
    %4705 = vdwg.mxu0
    %v4706 = vld [vmem:[%s3424] sm:$0xf]
    %v4707 = vld [vmem:[%s3424 + $0x4] sm:$0xf]
    %v4708 = vld [vmem:[%s3424 + $0x8] sm:$0xf]
    %v4709 = vld [vmem:[%s3424 + $0xc] sm:$0xf]
    %v4710 = vld [vmem:[#allocation3 + $0x1c] sm:$0xff]
    %v4711 = vld [vmem:[#allocation3 + $0x24] sm:$0xf]
    %v4712 = vld [vmem:[#allocation3 + $0x5c] sm:$0xff]
    %v4713 = vld [vmem:[#allocation3 + $0x64] sm:$0xf]
    %v4714 = vld [vmem:[#allocation3 + $0x9c] sm:$0xff]
    %v4715 = vld [vmem:[#allocation3 + $0xa4] sm:$0xf]
    %v4716 = vld [vmem:[#allocation3 + $0xdc] sm:$0xff]
    %v4717 = vld [vmem:[#allocation3 + $0xe4] sm:$0xf]
    %v4722 = vunpack.c.l.b16 %v4706
    %v4723 = vunpack.c.l.b16 %v4707
    %v4724 = vunpack.c.l.b16 %v4708
    %v4725 = vunpack.c.l.b16 %v4709
    %v4726 = vpack.c.b16 %v4723, %v4722
    %v4727 = vpack.c.b16 %v4725, %v4724
    %v4736 = vunpack.c.l.b16 %v4710
    %v4737 = vunpack.c.h.b16 %v4710
    %v4738 = vunpack.c.l.b16 %v4711
    %v4739 = vunpack.c.l.b16 %v4712
    %v4740 = vunpack.c.h.b16 %v4712
    %v4741 = vunpack.c.l.b16 %v4713
    %v4742 = vunpack.c.l.b16 %v4714
    %v4743 = vunpack.c.h.b16 %v4714
    %v4744 = vunpack.c.l.b16 %v4715
    %v4745 = vunpack.c.l.b16 %v4716
    %v4746 = vunpack.c.h.b16 %v4716
    %v4747 = vunpack.c.l.b16 %v4717
    %v4748 = vpack.c.b16 %v4739, %v4736
    %v4749 = vpack.c.b16 %v4740, %v4737
    %v4750 = vpack.c.b16 %v4741, %v4738
    %v4751 = vpack.c.b16 %v4745, %v4742
    %v4752 = vpack.c.b16 %v4746, %v4743
    %v4753 = vpack.c.b16 %v4747, %v4744
    %4754 = vrot.lane.b32.xlu0 %v4748, 127
    %v4755 = vpop.permute.xlu0 %4754
    %4756 = vrot.lane.b32.xlu0 %v4749, 127
    %v4757 = vpop.permute.xlu0 %4756
    %4758 = vrot.lane.b32.xlu0 %v4750, 127
    %v4759 = vpop.permute.xlu0 %4758
    %4760 = vrot.lane.b32.xlu0 %v4751, 127
    %v4761 = vpop.permute.xlu0 %4760
    %4762 = vrot.lane.b32.xlu0 %v4752, 127
    %v4763 = vpop.permute.xlu0 %4762
    %4764 = vrot.lane.b32.xlu0 %v4753, 127
    %v4765 = vpop.permute.xlu0 %4764
    %v4766 = vsel %vm276, %v4755, %v4757
    %v4767 = vsel %vm276, %v4757, %v4759
    %v4768 = vsel %vm276, %v4761, %v4763
    %v4769 = vsel %vm276, %v4763, %v4765
    %v4775 = vsel %vm3249, %v4726, 0
    %v4778 = vsel %vm3249, %v4727, 0
    %4780 = vmatprep.subr.bf16.mxu0 0
    %4781 = vmatpush1.bf16.msra.mxu0 0
    %4782 = vmatprep.subr.bf16.mxu0 0
    %4783 = vmatpush1.bf16.msra.mxu0 0
    %4784 = vmatprep.subr.bf16.mxu0 0
    %4785 = vmatpush1.bf16.msra.mxu0 0
    %4786 = vmatprep.subr.bf16.mxu0 0
    %4787 = vmatpush1.bf16.msra.mxu0 0
    %4788 = vmatprep.subr.bf16.mxu0 0
    %4789 = vmatpush1.bf16.msra.mxu0 0
    %4790 = vmatprep.subr.bf16.mxu0 0
    %4791 = vmatpush1.bf16.msra.mxu0 0
    %4792 = vmatprep.subr.bf16.mxu0 %v4769
    %4793 = vmatpush1.bf16.msra.mxu0 %v4768
    %4794 = vmatprep.subr.bf16.mxu0 %v4767
    %4795 = vmatpush1.bf16.msra.mxu0 %v4766
    %4796 = vmatprep.subr.bf16.mxu0 0
    %4797 = vmatpush2.bf16.msra.mxu0 0
    %4798 = vmatprep.subr.bf16.mxu0 0
    %4799 = vmatpush2.bf16.msra.mxu0 0
    %4800 = vmatprep.subr.bf16.mxu0 0
    %4801 = vmatpush2.bf16.msra.mxu0 0
    %4802 = vmatprep.subr.bf16.mxu0 0
    %4803 = vmatpush2.bf16.msra.mxu0 0
    %4804 = vmatprep.subr.bf16.mxu0 0
    %4805 = vmatpush2.bf16.msra.mxu0 0
    %4806 = vmatprep.subr.bf16.mxu0 0
    %4807 = vmatpush2.bf16.msra.mxu0 0
    %4808 = vmatprep.subr.bf16.mxu0 0
    %4809 = vmatpush2.bf16.msra.mxu0 0
    %4810 = vmatprep.subr.bf16.mxu0 0
    %4811 = vmatpush2.bf16.msra.mxu0 0
    %4812 = vmatprep.mubr.bf16.mxu0 0
    %4813 = vmatmul.mubr.bf16.gmra.mxu0 %v4775
    %v4814 = vpop.f32.mrf.mxu0
    %v4815 = vadd.f32 0.0, %v4814
    %v4816 = vpop.f32.mrf.mxu0
    %v4817 = vadd.f32 0.0, %v4816
    %v4818 = vpop.f32.mrf.mxu0
    %v4819 = vadd.f32 0.0, %v4818
    %v4820 = vpop.f32.mrf.mxu0
    %v4821 = vadd.f32 0.0, %v4820
    %4822 = vmatprep.mubr.bf16.mxu0 0
    %4823 = vmatmul.mubr.bf16.gmra.mxu0 %v4778
    %v4824 = vpop.f32.mrf.mxu0
    %v4825 = vadd.f32 0.0, %v4824
    %v4826 = vpop.f32.mrf.mxu0
    %v4827 = vadd.f32 0.0, %v4826
    %v4828 = vpop.f32.mrf.mxu0
    %v4829 = vadd.f32 0.0, %v4828
    %v4830 = vpop.f32.mrf.mxu0
    %v4831 = vadd.f32 0.0, %v4830
    %4832 = vdwg.mxu0
    %v4833 = vadd.f32 %v4688, %v4815
    %v4834 = vadd.f32 %v4690, %v4817
    %v4835 = vadd.f32 %v4692, %v4819
    %v4836 = vadd.f32 %v4694, %v4821
    %v4837 = vadd.f32 %v4698, %v4825
    %v4838 = vadd.f32 %v4700, %v4827
    %v4839 = vadd.f32 %v4702, %v4829
    %v4840 = vadd.f32 %v4704, %v4831
    %4841 = vst [vmem:[#allocation2 + $0x30] sm:$0xff] %v4833
    %4842 = vst [vmem:[#allocation2 + $0x38] sm:$0xff] %v4834
    %4843 = vst [vmem:[#allocation2 + $0xa0] sm:$0xff] %v4835
    %4844 = vst [vmem:[#allocation2 + $0xa8] sm:$0xff] %v4836
    %4845 = vst [vmem:[#allocation2 + $0x110] sm:$0xff] %v4837
    %4846 = vst [vmem:[#allocation2 + $0x118] sm:$0xff] %v4838
    %4847 = vst [vmem:[#allocation2 + $0x180] sm:$0xff] %v4839
    %4848 = vst [vmem:[#allocation2 + $0x188] sm:$0xff] %v4840
    %v4849 = vld [vmem:[%s8 + $0x6] sm:$0x3]
    %v4851 = vlaneseq
    %v4852 = vshrl.u32 %v4851, 7
    %v4853 = vsub.s32 0, %v4852
    %v4854 = vrot.slane %v4849, %v4853
    %v4855 = vlaneseq
    %v4856 = vshrl.u32 %v4855, 7
    %v4857 = vsub.s32 1, %v4856
    %v4858 = vrot.slane %v4849, %v4857
    %v4861 = vmul.f32 %v4833, %v4854
    %v4862 = vmul.f32 %v4834, %v4858
    %v4863 = vmul.f32 %v4835, %v4854
    %v4864 = vmul.f32 %v4836, %v4858
    %v4865 = vmul.f32 %v4837, %v4854
    %v4866 = vmul.f32 %v4838, %v4858
    %v4867 = vmul.f32 %v4839, %v4854
    %v4868 = vmul.f32 %v4840, %v4858
    %v4869 = vadd.f32 %v4861, %v4862
    %4870 = vadd.xlane.f32.xlu0 %v4869
    %v4871 = vpop.xlane.xlu0 %4870
    %v4872 = vadd.f32 %v4863, %v4864
    %4873 = vadd.xlane.f32.xlu0 %v4872
    %v4874 = vpop.xlane.xlu0 %4873
    %v4875 = vadd.f32 %v4865, %v4866
    %4876 = vadd.xlane.f32.xlu0 %v4875
    %v4877 = vpop.xlane.xlu0 %4876
    %v4878 = vadd.f32 %v4867, %v4868
    %4879 = vadd.xlane.f32.xlu0 %v4878
    %v4880 = vpop.xlane.xlu0 %4879
    %v4881 = vadd.f32 %v4454, %v4871
    %v4882 = vadd.f32 %v4455, %v4874
    %v4883 = vadd.f32 %v4456, %v4877
    %v4884 = vadd.f32 %v4457, %v4880
    %v4885 = vmul.f32 %v4861, %v4833
    %v4886 = vmul.f32 %v4862, %v4834
    %v4887 = vmul.f32 %v4863, %v4835
    %v4888 = vmul.f32 %v4864, %v4836
    %v4889 = vmul.f32 %v4865, %v4837
    %v4890 = vmul.f32 %v4866, %v4838
    %v4891 = vmul.f32 %v4867, %v4839
    %v4892 = vmul.f32 %v4868, %v4840
    %v4893 = vadd.f32 %v4885, %v4886
    %4894 = vadd.xlane.f32.xlu0 %v4893
    %v4895 = vpop.xlane.xlu0 %4894
    %v4896 = vadd.f32 %v4887, %v4888
    %4897 = vadd.xlane.f32.xlu0 %v4896
    %v4898 = vpop.xlane.xlu0 %4897
    %v4899 = vadd.f32 %v4889, %v4890
    %4900 = vadd.xlane.f32.xlu0 %v4899
    %v4901 = vpop.xlane.xlu0 %4900
    %v4902 = vadd.f32 %v4891, %v4892
    %4903 = vadd.xlane.f32.xlu0 %v4902
    %v4904 = vpop.xlane.xlu0 %4903
    %v4905 = vadd.f32 %v4478, %v4895
    %v4906 = vadd.f32 %v4479, %v4898
    %v4907 = vadd.f32 %v4480, %v4901
    %v4908 = vadd.f32 %v4481, %v4904
    %v4909 = vld [vmem:[%s2] sm:$0xf]
    %v4910 = vld [vmem:[%s2 + $0x4] sm:$0xf]
    %v4911 = vld [vmem:[%s2 + $0x8] sm:$0xf]
    %v4912 = vld [vmem:[%s2 + $0xc] sm:$0xf]
    %v4913 = vld [vmem:[#allocation3 + $0x20] sm:$0xff]
    %v4914 = vld [vmem:[#allocation3 + $0x28] sm:$0xf]
    %v4915 = vld [vmem:[#allocation3 + $0x60] sm:$0xff]
    %v4916 = vld [vmem:[#allocation3 + $0x68] sm:$0xf]
    %v4917 = vld [vmem:[#allocation3 + $0xa0] sm:$0xff]
    %v4918 = vld [vmem:[#allocation3 + $0xa8] sm:$0xf]
    %v4919 = vld [vmem:[#allocation3 + $0xe0] sm:$0xff]
    %v4920 = vld [vmem:[#allocation3 + $0xe8] sm:$0xf]
    %v4921 = vld [vmem:[%s3210] sm:$0xf]
    %v4922 = vld [vmem:[%s3210 + $0x4] sm:$0xf]
    %v4923 = vld [vmem:[%s3210 + $0x8] sm:$0xf]
    %v4924 = vld [vmem:[%s3210 + $0xc] sm:$0xf]
    %v4925 = vld [vmem:[#allocation3 + $0x24] sm:$0xff]
    %v4926 = vld [vmem:[#allocation3 + $0x64] sm:$0xff]
    %v4927 = vld [vmem:[#allocation3 + $0xa4] sm:$0xff]
    %v4928 = vld [vmem:[#allocation3 + $0xe4] sm:$0xff]
    %v4933 = vunpack.c.l.b16 %v4921
    %v4934 = vunpack.c.l.b16 %v4922
    %v4935 = vunpack.c.l.b16 %v4923
    %v4936 = vunpack.c.l.b16 %v4924
    %v4937 = vpack.c.b16 %v4934, %v4933
    %v4938 = vpack.c.b16 %v4936, %v4935
    %v4943 = vunpack.c.l.b16 %v4925
    %v4944 = vunpack.c.h.b16 %v4925
    %v4945 = vunpack.c.l.b16 %v4926
    %v4946 = vunpack.c.h.b16 %v4926
    %v4947 = vunpack.c.l.b16 %v4927
    %v4948 = vunpack.c.h.b16 %v4927
    %v4949 = vunpack.c.l.b16 %v4928
    %v4950 = vunpack.c.h.b16 %v4928
    %v4951 = vpack.c.b16 %v4945, %v4943
    %v4952 = vpack.c.b16 %v4946, %v4944
    %v4953 = vpack.c.b16 %v4949, %v4947
    %v4954 = vpack.c.b16 %v4950, %v4948
    %v4960 = vsel %vm3249, %v4937, 0
    %v4963 = vsel %vm3249, %v4938, 0
    %4965 = vmatprep.subr.bf16.mxu0 0
    %4966 = vmatpush1.bf16.msra.mxu0 0
    %4967 = vmatprep.subr.bf16.mxu0 0
    %4968 = vmatpush1.bf16.msra.mxu0 0
    %4969 = vmatprep.subr.bf16.mxu0 0
    %4970 = vmatpush1.bf16.msra.mxu0 0
    %4971 = vmatprep.subr.bf16.mxu0 0
    %4972 = vmatpush1.bf16.msra.mxu0 0
    %4973 = vmatprep.subr.bf16.mxu0 0
    %4974 = vmatpush1.bf16.msra.mxu0 0
    %4975 = vmatprep.subr.bf16.mxu0 0
    %4976 = vmatpush1.bf16.msra.mxu0 0
    %4977 = vmatprep.subr.bf16.mxu0 %v4954
    %4978 = vmatpush1.bf16.msra.mxu0 %v4953
    %4979 = vmatprep.subr.bf16.mxu0 %v4952
    %4980 = vmatpush1.bf16.msra.mxu0 %v4951
    %4981 = vmatprep.subr.bf16.mxu0 0
    %4982 = vmatpush2.bf16.msra.mxu0 0
    %4983 = vmatprep.subr.bf16.mxu0 0
    %4984 = vmatpush2.bf16.msra.mxu0 0
    %4985 = vmatprep.subr.bf16.mxu0 0
    %4986 = vmatpush2.bf16.msra.mxu0 0
    %4987 = vmatprep.subr.bf16.mxu0 0
    %4988 = vmatpush2.bf16.msra.mxu0 0
    %4989 = vmatprep.subr.bf16.mxu0 0
    %4990 = vmatpush2.bf16.msra.mxu0 0
    %4991 = vmatprep.subr.bf16.mxu0 0
    %4992 = vmatpush2.bf16.msra.mxu0 0
    %4993 = vmatprep.subr.bf16.mxu0 0
    %4994 = vmatpush2.bf16.msra.mxu0 0
    %4995 = vmatprep.subr.bf16.mxu0 0
    %4996 = vmatpush2.bf16.msra.mxu0 0
    %4997 = vmatprep.mubr.bf16.mxu0 0
    %4998 = vmatmul.mubr.bf16.gmra.mxu0 %v4960
    %v4999 = vpop.f32.mrf.mxu0
    %v5000 = vadd.f32 0.0, %v4999
    %v5001 = vpop.f32.mrf.mxu0
    %v5002 = vadd.f32 0.0, %v5001
    %v5003 = vpop.f32.mrf.mxu0
    %v5004 = vadd.f32 0.0, %v5003
    %v5005 = vpop.f32.mrf.mxu0
    %v5006 = vadd.f32 0.0, %v5005
    %5007 = vmatprep.mubr.bf16.mxu0 0
    %5008 = vmatmul.mubr.bf16.gmra.mxu0 %v4963
    %v5009 = vpop.f32.mrf.mxu0
    %v5010 = vadd.f32 0.0, %v5009
    %v5011 = vpop.f32.mrf.mxu0
    %v5012 = vadd.f32 0.0, %v5011
    %v5013 = vpop.f32.mrf.mxu0
    %v5014 = vadd.f32 0.0, %v5013
    %v5015 = vpop.f32.mrf.mxu0
    %v5016 = vadd.f32 0.0, %v5015
    %5017 = vdwg.mxu0
    %v5022 = vunpack.c.l.b16 %v4909
    %v5023 = vunpack.c.l.b16 %v4910
    %v5024 = vunpack.c.l.b16 %v4911
    %v5025 = vunpack.c.l.b16 %v4912
    %v5026 = vpack.c.b16 %v5023, %v5022
    %v5027 = vpack.c.b16 %v5025, %v5024
    %v5036 = vunpack.c.l.b16 %v4913
    %v5037 = vunpack.c.h.b16 %v4913
    %v5038 = vunpack.c.l.b16 %v4914
    %v5039 = vunpack.c.l.b16 %v4915
    %v5040 = vunpack.c.h.b16 %v4915
    %v5041 = vunpack.c.l.b16 %v4916
    %v5042 = vunpack.c.l.b16 %v4917
    %v5043 = vunpack.c.h.b16 %v4917
    %v5044 = vunpack.c.l.b16 %v4918
    %v5045 = vunpack.c.l.b16 %v4919
    %v5046 = vunpack.c.h.b16 %v4919
    %v5047 = vunpack.c.l.b16 %v4920
    %v5048 = vpack.c.b16 %v5039, %v5036
    %v5049 = vpack.c.b16 %v5040, %v5037
    %v5050 = vpack.c.b16 %v5041, %v5038
    %v5051 = vpack.c.b16 %v5045, %v5042
    %v5052 = vpack.c.b16 %v5046, %v5043
    %v5053 = vpack.c.b16 %v5047, %v5044
    %5054 = vrot.lane.b32.xlu0 %v5048, 1
    %v5055 = vpop.permute.xlu0 %5054
    %5056 = vrot.lane.b32.xlu0 %v5049, 1
    %v5057 = vpop.permute.xlu0 %5056
    %5058 = vrot.lane.b32.xlu0 %v5050, 1
    %v5059 = vpop.permute.xlu0 %5058
    %5060 = vrot.lane.b32.xlu0 %v5051, 1
    %v5061 = vpop.permute.xlu0 %5060
    %5062 = vrot.lane.b32.xlu0 %v5052, 1
    %v5063 = vpop.permute.xlu0 %5062
    %5064 = vrot.lane.b32.xlu0 %v5053, 1
    %v5065 = vpop.permute.xlu0 %5064
    %v5066 = vsel %vm177, %v5055, %v5057
    %v5067 = vsel %vm177, %v5057, %v5059
    %v5068 = vsel %vm177, %v5061, %v5063
    %v5069 = vsel %vm177, %v5063, %v5065
    %v5075 = vsel %vm3249, %v5026, 0
    %v5078 = vsel %vm3249, %v5027, 0
    %5080 = vmatprep.subr.bf16.mxu0 0
    %5081 = vmatpush1.bf16.msra.mxu0 0
    %5082 = vmatprep.subr.bf16.mxu0 0
    %5083 = vmatpush1.bf16.msra.mxu0 0
    %5084 = vmatprep.subr.bf16.mxu0 0
    %5085 = vmatpush1.bf16.msra.mxu0 0
    %5086 = vmatprep.subr.bf16.mxu0 0
    %5087 = vmatpush1.bf16.msra.mxu0 0
    %5088 = vmatprep.subr.bf16.mxu0 0
    %5089 = vmatpush1.bf16.msra.mxu0 0
    %5090 = vmatprep.subr.bf16.mxu0 0
    %5091 = vmatpush1.bf16.msra.mxu0 0
    %5092 = vmatprep.subr.bf16.mxu0 %v5069
    %5093 = vmatpush1.bf16.msra.mxu0 %v5068
    %5094 = vmatprep.subr.bf16.mxu0 %v5067
    %5095 = vmatpush1.bf16.msra.mxu0 %v5066
    %5096 = vmatprep.subr.bf16.mxu0 0
    %5097 = vmatpush2.bf16.msra.mxu0 0
    %5098 = vmatprep.subr.bf16.mxu0 0
    %5099 = vmatpush2.bf16.msra.mxu0 0
    %5100 = vmatprep.subr.bf16.mxu0 0
    %5101 = vmatpush2.bf16.msra.mxu0 0
    %5102 = vmatprep.subr.bf16.mxu0 0
    %5103 = vmatpush2.bf16.msra.mxu0 0
    %5104 = vmatprep.subr.bf16.mxu0 0
    %5105 = vmatpush2.bf16.msra.mxu0 0
    %5106 = vmatprep.subr.bf16.mxu0 0
    %5107 = vmatpush2.bf16.msra.mxu0 0
    %5108 = vmatprep.subr.bf16.mxu0 0
    %5109 = vmatpush2.bf16.msra.mxu0 0
    %5110 = vmatprep.subr.bf16.mxu0 0
    %5111 = vmatpush2.bf16.msra.mxu0 0
    %5112 = vmatprep.mubr.bf16.mxu0 0
    %5113 = vmatmul.mubr.bf16.gmra.mxu0 %v5075
    %v5114 = vpop.f32.mrf.mxu0
    %v5115 = vadd.f32 %v5000, %v5114
    %v5116 = vpop.f32.mrf.mxu0
    %v5117 = vadd.f32 %v5002, %v5116
    %v5118 = vpop.f32.mrf.mxu0
    %v5119 = vadd.f32 %v5004, %v5118
    %v5120 = vpop.f32.mrf.mxu0
    %v5121 = vadd.f32 %v5006, %v5120
    %5122 = vmatprep.mubr.bf16.mxu0 0
    %5123 = vmatmul.mubr.bf16.gmra.mxu0 %v5078
    %v5124 = vpop.f32.mrf.mxu0
    %v5125 = vadd.f32 %v5010, %v5124
    %v5126 = vpop.f32.mrf.mxu0
    %v5127 = vadd.f32 %v5012, %v5126
    %v5128 = vpop.f32.mrf.mxu0
    %v5129 = vadd.f32 %v5014, %v5128
    %v5130 = vpop.f32.mrf.mxu0
    %v5131 = vadd.f32 %v5016, %v5130
    %5132 = vdwg.mxu0
    %v5133 = vld [vmem:[%s3424] sm:$0xf]
    %v5134 = vld [vmem:[%s3424 + $0x4] sm:$0xf]
    %v5135 = vld [vmem:[%s3424 + $0x8] sm:$0xf]
    %v5136 = vld [vmem:[%s3424 + $0xc] sm:$0xf]
    %v5137 = vld [vmem:[#allocation3 + $0x24] sm:$0xff]
    %v5138 = vld [vmem:[#allocation3 + $0x2c] sm:$0xf]
    %v5139 = vld [vmem:[#allocation3 + $0x64] sm:$0xff]
    %v5140 = vld [vmem:[#allocation3 + $0x6c] sm:$0xf]
    %v5141 = vld [vmem:[#allocation3 + $0xa4] sm:$0xff]
    %v5142 = vld [vmem:[#allocation3 + $0xac] sm:$0xf]
    %v5143 = vld [vmem:[#allocation3 + $0xe4] sm:$0xff]
    %v5144 = vld [vmem:[#allocation3 + $0xec] sm:$0xf]
    %v5149 = vunpack.c.l.b16 %v5133
    %v5150 = vunpack.c.l.b16 %v5134
    %v5151 = vunpack.c.l.b16 %v5135
    %v5152 = vunpack.c.l.b16 %v5136
    %v5153 = vpack.c.b16 %v5150, %v5149
    %v5154 = vpack.c.b16 %v5152, %v5151
    %v5163 = vunpack.c.l.b16 %v5137
    %v5164 = vunpack.c.h.b16 %v5137
    %v5165 = vunpack.c.l.b16 %v5138
    %v5166 = vunpack.c.l.b16 %v5139
    %v5167 = vunpack.c.h.b16 %v5139
    %v5168 = vunpack.c.l.b16 %v5140
    %v5169 = vunpack.c.l.b16 %v5141
    %v5170 = vunpack.c.h.b16 %v5141
    %v5171 = vunpack.c.l.b16 %v5142
    %v5172 = vunpack.c.l.b16 %v5143
    %v5173 = vunpack.c.h.b16 %v5143
    %v5174 = vunpack.c.l.b16 %v5144
    %v5175 = vpack.c.b16 %v5166, %v5163
    %v5176 = vpack.c.b16 %v5167, %v5164
    %v5177 = vpack.c.b16 %v5168, %v5165
    %v5178 = vpack.c.b16 %v5172, %v5169
    %v5179 = vpack.c.b16 %v5173, %v5170
    %v5180 = vpack.c.b16 %v5174, %v5171
    %5181 = vrot.lane.b32.xlu0 %v5175, 127
    %v5182 = vpop.permute.xlu0 %5181
    %5183 = vrot.lane.b32.xlu0 %v5176, 127
    %v5184 = vpop.permute.xlu0 %5183
    %5185 = vrot.lane.b32.xlu0 %v5177, 127
    %v5186 = vpop.permute.xlu0 %5185
    %5187 = vrot.lane.b32.xlu0 %v5178, 127
    %v5188 = vpop.permute.xlu0 %5187
    %5189 = vrot.lane.b32.xlu0 %v5179, 127
    %v5190 = vpop.permute.xlu0 %5189
    %5191 = vrot.lane.b32.xlu0 %v5180, 127
    %v5192 = vpop.permute.xlu0 %5191
    %v5193 = vsel %vm276, %v5182, %v5184
    %v5194 = vsel %vm276, %v5184, %v5186
    %v5195 = vsel %vm276, %v5188, %v5190
    %v5196 = vsel %vm276, %v5190, %v5192
    %v5202 = vsel %vm3249, %v5153, 0
    %v5205 = vsel %vm3249, %v5154, 0
    %5207 = vmatprep.subr.bf16.mxu0 0
    %5208 = vmatpush1.bf16.msra.mxu0 0
    %5209 = vmatprep.subr.bf16.mxu0 0
    %5210 = vmatpush1.bf16.msra.mxu0 0
    %5211 = vmatprep.subr.bf16.mxu0 0
    %5212 = vmatpush1.bf16.msra.mxu0 0
    %5213 = vmatprep.subr.bf16.mxu0 0
    %5214 = vmatpush1.bf16.msra.mxu0 0
    %5215 = vmatprep.subr.bf16.mxu0 0
    %5216 = vmatpush1.bf16.msra.mxu0 0
    %5217 = vmatprep.subr.bf16.mxu0 0
    %5218 = vmatpush1.bf16.msra.mxu0 0
    %5219 = vmatprep.subr.bf16.mxu0 %v5196
    %5220 = vmatpush1.bf16.msra.mxu0 %v5195
    %5221 = vmatprep.subr.bf16.mxu0 %v5194
    %5222 = vmatpush1.bf16.msra.mxu0 %v5193
    %5223 = vmatprep.subr.bf16.mxu0 0
    %5224 = vmatpush2.bf16.msra.mxu0 0
    %5225 = vmatprep.subr.bf16.mxu0 0
    %5226 = vmatpush2.bf16.msra.mxu0 0
    %5227 = vmatprep.subr.bf16.mxu0 0
    %5228 = vmatpush2.bf16.msra.mxu0 0
    %5229 = vmatprep.subr.bf16.mxu0 0
    %5230 = vmatpush2.bf16.msra.mxu0 0
    %5231 = vmatprep.subr.bf16.mxu0 0
    %5232 = vmatpush2.bf16.msra.mxu0 0
    %5233 = vmatprep.subr.bf16.mxu0 0
    %5234 = vmatpush2.bf16.msra.mxu0 0
    %5235 = vmatprep.subr.bf16.mxu0 0
    %5236 = vmatpush2.bf16.msra.mxu0 0
    %5237 = vmatprep.subr.bf16.mxu0 0
    %5238 = vmatpush2.bf16.msra.mxu0 0
    %5239 = vmatprep.mubr.bf16.mxu0 0
    %5240 = vmatmul.mubr.bf16.gmra.mxu0 %v5202
    %v5241 = vpop.f32.mrf.mxu0
    %v5242 = vadd.f32 0.0, %v5241
    %v5243 = vpop.f32.mrf.mxu0
    %v5244 = vadd.f32 0.0, %v5243
    %v5245 = vpop.f32.mrf.mxu0
    %v5246 = vadd.f32 0.0, %v5245
    %v5247 = vpop.f32.mrf.mxu0
    %v5248 = vadd.f32 0.0, %v5247
    %5249 = vmatprep.mubr.bf16.mxu0 0
    %5250 = vmatmul.mubr.bf16.gmra.mxu0 %v5205
    %v5251 = vpop.f32.mrf.mxu0
    %v5252 = vadd.f32 0.0, %v5251
    %v5253 = vpop.f32.mrf.mxu0
    %v5254 = vadd.f32 0.0, %v5253
    %v5255 = vpop.f32.mrf.mxu0
    %v5256 = vadd.f32 0.0, %v5255
    %v5257 = vpop.f32.mrf.mxu0
    %v5258 = vadd.f32 0.0, %v5257
    %5259 = vdwg.mxu0
    %v5260 = vadd.f32 %v5115, %v5242
    %v5261 = vadd.f32 %v5117, %v5244
    %v5262 = vadd.f32 %v5119, %v5246
    %v5263 = vadd.f32 %v5121, %v5248
    %v5264 = vadd.f32 %v5125, %v5252
    %v5265 = vadd.f32 %v5127, %v5254
    %v5266 = vadd.f32 %v5129, %v5256
    %v5267 = vadd.f32 %v5131, %v5258
    %5268 = vst [vmem:[#allocation2 + $0x40] sm:$0xff] %v5260
    %5269 = vst [vmem:[#allocation2 + $0x48] sm:$0xff] %v5261
    %5270 = vst [vmem:[#allocation2 + $0xb0] sm:$0xff] %v5262
    %5271 = vst [vmem:[#allocation2 + $0xb8] sm:$0xff] %v5263
    %5272 = vst [vmem:[#allocation2 + $0x120] sm:$0xff] %v5264
    %5273 = vst [vmem:[#allocation2 + $0x128] sm:$0xff] %v5265
    %5274 = vst [vmem:[#allocation2 + $0x190] sm:$0xff] %v5266
    %5275 = vst [vmem:[#allocation2 + $0x198] sm:$0xff] %v5267
    %v5276 = vld [vmem:[%s8 + $0x8] sm:$0x3]
    %v5278 = vlaneseq
    %v5279 = vshrl.u32 %v5278, 7
    %v5280 = vsub.s32 0, %v5279
    %v5281 = vrot.slane %v5276, %v5280
    %v5282 = vlaneseq
    %v5283 = vshrl.u32 %v5282, 7
    %v5284 = vsub.s32 1, %v5283
    %v5285 = vrot.slane %v5276, %v5284
    %v5288 = vmul.f32 %v5260, %v5281
    %v5289 = vmul.f32 %v5261, %v5285
    %v5290 = vmul.f32 %v5262, %v5281
    %v5291 = vmul.f32 %v5263, %v5285
    %v5292 = vmul.f32 %v5264, %v5281
    %v5293 = vmul.f32 %v5265, %v5285
    %v5294 = vmul.f32 %v5266, %v5281
    %v5295 = vmul.f32 %v5267, %v5285
    %v5296 = vadd.f32 %v5288, %v5289
    %5297 = vadd.xlane.f32.xlu0 %v5296
    %v5298 = vpop.xlane.xlu0 %5297
    %v5299 = vadd.f32 %v5290, %v5291
    %5300 = vadd.xlane.f32.xlu0 %v5299
    %v5301 = vpop.xlane.xlu0 %5300
    %v5302 = vadd.f32 %v5292, %v5293
    %5303 = vadd.xlane.f32.xlu0 %v5302
    %v5304 = vpop.xlane.xlu0 %5303
    %v5305 = vadd.f32 %v5294, %v5295
    %5306 = vadd.xlane.f32.xlu0 %v5305
    %v5307 = vpop.xlane.xlu0 %5306
    %v5308 = vadd.f32 %v4881, %v5298
    %v5309 = vadd.f32 %v4882, %v5301
    %v5310 = vadd.f32 %v4883, %v5304
    %v5311 = vadd.f32 %v4884, %v5307
    %v5312 = vmul.f32 %v5288, %v5260
    %v5313 = vmul.f32 %v5289, %v5261
    %v5314 = vmul.f32 %v5290, %v5262
    %v5315 = vmul.f32 %v5291, %v5263
    %v5316 = vmul.f32 %v5292, %v5264
    %v5317 = vmul.f32 %v5293, %v5265
    %v5318 = vmul.f32 %v5294, %v5266
    %v5319 = vmul.f32 %v5295, %v5267
    %v5320 = vadd.f32 %v5312, %v5313
    %5321 = vadd.xlane.f32.xlu0 %v5320
    %v5322 = vpop.xlane.xlu0 %5321
    %v5323 = vadd.f32 %v5314, %v5315
    %5324 = vadd.xlane.f32.xlu0 %v5323
    %v5325 = vpop.xlane.xlu0 %5324
    %v5326 = vadd.f32 %v5316, %v5317
    %5327 = vadd.xlane.f32.xlu0 %v5326
    %v5328 = vpop.xlane.xlu0 %5327
    %v5329 = vadd.f32 %v5318, %v5319
    %5330 = vadd.xlane.f32.xlu0 %v5329
    %v5331 = vpop.xlane.xlu0 %5330
    %v5332 = vadd.f32 %v4905, %v5322
    %v5333 = vadd.f32 %v4906, %v5325
    %v5334 = vadd.f32 %v4907, %v5328
    %v5335 = vadd.f32 %v4908, %v5331
    %v5336 = vld [vmem:[%s2] sm:$0xf]
    %v5337 = vld [vmem:[%s2 + $0x4] sm:$0xf]
    %v5338 = vld [vmem:[%s2 + $0x8] sm:$0xf]
    %v5339 = vld [vmem:[%s2 + $0xc] sm:$0xf]
    %v5340 = vld [vmem:[#allocation3 + $0x28] sm:$0xff]
    %v5341 = vld [vmem:[#allocation3 + $0x30] sm:$0xf]
    %v5342 = vld [vmem:[#allocation3 + $0x68] sm:$0xff]
    %v5343 = vld [vmem:[#allocation3 + $0x70] sm:$0xf]
    %v5344 = vld [vmem:[#allocation3 + $0xa8] sm:$0xff]
    %v5345 = vld [vmem:[#allocation3 + $0xb0] sm:$0xf]
    %v5346 = vld [vmem:[#allocation3 + $0xe8] sm:$0xff]
    %v5347 = vld [vmem:[#allocation3 + $0xf0] sm:$0xf]
    %v5348 = vld [vmem:[%s3210] sm:$0xf]
    %v5349 = vld [vmem:[%s3210 + $0x4] sm:$0xf]
    %v5350 = vld [vmem:[%s3210 + $0x8] sm:$0xf]
    %v5351 = vld [vmem:[%s3210 + $0xc] sm:$0xf]
    %v5352 = vld [vmem:[#allocation3 + $0x2c] sm:$0xff]
    %v5353 = vld [vmem:[#allocation3 + $0x6c] sm:$0xff]
    %v5354 = vld [vmem:[#allocation3 + $0xac] sm:$0xff]
    %v5355 = vld [vmem:[#allocation3 + $0xec] sm:$0xff]
    %v5360 = vunpack.c.l.b16 %v5348
    %v5361 = vunpack.c.l.b16 %v5349
    %v5362 = vunpack.c.l.b16 %v5350
    %v5363 = vunpack.c.l.b16 %v5351
    %v5364 = vpack.c.b16 %v5361, %v5360
    %v5365 = vpack.c.b16 %v5363, %v5362
    %v5370 = vunpack.c.l.b16 %v5352
    %v5371 = vunpack.c.h.b16 %v5352
    %v5372 = vunpack.c.l.b16 %v5353
    %v5373 = vunpack.c.h.b16 %v5353
    %v5374 = vunpack.c.l.b16 %v5354
    %v5375 = vunpack.c.h.b16 %v5354
    %v5376 = vunpack.c.l.b16 %v5355
    %v5377 = vunpack.c.h.b16 %v5355
    %v5378 = vpack.c.b16 %v5372, %v5370
    %v5379 = vpack.c.b16 %v5373, %v5371
    %v5380 = vpack.c.b16 %v5376, %v5374
    %v5381 = vpack.c.b16 %v5377, %v5375
    %v5387 = vsel %vm3249, %v5364, 0
    %v5390 = vsel %vm3249, %v5365, 0
    %5392 = vmatprep.subr.bf16.mxu0 0
    %5393 = vmatpush1.bf16.msra.mxu0 0
    %5394 = vmatprep.subr.bf16.mxu0 0
    %5395 = vmatpush1.bf16.msra.mxu0 0
    %5396 = vmatprep.subr.bf16.mxu0 0
    %5397 = vmatpush1.bf16.msra.mxu0 0
    %5398 = vmatprep.subr.bf16.mxu0 0
    %5399 = vmatpush1.bf16.msra.mxu0 0
    %5400 = vmatprep.subr.bf16.mxu0 0
    %5401 = vmatpush1.bf16.msra.mxu0 0
    %5402 = vmatprep.subr.bf16.mxu0 0
    %5403 = vmatpush1.bf16.msra.mxu0 0
    %5404 = vmatprep.subr.bf16.mxu0 %v5381
    %5405 = vmatpush1.bf16.msra.mxu0 %v5380
    %5406 = vmatprep.subr.bf16.mxu0 %v5379
    %5407 = vmatpush1.bf16.msra.mxu0 %v5378
    %5408 = vmatprep.subr.bf16.mxu0 0
    %5409 = vmatpush2.bf16.msra.mxu0 0
    %5410 = vmatprep.subr.bf16.mxu0 0
    %5411 = vmatpush2.bf16.msra.mxu0 0
    %5412 = vmatprep.subr.bf16.mxu0 0
    %5413 = vmatpush2.bf16.msra.mxu0 0
    %5414 = vmatprep.subr.bf16.mxu0 0
    %5415 = vmatpush2.bf16.msra.mxu0 0
    %5416 = vmatprep.subr.bf16.mxu0 0
    %5417 = vmatpush2.bf16.msra.mxu0 0
    %5418 = vmatprep.subr.bf16.mxu0 0
    %5419 = vmatpush2.bf16.msra.mxu0 0
    %5420 = vmatprep.subr.bf16.mxu0 0
    %5421 = vmatpush2.bf16.msra.mxu0 0
    %5422 = vmatprep.subr.bf16.mxu0 0
    %5423 = vmatpush2.bf16.msra.mxu0 0
    %5424 = vmatprep.mubr.bf16.mxu0 0
    %5425 = vmatmul.mubr.bf16.gmra.mxu0 %v5387
    %v5426 = vpop.f32.mrf.mxu0
    %v5427 = vadd.f32 0.0, %v5426
    %v5428 = vpop.f32.mrf.mxu0
    %v5429 = vadd.f32 0.0, %v5428
    %v5430 = vpop.f32.mrf.mxu0
    %v5431 = vadd.f32 0.0, %v5430
    %v5432 = vpop.f32.mrf.mxu0
    %v5433 = vadd.f32 0.0, %v5432
    %5434 = vmatprep.mubr.bf16.mxu0 0
    %5435 = vmatmul.mubr.bf16.gmra.mxu0 %v5390
    %v5436 = vpop.f32.mrf.mxu0
    %v5437 = vadd.f32 0.0, %v5436
    %v5438 = vpop.f32.mrf.mxu0
    %v5439 = vadd.f32 0.0, %v5438
    %v5440 = vpop.f32.mrf.mxu0
    %v5441 = vadd.f32 0.0, %v5440
    %v5442 = vpop.f32.mrf.mxu0
    %v5443 = vadd.f32 0.0, %v5442
    %5444 = vdwg.mxu0
    %v5449 = vunpack.c.l.b16 %v5336
    %v5450 = vunpack.c.l.b16 %v5337
    %v5451 = vunpack.c.l.b16 %v5338
    %v5452 = vunpack.c.l.b16 %v5339
    %v5453 = vpack.c.b16 %v5450, %v5449
    %v5454 = vpack.c.b16 %v5452, %v5451
    %v5463 = vunpack.c.l.b16 %v5340
    %v5464 = vunpack.c.h.b16 %v5340
    %v5465 = vunpack.c.l.b16 %v5341
    %v5466 = vunpack.c.l.b16 %v5342
    %v5467 = vunpack.c.h.b16 %v5342
    %v5468 = vunpack.c.l.b16 %v5343
    %v5469 = vunpack.c.l.b16 %v5344
    %v5470 = vunpack.c.h.b16 %v5344
    %v5471 = vunpack.c.l.b16 %v5345
    %v5472 = vunpack.c.l.b16 %v5346
    %v5473 = vunpack.c.h.b16 %v5346
    %v5474 = vunpack.c.l.b16 %v5347
    %v5475 = vpack.c.b16 %v5466, %v5463
    %v5476 = vpack.c.b16 %v5467, %v5464
    %v5477 = vpack.c.b16 %v5468, %v5465
    %v5478 = vpack.c.b16 %v5472, %v5469
    %v5479 = vpack.c.b16 %v5473, %v5470
    %v5480 = vpack.c.b16 %v5474, %v5471
    %5481 = vrot.lane.b32.xlu0 %v5475, 1
    %v5482 = vpop.permute.xlu0 %5481
    %5483 = vrot.lane.b32.xlu0 %v5476, 1
    %v5484 = vpop.permute.xlu0 %5483
    %5485 = vrot.lane.b32.xlu0 %v5477, 1
    %v5486 = vpop.permute.xlu0 %5485
    %5487 = vrot.lane.b32.xlu0 %v5478, 1
    %v5488 = vpop.permute.xlu0 %5487
    %5489 = vrot.lane.b32.xlu0 %v5479, 1
    %v5490 = vpop.permute.xlu0 %5489
    %5491 = vrot.lane.b32.xlu0 %v5480, 1
    %v5492 = vpop.permute.xlu0 %5491
    %v5493 = vsel %vm177, %v5482, %v5484
    %v5494 = vsel %vm177, %v5484, %v5486
    %v5495 = vsel %vm177, %v5488, %v5490
    %v5496 = vsel %vm177, %v5490, %v5492
    %v5502 = vsel %vm3249, %v5453, 0
    %v5505 = vsel %vm3249, %v5454, 0
    %5507 = vmatprep.subr.bf16.mxu0 0
    %5508 = vmatpush1.bf16.msra.mxu0 0
    %5509 = vmatprep.subr.bf16.mxu0 0
    %5510 = vmatpush1.bf16.msra.mxu0 0
    %5511 = vmatprep.subr.bf16.mxu0 0
    %5512 = vmatpush1.bf16.msra.mxu0 0
    %5513 = vmatprep.subr.bf16.mxu0 0
    %5514 = vmatpush1.bf16.msra.mxu0 0
    %5515 = vmatprep.subr.bf16.mxu0 0
    %5516 = vmatpush1.bf16.msra.mxu0 0
    %5517 = vmatprep.subr.bf16.mxu0 0
    %5518 = vmatpush1.bf16.msra.mxu0 0
    %5519 = vmatprep.subr.bf16.mxu0 %v5496
    %5520 = vmatpush1.bf16.msra.mxu0 %v5495
    %5521 = vmatprep.subr.bf16.mxu0 %v5494
    %5522 = vmatpush1.bf16.msra.mxu0 %v5493
    %5523 = vmatprep.subr.bf16.mxu0 0
    %5524 = vmatpush2.bf16.msra.mxu0 0
    %5525 = vmatprep.subr.bf16.mxu0 0
    %5526 = vmatpush2.bf16.msra.mxu0 0
    %5527 = vmatprep.subr.bf16.mxu0 0
    %5528 = vmatpush2.bf16.msra.mxu0 0
    %5529 = vmatprep.subr.bf16.mxu0 0
    %5530 = vmatpush2.bf16.msra.mxu0 0
    %5531 = vmatprep.subr.bf16.mxu0 0
    %5532 = vmatpush2.bf16.msra.mxu0 0
    %5533 = vmatprep.subr.bf16.mxu0 0
    %5534 = vmatpush2.bf16.msra.mxu0 0
    %5535 = vmatprep.subr.bf16.mxu0 0
    %5536 = vmatpush2.bf16.msra.mxu0 0
    %5537 = vmatprep.subr.bf16.mxu0 0
    %5538 = vmatpush2.bf16.msra.mxu0 0
    %5539 = vmatprep.mubr.bf16.mxu0 0
    %5540 = vmatmul.mubr.bf16.gmra.mxu0 %v5502
    %v5541 = vpop.f32.mrf.mxu0
    %v5542 = vadd.f32 %v5427, %v5541
    %v5543 = vpop.f32.mrf.mxu0
    %v5544 = vadd.f32 %v5429, %v5543
    %v5545 = vpop.f32.mrf.mxu0
    %v5546 = vadd.f32 %v5431, %v5545
    %v5547 = vpop.f32.mrf.mxu0
    %v5548 = vadd.f32 %v5433, %v5547
    %5549 = vmatprep.mubr.bf16.mxu0 0
    %5550 = vmatmul.mubr.bf16.gmra.mxu0 %v5505
    %v5551 = vpop.f32.mrf.mxu0
    %v5552 = vadd.f32 %v5437, %v5551
    %v5553 = vpop.f32.mrf.mxu0
    %v5554 = vadd.f32 %v5439, %v5553
    %v5555 = vpop.f32.mrf.mxu0
    %v5556 = vadd.f32 %v5441, %v5555
    %v5557 = vpop.f32.mrf.mxu0
    %v5558 = vadd.f32 %v5443, %v5557
    %5559 = vdwg.mxu0
    %v5560 = vld [vmem:[%s3424] sm:$0xf]
    %v5561 = vld [vmem:[%s3424 + $0x4] sm:$0xf]
    %v5562 = vld [vmem:[%s3424 + $0x8] sm:$0xf]
    %v5563 = vld [vmem:[%s3424 + $0xc] sm:$0xf]
    %v5564 = vld [vmem:[#allocation3 + $0x2c] sm:$0xff]
    %v5565 = vld [vmem:[#allocation3 + $0x34] sm:$0xf]
    %v5566 = vld [vmem:[#allocation3 + $0x6c] sm:$0xff]
    %v5567 = vld [vmem:[#allocation3 + $0x74] sm:$0xf]
    %v5568 = vld [vmem:[#allocation3 + $0xac] sm:$0xff]
    %v5569 = vld [vmem:[#allocation3 + $0xb4] sm:$0xf]
    %v5570 = vld [vmem:[#allocation3 + $0xec] sm:$0xff]
    %v5571 = vld [vmem:[#allocation3 + $0xf4] sm:$0xf]
    %v5576 = vunpack.c.l.b16 %v5560
    %v5577 = vunpack.c.l.b16 %v5561
    %v5578 = vunpack.c.l.b16 %v5562
    %v5579 = vunpack.c.l.b16 %v5563
    %v5580 = vpack.c.b16 %v5577, %v5576
    %v5581 = vpack.c.b16 %v5579, %v5578
    %v5590 = vunpack.c.l.b16 %v5564
    %v5591 = vunpack.c.h.b16 %v5564
    %v5592 = vunpack.c.l.b16 %v5565
    %v5593 = vunpack.c.l.b16 %v5566
    %v5594 = vunpack.c.h.b16 %v5566
    %v5595 = vunpack.c.l.b16 %v5567
    %v5596 = vunpack.c.l.b16 %v5568
    %v5597 = vunpack.c.h.b16 %v5568
    %v5598 = vunpack.c.l.b16 %v5569
    %v5599 = vunpack.c.l.b16 %v5570
    %v5600 = vunpack.c.h.b16 %v5570
    %v5601 = vunpack.c.l.b16 %v5571
    %v5602 = vpack.c.b16 %v5593, %v5590
    %v5603 = vpack.c.b16 %v5594, %v5591
    %v5604 = vpack.c.b16 %v5595, %v5592
    %v5605 = vpack.c.b16 %v5599, %v5596
    %v5606 = vpack.c.b16 %v5600, %v5597
    %v5607 = vpack.c.b16 %v5601, %v5598
    %5608 = vrot.lane.b32.xlu0 %v5602, 127
    %v5609 = vpop.permute.xlu0 %5608
    %5610 = vrot.lane.b32.xlu0 %v5603, 127
    %v5611 = vpop.permute.xlu0 %5610
    %5612 = vrot.lane.b32.xlu0 %v5604, 127
    %v5613 = vpop.permute.xlu0 %5612
    %5614 = vrot.lane.b32.xlu0 %v5605, 127
    %v5615 = vpop.permute.xlu0 %5614
    %5616 = vrot.lane.b32.xlu0 %v5606, 127
    %v5617 = vpop.permute.xlu0 %5616
    %5618 = vrot.lane.b32.xlu0 %v5607, 127
    %v5619 = vpop.permute.xlu0 %5618
    %v5620 = vsel %vm276, %v5609, %v5611
    %v5621 = vsel %vm276, %v5611, %v5613
    %v5622 = vsel %vm276, %v5615, %v5617
    %v5623 = vsel %vm276, %v5617, %v5619
    %v5629 = vsel %vm3249, %v5580, 0
    %v5632 = vsel %vm3249, %v5581, 0
    %5634 = vmatprep.subr.bf16.mxu0 0
    %5635 = vmatpush1.bf16.msra.mxu0 0
    %5636 = vmatprep.subr.bf16.mxu0 0
    %5637 = vmatpush1.bf16.msra.mxu0 0
    %5638 = vmatprep.subr.bf16.mxu0 0
    %5639 = vmatpush1.bf16.msra.mxu0 0
    %5640 = vmatprep.subr.bf16.mxu0 0
    %5641 = vmatpush1.bf16.msra.mxu0 0
    %5642 = vmatprep.subr.bf16.mxu0 0
    %5643 = vmatpush1.bf16.msra.mxu0 0
    %5644 = vmatprep.subr.bf16.mxu0 0
    %5645 = vmatpush1.bf16.msra.mxu0 0
    %5646 = vmatprep.subr.bf16.mxu0 %v5623
    %5647 = vmatpush1.bf16.msra.mxu0 %v5622
    %5648 = vmatprep.subr.bf16.mxu0 %v5621
    %5649 = vmatpush1.bf16.msra.mxu0 %v5620
    %5650 = vmatprep.subr.bf16.mxu0 0
    %5651 = vmatpush2.bf16.msra.mxu0 0
    %5652 = vmatprep.subr.bf16.mxu0 0
    %5653 = vmatpush2.bf16.msra.mxu0 0
    %5654 = vmatprep.subr.bf16.mxu0 0
    %5655 = vmatpush2.bf16.msra.mxu0 0
    %5656 = vmatprep.subr.bf16.mxu0 0
    %5657 = vmatpush2.bf16.msra.mxu0 0
    %5658 = vmatprep.subr.bf16.mxu0 0
    %5659 = vmatpush2.bf16.msra.mxu0 0
    %5660 = vmatprep.subr.bf16.mxu0 0
    %5661 = vmatpush2.bf16.msra.mxu0 0
    %5662 = vmatprep.subr.bf16.mxu0 0
    %5663 = vmatpush2.bf16.msra.mxu0 0
    %5664 = vmatprep.subr.bf16.mxu0 0
    %5665 = vmatpush2.bf16.msra.mxu0 0
    %5666 = vmatprep.mubr.bf16.mxu0 0
    %5667 = vmatmul.mubr.bf16.gmra.mxu0 %v5629
    %v5668 = vpop.f32.mrf.mxu0
    %v5669 = vadd.f32 0.0, %v5668
    %v5670 = vpop.f32.mrf.mxu0
    %v5671 = vadd.f32 0.0, %v5670
    %v5672 = vpop.f32.mrf.mxu0
    %v5673 = vadd.f32 0.0, %v5672
    %v5674 = vpop.f32.mrf.mxu0
    %v5675 = vadd.f32 0.0, %v5674
    %5676 = vmatprep.mubr.bf16.mxu0 0
    %5677 = vmatmul.mubr.bf16.gmra.mxu0 %v5632
    %v5678 = vpop.f32.mrf.mxu0
    %v5679 = vadd.f32 0.0, %v5678
    %v5680 = vpop.f32.mrf.mxu0
    %v5681 = vadd.f32 0.0, %v5680
    %v5682 = vpop.f32.mrf.mxu0
    %v5683 = vadd.f32 0.0, %v5682
    %v5684 = vpop.f32.mrf.mxu0
    %v5685 = vadd.f32 0.0, %v5684
    %5686 = vdwg.mxu0
    %v5687 = vadd.f32 %v5542, %v5669
    %v5688 = vadd.f32 %v5544, %v5671
    %v5689 = vadd.f32 %v5546, %v5673
    %v5690 = vadd.f32 %v5548, %v5675
    %v5691 = vadd.f32 %v5552, %v5679
    %v5692 = vadd.f32 %v5554, %v5681
    %v5693 = vadd.f32 %v5556, %v5683
    %v5694 = vadd.f32 %v5558, %v5685
    %5695 = vst [vmem:[#allocation2 + $0x50] sm:$0xff] %v5687
    %5696 = vst [vmem:[#allocation2 + $0x58] sm:$0xff] %v5688
    %5697 = vst [vmem:[#allocation2 + $0xc0] sm:$0xff] %v5689
    %5698 = vst [vmem:[#allocation2 + $0xc8] sm:$0xff] %v5690
    %5699 = vst [vmem:[#allocation2 + $0x130] sm:$0xff] %v5691
    %5700 = vst [vmem:[#allocation2 + $0x138] sm:$0xff] %v5692
    %5701 = vst [vmem:[#allocation2 + $0x1a0] sm:$0xff] %v5693
    %5702 = vst [vmem:[#allocation2 + $0x1a8] sm:$0xff] %v5694
    %v5703 = vld [vmem:[%s8 + $0xa] sm:$0x3]
    %v5705 = vlaneseq
    %v5706 = vshrl.u32 %v5705, 7
    %v5707 = vsub.s32 0, %v5706
    %v5708 = vrot.slane %v5703, %v5707
    %v5709 = vlaneseq
    %v5710 = vshrl.u32 %v5709, 7
    %v5711 = vsub.s32 1, %v5710
    %v5712 = vrot.slane %v5703, %v5711
    %v5715 = vmul.f32 %v5687, %v5708
    %v5716 = vmul.f32 %v5688, %v5712
    %v5717 = vmul.f32 %v5689, %v5708
    %v5718 = vmul.f32 %v5690, %v5712
    %v5719 = vmul.f32 %v5691, %v5708
    %v5720 = vmul.f32 %v5692, %v5712
    %v5721 = vmul.f32 %v5693, %v5708
    %v5722 = vmul.f32 %v5694, %v5712
    %v5723 = vadd.f32 %v5715, %v5716
    %5724 = vadd.xlane.f32.xlu0 %v5723
    %v5725 = vpop.xlane.xlu0 %5724
    %v5726 = vadd.f32 %v5717, %v5718
    %5727 = vadd.xlane.f32.xlu0 %v5726
    %v5728 = vpop.xlane.xlu0 %5727
    %v5729 = vadd.f32 %v5719, %v5720
    %5730 = vadd.xlane.f32.xlu0 %v5729
    %v5731 = vpop.xlane.xlu0 %5730
    %v5732 = vadd.f32 %v5721, %v5722
    %5733 = vadd.xlane.f32.xlu0 %v5732
    %v5734 = vpop.xlane.xlu0 %5733
    %v5735 = vadd.f32 %v5308, %v5725
    %v5736 = vadd.f32 %v5309, %v5728
    %v5737 = vadd.f32 %v5310, %v5731
    %v5738 = vadd.f32 %v5311, %v5734
    %v5739 = vmul.f32 %v5715, %v5687
    %v5740 = vmul.f32 %v5716, %v5688
    %v5741 = vmul.f32 %v5717, %v5689
    %v5742 = vmul.f32 %v5718, %v5690
    %v5743 = vmul.f32 %v5719, %v5691
    %v5744 = vmul.f32 %v5720, %v5692
    %v5745 = vmul.f32 %v5721, %v5693
    %v5746 = vmul.f32 %v5722, %v5694
    %v5747 = vadd.f32 %v5739, %v5740
    %5748 = vadd.xlane.f32.xlu0 %v5747
    %v5749 = vpop.xlane.xlu0 %5748
    %v5750 = vadd.f32 %v5741, %v5742
    %5751 = vadd.xlane.f32.xlu0 %v5750
    %v5752 = vpop.xlane.xlu0 %5751
    %v5753 = vadd.f32 %v5743, %v5744
    %5754 = vadd.xlane.f32.xlu0 %v5753
    %v5755 = vpop.xlane.xlu0 %5754
    %v5756 = vadd.f32 %v5745, %v5746
    %5757 = vadd.xlane.f32.xlu0 %v5756
    %v5758 = vpop.xlane.xlu0 %5757
    %v5759 = vadd.f32 %v5332, %v5749
    %v5760 = vadd.f32 %v5333, %v5752
    %v5761 = vadd.f32 %v5334, %v5755
    %v5762 = vadd.f32 %v5335, %v5758
    %v5763 = vld [vmem:[%s2] sm:$0xf]
    %v5764 = vld [vmem:[%s2 + $0x4] sm:$0xf]
    %v5765 = vld [vmem:[%s2 + $0x8] sm:$0xf]
    %v5766 = vld [vmem:[%s2 + $0xc] sm:$0xf]
    %v5767 = vld [vmem:[#allocation3 + $0x30] sm:$0xff]
    %v5768 = vld [vmem:[#allocation3 + $0x38] sm:$0xf]
    %v5769 = vld [vmem:[#allocation3 + $0x70] sm:$0xff]
    %v5770 = vld [vmem:[#allocation3 + $0x78] sm:$0xf]
    %v5771 = vld [vmem:[#allocation3 + $0xb0] sm:$0xff]
    %v5772 = vld [vmem:[#allocation3 + $0xb8] sm:$0xf]
    %v5773 = vld [vmem:[#allocation3 + $0xf0] sm:$0xff]
    %v5774 = vld [vmem:[#allocation3 + $0xf8] sm:$0xf]
    %v5775 = vld [vmem:[%s3210] sm:$0xf]
    %v5776 = vld [vmem:[%s3210 + $0x4] sm:$0xf]
    %v5777 = vld [vmem:[%s3210 + $0x8] sm:$0xf]
    %v5778 = vld [vmem:[%s3210 + $0xc] sm:$0xf]
    %v5779 = vld [vmem:[#allocation3 + $0x34] sm:$0xff]
    %v5780 = vld [vmem:[#allocation3 + $0x74] sm:$0xff]
    %v5781 = vld [vmem:[#allocation3 + $0xb4] sm:$0xff]
    %v5782 = vld [vmem:[#allocation3 + $0xf4] sm:$0xff]
    %v5787 = vunpack.c.l.b16 %v5775
    %v5788 = vunpack.c.l.b16 %v5776
    %v5789 = vunpack.c.l.b16 %v5777
    %v5790 = vunpack.c.l.b16 %v5778
    %v5791 = vpack.c.b16 %v5788, %v5787
    %v5792 = vpack.c.b16 %v5790, %v5789
    %v5797 = vunpack.c.l.b16 %v5779
    %v5798 = vunpack.c.h.b16 %v5779
    %v5799 = vunpack.c.l.b16 %v5780
    %v5800 = vunpack.c.h.b16 %v5780
    %v5801 = vunpack.c.l.b16 %v5781
    %v5802 = vunpack.c.h.b16 %v5781
    %v5803 = vunpack.c.l.b16 %v5782
    %v5804 = vunpack.c.h.b16 %v5782
    %v5805 = vpack.c.b16 %v5799, %v5797
    %v5806 = vpack.c.b16 %v5800, %v5798
    %v5807 = vpack.c.b16 %v5803, %v5801
    %v5808 = vpack.c.b16 %v5804, %v5802
    %v5814 = vsel %vm3249, %v5791, 0
    %v5817 = vsel %vm3249, %v5792, 0
    %5819 = vmatprep.subr.bf16.mxu0 0
    %5820 = vmatpush1.bf16.msra.mxu0 0
    %5821 = vmatprep.subr.bf16.mxu0 0
    %5822 = vmatpush1.bf16.msra.mxu0 0
    %5823 = vmatprep.subr.bf16.mxu0 0
    %5824 = vmatpush1.bf16.msra.mxu0 0
    %5825 = vmatprep.subr.bf16.mxu0 0
    %5826 = vmatpush1.bf16.msra.mxu0 0
    %5827 = vmatprep.subr.bf16.mxu0 0
    %5828 = vmatpush1.bf16.msra.mxu0 0
    %5829 = vmatprep.subr.bf16.mxu0 0
    %5830 = vmatpush1.bf16.msra.mxu0 0
    %5831 = vmatprep.subr.bf16.mxu0 %v5808
    %5832 = vmatpush1.bf16.msra.mxu0 %v5807
    %5833 = vmatprep.subr.bf16.mxu0 %v5806
    %5834 = vmatpush1.bf16.msra.mxu0 %v5805
    %5835 = vmatprep.subr.bf16.mxu0 0
    %5836 = vmatpush2.bf16.msra.mxu0 0
    %5837 = vmatprep.subr.bf16.mxu0 0
    %5838 = vmatpush2.bf16.msra.mxu0 0
    %5839 = vmatprep.subr.bf16.mxu0 0
    %5840 = vmatpush2.bf16.msra.mxu0 0
    %5841 = vmatprep.subr.bf16.mxu0 0
    %5842 = vmatpush2.bf16.msra.mxu0 0
    %5843 = vmatprep.subr.bf16.mxu0 0
    %5844 = vmatpush2.bf16.msra.mxu0 0
    %5845 = vmatprep.subr.bf16.mxu0 0
    %5846 = vmatpush2.bf16.msra.mxu0 0
    %5847 = vmatprep.subr.bf16.mxu0 0
    %5848 = vmatpush2.bf16.msra.mxu0 0
    %5849 = vmatprep.subr.bf16.mxu0 0
    %5850 = vmatpush2.bf16.msra.mxu0 0
    %5851 = vmatprep.mubr.bf16.mxu0 0
    %5852 = vmatmul.mubr.bf16.gmra.mxu0 %v5814
    %v5853 = vpop.f32.mrf.mxu0
    %v5854 = vadd.f32 0.0, %v5853
    %v5855 = vpop.f32.mrf.mxu0
    %v5856 = vadd.f32 0.0, %v5855
    %v5857 = vpop.f32.mrf.mxu0
    %v5858 = vadd.f32 0.0, %v5857
    %v5859 = vpop.f32.mrf.mxu0
    %v5860 = vadd.f32 0.0, %v5859
    %5861 = vmatprep.mubr.bf16.mxu0 0
    %5862 = vmatmul.mubr.bf16.gmra.mxu0 %v5817
    %v5863 = vpop.f32.mrf.mxu0
    %v5864 = vadd.f32 0.0, %v5863
    %v5865 = vpop.f32.mrf.mxu0
    %v5866 = vadd.f32 0.0, %v5865
    %v5867 = vpop.f32.mrf.mxu0
    %v5868 = vadd.f32 0.0, %v5867
    %v5869 = vpop.f32.mrf.mxu0
    %v5870 = vadd.f32 0.0, %v5869
    %5871 = vdwg.mxu0
    %v5876 = vunpack.c.l.b16 %v5763
    %v5877 = vunpack.c.l.b16 %v5764
    %v5878 = vunpack.c.l.b16 %v5765
    %v5879 = vunpack.c.l.b16 %v5766
    %v5880 = vpack.c.b16 %v5877, %v5876
    %v5881 = vpack.c.b16 %v5879, %v5878
    %v5890 = vunpack.c.l.b16 %v5767
    %v5891 = vunpack.c.h.b16 %v5767
    %v5892 = vunpack.c.l.b16 %v5768
    %v5893 = vunpack.c.l.b16 %v5769
    %v5894 = vunpack.c.h.b16 %v5769
    %v5895 = vunpack.c.l.b16 %v5770
    %v5896 = vunpack.c.l.b16 %v5771
    %v5897 = vunpack.c.h.b16 %v5771
    %v5898 = vunpack.c.l.b16 %v5772
    %v5899 = vunpack.c.l.b16 %v5773
    %v5900 = vunpack.c.h.b16 %v5773
    %v5901 = vunpack.c.l.b16 %v5774
    %v5902 = vpack.c.b16 %v5893, %v5890
    %v5903 = vpack.c.b16 %v5894, %v5891
    %v5904 = vpack.c.b16 %v5895, %v5892
    %v5905 = vpack.c.b16 %v5899, %v5896
    %v5906 = vpack.c.b16 %v5900, %v5897
    %v5907 = vpack.c.b16 %v5901, %v5898
    %5908 = vrot.lane.b32.xlu0 %v5902, 1
    %v5909 = vpop.permute.xlu0 %5908
    %5910 = vrot.lane.b32.xlu0 %v5903, 1
    %v5911 = vpop.permute.xlu0 %5910
    %5912 = vrot.lane.b32.xlu0 %v5904, 1
    %v5913 = vpop.permute.xlu0 %5912
    %5914 = vrot.lane.b32.xlu0 %v5905, 1
    %v5915 = vpop.permute.xlu0 %5914
    %5916 = vrot.lane.b32.xlu0 %v5906, 1
    %v5917 = vpop.permute.xlu0 %5916
    %5918 = vrot.lane.b32.xlu0 %v5907, 1
    %v5919 = vpop.permute.xlu0 %5918
    %v5920 = vsel %vm177, %v5909, %v5911
    %v5921 = vsel %vm177, %v5911, %v5913
    %v5922 = vsel %vm177, %v5915, %v5917
    %v5923 = vsel %vm177, %v5917, %v5919
    %v5929 = vsel %vm3249, %v5880, 0
    %v5932 = vsel %vm3249, %v5881, 0
    %5934 = vmatprep.subr.bf16.mxu0 0
    %5935 = vmatpush1.bf16.msra.mxu0 0
    %5936 = vmatprep.subr.bf16.mxu0 0
    %5937 = vmatpush1.bf16.msra.mxu0 0
    %5938 = vmatprep.subr.bf16.mxu0 0
    %5939 = vmatpush1.bf16.msra.mxu0 0
    %5940 = vmatprep.subr.bf16.mxu0 0
    %5941 = vmatpush1.bf16.msra.mxu0 0
    %5942 = vmatprep.subr.bf16.mxu0 0
    %5943 = vmatpush1.bf16.msra.mxu0 0
    %5944 = vmatprep.subr.bf16.mxu0 0
    %5945 = vmatpush1.bf16.msra.mxu0 0
    %5946 = vmatprep.subr.bf16.mxu0 %v5923
    %5947 = vmatpush1.bf16.msra.mxu0 %v5922
    %5948 = vmatprep.subr.bf16.mxu0 %v5921
    %5949 = vmatpush1.bf16.msra.mxu0 %v5920
    %5950 = vmatprep.subr.bf16.mxu0 0
    %5951 = vmatpush2.bf16.msra.mxu0 0
    %5952 = vmatprep.subr.bf16.mxu0 0
    %5953 = vmatpush2.bf16.msra.mxu0 0
    %5954 = vmatprep.subr.bf16.mxu0 0
    %5955 = vmatpush2.bf16.msra.mxu0 0
    %5956 = vmatprep.subr.bf16.mxu0 0
    %5957 = vmatpush2.bf16.msra.mxu0 0
    %5958 = vmatprep.subr.bf16.mxu0 0
    %5959 = vmatpush2.bf16.msra.mxu0 0
    %5960 = vmatprep.subr.bf16.mxu0 0
    %5961 = vmatpush2.bf16.msra.mxu0 0
    %5962 = vmatprep.subr.bf16.mxu0 0
    %5963 = vmatpush2.bf16.msra.mxu0 0
    %5964 = vmatprep.subr.bf16.mxu0 0
    %5965 = vmatpush2.bf16.msra.mxu0 0
    %5966 = vmatprep.mubr.bf16.mxu0 0
    %5967 = vmatmul.mubr.bf16.gmra.mxu0 %v5929
    %v5968 = vpop.f32.mrf.mxu0
    %v5969 = vadd.f32 %v5854, %v5968
    %v5970 = vpop.f32.mrf.mxu0
    %v5971 = vadd.f32 %v5856, %v5970
    %v5972 = vpop.f32.mrf.mxu0
    %v5973 = vadd.f32 %v5858, %v5972
    %v5974 = vpop.f32.mrf.mxu0
    %v5975 = vadd.f32 %v5860, %v5974
    %5976 = vmatprep.mubr.bf16.mxu0 0
    %5977 = vmatmul.mubr.bf16.gmra.mxu0 %v5932
    %v5978 = vpop.f32.mrf.mxu0
    %v5979 = vadd.f32 %v5864, %v5978
    %v5980 = vpop.f32.mrf.mxu0
    %v5981 = vadd.f32 %v5866, %v5980
    %v5982 = vpop.f32.mrf.mxu0
    %v5983 = vadd.f32 %v5868, %v5982
    %v5984 = vpop.f32.mrf.mxu0
    %v5985 = vadd.f32 %v5870, %v5984
    %5986 = vdwg.mxu0
    %v5987 = vld [vmem:[%s3424] sm:$0xf]
    %v5988 = vld [vmem:[%s3424 + $0x4] sm:$0xf]
    %v5989 = vld [vmem:[%s3424 + $0x8] sm:$0xf]
    %v5990 = vld [vmem:[%s3424 + $0xc] sm:$0xf]
    %v5991 = vld [vmem:[#allocation3 + $0x34] sm:$0xff]
    %v5992 = vld [vmem:[#allocation3 + $0x3c] sm:$0xf]
    %v5993 = vld [vmem:[#allocation3 + $0x74] sm:$0xff]
    %v5994 = vld [vmem:[#allocation3 + $0x7c] sm:$0xf]
    %v5995 = vld [vmem:[#allocation3 + $0xb4] sm:$0xff]
    %v5996 = vld [vmem:[#allocation3 + $0xbc] sm:$0xf]
    %v5997 = vld [vmem:[#allocation3 + $0xf4] sm:$0xff]
    %v5998 = vld [vmem:[#allocation3 + $0xfc] sm:$0xf]
    %v6003 = vunpack.c.l.b16 %v5987
    %v6004 = vunpack.c.l.b16 %v5988
    %v6005 = vunpack.c.l.b16 %v5989
    %v6006 = vunpack.c.l.b16 %v5990
    %v6007 = vpack.c.b16 %v6004, %v6003
    %v6008 = vpack.c.b16 %v6006, %v6005
    %v6017 = vunpack.c.l.b16 %v5991
    %v6018 = vunpack.c.h.b16 %v5991
    %v6019 = vunpack.c.l.b16 %v5992
    %v6020 = vunpack.c.l.b16 %v5993
    %v6021 = vunpack.c.h.b16 %v5993
    %v6022 = vunpack.c.l.b16 %v5994
    %v6023 = vunpack.c.l.b16 %v5995
    %v6024 = vunpack.c.h.b16 %v5995
    %v6025 = vunpack.c.l.b16 %v5996
    %v6026 = vunpack.c.l.b16 %v5997
    %v6027 = vunpack.c.h.b16 %v5997
    %v6028 = vunpack.c.l.b16 %v5998
    %v6029 = vpack.c.b16 %v6020, %v6017
    %v6030 = vpack.c.b16 %v6021, %v6018
    %v6031 = vpack.c.b16 %v6022, %v6019
    %v6032 = vpack.c.b16 %v6026, %v6023
    %v6033 = vpack.c.b16 %v6027, %v6024
    %v6034 = vpack.c.b16 %v6028, %v6025
    %6035 = vrot.lane.b32.xlu0 %v6029, 127
    %v6036 = vpop.permute.xlu0 %6035
    %6037 = vrot.lane.b32.xlu0 %v6030, 127
    %v6038 = vpop.permute.xlu0 %6037
    %6039 = vrot.lane.b32.xlu0 %v6031, 127
    %v6040 = vpop.permute.xlu0 %6039
    %6041 = vrot.lane.b32.xlu0 %v6032, 127
    %v6042 = vpop.permute.xlu0 %6041
    %6043 = vrot.lane.b32.xlu0 %v6033, 127
    %v6044 = vpop.permute.xlu0 %6043
    %6045 = vrot.lane.b32.xlu0 %v6034, 127
    %v6046 = vpop.permute.xlu0 %6045
    %v6047 = vsel %vm276, %v6036, %v6038
    %v6048 = vsel %vm276, %v6038, %v6040
    %v6049 = vsel %vm276, %v6042, %v6044
    %v6050 = vsel %vm276, %v6044, %v6046
    %v6056 = vsel %vm3249, %v6007, 0
    %v6059 = vsel %vm3249, %v6008, 0
    %6061 = vmatprep.subr.bf16.mxu0 0
    %6062 = vmatpush1.bf16.msra.mxu0 0
    %6063 = vmatprep.subr.bf16.mxu0 0
    %6064 = vmatpush1.bf16.msra.mxu0 0
    %6065 = vmatprep.subr.bf16.mxu0 0
    %6066 = vmatpush1.bf16.msra.mxu0 0
    %6067 = vmatprep.subr.bf16.mxu0 0
    %6068 = vmatpush1.bf16.msra.mxu0 0
    %6069 = vmatprep.subr.bf16.mxu0 0
    %6070 = vmatpush1.bf16.msra.mxu0 0
    %6071 = vmatprep.subr.bf16.mxu0 0
    %6072 = vmatpush1.bf16.msra.mxu0 0
    %6073 = vmatprep.subr.bf16.mxu0 %v6050
    %6074 = vmatpush1.bf16.msra.mxu0 %v6049
    %6075 = vmatprep.subr.bf16.mxu0 %v6048
    %6076 = vmatpush1.bf16.msra.mxu0 %v6047
    %6077 = vmatprep.subr.bf16.mxu0 0
    %6078 = vmatpush2.bf16.msra.mxu0 0
    %6079 = vmatprep.subr.bf16.mxu0 0
    %6080 = vmatpush2.bf16.msra.mxu0 0
    %6081 = vmatprep.subr.bf16.mxu0 0
    %6082 = vmatpush2.bf16.msra.mxu0 0
    %6083 = vmatprep.subr.bf16.mxu0 0
    %6084 = vmatpush2.bf16.msra.mxu0 0
    %6085 = vmatprep.subr.bf16.mxu0 0
    %6086 = vmatpush2.bf16.msra.mxu0 0
    %6087 = vmatprep.subr.bf16.mxu0 0
    %6088 = vmatpush2.bf16.msra.mxu0 0
    %6089 = vmatprep.subr.bf16.mxu0 0
    %6090 = vmatpush2.bf16.msra.mxu0 0
    %6091 = vmatprep.subr.bf16.mxu0 0
    %6092 = vmatpush2.bf16.msra.mxu0 0
    %6093 = vmatprep.mubr.bf16.mxu0 0
    %6094 = vmatmul.mubr.bf16.gmra.mxu0 %v6056
    %v6095 = vpop.f32.mrf.mxu0
    %v6096 = vadd.f32 0.0, %v6095
    %v6097 = vpop.f32.mrf.mxu0
    %v6098 = vadd.f32 0.0, %v6097
    %v6099 = vpop.f32.mrf.mxu0
    %v6100 = vadd.f32 0.0, %v6099
    %v6101 = vpop.f32.mrf.mxu0
    %v6102 = vadd.f32 0.0, %v6101
    %6103 = vmatprep.mubr.bf16.mxu0 0
    %6104 = vmatmul.mubr.bf16.gmra.mxu0 %v6059
    %v6105 = vpop.f32.mrf.mxu0
    %v6106 = vadd.f32 0.0, %v6105
    %v6107 = vpop.f32.mrf.mxu0
    %v6108 = vadd.f32 0.0, %v6107
    %v6109 = vpop.f32.mrf.mxu0
    %v6110 = vadd.f32 0.0, %v6109
    %v6111 = vpop.f32.mrf.mxu0
    %v6112 = vadd.f32 0.0, %v6111
    %6113 = vdwg.mxu0
    %v6114 = vadd.f32 %v5969, %v6096
    %v6115 = vadd.f32 %v5971, %v6098
    %v6116 = vadd.f32 %v5973, %v6100
    %v6117 = vadd.f32 %v5975, %v6102
    %v6118 = vadd.f32 %v5979, %v6106
    %v6119 = vadd.f32 %v5981, %v6108
    %v6120 = vadd.f32 %v5983, %v6110
    %v6121 = vadd.f32 %v5985, %v6112
    %6122 = vst [vmem:[#allocation2 + $0x60] sm:$0xff] %v6114
    %6123 = vst [vmem:[#allocation2 + $0x68] sm:$0xff] %v6115
    %6124 = vst [vmem:[#allocation2 + $0xd0] sm:$0xff] %v6116
    %6125 = vst [vmem:[#allocation2 + $0xd8] sm:$0xff] %v6117
    %6126 = vst [vmem:[#allocation2 + $0x140] sm:$0xff] %v6118
    %6127 = vst [vmem:[#allocation2 + $0x148] sm:$0xff] %v6119
    %6128 = vst [vmem:[#allocation2 + $0x1b0] sm:$0xff] %v6120
    %6129 = vst [vmem:[#allocation2 + $0x1b8] sm:$0xff] %v6121
    %v6130 = vld [vmem:[%s8 + $0xc] sm:$0x3]
    %v6132 = vlaneseq
    %v6133 = vshrl.u32 %v6132, 7
    %v6134 = vsub.s32 0, %v6133
    %v6135 = vrot.slane %v6130, %v6134
    %v6136 = vlaneseq
    %v6137 = vshrl.u32 %v6136, 7
    %v6138 = vsub.s32 1, %v6137
    %v6139 = vrot.slane %v6130, %v6138
    %v6142 = vmul.f32 %v6114, %v6135
    %v6143 = vmul.f32 %v6115, %v6139
    %v6144 = vmul.f32 %v6116, %v6135
    %v6145 = vmul.f32 %v6117, %v6139
    %v6146 = vmul.f32 %v6118, %v6135
    %v6147 = vmul.f32 %v6119, %v6139
    %v6148 = vmul.f32 %v6120, %v6135
    %v6149 = vmul.f32 %v6121, %v6139
    %v6150 = vadd.f32 %v6142, %v6143
    %6151 = vadd.xlane.f32.xlu0 %v6150
    %v6152 = vpop.xlane.xlu0 %6151
    %v6153 = vadd.f32 %v6144, %v6145
    %6154 = vadd.xlane.f32.xlu0 %v6153
    %v6155 = vpop.xlane.xlu0 %6154
    %v6156 = vadd.f32 %v6146, %v6147
    %6157 = vadd.xlane.f32.xlu0 %v6156
    %v6158 = vpop.xlane.xlu0 %6157
    %v6159 = vadd.f32 %v6148, %v6149
    %6160 = vadd.xlane.f32.xlu0 %v6159
    %v6161 = vpop.xlane.xlu0 %6160
    %v6162 = vadd.f32 %v5735, %v6152
    %v6163 = vadd.f32 %v5736, %v6155
    %v6164 = vadd.f32 %v5737, %v6158
    %v6165 = vadd.f32 %v5738, %v6161
    %v6166 = vmul.f32 %v6142, %v6114
    %v6167 = vmul.f32 %v6143, %v6115
    %v6168 = vmul.f32 %v6144, %v6116
    %v6169 = vmul.f32 %v6145, %v6117
    %v6170 = vmul.f32 %v6146, %v6118
    %v6171 = vmul.f32 %v6147, %v6119
    %v6172 = vmul.f32 %v6148, %v6120
    %v6173 = vmul.f32 %v6149, %v6121
    %v6174 = vadd.f32 %v6166, %v6167
    %6175 = vadd.xlane.f32.xlu0 %v6174
    %v6176 = vpop.xlane.xlu0 %6175
    %v6177 = vadd.f32 %v6168, %v6169
    %6178 = vadd.xlane.f32.xlu0 %v6177
    %v6179 = vpop.xlane.xlu0 %6178
    %v6180 = vadd.f32 %v6170, %v6171
    %6181 = vadd.xlane.f32.xlu0 %v6180
    %v6182 = vpop.xlane.xlu0 %6181
    %v6183 = vadd.f32 %v6172, %v6173
    %6184 = vadd.xlane.f32.xlu0 %v6183
    %v6185 = vpop.xlane.xlu0 %6184
    %v6186 = vadd.f32 %v5759, %v6176
    %v6187 = vadd.f32 %v5760, %v6179
    %v6188 = vadd.f32 %v5761, %v6182
    %v6189 = vadd.f32 %v5762, %v6185
    %v6190 = vld [vmem:[%s5] sm:$0xff]
    %v6191 = vld [vmem:[%s5 + $0x8] sm:$0xff]
    %v6192 = vld [vmem:[%s5 + $0x10] sm:$0xff]
    %v6193 = vld [vmem:[%s5 + $0x18] sm:$0xff]
    %v6194 = vld [vmem:[%s6] sm:$0xff]
    %v6195 = vld [vmem:[%s6 + $0x8] sm:$0xff]
    %v6196 = vld [vmem:[%s6 + $0x10] sm:$0xff]
    %v6197 = vld [vmem:[%s6 + $0x18] sm:$0xff]
    %v6198 = vmul.f32 %v6162, 0.00125
    %v6199 = vmul.f32 %v6163, 0.00125
    %v6200 = vmul.f32 %v6164, 0.00125
    %v6201 = vmul.f32 %v6165, 0.00125
    %v6202 = vmul.f32 %v6186, 0.00125
    %v6203 = vmul.f32 %v6187, 0.00125
    %v6204 = vmul.f32 %v6188, 0.00125
    %v6205 = vmul.f32 %v6189, 0.00125
    %v6206 = vmul.f32 %v6198, %v6198
    %v6207 = vmul.f32 %v6199, %v6199
    %v6208 = vmul.f32 %v6200, %v6200
    %v6209 = vmul.f32 %v6201, %v6201
    %v6210 = vsub.f32 %v6202, %v6206
    %v6211 = vsub.f32 %v6203, %v6207
    %v6212 = vsub.f32 %v6204, %v6208
    %v6213 = vsub.f32 %v6205, %v6209
    %v6214 = vmax.f32 %v6210, 0.0
    %v6215 = vmax.f32 %v6211, 0.0
    %v6216 = vmax.f32 %v6212, 0.0
    %v6217 = vmax.f32 %v6213, 0.0
    %v6218 = vadd.f32 %v6214, 1e-05
    %v6219 = vadd.f32 %v6215, 1e-05
    %v6220 = vadd.f32 %v6216, 1e-05
    %v6221 = vadd.f32 %v6217, 1e-05
    %v6222 = vrsqrt.pop %v6218
    %v6223 = vrsqrt.pop %v6219
    %v6224 = vrsqrt.pop %v6220
    %v6225 = vrsqrt.pop %v6221
    %v6226 = vmul.f32 %v6190, %v6222
    %v6227 = vmul.f32 %v6191, %v6223
    %v6228 = vmul.f32 %v6192, %v6224
    %v6229 = vmul.f32 %v6193, %v6225
    %v6230 = vmul.f32 %v6198, %v6226
    %v6231 = vmul.f32 %v6199, %v6227
    %v6232 = vmul.f32 %v6200, %v6228
    %v6233 = vmul.f32 %v6201, %v6229
    %v6234 = vsub.f32 %v6194, %v6230
    %v6235 = vsub.f32 %v6195, %v6231
    %v6236 = vsub.f32 %v6196, %v6232
    %v6237 = vsub.f32 %v6197, %v6233
    %v6238 = vld [vmem:[#allocation2] sm:$0xff]
    %v6239 = vld [vmem:[#allocation2 + $0x8] sm:$0xff]
    %v6240 = vld [vmem:[#allocation2 + $0x70] sm:$0xff]
    %v6241 = vld [vmem:[#allocation2 + $0x78] sm:$0xff]
    %v6242 = vld [vmem:[#allocation2 + $0xe0] sm:$0xff]
    %v6243 = vld [vmem:[#allocation2 + $0xe8] sm:$0xff]
    %v6244 = vld [vmem:[#allocation2 + $0x150] sm:$0xff]
    %v6245 = vld [vmem:[#allocation2 + $0x158] sm:$0xff]
    %6247 = vset.pattern.permute.xlu0 0
    %6248 = vperm.xlu0 %6247, %v6226
    %v6249 = vpop.permute.xlu0 %6248
    %6252 = vset.pattern.permute.xlu0 0
    %6253 = vperm.xlu0 %6252, %v6227
    %v6254 = vpop.permute.xlu0 %6253
    %6257 = vset.pattern.permute.xlu0 0
    %6258 = vperm.xlu0 %6257, %v6228
    %v6259 = vpop.permute.xlu0 %6258
    %6262 = vset.pattern.permute.xlu0 0
    %6263 = vperm.xlu0 %6262, %v6229
    %v6264 = vpop.permute.xlu0 %6263
    %v6266 = vmul.f32 %v6238, %v6249
    %v6267 = vmul.f32 %v6239, %v6249
    %v6268 = vmul.f32 %v6240, %v6254
    %v6269 = vmul.f32 %v6241, %v6254
    %v6270 = vmul.f32 %v6242, %v6259
    %v6271 = vmul.f32 %v6243, %v6259
    %v6272 = vmul.f32 %v6244, %v6264
    %v6273 = vmul.f32 %v6245, %v6264
    %6275 = vset.pattern.permute.xlu0 0
    %6276 = vperm.xlu0 %6275, %v6234
    %v6277 = vpop.permute.xlu0 %6276
    %6280 = vset.pattern.permute.xlu0 0
    %6281 = vperm.xlu0 %6280, %v6235
    %v6282 = vpop.permute.xlu0 %6281
    %6285 = vset.pattern.permute.xlu0 0
    %6286 = vperm.xlu0 %6285, %v6236
    %v6287 = vpop.permute.xlu0 %6286
    %6290 = vset.pattern.permute.xlu0 0
    %6291 = vperm.xlu0 %6290, %v6237
    %v6292 = vpop.permute.xlu0 %6291
    %v6294 = vadd.f32 %v6266, %v6277
    %v6295 = vadd.f32 %v6267, %v6277
    %v6296 = vadd.f32 %v6268, %v6282
    %v6297 = vadd.f32 %v6269, %v6282
    %v6298 = vadd.f32 %v6270, %v6287
    %v6299 = vadd.f32 %v6271, %v6287
    %v6300 = vadd.f32 %v6272, %v6292
    %v6301 = vadd.f32 %v6273, %v6292
    %v6302 = vmax.f32 %v6294, 0.0
    %v6303 = vmax.f32 %v6295, 0.0
    %v6304 = vmax.f32 %v6296, 0.0
    %v6305 = vmax.f32 %v6297, 0.0
    %v6306 = vmax.f32 %v6298, 0.0
    %v6307 = vmax.f32 %v6299, 0.0
    %v6308 = vmax.f32 %v6300, 0.0
    %v6309 = vmax.f32 %v6301, 0.0
    %v6310 = vpack.c.bf16 %v6304, %v6302
    %v6311 = vpack.c.bf16 %v6305, %v6303
    %v6312 = vpack.c.bf16 %v6308, %v6306
    %v6313 = vpack.c.bf16 %v6309, %v6307
    %v6318 = vunpack.c.l.b16 %v6310
    %v6319 = vunpack.c.l.b16 %v6311
    %v6320 = vunpack.c.h.b16 %v6310
    %v6321 = vunpack.c.h.b16 %v6311
    %v6322 = vunpack.c.l.b16 %v6312
    %v6323 = vunpack.c.l.b16 %v6313
    %v6324 = vunpack.c.h.b16 %v6312
    %v6325 = vunpack.c.h.b16 %v6313
    %v6326 = vpack.c.b16 %v6319, %v6318
    %v6327 = vpack.c.b16 %v6321, %v6320
    %v6328 = vpack.c.b16 %v6323, %v6322
    %v6329 = vpack.c.b16 %v6325, %v6324
    %6334 = vst [vmem:[#allocation3 + $0x4] sm:$0xff] %v6326
    %6335 = vst [vmem:[#allocation3 + $0x44] sm:$0xff] %v6327
    %6336 = vst [vmem:[#allocation3 + $0x84] sm:$0xff] %v6328
    %6337 = vst [vmem:[#allocation3 + $0xc4] sm:$0xff] %v6329
    %v6338 = vld [vmem:[#allocation2 + $0x10] sm:$0xff]
    %v6339 = vld [vmem:[#allocation2 + $0x18] sm:$0xff]
    %v6340 = vld [vmem:[#allocation2 + $0x80] sm:$0xff]
    %v6341 = vld [vmem:[#allocation2 + $0x88] sm:$0xff]
    %v6342 = vld [vmem:[#allocation2 + $0xf0] sm:$0xff]
    %v6343 = vld [vmem:[#allocation2 + $0xf8] sm:$0xff]
    %v6344 = vld [vmem:[#allocation2 + $0x160] sm:$0xff]
    %v6345 = vld [vmem:[#allocation2 + $0x168] sm:$0xff]
    %v6346 = vmul.f32 %v6338, %v6249
    %v6347 = vmul.f32 %v6339, %v6249
    %v6348 = vmul.f32 %v6340, %v6254
    %v6349 = vmul.f32 %v6341, %v6254
    %v6350 = vmul.f32 %v6342, %v6259
    %v6351 = vmul.f32 %v6343, %v6259
    %v6352 = vmul.f32 %v6344, %v6264
    %v6353 = vmul.f32 %v6345, %v6264
    %v6354 = vadd.f32 %v6346, %v6277
    %v6355 = vadd.f32 %v6347, %v6277
    %v6356 = vadd.f32 %v6348, %v6282
    %v6357 = vadd.f32 %v6349, %v6282
    %v6358 = vadd.f32 %v6350, %v6287
    %v6359 = vadd.f32 %v6351, %v6287
    %v6360 = vadd.f32 %v6352, %v6292
    %v6361 = vadd.f32 %v6353, %v6292
    %v6362 = vmax.f32 %v6354, 0.0
    %v6363 = vmax.f32 %v6355, 0.0
    %v6364 = vmax.f32 %v6356, 0.0
    %v6365 = vmax.f32 %v6357, 0.0
    %v6366 = vmax.f32 %v6358, 0.0
    %v6367 = vmax.f32 %v6359, 0.0
    %v6368 = vmax.f32 %v6360, 0.0
    %v6369 = vmax.f32 %v6361, 0.0
    %v6370 = vpack.c.bf16 %v6364, %v6362
    %v6371 = vpack.c.bf16 %v6365, %v6363
    %v6372 = vpack.c.bf16 %v6368, %v6366
    %v6373 = vpack.c.bf16 %v6369, %v6367
    %v6378 = vunpack.c.l.b16 %v6370
    %v6379 = vunpack.c.l.b16 %v6371
    %v6380 = vunpack.c.h.b16 %v6370
    %v6381 = vunpack.c.h.b16 %v6371
    %v6382 = vunpack.c.l.b16 %v6372
    %v6383 = vunpack.c.l.b16 %v6373
    %v6384 = vunpack.c.h.b16 %v6372
    %v6385 = vunpack.c.h.b16 %v6373
    %v6386 = vpack.c.b16 %v6379, %v6378
    %v6387 = vpack.c.b16 %v6381, %v6380
    %v6388 = vpack.c.b16 %v6383, %v6382
    %v6389 = vpack.c.b16 %v6385, %v6384
    %6394 = vst [vmem:[#allocation3 + $0xc] sm:$0xff] %v6386
    %6395 = vst [vmem:[#allocation3 + $0x4c] sm:$0xff] %v6387
    %6396 = vst [vmem:[#allocation3 + $0x8c] sm:$0xff] %v6388
    %6397 = vst [vmem:[#allocation3 + $0xcc] sm:$0xff] %v6389
    %v6398 = vld [vmem:[#allocation2 + $0x20] sm:$0xff]
    %v6399 = vld [vmem:[#allocation2 + $0x28] sm:$0xff]
    %v6400 = vld [vmem:[#allocation2 + $0x90] sm:$0xff]
    %v6401 = vld [vmem:[#allocation2 + $0x98] sm:$0xff]
    %v6402 = vld [vmem:[#allocation2 + $0x100] sm:$0xff]
    %v6403 = vld [vmem:[#allocation2 + $0x108] sm:$0xff]
    %v6404 = vld [vmem:[#allocation2 + $0x170] sm:$0xff]
    %v6405 = vld [vmem:[#allocation2 + $0x178] sm:$0xff]
    %v6406 = vmul.f32 %v6398, %v6249
    %v6407 = vmul.f32 %v6399, %v6249
    %v6408 = vmul.f32 %v6400, %v6254
    %v6409 = vmul.f32 %v6401, %v6254
    %v6410 = vmul.f32 %v6402, %v6259
    %v6411 = vmul.f32 %v6403, %v6259
    %v6412 = vmul.f32 %v6404, %v6264
    %v6413 = vmul.f32 %v6405, %v6264
    %v6414 = vadd.f32 %v6406, %v6277
    %v6415 = vadd.f32 %v6407, %v6277
    %v6416 = vadd.f32 %v6408, %v6282
    %v6417 = vadd.f32 %v6409, %v6282
    %v6418 = vadd.f32 %v6410, %v6287
    %v6419 = vadd.f32 %v6411, %v6287
    %v6420 = vadd.f32 %v6412, %v6292
    %v6421 = vadd.f32 %v6413, %v6292
    %v6422 = vmax.f32 %v6414, 0.0
    %v6423 = vmax.f32 %v6415, 0.0
    %v6424 = vmax.f32 %v6416, 0.0
    %v6425 = vmax.f32 %v6417, 0.0
    %v6426 = vmax.f32 %v6418, 0.0
    %v6427 = vmax.f32 %v6419, 0.0
    %v6428 = vmax.f32 %v6420, 0.0
    %v6429 = vmax.f32 %v6421, 0.0
    %v6430 = vpack.c.bf16 %v6424, %v6422
    %v6431 = vpack.c.bf16 %v6425, %v6423
    %v6432 = vpack.c.bf16 %v6428, %v6426
    %v6433 = vpack.c.bf16 %v6429, %v6427
    %v6438 = vunpack.c.l.b16 %v6430
    %v6439 = vunpack.c.l.b16 %v6431
    %v6440 = vunpack.c.h.b16 %v6430
    %v6441 = vunpack.c.h.b16 %v6431
    %v6442 = vunpack.c.l.b16 %v6432
    %v6443 = vunpack.c.l.b16 %v6433
    %v6444 = vunpack.c.h.b16 %v6432
    %v6445 = vunpack.c.h.b16 %v6433
    %v6446 = vpack.c.b16 %v6439, %v6438
    %v6447 = vpack.c.b16 %v6441, %v6440
    %v6448 = vpack.c.b16 %v6443, %v6442
    %v6449 = vpack.c.b16 %v6445, %v6444
    %6454 = vst [vmem:[#allocation3 + $0x14] sm:$0xff] %v6446
    %6455 = vst [vmem:[#allocation3 + $0x54] sm:$0xff] %v6447
    %6456 = vst [vmem:[#allocation3 + $0x94] sm:$0xff] %v6448
    %6457 = vst [vmem:[#allocation3 + $0xd4] sm:$0xff] %v6449
    %v6458 = vld [vmem:[#allocation2 + $0x30] sm:$0xff]
    %v6459 = vld [vmem:[#allocation2 + $0x38] sm:$0xff]
    %v6460 = vld [vmem:[#allocation2 + $0xa0] sm:$0xff]
    %v6461 = vld [vmem:[#allocation2 + $0xa8] sm:$0xff]
    %v6462 = vld [vmem:[#allocation2 + $0x110] sm:$0xff]
    %v6463 = vld [vmem:[#allocation2 + $0x118] sm:$0xff]
    %v6464 = vld [vmem:[#allocation2 + $0x180] sm:$0xff]
    %v6465 = vld [vmem:[#allocation2 + $0x188] sm:$0xff]
    %v6466 = vmul.f32 %v6458, %v6249
    %v6467 = vmul.f32 %v6459, %v6249
    %v6468 = vmul.f32 %v6460, %v6254
    %v6469 = vmul.f32 %v6461, %v6254
    %v6470 = vmul.f32 %v6462, %v6259
    %v6471 = vmul.f32 %v6463, %v6259
    %v6472 = vmul.f32 %v6464, %v6264
    %v6473 = vmul.f32 %v6465, %v6264
    %v6474 = vadd.f32 %v6466, %v6277
    %v6475 = vadd.f32 %v6467, %v6277
    %v6476 = vadd.f32 %v6468, %v6282
    %v6477 = vadd.f32 %v6469, %v6282
    %v6478 = vadd.f32 %v6470, %v6287
    %v6479 = vadd.f32 %v6471, %v6287
    %v6480 = vadd.f32 %v6472, %v6292
    %v6481 = vadd.f32 %v6473, %v6292
    %v6482 = vmax.f32 %v6474, 0.0
    %v6483 = vmax.f32 %v6475, 0.0
    %v6484 = vmax.f32 %v6476, 0.0
    %v6485 = vmax.f32 %v6477, 0.0
    %v6486 = vmax.f32 %v6478, 0.0
    %v6487 = vmax.f32 %v6479, 0.0
    %v6488 = vmax.f32 %v6480, 0.0
    %v6489 = vmax.f32 %v6481, 0.0
    %v6490 = vpack.c.bf16 %v6484, %v6482
    %v6491 = vpack.c.bf16 %v6485, %v6483
    %v6492 = vpack.c.bf16 %v6488, %v6486
    %v6493 = vpack.c.bf16 %v6489, %v6487
    %v6498 = vunpack.c.l.b16 %v6490
    %v6499 = vunpack.c.l.b16 %v6491
    %v6500 = vunpack.c.h.b16 %v6490
    %v6501 = vunpack.c.h.b16 %v6491
    %v6502 = vunpack.c.l.b16 %v6492
    %v6503 = vunpack.c.l.b16 %v6493
    %v6504 = vunpack.c.h.b16 %v6492
    %v6505 = vunpack.c.h.b16 %v6493
    %v6506 = vpack.c.b16 %v6499, %v6498
    %v6507 = vpack.c.b16 %v6501, %v6500
    %v6508 = vpack.c.b16 %v6503, %v6502
    %v6509 = vpack.c.b16 %v6505, %v6504
    %6514 = vst [vmem:[#allocation3 + $0x1c] sm:$0xff] %v6506
    %6515 = vst [vmem:[#allocation3 + $0x5c] sm:$0xff] %v6507
    %6516 = vst [vmem:[#allocation3 + $0x9c] sm:$0xff] %v6508
    %6517 = vst [vmem:[#allocation3 + $0xdc] sm:$0xff] %v6509
    %v6518 = vld [vmem:[#allocation2 + $0x40] sm:$0xff]
    %v6519 = vld [vmem:[#allocation2 + $0x48] sm:$0xff]
    %v6520 = vld [vmem:[#allocation2 + $0xb0] sm:$0xff]
    %v6521 = vld [vmem:[#allocation2 + $0xb8] sm:$0xff]
    %v6522 = vld [vmem:[#allocation2 + $0x120] sm:$0xff]
    %v6523 = vld [vmem:[#allocation2 + $0x128] sm:$0xff]
    %v6524 = vld [vmem:[#allocation2 + $0x190] sm:$0xff]
    %v6525 = vld [vmem:[#allocation2 + $0x198] sm:$0xff]
    %v6526 = vmul.f32 %v6518, %v6249
    %v6527 = vmul.f32 %v6519, %v6249
    %v6528 = vmul.f32 %v6520, %v6254
    %v6529 = vmul.f32 %v6521, %v6254
    %v6530 = vmul.f32 %v6522, %v6259
    %v6531 = vmul.f32 %v6523, %v6259
    %v6532 = vmul.f32 %v6524, %v6264
    %v6533 = vmul.f32 %v6525, %v6264
    %v6534 = vadd.f32 %v6526, %v6277
    %v6535 = vadd.f32 %v6527, %v6277
    %v6536 = vadd.f32 %v6528, %v6282
    %v6537 = vadd.f32 %v6529, %v6282
    %v6538 = vadd.f32 %v6530, %v6287
    %v6539 = vadd.f32 %v6531, %v6287
    %v6540 = vadd.f32 %v6532, %v6292
    %v6541 = vadd.f32 %v6533, %v6292
    %v6542 = vmax.f32 %v6534, 0.0
    %v6543 = vmax.f32 %v6535, 0.0
    %v6544 = vmax.f32 %v6536, 0.0
    %v6545 = vmax.f32 %v6537, 0.0
    %v6546 = vmax.f32 %v6538, 0.0
    %v6547 = vmax.f32 %v6539, 0.0
    %v6548 = vmax.f32 %v6540, 0.0
    %v6549 = vmax.f32 %v6541, 0.0
    %v6550 = vpack.c.bf16 %v6544, %v6542
    %v6551 = vpack.c.bf16 %v6545, %v6543
    %v6552 = vpack.c.bf16 %v6548, %v6546
    %v6553 = vpack.c.bf16 %v6549, %v6547
    %v6558 = vunpack.c.l.b16 %v6550
    %v6559 = vunpack.c.l.b16 %v6551
    %v6560 = vunpack.c.h.b16 %v6550
    %v6561 = vunpack.c.h.b16 %v6551
    %v6562 = vunpack.c.l.b16 %v6552
    %v6563 = vunpack.c.l.b16 %v6553
    %v6564 = vunpack.c.h.b16 %v6552
    %v6565 = vunpack.c.h.b16 %v6553
    %v6566 = vpack.c.b16 %v6559, %v6558
    %v6567 = vpack.c.b16 %v6561, %v6560
    %v6568 = vpack.c.b16 %v6563, %v6562
    %v6569 = vpack.c.b16 %v6565, %v6564
    %6574 = vst [vmem:[#allocation3 + $0x24] sm:$0xff] %v6566
    %6575 = vst [vmem:[#allocation3 + $0x64] sm:$0xff] %v6567
    %6576 = vst [vmem:[#allocation3 + $0xa4] sm:$0xff] %v6568
    %6577 = vst [vmem:[#allocation3 + $0xe4] sm:$0xff] %v6569
    %v6578 = vld [vmem:[#allocation2 + $0x50] sm:$0xff]
    %v6579 = vld [vmem:[#allocation2 + $0x58] sm:$0xff]
    %v6580 = vld [vmem:[#allocation2 + $0xc0] sm:$0xff]
    %v6581 = vld [vmem:[#allocation2 + $0xc8] sm:$0xff]
    %v6582 = vld [vmem:[#allocation2 + $0x130] sm:$0xff]
    %v6583 = vld [vmem:[#allocation2 + $0x138] sm:$0xff]
    %v6584 = vld [vmem:[#allocation2 + $0x1a0] sm:$0xff]
    %v6585 = vld [vmem:[#allocation2 + $0x1a8] sm:$0xff]
    %v6586 = vmul.f32 %v6578, %v6249
    %v6587 = vmul.f32 %v6579, %v6249
    %v6588 = vmul.f32 %v6580, %v6254
    %v6589 = vmul.f32 %v6581, %v6254
    %v6590 = vmul.f32 %v6582, %v6259
    %v6591 = vmul.f32 %v6583, %v6259
    %v6592 = vmul.f32 %v6584, %v6264
    %v6593 = vmul.f32 %v6585, %v6264
    %v6594 = vadd.f32 %v6586, %v6277
    %v6595 = vadd.f32 %v6587, %v6277
    %v6596 = vadd.f32 %v6588, %v6282
    %v6597 = vadd.f32 %v6589, %v6282
    %v6598 = vadd.f32 %v6590, %v6287
    %v6599 = vadd.f32 %v6591, %v6287
    %v6600 = vadd.f32 %v6592, %v6292
    %v6601 = vadd.f32 %v6593, %v6292
    %v6602 = vmax.f32 %v6594, 0.0
    %v6603 = vmax.f32 %v6595, 0.0
    %v6604 = vmax.f32 %v6596, 0.0
    %v6605 = vmax.f32 %v6597, 0.0
    %v6606 = vmax.f32 %v6598, 0.0
    %v6607 = vmax.f32 %v6599, 0.0
    %v6608 = vmax.f32 %v6600, 0.0
    %v6609 = vmax.f32 %v6601, 0.0
    %v6610 = vpack.c.bf16 %v6604, %v6602
    %v6611 = vpack.c.bf16 %v6605, %v6603
    %v6612 = vpack.c.bf16 %v6608, %v6606
    %v6613 = vpack.c.bf16 %v6609, %v6607
    %v6618 = vunpack.c.l.b16 %v6610
    %v6619 = vunpack.c.l.b16 %v6611
    %v6620 = vunpack.c.h.b16 %v6610
    %v6621 = vunpack.c.h.b16 %v6611
    %v6622 = vunpack.c.l.b16 %v6612
    %v6623 = vunpack.c.l.b16 %v6613
    %v6624 = vunpack.c.h.b16 %v6612
    %v6625 = vunpack.c.h.b16 %v6613
    %v6626 = vpack.c.b16 %v6619, %v6618
    %v6627 = vpack.c.b16 %v6621, %v6620
    %v6628 = vpack.c.b16 %v6623, %v6622
    %v6629 = vpack.c.b16 %v6625, %v6624
    %6634 = vst [vmem:[#allocation3 + $0x2c] sm:$0xff] %v6626
    %6635 = vst [vmem:[#allocation3 + $0x6c] sm:$0xff] %v6627
    %6636 = vst [vmem:[#allocation3 + $0xac] sm:$0xff] %v6628
    %6637 = vst [vmem:[#allocation3 + $0xec] sm:$0xff] %v6629
    %v6638 = vld [vmem:[#allocation2 + $0x60] sm:$0xff]
    %v6639 = vld [vmem:[#allocation2 + $0x68] sm:$0xff]
    %v6640 = vld [vmem:[#allocation2 + $0xd0] sm:$0xff]
    %v6641 = vld [vmem:[#allocation2 + $0xd8] sm:$0xff]
    %v6642 = vld [vmem:[#allocation2 + $0x140] sm:$0xff]
    %v6643 = vld [vmem:[#allocation2 + $0x148] sm:$0xff]
    %v6644 = vld [vmem:[#allocation2 + $0x1b0] sm:$0xff]
    %v6645 = vld [vmem:[#allocation2 + $0x1b8] sm:$0xff]
    %v6646 = vmul.f32 %v6638, %v6249
    %v6647 = vmul.f32 %v6639, %v6249
    %v6648 = vmul.f32 %v6640, %v6254
    %v6649 = vmul.f32 %v6641, %v6254
    %v6650 = vmul.f32 %v6642, %v6259
    %v6651 = vmul.f32 %v6643, %v6259
    %v6652 = vmul.f32 %v6644, %v6264
    %v6653 = vmul.f32 %v6645, %v6264
    %v6654 = vadd.f32 %v6646, %v6277
    %v6655 = vadd.f32 %v6647, %v6277
    %v6656 = vadd.f32 %v6648, %v6282
    %v6657 = vadd.f32 %v6649, %v6282
    %v6658 = vadd.f32 %v6650, %v6287
    %v6659 = vadd.f32 %v6651, %v6287
    %v6660 = vadd.f32 %v6652, %v6292
    %v6661 = vadd.f32 %v6653, %v6292
    %v6662 = vmax.f32 %v6654, 0.0
    %v6663 = vmax.f32 %v6655, 0.0
    %v6664 = vmax.f32 %v6656, 0.0
    %v6665 = vmax.f32 %v6657, 0.0
    %v6666 = vmax.f32 %v6658, 0.0
    %v6667 = vmax.f32 %v6659, 0.0
    %v6668 = vmax.f32 %v6660, 0.0
    %v6669 = vmax.f32 %v6661, 0.0
    %v6670 = vpack.c.bf16 %v6664, %v6662
    %v6671 = vpack.c.bf16 %v6665, %v6663
    %v6672 = vpack.c.bf16 %v6668, %v6666
    %v6673 = vpack.c.bf16 %v6669, %v6667
    %v6678 = vunpack.c.l.b16 %v6670
    %v6679 = vunpack.c.l.b16 %v6671
    %v6680 = vunpack.c.h.b16 %v6670
    %v6681 = vunpack.c.h.b16 %v6671
    %v6682 = vunpack.c.l.b16 %v6672
    %v6683 = vunpack.c.l.b16 %v6673
    %v6684 = vunpack.c.h.b16 %v6672
    %v6685 = vunpack.c.h.b16 %v6673
    %v6686 = vpack.c.b16 %v6679, %v6678
    %v6687 = vpack.c.b16 %v6681, %v6680
    %v6688 = vpack.c.b16 %v6683, %v6682
    %v6689 = vpack.c.b16 %v6685, %v6684
    %6694 = vst [vmem:[#allocation3 + $0x34] sm:$0xff] %v6686
    %6695 = vst [vmem:[#allocation3 + $0x74] sm:$0xff] %v6687
    %6696 = vst [vmem:[#allocation3 + $0xb4] sm:$0xff] %v6688
    %6697 = vst [vmem:[#allocation3 + $0xf4] sm:$0xff] %v6689
    %v6698 = vld [vmem:[#allocation3 + $0x4] sm:$0xff]
    %v6699 = vld [vmem:[#allocation3 + $0xc] sm:$0xff]
    %v6700 = vld [vmem:[#allocation3 + $0x14] sm:$0xff]
    %v6701 = vld [vmem:[#allocation3 + $0x1c] sm:$0xf]
    %v6702 = vld [vmem:[#allocation3 + $0x44] sm:$0xff]
    %v6703 = vld [vmem:[#allocation3 + $0x4c] sm:$0xff]
    %v6704 = vld [vmem:[#allocation3 + $0x54] sm:$0xff]
    %v6705 = vld [vmem:[#allocation3 + $0x5c] sm:$0xf]
    %v6706 = vld [vmem:[#allocation3 + $0x84] sm:$0xff]
    %v6707 = vld [vmem:[#allocation3 + $0x8c] sm:$0xff]
    %v6708 = vld [vmem:[#allocation3 + $0x94] sm:$0xff]
    %v6709 = vld [vmem:[#allocation3 + $0x9c] sm:$0xf]
    %v6710 = vld [vmem:[#allocation3 + $0xc4] sm:$0xff]
    %v6711 = vld [vmem:[#allocation3 + $0xcc] sm:$0xff]
    %v6712 = vld [vmem:[#allocation3 + $0xd4] sm:$0xff]
    %v6713 = vld [vmem:[#allocation3 + $0xdc] sm:$0xf]
    %v6714 = vld [vmem:[#allocation4] sm:$0xff]
    %v6715 = vld [vmem:[#allocation4 + $0x8] sm:$0xff]
    %v6716 = vld [vmem:[#allocation4 + $0x10] sm:$0xff]
    %v6717 = vld [vmem:[#allocation4 + $0x18] sm:$0xff]
    %v6718 = vld [vmem:[#allocation4 + $0x20] sm:$0xff]
    %v6719 = vld [vmem:[#allocation4 + $0x28] sm:$0xff]
    %v6720 = vld [vmem:[#allocation4 + $0x30] sm:$0xff]
    %v6721 = vld [vmem:[#allocation4 + $0x38] sm:$0xff]
    %v6722 = vld [vmem:[#allocation4 + $0x40] sm:$0xff]
    %v6723 = vld [vmem:[#allocation4 + $0x48] sm:$0xff]
    %v6724 = vld [vmem:[#allocation4 + $0x50] sm:$0xff]
    %v6725 = vld [vmem:[#allocation4 + $0x58] sm:$0xff]
    %v6726 = vld [vmem:[#allocation4 + $0x60] sm:$0xff]
    %v6727 = vld [vmem:[#allocation4 + $0x68] sm:$0xff]
    %v6728 = vld [vmem:[#allocation4 + $0x70] sm:$0xff]
    %v6729 = vld [vmem:[#allocation4 + $0x78] sm:$0xff]
    %v6730 = vld [vmem:[#allocation4 + $0x80] sm:$0xff]
    %v6731 = vld [vmem:[#allocation4 + $0x88] sm:$0xff]
    %v6732 = vld [vmem:[#allocation4 + $0x90] sm:$0xff]
    %v6733 = vld [vmem:[#allocation4 + $0x98] sm:$0xff]
    %v6734 = vld [vmem:[#allocation4 + $0xa0] sm:$0xff]
    %v6735 = vld [vmem:[#allocation4 + $0xa8] sm:$0xff]
    %v6736 = vld [vmem:[#allocation4 + $0xb0] sm:$0xff]
    %v6737 = vld [vmem:[#allocation4 + $0xb8] sm:$0xff]
    %v6738 = vld [vmem:[#allocation4 + $0xc0] sm:$0xff]
    %v6739 = vld [vmem:[#allocation4 + $0xc8] sm:$0xff]
    %v6740 = vld [vmem:[#allocation4 + $0xd0] sm:$0xff]
    %v6741 = vld [vmem:[#allocation4 + $0xd8] sm:$0xff]
    %v6742 = vld [vmem:[#allocation4 + $0xe0] sm:$0xff]
    %v6743 = vld [vmem:[#allocation4 + $0xe8] sm:$0xff]
    %v6744 = vld [vmem:[#allocation4 + $0xf0] sm:$0xff]
    %v6745 = vld [vmem:[#allocation4 + $0xf8] sm:$0xff]
    %v6746 = vld [vmem:[#allocation4 + $0x100] sm:$0xff]
    %v6747 = vld [vmem:[#allocation4 + $0x108] sm:$0xff]
    %v6748 = vld [vmem:[#allocation4 + $0x110] sm:$0xff]
    %v6749 = vld [vmem:[#allocation4 + $0x118] sm:$0xff]
    %v6750 = vld [vmem:[#allocation4 + $0x120] sm:$0xff]
    %v6751 = vld [vmem:[#allocation4 + $0x128] sm:$0xff]
    %v6752 = vld [vmem:[#allocation4 + $0x130] sm:$0xff]
    %v6753 = vld [vmem:[#allocation4 + $0x138] sm:$0xff]
    %v6754 = vld [vmem:[#allocation4 + $0x140] sm:$0xff]
    %v6755 = vld [vmem:[#allocation4 + $0x148] sm:$0xff]
    %v6756 = vld [vmem:[#allocation4 + $0x150] sm:$0xff]
    %v6757 = vld [vmem:[#allocation4 + $0x158] sm:$0xff]
    %v6758 = vld [vmem:[#allocation4 + $0x160] sm:$0xff]
    %v6759 = vld [vmem:[#allocation4 + $0x168] sm:$0xff]
    %v6760 = vld [vmem:[#allocation4 + $0x170] sm:$0xff]
    %v6761 = vld [vmem:[#allocation4 + $0x178] sm:$0xff]
    %v6762 = vld [vmem:[#allocation4 + $0x180] sm:$0xff]
    %v6763 = vld [vmem:[#allocation4 + $0x188] sm:$0xff]
    %v6764 = vld [vmem:[#allocation4 + $0x190] sm:$0xff]
    %v6765 = vld [vmem:[#allocation4 + $0x198] sm:$0xff]
    %v6766 = vld [vmem:[#allocation4 + $0x1a0] sm:$0xff]
    %v6767 = vld [vmem:[#allocation4 + $0x1a8] sm:$0xff]
    %v6768 = vld [vmem:[#allocation4 + $0x1b0] sm:$0xff]
    %v6769 = vld [vmem:[#allocation4 + $0x1b8] sm:$0xff]
    %v6770 = vld [vmem:[#allocation4 + $0x1c0] sm:$0xff]
    %v6771 = vld [vmem:[#allocation4 + $0x1c8] sm:$0xff]
    %v6772 = vld [vmem:[#allocation4 + $0x1d0] sm:$0xff]
    %v6773 = vld [vmem:[#allocation4 + $0x1d8] sm:$0xff]
    %v6774 = vld [vmem:[#allocation4 + $0x1e0] sm:$0xff]
    %v6775 = vld [vmem:[#allocation4 + $0x1e8] sm:$0xff]
    %v6776 = vld [vmem:[#allocation4 + $0x1f0] sm:$0xff]
    %v6777 = vld [vmem:[#allocation4 + $0x1f8] sm:$0xff]
    %v6778 = vld [vmem:[#allocation4 + $0x200] sm:$0xff]
    %v6779 = vld [vmem:[#allocation4 + $0x208] sm:$0xff]
    %v6780 = vld [vmem:[#allocation4 + $0x210] sm:$0xff]
    %v6781 = vld [vmem:[#allocation4 + $0x218] sm:$0xff]
    %v6782 = vld [vmem:[#allocation4 + $0x220] sm:$0xff]
    %v6783 = vld [vmem:[#allocation4 + $0x228] sm:$0xff]
    %v6784 = vld [vmem:[#allocation4 + $0x230] sm:$0xff]
    %v6785 = vld [vmem:[#allocation4 + $0x238] sm:$0xff]
    %v6786 = vld [vmem:[#allocation4 + $0x240] sm:$0xff]
    %v6787 = vld [vmem:[#allocation4 + $0x248] sm:$0xff]
    %v6788 = vld [vmem:[#allocation4 + $0x250] sm:$0xff]
    %v6789 = vld [vmem:[#allocation4 + $0x258] sm:$0xff]
    %v6790 = vld [vmem:[#allocation4 + $0x260] sm:$0xff]
    %v6791 = vld [vmem:[#allocation4 + $0x268] sm:$0xff]
    %v6792 = vld [vmem:[#allocation4 + $0x270] sm:$0xff]
    %v6793 = vld [vmem:[#allocation4 + $0x278] sm:$0xff]
    %v6794 = vld [vmem:[#allocation4 + $0x280] sm:$0xff]
    %v6795 = vld [vmem:[#allocation4 + $0x288] sm:$0xff]
    %v6796 = vld [vmem:[#allocation4 + $0x290] sm:$0xff]
    %v6797 = vld [vmem:[#allocation4 + $0x298] sm:$0xff]
    %v6798 = vld [vmem:[#allocation4 + $0x2a0] sm:$0xff]
    %v6799 = vld [vmem:[#allocation4 + $0x2a8] sm:$0xff]
    %v6800 = vld [vmem:[#allocation4 + $0x2b0] sm:$0xff]
    %v6801 = vld [vmem:[#allocation4 + $0x2b8] sm:$0xff]
    %v6802 = vld [vmem:[#allocation4 + $0x2c0] sm:$0xff]
    %v6803 = vld [vmem:[#allocation4 + $0x2c8] sm:$0xff]
    %v6804 = vld [vmem:[#allocation4 + $0x2d0] sm:$0xff]
    %v6805 = vld [vmem:[#allocation4 + $0x2d8] sm:$0xff]
    %v6806 = vld [vmem:[#allocation4 + $0x2e0] sm:$0xff]
    %v6807 = vld [vmem:[#allocation4 + $0x2e8] sm:$0xff]
    %v6808 = vld [vmem:[#allocation4 + $0x2f0] sm:$0xff]
    %v6809 = vld [vmem:[#allocation4 + $0x2f8] sm:$0xff]
    %v6810 = vld [vmem:[#allocation4 + $0x300] sm:$0xff]
    %v6811 = vld [vmem:[#allocation4 + $0x308] sm:$0xff]
    %v6812 = vld [vmem:[#allocation4 + $0x310] sm:$0xff]
    %v6813 = vld [vmem:[#allocation4 + $0x318] sm:$0xff]
    %v6814 = vld [vmem:[#allocation4 + $0x320] sm:$0xff]
    %v6815 = vld [vmem:[#allocation4 + $0x328] sm:$0xff]
    %v6816 = vld [vmem:[#allocation4 + $0x330] sm:$0xff]
    %v6817 = vld [vmem:[#allocation4 + $0x338] sm:$0xff]
    %v6818 = vld [vmem:[#allocation4 + $0x340] sm:$0xff]
    %v6819 = vld [vmem:[#allocation4 + $0x348] sm:$0xff]
    %v6820 = vld [vmem:[#allocation4 + $0x350] sm:$0xff]
    %v6821 = vld [vmem:[#allocation4 + $0x358] sm:$0xff]
    %v6822 = vld [vmem:[#allocation4 + $0x360] sm:$0xff]
    %v6823 = vld [vmem:[#allocation4 + $0x368] sm:$0xff]
    %v6824 = vld [vmem:[#allocation4 + $0x370] sm:$0xff]
    %v6825 = vld [vmem:[#allocation4 + $0x378] sm:$0xff]
    %v6842 = vunpack.c.l.b16 %v6698
    %v6843 = vunpack.c.h.b16 %v6698
    %v6844 = vunpack.c.l.b16 %v6699
    %v6845 = vunpack.c.h.b16 %v6699
    %v6846 = vunpack.c.l.b16 %v6700
    %v6847 = vunpack.c.h.b16 %v6700
    %v6848 = vunpack.c.l.b16 %v6701
    %v6849 = vunpack.c.l.b16 %v6702
    %v6850 = vunpack.c.h.b16 %v6702
    %v6851 = vunpack.c.l.b16 %v6703
    %v6852 = vunpack.c.h.b16 %v6703
    %v6853 = vunpack.c.l.b16 %v6704
    %v6854 = vunpack.c.h.b16 %v6704
    %v6855 = vunpack.c.l.b16 %v6705
    %v6856 = vunpack.c.l.b16 %v6706
    %v6857 = vunpack.c.h.b16 %v6706
    %v6858 = vunpack.c.l.b16 %v6707
    %v6859 = vunpack.c.h.b16 %v6707
    %v6860 = vunpack.c.l.b16 %v6708
    %v6861 = vunpack.c.h.b16 %v6708
    %v6862 = vunpack.c.l.b16 %v6709
    %v6863 = vunpack.c.l.b16 %v6710
    %v6864 = vunpack.c.h.b16 %v6710
    %v6865 = vunpack.c.l.b16 %v6711
    %v6866 = vunpack.c.h.b16 %v6711
    %v6867 = vunpack.c.l.b16 %v6712
    %v6868 = vunpack.c.h.b16 %v6712
    %v6869 = vunpack.c.l.b16 %v6713
    %v6870 = vpack.c.b16 %v6849, %v6842
    %v6871 = vpack.c.b16 %v6850, %v6843
    %v6872 = vpack.c.b16 %v6851, %v6844
    %v6873 = vpack.c.b16 %v6852, %v6845
    %v6874 = vpack.c.b16 %v6853, %v6846
    %v6875 = vpack.c.b16 %v6854, %v6847
    %v6876 = vpack.c.b16 %v6855, %v6848
    %v6877 = vpack.c.b16 %v6863, %v6856
    %v6878 = vpack.c.b16 %v6864, %v6857
    %v6879 = vpack.c.b16 %v6865, %v6858
    %v6880 = vpack.c.b16 %v6866, %v6859
    %v6881 = vpack.c.b16 %v6867, %v6860
    %v6882 = vpack.c.b16 %v6868, %v6861
    %v6883 = vpack.c.b16 %v6869, %v6862
    %v7010 = vunpack.c.l.b16 %v6714
    %v7011 = vunpack.c.h.b16 %v6714
    %v7012 = vunpack.c.l.b16 %v6715
    %v7013 = vunpack.c.h.b16 %v6715
    %v7014 = vunpack.c.l.b16 %v6716
    %v7015 = vunpack.c.h.b16 %v6716
    %v7016 = vunpack.c.l.b16 %v6717
    %v7017 = vunpack.c.h.b16 %v6717
    %v7018 = vunpack.c.l.b16 %v6718
    %v7019 = vunpack.c.h.b16 %v6718
    %v7020 = vunpack.c.l.b16 %v6719
    %v7021 = vunpack.c.h.b16 %v6719
    %v7022 = vunpack.c.l.b16 %v6720
    %v7023 = vunpack.c.h.b16 %v6720
    %v7024 = vunpack.c.l.b16 %v6721
    %v7025 = vunpack.c.h.b16 %v6721
    %v7026 = vunpack.c.l.b16 %v6722
    %v7027 = vunpack.c.h.b16 %v6722
    %v7028 = vunpack.c.l.b16 %v6723
    %v7029 = vunpack.c.h.b16 %v6723
    %v7030 = vunpack.c.l.b16 %v6724
    %v7031 = vunpack.c.h.b16 %v6724
    %v7032 = vunpack.c.l.b16 %v6725
    %v7033 = vunpack.c.h.b16 %v6725
    %v7034 = vunpack.c.l.b16 %v6726
    %v7035 = vunpack.c.h.b16 %v6726
    %v7036 = vunpack.c.l.b16 %v6727
    %v7037 = vunpack.c.h.b16 %v6727
    %v7038 = vunpack.c.l.b16 %v6728
    %v7039 = vunpack.c.h.b16 %v6728
    %v7040 = vunpack.c.l.b16 %v6729
    %v7041 = vunpack.c.h.b16 %v6729
    %v7042 = vunpack.c.l.b16 %v6730
    %v7043 = vunpack.c.h.b16 %v6730
    %v7044 = vunpack.c.l.b16 %v6731
    %v7045 = vunpack.c.h.b16 %v6731
    %v7046 = vunpack.c.l.b16 %v6732
    %v7047 = vunpack.c.h.b16 %v6732
    %v7048 = vunpack.c.l.b16 %v6733
    %v7049 = vunpack.c.h.b16 %v6733
    %v7050 = vunpack.c.l.b16 %v6734
    %v7051 = vunpack.c.h.b16 %v6734
    %v7052 = vunpack.c.l.b16 %v6735
    %v7053 = vunpack.c.h.b16 %v6735
    %v7054 = vunpack.c.l.b16 %v6736
    %v7055 = vunpack.c.h.b16 %v6736
    %v7056 = vunpack.c.l.b16 %v6737
    %v7057 = vunpack.c.h.b16 %v6737
    %v7058 = vunpack.c.l.b16 %v6738
    %v7059 = vunpack.c.h.b16 %v6738
    %v7060 = vunpack.c.l.b16 %v6739
    %v7061 = vunpack.c.h.b16 %v6739
    %v7062 = vunpack.c.l.b16 %v6740
    %v7063 = vunpack.c.h.b16 %v6740
    %v7064 = vunpack.c.l.b16 %v6741
    %v7065 = vunpack.c.h.b16 %v6741
    %v7066 = vunpack.c.l.b16 %v6742
    %v7067 = vunpack.c.h.b16 %v6742
    %v7068 = vunpack.c.l.b16 %v6743
    %v7069 = vunpack.c.h.b16 %v6743
    %v7070 = vunpack.c.l.b16 %v6744
    %v7071 = vunpack.c.h.b16 %v6744
    %v7072 = vunpack.c.l.b16 %v6745
    %v7073 = vunpack.c.h.b16 %v6745
    %v7074 = vunpack.c.l.b16 %v6746
    %v7075 = vunpack.c.h.b16 %v6746
    %v7076 = vunpack.c.l.b16 %v6747
    %v7077 = vunpack.c.h.b16 %v6747
    %v7078 = vunpack.c.l.b16 %v6748
    %v7079 = vunpack.c.h.b16 %v6748
    %v7080 = vunpack.c.l.b16 %v6749
    %v7081 = vunpack.c.h.b16 %v6749
    %v7082 = vunpack.c.l.b16 %v6750
    %v7083 = vunpack.c.h.b16 %v6750
    %v7084 = vunpack.c.l.b16 %v6751
    %v7085 = vunpack.c.h.b16 %v6751
    %v7086 = vunpack.c.l.b16 %v6752
    %v7087 = vunpack.c.h.b16 %v6752
    %v7088 = vunpack.c.l.b16 %v6753
    %v7089 = vunpack.c.h.b16 %v6753
    %v7090 = vunpack.c.l.b16 %v6754
    %v7091 = vunpack.c.h.b16 %v6754
    %v7092 = vunpack.c.l.b16 %v6755
    %v7093 = vunpack.c.h.b16 %v6755
    %v7094 = vunpack.c.l.b16 %v6756
    %v7095 = vunpack.c.h.b16 %v6756
    %v7096 = vunpack.c.l.b16 %v6757
    %v7097 = vunpack.c.h.b16 %v6757
    %v7098 = vunpack.c.l.b16 %v6758
    %v7099 = vunpack.c.h.b16 %v6758
    %v7100 = vunpack.c.l.b16 %v6759
    %v7101 = vunpack.c.h.b16 %v6759
    %v7102 = vunpack.c.l.b16 %v6760
    %v7103 = vunpack.c.h.b16 %v6760
    %v7104 = vunpack.c.l.b16 %v6761
    %v7105 = vunpack.c.h.b16 %v6761
    %v7106 = vunpack.c.l.b16 %v6762
    %v7107 = vunpack.c.h.b16 %v6762
    %v7108 = vunpack.c.l.b16 %v6763
    %v7109 = vunpack.c.h.b16 %v6763
    %v7110 = vunpack.c.l.b16 %v6764
    %v7111 = vunpack.c.h.b16 %v6764
    %v7112 = vunpack.c.l.b16 %v6765
    %v7113 = vunpack.c.h.b16 %v6765
    %v7114 = vunpack.c.l.b16 %v6766
    %v7115 = vunpack.c.h.b16 %v6766
    %v7116 = vunpack.c.l.b16 %v6767
    %v7117 = vunpack.c.h.b16 %v6767
    %v7118 = vunpack.c.l.b16 %v6768
    %v7119 = vunpack.c.h.b16 %v6768
    %v7120 = vunpack.c.l.b16 %v6769
    %v7121 = vunpack.c.h.b16 %v6769
    %v7122 = vunpack.c.l.b16 %v6770
    %v7123 = vunpack.c.h.b16 %v6770
    %v7124 = vunpack.c.l.b16 %v6771
    %v7125 = vunpack.c.h.b16 %v6771
    %v7126 = vunpack.c.l.b16 %v6772
    %v7127 = vunpack.c.h.b16 %v6772
    %v7128 = vunpack.c.l.b16 %v6773
    %v7129 = vunpack.c.h.b16 %v6773
    %v7130 = vunpack.c.l.b16 %v6774
    %v7131 = vunpack.c.h.b16 %v6774
    %v7132 = vunpack.c.l.b16 %v6775
    %v7133 = vunpack.c.h.b16 %v6775
    %v7134 = vunpack.c.l.b16 %v6776
    %v7135 = vunpack.c.h.b16 %v6776
    %v7136 = vunpack.c.l.b16 %v6777
    %v7137 = vunpack.c.h.b16 %v6777
    %v7138 = vunpack.c.l.b16 %v6778
    %v7139 = vunpack.c.h.b16 %v6778
    %v7140 = vunpack.c.l.b16 %v6779
    %v7141 = vunpack.c.h.b16 %v6779
    %v7142 = vunpack.c.l.b16 %v6780
    %v7143 = vunpack.c.h.b16 %v6780
    %v7144 = vunpack.c.l.b16 %v6781
    %v7145 = vunpack.c.h.b16 %v6781
    %v7146 = vunpack.c.l.b16 %v6782
    %v7147 = vunpack.c.h.b16 %v6782
    %v7148 = vunpack.c.l.b16 %v6783
    %v7149 = vunpack.c.h.b16 %v6783
    %v7150 = vunpack.c.l.b16 %v6784
    %v7151 = vunpack.c.h.b16 %v6784
    %v7152 = vunpack.c.l.b16 %v6785
    %v7153 = vunpack.c.h.b16 %v6785
    %v7154 = vunpack.c.l.b16 %v6786
    %v7155 = vunpack.c.h.b16 %v6786
    %v7156 = vunpack.c.l.b16 %v6787
    %v7157 = vunpack.c.h.b16 %v6787
    %v7158 = vunpack.c.l.b16 %v6788
    %v7159 = vunpack.c.h.b16 %v6788
    %v7160 = vunpack.c.l.b16 %v6789
    %v7161 = vunpack.c.h.b16 %v6789
    %v7162 = vunpack.c.l.b16 %v6790
    %v7163 = vunpack.c.h.b16 %v6790
    %v7164 = vunpack.c.l.b16 %v6791
    %v7165 = vunpack.c.h.b16 %v6791
    %v7166 = vunpack.c.l.b16 %v6792
    %v7167 = vunpack.c.h.b16 %v6792
    %v7168 = vunpack.c.l.b16 %v6793
    %v7169 = vunpack.c.h.b16 %v6793
    %v7170 = vunpack.c.l.b16 %v6794
    %v7171 = vunpack.c.h.b16 %v6794
    %v7172 = vunpack.c.l.b16 %v6795
    %v7173 = vunpack.c.h.b16 %v6795
    %v7174 = vunpack.c.l.b16 %v6796
    %v7175 = vunpack.c.h.b16 %v6796
    %v7176 = vunpack.c.l.b16 %v6797
    %v7177 = vunpack.c.h.b16 %v6797
    %v7178 = vunpack.c.l.b16 %v6798
    %v7179 = vunpack.c.h.b16 %v6798
    %v7180 = vunpack.c.l.b16 %v6799
    %v7181 = vunpack.c.h.b16 %v6799
    %v7182 = vunpack.c.l.b16 %v6800
    %v7183 = vunpack.c.h.b16 %v6800
    %v7184 = vunpack.c.l.b16 %v6801
    %v7185 = vunpack.c.h.b16 %v6801
    %v7186 = vunpack.c.l.b16 %v6802
    %v7187 = vunpack.c.h.b16 %v6802
    %v7188 = vunpack.c.l.b16 %v6803
    %v7189 = vunpack.c.h.b16 %v6803
    %v7190 = vunpack.c.l.b16 %v6804
    %v7191 = vunpack.c.h.b16 %v6804
    %v7192 = vunpack.c.l.b16 %v6805
    %v7193 = vunpack.c.h.b16 %v6805
    %v7194 = vunpack.c.l.b16 %v6806
    %v7195 = vunpack.c.h.b16 %v6806
    %v7196 = vunpack.c.l.b16 %v6807
    %v7197 = vunpack.c.h.b16 %v6807
    %v7198 = vunpack.c.l.b16 %v6808
    %v7199 = vunpack.c.h.b16 %v6808
    %v7200 = vunpack.c.l.b16 %v6809
    %v7201 = vunpack.c.h.b16 %v6809
    %v7202 = vunpack.c.l.b16 %v6810
    %v7203 = vunpack.c.h.b16 %v6810
    %v7204 = vunpack.c.l.b16 %v6811
    %v7205 = vunpack.c.h.b16 %v6811
    %v7206 = vunpack.c.l.b16 %v6812
    %v7207 = vunpack.c.h.b16 %v6812
    %v7208 = vunpack.c.l.b16 %v6813
    %v7209 = vunpack.c.h.b16 %v6813
    %v7210 = vunpack.c.l.b16 %v6814
    %v7211 = vunpack.c.h.b16 %v6814
    %v7212 = vunpack.c.l.b16 %v6815
    %v7213 = vunpack.c.h.b16 %v6815
    %v7214 = vunpack.c.l.b16 %v6816
    %v7215 = vunpack.c.h.b16 %v6816
    %v7216 = vunpack.c.l.b16 %v6817
    %v7217 = vunpack.c.h.b16 %v6817
    %v7218 = vunpack.c.l.b16 %v6818
    %v7219 = vunpack.c.h.b16 %v6818
    %v7220 = vunpack.c.l.b16 %v6819
    %v7221 = vunpack.c.h.b16 %v6819
    %v7222 = vunpack.c.l.b16 %v6820
    %v7223 = vunpack.c.h.b16 %v6820
    %v7224 = vunpack.c.l.b16 %v6821
    %v7225 = vunpack.c.h.b16 %v6821
    %v7226 = vunpack.c.l.b16 %v6822
    %v7227 = vunpack.c.h.b16 %v6822
    %v7228 = vunpack.c.l.b16 %v6823
    %v7229 = vunpack.c.h.b16 %v6823
    %v7230 = vunpack.c.l.b16 %v6824
    %v7231 = vunpack.c.h.b16 %v6824
    %v7232 = vunpack.c.l.b16 %v6825
    %v7233 = vunpack.c.h.b16 %v6825
    %v7234 = vpack.c.b16 %v7012, %v7010
    %v7235 = vpack.c.b16 %v7013, %v7011
    %v7236 = vpack.c.b16 %v7016, %v7014
    %v7237 = vpack.c.b16 %v7017, %v7015
    %v7238 = vpack.c.b16 %v7020, %v7018
    %v7239 = vpack.c.b16 %v7021, %v7019
    %v7240 = vpack.c.b16 %v7024, %v7022
    %v7241 = vpack.c.b16 %v7025, %v7023
    %v7242 = vpack.c.b16 %v7028, %v7026
    %v7243 = vpack.c.b16 %v7029, %v7027
    %v7244 = vpack.c.b16 %v7032, %v7030
    %v7245 = vpack.c.b16 %v7033, %v7031
    %v7246 = vpack.c.b16 %v7036, %v7034
    %v7247 = vpack.c.b16 %v7037, %v7035
    %v7248 = vpack.c.b16 %v7040, %v7038
    %v7249 = vpack.c.b16 %v7041, %v7039
    %v7250 = vpack.c.b16 %v7044, %v7042
    %v7251 = vpack.c.b16 %v7045, %v7043
    %v7252 = vpack.c.b16 %v7048, %v7046
    %v7253 = vpack.c.b16 %v7049, %v7047
    %v7254 = vpack.c.b16 %v7052, %v7050
    %v7255 = vpack.c.b16 %v7053, %v7051
    %v7256 = vpack.c.b16 %v7056, %v7054
    %v7257 = vpack.c.b16 %v7057, %v7055
    %v7258 = vpack.c.b16 %v7060, %v7058
    %v7259 = vpack.c.b16 %v7061, %v7059
    %v7260 = vpack.c.b16 %v7064, %v7062
    %v7261 = vpack.c.b16 %v7065, %v7063
    %v7262 = vpack.c.b16 %v7068, %v7066
    %v7263 = vpack.c.b16 %v7069, %v7067
    %v7264 = vpack.c.b16 %v7072, %v7070
    %v7265 = vpack.c.b16 %v7073, %v7071
    %v7266 = vpack.c.b16 %v7076, %v7074
    %v7267 = vpack.c.b16 %v7077, %v7075
    %v7268 = vpack.c.b16 %v7080, %v7078
    %v7269 = vpack.c.b16 %v7081, %v7079
    %v7270 = vpack.c.b16 %v7084, %v7082
    %v7271 = vpack.c.b16 %v7085, %v7083
    %v7272 = vpack.c.b16 %v7088, %v7086
    %v7273 = vpack.c.b16 %v7089, %v7087
    %v7274 = vpack.c.b16 %v7092, %v7090
    %v7275 = vpack.c.b16 %v7093, %v7091
    %v7276 = vpack.c.b16 %v7096, %v7094
    %v7277 = vpack.c.b16 %v7097, %v7095
    %v7278 = vpack.c.b16 %v7100, %v7098
    %v7279 = vpack.c.b16 %v7101, %v7099
    %v7280 = vpack.c.b16 %v7104, %v7102
    %v7281 = vpack.c.b16 %v7105, %v7103
    %v7282 = vpack.c.b16 %v7108, %v7106
    %v7283 = vpack.c.b16 %v7109, %v7107
    %v7284 = vpack.c.b16 %v7112, %v7110
    %v7285 = vpack.c.b16 %v7113, %v7111
    %v7286 = vpack.c.b16 %v7116, %v7114
    %v7287 = vpack.c.b16 %v7117, %v7115
    %v7288 = vpack.c.b16 %v7120, %v7118
    %v7289 = vpack.c.b16 %v7121, %v7119
    %v7290 = vpack.c.b16 %v7124, %v7122
    %v7291 = vpack.c.b16 %v7125, %v7123
    %v7292 = vpack.c.b16 %v7128, %v7126
    %v7293 = vpack.c.b16 %v7129, %v7127
    %v7294 = vpack.c.b16 %v7132, %v7130
    %v7295 = vpack.c.b16 %v7133, %v7131
    %v7296 = vpack.c.b16 %v7136, %v7134
    %v7297 = vpack.c.b16 %v7137, %v7135
    %v7298 = vpack.c.b16 %v7140, %v7138
    %v7299 = vpack.c.b16 %v7141, %v7139
    %v7300 = vpack.c.b16 %v7144, %v7142
    %v7301 = vpack.c.b16 %v7145, %v7143
    %v7302 = vpack.c.b16 %v7148, %v7146
    %v7303 = vpack.c.b16 %v7149, %v7147
    %v7304 = vpack.c.b16 %v7152, %v7150
    %v7305 = vpack.c.b16 %v7153, %v7151
    %v7306 = vpack.c.b16 %v7156, %v7154
    %v7307 = vpack.c.b16 %v7157, %v7155
    %v7308 = vpack.c.b16 %v7160, %v7158
    %v7309 = vpack.c.b16 %v7161, %v7159
    %v7310 = vpack.c.b16 %v7164, %v7162
    %v7311 = vpack.c.b16 %v7165, %v7163
    %v7312 = vpack.c.b16 %v7168, %v7166
    %v7313 = vpack.c.b16 %v7169, %v7167
    %v7314 = vpack.c.b16 %v7172, %v7170
    %v7315 = vpack.c.b16 %v7173, %v7171
    %v7316 = vpack.c.b16 %v7176, %v7174
    %v7317 = vpack.c.b16 %v7177, %v7175
    %v7318 = vpack.c.b16 %v7180, %v7178
    %v7319 = vpack.c.b16 %v7181, %v7179
    %v7320 = vpack.c.b16 %v7184, %v7182
    %v7321 = vpack.c.b16 %v7185, %v7183
    %v7322 = vpack.c.b16 %v7188, %v7186
    %v7323 = vpack.c.b16 %v7189, %v7187
    %v7324 = vpack.c.b16 %v7192, %v7190
    %v7325 = vpack.c.b16 %v7193, %v7191
    %v7326 = vpack.c.b16 %v7196, %v7194
    %v7327 = vpack.c.b16 %v7197, %v7195
    %v7328 = vpack.c.b16 %v7200, %v7198
    %v7329 = vpack.c.b16 %v7201, %v7199
    %v7330 = vpack.c.b16 %v7204, %v7202
    %v7331 = vpack.c.b16 %v7205, %v7203
    %v7332 = vpack.c.b16 %v7208, %v7206
    %v7333 = vpack.c.b16 %v7209, %v7207
    %v7334 = vpack.c.b16 %v7212, %v7210
    %v7335 = vpack.c.b16 %v7213, %v7211
    %v7336 = vpack.c.b16 %v7216, %v7214
    %v7337 = vpack.c.b16 %v7217, %v7215
    %v7338 = vpack.c.b16 %v7220, %v7218
    %v7339 = vpack.c.b16 %v7221, %v7219
    %v7340 = vpack.c.b16 %v7224, %v7222
    %v7341 = vpack.c.b16 %v7225, %v7223
    %v7342 = vpack.c.b16 %v7228, %v7226
    %v7343 = vpack.c.b16 %v7229, %v7227
    %v7344 = vpack.c.b16 %v7232, %v7230
    %v7345 = vpack.c.b16 %v7233, %v7231
    %7458 = vmatprep.subr.bf16.mxu0 %v7249
    %7459 = vmatpush1.bf16.msra.mxu0 %v7248
    %7460 = vmatprep.subr.bf16.mxu0 %v7247
    %7461 = vmatpush1.bf16.msra.mxu0 %v7246
    %7462 = vmatprep.subr.bf16.mxu0 %v7245
    %7463 = vmatpush1.bf16.msra.mxu0 %v7244
    %7464 = vmatprep.subr.bf16.mxu0 %v7243
    %7465 = vmatpush1.bf16.msra.mxu0 %v7242
    %7466 = vmatprep.subr.bf16.mxu0 %v7241
    %7467 = vmatpush1.bf16.msra.mxu0 %v7240
    %7468 = vmatprep.subr.bf16.mxu0 %v7239
    %7469 = vmatpush1.bf16.msra.mxu0 %v7238
    %7470 = vmatprep.subr.bf16.mxu0 %v7237
    %7471 = vmatpush1.bf16.msra.mxu0 %v7236
    %7472 = vmatprep.subr.bf16.mxu0 %v7235
    %7473 = vmatpush1.bf16.msra.mxu0 %v7234
    %7474 = vmatprep.subr.bf16.mxu0 %v7265
    %7475 = vmatpush2.bf16.msra.mxu0 %v7264
    %7476 = vmatprep.subr.bf16.mxu0 %v7263
    %7477 = vmatpush2.bf16.msra.mxu0 %v7262
    %7478 = vmatprep.subr.bf16.mxu0 %v7261
    %7479 = vmatpush2.bf16.msra.mxu0 %v7260
    %7480 = vmatprep.subr.bf16.mxu0 %v7259
    %7481 = vmatpush2.bf16.msra.mxu0 %v7258
    %7482 = vmatprep.subr.bf16.mxu0 %v7257
    %7483 = vmatpush2.bf16.msra.mxu0 %v7256
    %7484 = vmatprep.subr.bf16.mxu0 %v7255
    %7485 = vmatpush2.bf16.msra.mxu0 %v7254
    %7486 = vmatprep.subr.bf16.mxu0 %v7253
    %7487 = vmatpush2.bf16.msra.mxu0 %v7252
    %7488 = vmatprep.subr.bf16.mxu0 %v7251
    %7489 = vmatpush2.bf16.msra.mxu0 %v7250
    %7490 = vmatprep.mubr.bf16.mxu0 %v6871
    %7491 = vmatmul.mubr.bf16.gmra.mxu0 %v6870
    %v7492 = vpop.f32.mrf.mxu0
    %v7493 = vadd.f32 0.0, %v7492
    %v7494 = vpop.f32.mrf.mxu0
    %v7495 = vadd.f32 0.0, %v7494
    %v7496 = vpop.f32.mrf.mxu0
    %v7497 = vadd.f32 0.0, %v7496
    %v7498 = vpop.f32.mrf.mxu0
    %v7499 = vadd.f32 0.0, %v7498
    %7500 = vmatprep.mubr.bf16.mxu0 %v6878
    %7501 = vmatmul.mubr.bf16.gmra.mxu0 %v6877
    %v7502 = vpop.f32.mrf.mxu0
    %v7503 = vadd.f32 0.0, %v7502
    %v7504 = vpop.f32.mrf.mxu0
    %v7505 = vadd.f32 0.0, %v7504
    %v7506 = vpop.f32.mrf.mxu0
    %v7507 = vadd.f32 0.0, %v7506
    %v7508 = vpop.f32.mrf.mxu0
    %v7509 = vadd.f32 0.0, %v7508
    %7510 = vdwg.mxu0
    %7511 = vmatprep.subr.bf16.mxu0 %v7281
    %7512 = vmatpush1.bf16.msra.mxu0 %v7280
    %7513 = vmatprep.subr.bf16.mxu0 %v7279
    %7514 = vmatpush1.bf16.msra.mxu0 %v7278
    %7515 = vmatprep.subr.bf16.mxu0 %v7277
    %7516 = vmatpush1.bf16.msra.mxu0 %v7276
    %7517 = vmatprep.subr.bf16.mxu0 %v7275
    %7518 = vmatpush1.bf16.msra.mxu0 %v7274
    %7519 = vmatprep.subr.bf16.mxu0 %v7273
    %7520 = vmatpush1.bf16.msra.mxu0 %v7272
    %7521 = vmatprep.subr.bf16.mxu0 %v7271
    %7522 = vmatpush1.bf16.msra.mxu0 %v7270
    %7523 = vmatprep.subr.bf16.mxu0 %v7269
    %7524 = vmatpush1.bf16.msra.mxu0 %v7268
    %7525 = vmatprep.subr.bf16.mxu0 %v7267
    %7526 = vmatpush1.bf16.msra.mxu0 %v7266
    %7527 = vmatprep.subr.bf16.mxu0 %v7297
    %7528 = vmatpush2.bf16.msra.mxu0 %v7296
    %7529 = vmatprep.subr.bf16.mxu0 %v7295
    %7530 = vmatpush2.bf16.msra.mxu0 %v7294
    %7531 = vmatprep.subr.bf16.mxu0 %v7293
    %7532 = vmatpush2.bf16.msra.mxu0 %v7292
    %7533 = vmatprep.subr.bf16.mxu0 %v7291
    %7534 = vmatpush2.bf16.msra.mxu0 %v7290
    %7535 = vmatprep.subr.bf16.mxu0 %v7289
    %7536 = vmatpush2.bf16.msra.mxu0 %v7288
    %7537 = vmatprep.subr.bf16.mxu0 %v7287
    %7538 = vmatpush2.bf16.msra.mxu0 %v7286
    %7539 = vmatprep.subr.bf16.mxu0 %v7285
    %7540 = vmatpush2.bf16.msra.mxu0 %v7284
    %7541 = vmatprep.subr.bf16.mxu0 %v7283
    %7542 = vmatpush2.bf16.msra.mxu0 %v7282
    %7543 = vmatprep.mubr.bf16.mxu0 %v6873
    %7544 = vmatmul.mubr.bf16.gmra.mxu0 %v6872
    %v7545 = vpop.f32.mrf.mxu0
    %v7546 = vadd.f32 %v7493, %v7545
    %v7547 = vpop.f32.mrf.mxu0
    %v7548 = vadd.f32 %v7495, %v7547
    %v7549 = vpop.f32.mrf.mxu0
    %v7550 = vadd.f32 %v7497, %v7549
    %v7551 = vpop.f32.mrf.mxu0
    %v7552 = vadd.f32 %v7499, %v7551
    %7553 = vmatprep.mubr.bf16.mxu0 %v6880
    %7554 = vmatmul.mubr.bf16.gmra.mxu0 %v6879
    %v7555 = vpop.f32.mrf.mxu0
    %v7556 = vadd.f32 %v7503, %v7555
    %v7557 = vpop.f32.mrf.mxu0
    %v7558 = vadd.f32 %v7505, %v7557
    %v7559 = vpop.f32.mrf.mxu0
    %v7560 = vadd.f32 %v7507, %v7559
    %v7561 = vpop.f32.mrf.mxu0
    %v7562 = vadd.f32 %v7509, %v7561
    %7563 = vdwg.mxu0
    %7564 = vmatprep.subr.bf16.mxu0 %v7313
    %7565 = vmatpush1.bf16.msra.mxu0 %v7312
    %7566 = vmatprep.subr.bf16.mxu0 %v7311
    %7567 = vmatpush1.bf16.msra.mxu0 %v7310
    %7568 = vmatprep.subr.bf16.mxu0 %v7309
    %7569 = vmatpush1.bf16.msra.mxu0 %v7308
    %7570 = vmatprep.subr.bf16.mxu0 %v7307
    %7571 = vmatpush1.bf16.msra.mxu0 %v7306
    %7572 = vmatprep.subr.bf16.mxu0 %v7305
    %7573 = vmatpush1.bf16.msra.mxu0 %v7304
    %7574 = vmatprep.subr.bf16.mxu0 %v7303
    %7575 = vmatpush1.bf16.msra.mxu0 %v7302
    %7576 = vmatprep.subr.bf16.mxu0 %v7301
    %7577 = vmatpush1.bf16.msra.mxu0 %v7300
    %7578 = vmatprep.subr.bf16.mxu0 %v7299
    %7579 = vmatpush1.bf16.msra.mxu0 %v7298
    %7580 = vmatprep.subr.bf16.mxu0 %v7329
    %7581 = vmatpush2.bf16.msra.mxu0 %v7328
    %7582 = vmatprep.subr.bf16.mxu0 %v7327
    %7583 = vmatpush2.bf16.msra.mxu0 %v7326
    %7584 = vmatprep.subr.bf16.mxu0 %v7325
    %7585 = vmatpush2.bf16.msra.mxu0 %v7324
    %7586 = vmatprep.subr.bf16.mxu0 %v7323
    %7587 = vmatpush2.bf16.msra.mxu0 %v7322
    %7588 = vmatprep.subr.bf16.mxu0 %v7321
    %7589 = vmatpush2.bf16.msra.mxu0 %v7320
    %7590 = vmatprep.subr.bf16.mxu0 %v7319
    %7591 = vmatpush2.bf16.msra.mxu0 %v7318
    %7592 = vmatprep.subr.bf16.mxu0 %v7317
    %7593 = vmatpush2.bf16.msra.mxu0 %v7316
    %7594 = vmatprep.subr.bf16.mxu0 %v7315
    %7595 = vmatpush2.bf16.msra.mxu0 %v7314
    %7596 = vmatprep.mubr.bf16.mxu0 %v6875
    %7597 = vmatmul.mubr.bf16.gmra.mxu0 %v6874
    %v7598 = vpop.f32.mrf.mxu0
    %v7599 = vadd.f32 %v7546, %v7598
    %v7600 = vpop.f32.mrf.mxu0
    %v7601 = vadd.f32 %v7548, %v7600
    %v7602 = vpop.f32.mrf.mxu0
    %v7603 = vadd.f32 %v7550, %v7602
    %v7604 = vpop.f32.mrf.mxu0
    %v7605 = vadd.f32 %v7552, %v7604
    %7606 = vmatprep.mubr.bf16.mxu0 %v6882
    %7607 = vmatmul.mubr.bf16.gmra.mxu0 %v6881
    %v7608 = vpop.f32.mrf.mxu0
    %v7609 = vadd.f32 %v7556, %v7608
    %v7610 = vpop.f32.mrf.mxu0
    %v7611 = vadd.f32 %v7558, %v7610
    %v7612 = vpop.f32.mrf.mxu0
    %v7613 = vadd.f32 %v7560, %v7612
    %v7614 = vpop.f32.mrf.mxu0
    %v7615 = vadd.f32 %v7562, %v7614
    %7616 = vdwg.mxu0
    %7617 = vmatprep.subr.bf16.mxu0 %v7345
    %7618 = vmatpush1.bf16.msra.mxu0 %v7344
    %7619 = vmatprep.subr.bf16.mxu0 %v7343
    %7620 = vmatpush1.bf16.msra.mxu0 %v7342
    %7621 = vmatprep.subr.bf16.mxu0 %v7341
    %7622 = vmatpush1.bf16.msra.mxu0 %v7340
    %7623 = vmatprep.subr.bf16.mxu0 %v7339
    %7624 = vmatpush1.bf16.msra.mxu0 %v7338
    %7625 = vmatprep.subr.bf16.mxu0 %v7337
    %7626 = vmatpush1.bf16.msra.mxu0 %v7336
    %7627 = vmatprep.subr.bf16.mxu0 %v7335
    %7628 = vmatpush1.bf16.msra.mxu0 %v7334
    %7629 = vmatprep.subr.bf16.mxu0 %v7333
    %7630 = vmatpush1.bf16.msra.mxu0 %v7332
    %7631 = vmatprep.subr.bf16.mxu0 %v7331
    %7632 = vmatpush1.bf16.msra.mxu0 %v7330
    %7633 = vmatprep.subr.bf16.mxu0 0
    %7634 = vmatpush2.bf16.msra.mxu0 0
    %7635 = vmatprep.subr.bf16.mxu0 0
    %7636 = vmatpush2.bf16.msra.mxu0 0
    %7637 = vmatprep.subr.bf16.mxu0 0
    %7638 = vmatpush2.bf16.msra.mxu0 0
    %7639 = vmatprep.subr.bf16.mxu0 0
    %7640 = vmatpush2.bf16.msra.mxu0 0
    %7641 = vmatprep.subr.bf16.mxu0 0
    %7642 = vmatpush2.bf16.msra.mxu0 0
    %7643 = vmatprep.subr.bf16.mxu0 0
    %7644 = vmatpush2.bf16.msra.mxu0 0
    %7645 = vmatprep.subr.bf16.mxu0 0
    %7646 = vmatpush2.bf16.msra.mxu0 0
    %7647 = vmatprep.subr.bf16.mxu0 0
    %7648 = vmatpush2.bf16.msra.mxu0 0
    %7649 = vmatprep.mubr.bf16.mxu0 0
    %7650 = vmatmul.mubr.bf16.gmra.mxu0 %v6876
    %v7651 = vpop.f32.mrf.mxu0
    %v7652 = vadd.f32 %v7599, %v7651
    %v7653 = vpop.f32.mrf.mxu0
    %v7654 = vadd.f32 %v7601, %v7653
    %v7655 = vpop.f32.mrf.mxu0
    %v7656 = vadd.f32 %v7603, %v7655
    %v7657 = vpop.f32.mrf.mxu0
    %v7658 = vadd.f32 %v7605, %v7657
    %7659 = vmatprep.mubr.bf16.mxu0 0
    %7660 = vmatmul.mubr.bf16.gmra.mxu0 %v6883
    %v7661 = vpop.f32.mrf.mxu0
    %v7662 = vadd.f32 %v7609, %v7661
    %v7663 = vpop.f32.mrf.mxu0
    %v7664 = vadd.f32 %v7611, %v7663
    %v7665 = vpop.f32.mrf.mxu0
    %v7666 = vadd.f32 %v7613, %v7665
    %v7667 = vpop.f32.mrf.mxu0
    %v7668 = vadd.f32 %v7615, %v7667
    %7669 = vdwg.mxu0
    %7670 = vst [vmem:[#allocation7] sm:$0xff] %v7652
    %7671 = vst [vmem:[#allocation7 + $0x8] sm:$0xff] %v7654
    %7672 = vst [vmem:[#allocation7 + $0x10] sm:$0xff] %v7656
    %7673 = vst [vmem:[#allocation7 + $0x18] sm:$0xff] %v7658
    %7674 = vst [vmem:[#allocation7 + $0x20] sm:$0xff] %v7662
    %7675 = vst [vmem:[#allocation7 + $0x28] sm:$0xff] %v7664
    %7676 = vst [vmem:[#allocation7 + $0x30] sm:$0xff] %v7666
    %7677 = vst [vmem:[#allocation7 + $0x38] sm:$0xff] %v7668
    %v7678 = vld [vmem:[#allocation3 + $0x20] sm:$0xff]
    %v7679 = vld [vmem:[#allocation3 + $0x28] sm:$0xff]
    %v7680 = vld [vmem:[#allocation3 + $0x30] sm:$0xff]
    %v7681 = vld [vmem:[#allocation3 + $0x38] sm:$0xf]
    %v7682 = vld [vmem:[#allocation3 + $0x60] sm:$0xff]
    %v7683 = vld [vmem:[#allocation3 + $0x68] sm:$0xff]
    %v7684 = vld [vmem:[#allocation3 + $0x70] sm:$0xff]
    %v7685 = vld [vmem:[#allocation3 + $0x78] sm:$0xf]
    %v7686 = vld [vmem:[#allocation3 + $0xa0] sm:$0xff]
    %v7687 = vld [vmem:[#allocation3 + $0xa8] sm:$0xff]
    %v7688 = vld [vmem:[#allocation3 + $0xb0] sm:$0xff]
    %v7689 = vld [vmem:[#allocation3 + $0xb8] sm:$0xf]
    %v7690 = vld [vmem:[#allocation3 + $0xe0] sm:$0xff]
    %v7691 = vld [vmem:[#allocation3 + $0xe8] sm:$0xff]
    %v7692 = vld [vmem:[#allocation3 + $0xf0] sm:$0xff]
    %v7693 = vld [vmem:[#allocation3 + $0xf8] sm:$0xf]
    %v7694 = vld [vmem:[#allocation4] sm:$0xff]
    %v7695 = vld [vmem:[#allocation4 + $0x8] sm:$0xff]
    %v7696 = vld [vmem:[#allocation4 + $0x10] sm:$0xff]
    %v7697 = vld [vmem:[#allocation4 + $0x18] sm:$0xff]
    %v7698 = vld [vmem:[#allocation4 + $0x20] sm:$0xff]
    %v7699 = vld [vmem:[#allocation4 + $0x28] sm:$0xff]
    %v7700 = vld [vmem:[#allocation4 + $0x30] sm:$0xff]
    %v7701 = vld [vmem:[#allocation4 + $0x38] sm:$0xff]
    %v7702 = vld [vmem:[#allocation4 + $0x40] sm:$0xff]
    %v7703 = vld [vmem:[#allocation4 + $0x48] sm:$0xff]
    %v7704 = vld [vmem:[#allocation4 + $0x50] sm:$0xff]
    %v7705 = vld [vmem:[#allocation4 + $0x58] sm:$0xff]
    %v7706 = vld [vmem:[#allocation4 + $0x60] sm:$0xff]
    %v7707 = vld [vmem:[#allocation4 + $0x68] sm:$0xff]
    %v7708 = vld [vmem:[#allocation4 + $0x70] sm:$0xff]
    %v7709 = vld [vmem:[#allocation4 + $0x78] sm:$0xff]
    %v7710 = vld [vmem:[#allocation4 + $0x80] sm:$0xff]
    %v7711 = vld [vmem:[#allocation4 + $0x88] sm:$0xff]
    %v7712 = vld [vmem:[#allocation4 + $0x90] sm:$0xff]
    %v7713 = vld [vmem:[#allocation4 + $0x98] sm:$0xff]
    %v7714 = vld [vmem:[#allocation4 + $0xa0] sm:$0xff]
    %v7715 = vld [vmem:[#allocation4 + $0xa8] sm:$0xff]
    %v7716 = vld [vmem:[#allocation4 + $0xb0] sm:$0xff]
    %v7717 = vld [vmem:[#allocation4 + $0xb8] sm:$0xff]
    %v7718 = vld [vmem:[#allocation4 + $0xc0] sm:$0xff]
    %v7719 = vld [vmem:[#allocation4 + $0xc8] sm:$0xff]
    %v7720 = vld [vmem:[#allocation4 + $0xd0] sm:$0xff]
    %v7721 = vld [vmem:[#allocation4 + $0xd8] sm:$0xff]
    %v7722 = vld [vmem:[#allocation4 + $0xe0] sm:$0xff]
    %v7723 = vld [vmem:[#allocation4 + $0xe8] sm:$0xff]
    %v7724 = vld [vmem:[#allocation4 + $0xf0] sm:$0xff]
    %v7725 = vld [vmem:[#allocation4 + $0xf8] sm:$0xff]
    %v7726 = vld [vmem:[#allocation4 + $0x100] sm:$0xff]
    %v7727 = vld [vmem:[#allocation4 + $0x108] sm:$0xff]
    %v7728 = vld [vmem:[#allocation4 + $0x110] sm:$0xff]
    %v7729 = vld [vmem:[#allocation4 + $0x118] sm:$0xff]
    %v7730 = vld [vmem:[#allocation4 + $0x120] sm:$0xff]
    %v7731 = vld [vmem:[#allocation4 + $0x128] sm:$0xff]
    %v7732 = vld [vmem:[#allocation4 + $0x130] sm:$0xff]
    %v7733 = vld [vmem:[#allocation4 + $0x138] sm:$0xff]
    %v7734 = vld [vmem:[#allocation4 + $0x140] sm:$0xff]
    %v7735 = vld [vmem:[#allocation4 + $0x148] sm:$0xff]
    %v7736 = vld [vmem:[#allocation4 + $0x150] sm:$0xff]
    %v7737 = vld [vmem:[#allocation4 + $0x158] sm:$0xff]
    %v7738 = vld [vmem:[#allocation4 + $0x160] sm:$0xff]
    %v7739 = vld [vmem:[#allocation4 + $0x168] sm:$0xff]
    %v7740 = vld [vmem:[#allocation4 + $0x170] sm:$0xff]
    %v7741 = vld [vmem:[#allocation4 + $0x178] sm:$0xff]
    %v7742 = vld [vmem:[#allocation4 + $0x180] sm:$0xff]
    %v7743 = vld [vmem:[#allocation4 + $0x188] sm:$0xff]
    %v7744 = vld [vmem:[#allocation4 + $0x190] sm:$0xff]
    %v7745 = vld [vmem:[#allocation4 + $0x198] sm:$0xff]
    %v7746 = vld [vmem:[#allocation4 + $0x1a0] sm:$0xff]
    %v7747 = vld [vmem:[#allocation4 + $0x1a8] sm:$0xff]
    %v7748 = vld [vmem:[#allocation4 + $0x1b0] sm:$0xff]
    %v7749 = vld [vmem:[#allocation4 + $0x1b8] sm:$0xff]
    %v7750 = vld [vmem:[#allocation4 + $0x1c0] sm:$0xff]
    %v7751 = vld [vmem:[#allocation4 + $0x1c8] sm:$0xff]
    %v7752 = vld [vmem:[#allocation4 + $0x1d0] sm:$0xff]
    %v7753 = vld [vmem:[#allocation4 + $0x1d8] sm:$0xff]
    %v7754 = vld [vmem:[#allocation4 + $0x1e0] sm:$0xff]
    %v7755 = vld [vmem:[#allocation4 + $0x1e8] sm:$0xff]
    %v7756 = vld [vmem:[#allocation4 + $0x1f0] sm:$0xff]
    %v7757 = vld [vmem:[#allocation4 + $0x1f8] sm:$0xff]
    %v7758 = vld [vmem:[#allocation4 + $0x200] sm:$0xff]
    %v7759 = vld [vmem:[#allocation4 + $0x208] sm:$0xff]
    %v7760 = vld [vmem:[#allocation4 + $0x210] sm:$0xff]
    %v7761 = vld [vmem:[#allocation4 + $0x218] sm:$0xff]
    %v7762 = vld [vmem:[#allocation4 + $0x220] sm:$0xff]
    %v7763 = vld [vmem:[#allocation4 + $0x228] sm:$0xff]
    %v7764 = vld [vmem:[#allocation4 + $0x230] sm:$0xff]
    %v7765 = vld [vmem:[#allocation4 + $0x238] sm:$0xff]
    %v7766 = vld [vmem:[#allocation4 + $0x240] sm:$0xff]
    %v7767 = vld [vmem:[#allocation4 + $0x248] sm:$0xff]
    %v7768 = vld [vmem:[#allocation4 + $0x250] sm:$0xff]
    %v7769 = vld [vmem:[#allocation4 + $0x258] sm:$0xff]
    %v7770 = vld [vmem:[#allocation4 + $0x260] sm:$0xff]
    %v7771 = vld [vmem:[#allocation4 + $0x268] sm:$0xff]
    %v7772 = vld [vmem:[#allocation4 + $0x270] sm:$0xff]
    %v7773 = vld [vmem:[#allocation4 + $0x278] sm:$0xff]
    %v7774 = vld [vmem:[#allocation4 + $0x280] sm:$0xff]
    %v7775 = vld [vmem:[#allocation4 + $0x288] sm:$0xff]
    %v7776 = vld [vmem:[#allocation4 + $0x290] sm:$0xff]
    %v7777 = vld [vmem:[#allocation4 + $0x298] sm:$0xff]
    %v7778 = vld [vmem:[#allocation4 + $0x2a0] sm:$0xff]
    %v7779 = vld [vmem:[#allocation4 + $0x2a8] sm:$0xff]
    %v7780 = vld [vmem:[#allocation4 + $0x2b0] sm:$0xff]
    %v7781 = vld [vmem:[#allocation4 + $0x2b8] sm:$0xff]
    %v7782 = vld [vmem:[#allocation4 + $0x2c0] sm:$0xff]
    %v7783 = vld [vmem:[#allocation4 + $0x2c8] sm:$0xff]
    %v7784 = vld [vmem:[#allocation4 + $0x2d0] sm:$0xff]
    %v7785 = vld [vmem:[#allocation4 + $0x2d8] sm:$0xff]
    %v7786 = vld [vmem:[#allocation4 + $0x2e0] sm:$0xff]
    %v7787 = vld [vmem:[#allocation4 + $0x2e8] sm:$0xff]
    %v7788 = vld [vmem:[#allocation4 + $0x2f0] sm:$0xff]
    %v7789 = vld [vmem:[#allocation4 + $0x2f8] sm:$0xff]
    %v7790 = vld [vmem:[#allocation4 + $0x300] sm:$0xff]
    %v7791 = vld [vmem:[#allocation4 + $0x308] sm:$0xff]
    %v7792 = vld [vmem:[#allocation4 + $0x310] sm:$0xff]
    %v7793 = vld [vmem:[#allocation4 + $0x318] sm:$0xff]
    %v7794 = vld [vmem:[#allocation4 + $0x320] sm:$0xff]
    %v7795 = vld [vmem:[#allocation4 + $0x328] sm:$0xff]
    %v7796 = vld [vmem:[#allocation4 + $0x330] sm:$0xff]
    %v7797 = vld [vmem:[#allocation4 + $0x338] sm:$0xff]
    %v7798 = vld [vmem:[#allocation4 + $0x340] sm:$0xff]
    %v7799 = vld [vmem:[#allocation4 + $0x348] sm:$0xff]
    %v7800 = vld [vmem:[#allocation4 + $0x350] sm:$0xff]
    %v7801 = vld [vmem:[#allocation4 + $0x358] sm:$0xff]
    %v7802 = vld [vmem:[#allocation4 + $0x360] sm:$0xff]
    %v7803 = vld [vmem:[#allocation4 + $0x368] sm:$0xff]
    %v7804 = vld [vmem:[#allocation4 + $0x370] sm:$0xff]
    %v7805 = vld [vmem:[#allocation4 + $0x378] sm:$0xff]
    %v7822 = vunpack.c.l.b16 %v7678
    %v7823 = vunpack.c.h.b16 %v7678
    %v7824 = vunpack.c.l.b16 %v7679
    %v7825 = vunpack.c.h.b16 %v7679
    %v7826 = vunpack.c.l.b16 %v7680
    %v7827 = vunpack.c.h.b16 %v7680
    %v7828 = vunpack.c.l.b16 %v7681
    %v7829 = vunpack.c.l.b16 %v7682
    %v7830 = vunpack.c.h.b16 %v7682
    %v7831 = vunpack.c.l.b16 %v7683
    %v7832 = vunpack.c.h.b16 %v7683
    %v7833 = vunpack.c.l.b16 %v7684
    %v7834 = vunpack.c.h.b16 %v7684
    %v7835 = vunpack.c.l.b16 %v7685
    %v7836 = vunpack.c.l.b16 %v7686
    %v7837 = vunpack.c.h.b16 %v7686
    %v7838 = vunpack.c.l.b16 %v7687
    %v7839 = vunpack.c.h.b16 %v7687
    %v7840 = vunpack.c.l.b16 %v7688
    %v7841 = vunpack.c.h.b16 %v7688
    %v7842 = vunpack.c.l.b16 %v7689
    %v7843 = vunpack.c.l.b16 %v7690
    %v7844 = vunpack.c.h.b16 %v7690
    %v7845 = vunpack.c.l.b16 %v7691
    %v7846 = vunpack.c.h.b16 %v7691
    %v7847 = vunpack.c.l.b16 %v7692
    %v7848 = vunpack.c.h.b16 %v7692
    %v7849 = vunpack.c.l.b16 %v7693
    %v7850 = vpack.c.b16 %v7829, %v7822
    %v7851 = vpack.c.b16 %v7830, %v7823
    %v7852 = vpack.c.b16 %v7831, %v7824
    %v7853 = vpack.c.b16 %v7832, %v7825
    %v7854 = vpack.c.b16 %v7833, %v7826
    %v7855 = vpack.c.b16 %v7834, %v7827
    %v7856 = vpack.c.b16 %v7835, %v7828
    %v7857 = vpack.c.b16 %v7843, %v7836
    %v7858 = vpack.c.b16 %v7844, %v7837
    %v7859 = vpack.c.b16 %v7845, %v7838
    %v7860 = vpack.c.b16 %v7846, %v7839
    %v7861 = vpack.c.b16 %v7847, %v7840
    %v7862 = vpack.c.b16 %v7848, %v7841
    %v7863 = vpack.c.b16 %v7849, %v7842
    %v7990 = vunpack.c.l.b16 %v7694
    %v7991 = vunpack.c.h.b16 %v7694
    %v7992 = vunpack.c.l.b16 %v7695
    %v7993 = vunpack.c.h.b16 %v7695
    %v7994 = vunpack.c.l.b16 %v7696
    %v7995 = vunpack.c.h.b16 %v7696
    %v7996 = vunpack.c.l.b16 %v7697
    %v7997 = vunpack.c.h.b16 %v7697
    %v7998 = vunpack.c.l.b16 %v7698
    %v7999 = vunpack.c.h.b16 %v7698
    %v8000 = vunpack.c.l.b16 %v7699
    %v8001 = vunpack.c.h.b16 %v7699
    %v8002 = vunpack.c.l.b16 %v7700
    %v8003 = vunpack.c.h.b16 %v7700
    %v8004 = vunpack.c.l.b16 %v7701
    %v8005 = vunpack.c.h.b16 %v7701
    %v8006 = vunpack.c.l.b16 %v7702
    %v8007 = vunpack.c.h.b16 %v7702
    %v8008 = vunpack.c.l.b16 %v7703
    %v8009 = vunpack.c.h.b16 %v7703
    %v8010 = vunpack.c.l.b16 %v7704
    %v8011 = vunpack.c.h.b16 %v7704
    %v8012 = vunpack.c.l.b16 %v7705
    %v8013 = vunpack.c.h.b16 %v7705
    %v8014 = vunpack.c.l.b16 %v7706
    %v8015 = vunpack.c.h.b16 %v7706
    %v8016 = vunpack.c.l.b16 %v7707
    %v8017 = vunpack.c.h.b16 %v7707
    %v8018 = vunpack.c.l.b16 %v7708
    %v8019 = vunpack.c.h.b16 %v7708
    %v8020 = vunpack.c.l.b16 %v7709
    %v8021 = vunpack.c.h.b16 %v7709
    %v8022 = vunpack.c.l.b16 %v7710
    %v8023 = vunpack.c.h.b16 %v7710
    %v8024 = vunpack.c.l.b16 %v7711
    %v8025 = vunpack.c.h.b16 %v7711
    %v8026 = vunpack.c.l.b16 %v7712
    %v8027 = vunpack.c.h.b16 %v7712
    %v8028 = vunpack.c.l.b16 %v7713
    %v8029 = vunpack.c.h.b16 %v7713
    %v8030 = vunpack.c.l.b16 %v7714
    %v8031 = vunpack.c.h.b16 %v7714
    %v8032 = vunpack.c.l.b16 %v7715
    %v8033 = vunpack.c.h.b16 %v7715
    %v8034 = vunpack.c.l.b16 %v7716
    %v8035 = vunpack.c.h.b16 %v7716
    %v8036 = vunpack.c.l.b16 %v7717
    %v8037 = vunpack.c.h.b16 %v7717
    %v8038 = vunpack.c.l.b16 %v7718
    %v8039 = vunpack.c.h.b16 %v7718
    %v8040 = vunpack.c.l.b16 %v7719
    %v8041 = vunpack.c.h.b16 %v7719
    %v8042 = vunpack.c.l.b16 %v7720
    %v8043 = vunpack.c.h.b16 %v7720
    %v8044 = vunpack.c.l.b16 %v7721
    %v8045 = vunpack.c.h.b16 %v7721
    %v8046 = vunpack.c.l.b16 %v7722
    %v8047 = vunpack.c.h.b16 %v7722
    %v8048 = vunpack.c.l.b16 %v7723
    %v8049 = vunpack.c.h.b16 %v7723
    %v8050 = vunpack.c.l.b16 %v7724
    %v8051 = vunpack.c.h.b16 %v7724
    %v8052 = vunpack.c.l.b16 %v7725
    %v8053 = vunpack.c.h.b16 %v7725
    %v8054 = vunpack.c.l.b16 %v7726
    %v8055 = vunpack.c.h.b16 %v7726
    %v8056 = vunpack.c.l.b16 %v7727
    %v8057 = vunpack.c.h.b16 %v7727
    %v8058 = vunpack.c.l.b16 %v7728
    %v8059 = vunpack.c.h.b16 %v7728
    %v8060 = vunpack.c.l.b16 %v7729
    %v8061 = vunpack.c.h.b16 %v7729
    %v8062 = vunpack.c.l.b16 %v7730
    %v8063 = vunpack.c.h.b16 %v7730
    %v8064 = vunpack.c.l.b16 %v7731
    %v8065 = vunpack.c.h.b16 %v7731
    %v8066 = vunpack.c.l.b16 %v7732
    %v8067 = vunpack.c.h.b16 %v7732
    %v8068 = vunpack.c.l.b16 %v7733
    %v8069 = vunpack.c.h.b16 %v7733
    %v8070 = vunpack.c.l.b16 %v7734
    %v8071 = vunpack.c.h.b16 %v7734
    %v8072 = vunpack.c.l.b16 %v7735
    %v8073 = vunpack.c.h.b16 %v7735
    %v8074 = vunpack.c.l.b16 %v7736
    %v8075 = vunpack.c.h.b16 %v7736
    %v8076 = vunpack.c.l.b16 %v7737
    %v8077 = vunpack.c.h.b16 %v7737
    %v8078 = vunpack.c.l.b16 %v7738
    %v8079 = vunpack.c.h.b16 %v7738
    %v8080 = vunpack.c.l.b16 %v7739
    %v8081 = vunpack.c.h.b16 %v7739
    %v8082 = vunpack.c.l.b16 %v7740
    %v8083 = vunpack.c.h.b16 %v7740
    %v8084 = vunpack.c.l.b16 %v7741
    %v8085 = vunpack.c.h.b16 %v7741
    %v8086 = vunpack.c.l.b16 %v7742
    %v8087 = vunpack.c.h.b16 %v7742
    %v8088 = vunpack.c.l.b16 %v7743
    %v8089 = vunpack.c.h.b16 %v7743
    %v8090 = vunpack.c.l.b16 %v7744
    %v8091 = vunpack.c.h.b16 %v7744
    %v8092 = vunpack.c.l.b16 %v7745
    %v8093 = vunpack.c.h.b16 %v7745
    %v8094 = vunpack.c.l.b16 %v7746
    %v8095 = vunpack.c.h.b16 %v7746
    %v8096 = vunpack.c.l.b16 %v7747
    %v8097 = vunpack.c.h.b16 %v7747
    %v8098 = vunpack.c.l.b16 %v7748
    %v8099 = vunpack.c.h.b16 %v7748
    %v8100 = vunpack.c.l.b16 %v7749
    %v8101 = vunpack.c.h.b16 %v7749
    %v8102 = vunpack.c.l.b16 %v7750
    %v8103 = vunpack.c.h.b16 %v7750
    %v8104 = vunpack.c.l.b16 %v7751
    %v8105 = vunpack.c.h.b16 %v7751
    %v8106 = vunpack.c.l.b16 %v7752
    %v8107 = vunpack.c.h.b16 %v7752
    %v8108 = vunpack.c.l.b16 %v7753
    %v8109 = vunpack.c.h.b16 %v7753
    %v8110 = vunpack.c.l.b16 %v7754
    %v8111 = vunpack.c.h.b16 %v7754
    %v8112 = vunpack.c.l.b16 %v7755
    %v8113 = vunpack.c.h.b16 %v7755
    %v8114 = vunpack.c.l.b16 %v7756
    %v8115 = vunpack.c.h.b16 %v7756
    %v8116 = vunpack.c.l.b16 %v7757
    %v8117 = vunpack.c.h.b16 %v7757
    %v8118 = vunpack.c.l.b16 %v7758
    %v8119 = vunpack.c.h.b16 %v7758
    %v8120 = vunpack.c.l.b16 %v7759
    %v8121 = vunpack.c.h.b16 %v7759
    %v8122 = vunpack.c.l.b16 %v7760
    %v8123 = vunpack.c.h.b16 %v7760
    %v8124 = vunpack.c.l.b16 %v7761
    %v8125 = vunpack.c.h.b16 %v7761
    %v8126 = vunpack.c.l.b16 %v7762
    %v8127 = vunpack.c.h.b16 %v7762
    %v8128 = vunpack.c.l.b16 %v7763
    %v8129 = vunpack.c.h.b16 %v7763
    %v8130 = vunpack.c.l.b16 %v7764
    %v8131 = vunpack.c.h.b16 %v7764
    %v8132 = vunpack.c.l.b16 %v7765
    %v8133 = vunpack.c.h.b16 %v7765
    %v8134 = vunpack.c.l.b16 %v7766
    %v8135 = vunpack.c.h.b16 %v7766
    %v8136 = vunpack.c.l.b16 %v7767
    %v8137 = vunpack.c.h.b16 %v7767
    %v8138 = vunpack.c.l.b16 %v7768
    %v8139 = vunpack.c.h.b16 %v7768
    %v8140 = vunpack.c.l.b16 %v7769
    %v8141 = vunpack.c.h.b16 %v7769
    %v8142 = vunpack.c.l.b16 %v7770
    %v8143 = vunpack.c.h.b16 %v7770
    %v8144 = vunpack.c.l.b16 %v7771
    %v8145 = vunpack.c.h.b16 %v7771
    %v8146 = vunpack.c.l.b16 %v7772
    %v8147 = vunpack.c.h.b16 %v7772
    %v8148 = vunpack.c.l.b16 %v7773
    %v8149 = vunpack.c.h.b16 %v7773
    %v8150 = vunpack.c.l.b16 %v7774
    %v8151 = vunpack.c.h.b16 %v7774
    %v8152 = vunpack.c.l.b16 %v7775
    %v8153 = vunpack.c.h.b16 %v7775
    %v8154 = vunpack.c.l.b16 %v7776
    %v8155 = vunpack.c.h.b16 %v7776
    %v8156 = vunpack.c.l.b16 %v7777
    %v8157 = vunpack.c.h.b16 %v7777
    %v8158 = vunpack.c.l.b16 %v7778
    %v8159 = vunpack.c.h.b16 %v7778
    %v8160 = vunpack.c.l.b16 %v7779
    %v8161 = vunpack.c.h.b16 %v7779
    %v8162 = vunpack.c.l.b16 %v7780
    %v8163 = vunpack.c.h.b16 %v7780
    %v8164 = vunpack.c.l.b16 %v7781
    %v8165 = vunpack.c.h.b16 %v7781
    %v8166 = vunpack.c.l.b16 %v7782
    %v8167 = vunpack.c.h.b16 %v7782
    %v8168 = vunpack.c.l.b16 %v7783
    %v8169 = vunpack.c.h.b16 %v7783
    %v8170 = vunpack.c.l.b16 %v7784
    %v8171 = vunpack.c.h.b16 %v7784
    %v8172 = vunpack.c.l.b16 %v7785
    %v8173 = vunpack.c.h.b16 %v7785
    %v8174 = vunpack.c.l.b16 %v7786
    %v8175 = vunpack.c.h.b16 %v7786
    %v8176 = vunpack.c.l.b16 %v7787
    %v8177 = vunpack.c.h.b16 %v7787
    %v8178 = vunpack.c.l.b16 %v7788
    %v8179 = vunpack.c.h.b16 %v7788
    %v8180 = vunpack.c.l.b16 %v7789
    %v8181 = vunpack.c.h.b16 %v7789
    %v8182 = vunpack.c.l.b16 %v7790
    %v8183 = vunpack.c.h.b16 %v7790
    %v8184 = vunpack.c.l.b16 %v7791
    %v8185 = vunpack.c.h.b16 %v7791
    %v8186 = vunpack.c.l.b16 %v7792
    %v8187 = vunpack.c.h.b16 %v7792
    %v8188 = vunpack.c.l.b16 %v7793
    %v8189 = vunpack.c.h.b16 %v7793
    %v8190 = vunpack.c.l.b16 %v7794
    %v8191 = vunpack.c.h.b16 %v7794
    %v8192 = vunpack.c.l.b16 %v7795
    %v8193 = vunpack.c.h.b16 %v7795
    %v8194 = vunpack.c.l.b16 %v7796
    %v8195 = vunpack.c.h.b16 %v7796
    %v8196 = vunpack.c.l.b16 %v7797
    %v8197 = vunpack.c.h.b16 %v7797
    %v8198 = vunpack.c.l.b16 %v7798
    %v8199 = vunpack.c.h.b16 %v7798
    %v8200 = vunpack.c.l.b16 %v7799
    %v8201 = vunpack.c.h.b16 %v7799
    %v8202 = vunpack.c.l.b16 %v7800
    %v8203 = vunpack.c.h.b16 %v7800
    %v8204 = vunpack.c.l.b16 %v7801
    %v8205 = vunpack.c.h.b16 %v7801
    %v8206 = vunpack.c.l.b16 %v7802
    %v8207 = vunpack.c.h.b16 %v7802
    %v8208 = vunpack.c.l.b16 %v7803
    %v8209 = vunpack.c.h.b16 %v7803
    %v8210 = vunpack.c.l.b16 %v7804
    %v8211 = vunpack.c.h.b16 %v7804
    %v8212 = vunpack.c.l.b16 %v7805
    %v8213 = vunpack.c.h.b16 %v7805
    %v8214 = vpack.c.b16 %v7992, %v7990
    %v8215 = vpack.c.b16 %v7993, %v7991
    %v8216 = vpack.c.b16 %v7996, %v7994
    %v8217 = vpack.c.b16 %v7997, %v7995
    %v8218 = vpack.c.b16 %v8000, %v7998
    %v8219 = vpack.c.b16 %v8001, %v7999
    %v8220 = vpack.c.b16 %v8004, %v8002
    %v8221 = vpack.c.b16 %v8005, %v8003
    %v8222 = vpack.c.b16 %v8008, %v8006
    %v8223 = vpack.c.b16 %v8009, %v8007
    %v8224 = vpack.c.b16 %v8012, %v8010
    %v8225 = vpack.c.b16 %v8013, %v8011
    %v8226 = vpack.c.b16 %v8016, %v8014
    %v8227 = vpack.c.b16 %v8017, %v8015
    %v8228 = vpack.c.b16 %v8020, %v8018
    %v8229 = vpack.c.b16 %v8021, %v8019
    %v8230 = vpack.c.b16 %v8024, %v8022
    %v8231 = vpack.c.b16 %v8025, %v8023
    %v8232 = vpack.c.b16 %v8028, %v8026
    %v8233 = vpack.c.b16 %v8029, %v8027
    %v8234 = vpack.c.b16 %v8032, %v8030
    %v8235 = vpack.c.b16 %v8033, %v8031
    %v8236 = vpack.c.b16 %v8036, %v8034
    %v8237 = vpack.c.b16 %v8037, %v8035
    %v8238 = vpack.c.b16 %v8040, %v8038
    %v8239 = vpack.c.b16 %v8041, %v8039
    %v8240 = vpack.c.b16 %v8044, %v8042
    %v8241 = vpack.c.b16 %v8045, %v8043
    %v8242 = vpack.c.b16 %v8048, %v8046
    %v8243 = vpack.c.b16 %v8049, %v8047
    %v8244 = vpack.c.b16 %v8052, %v8050
    %v8245 = vpack.c.b16 %v8053, %v8051
    %v8246 = vpack.c.b16 %v8056, %v8054
    %v8247 = vpack.c.b16 %v8057, %v8055
    %v8248 = vpack.c.b16 %v8060, %v8058
    %v8249 = vpack.c.b16 %v8061, %v8059
    %v8250 = vpack.c.b16 %v8064, %v8062
    %v8251 = vpack.c.b16 %v8065, %v8063
    %v8252 = vpack.c.b16 %v8068, %v8066
    %v8253 = vpack.c.b16 %v8069, %v8067
    %v8254 = vpack.c.b16 %v8072, %v8070
    %v8255 = vpack.c.b16 %v8073, %v8071
    %v8256 = vpack.c.b16 %v8076, %v8074
    %v8257 = vpack.c.b16 %v8077, %v8075
    %v8258 = vpack.c.b16 %v8080, %v8078
    %v8259 = vpack.c.b16 %v8081, %v8079
    %v8260 = vpack.c.b16 %v8084, %v8082
    %v8261 = vpack.c.b16 %v8085, %v8083
    %v8262 = vpack.c.b16 %v8088, %v8086
    %v8263 = vpack.c.b16 %v8089, %v8087
    %v8264 = vpack.c.b16 %v8092, %v8090
    %v8265 = vpack.c.b16 %v8093, %v8091
    %v8266 = vpack.c.b16 %v8096, %v8094
    %v8267 = vpack.c.b16 %v8097, %v8095
    %v8268 = vpack.c.b16 %v8100, %v8098
    %v8269 = vpack.c.b16 %v8101, %v8099
    %v8270 = vpack.c.b16 %v8104, %v8102
    %v8271 = vpack.c.b16 %v8105, %v8103
    %v8272 = vpack.c.b16 %v8108, %v8106
    %v8273 = vpack.c.b16 %v8109, %v8107
    %v8274 = vpack.c.b16 %v8112, %v8110
    %v8275 = vpack.c.b16 %v8113, %v8111
    %v8276 = vpack.c.b16 %v8116, %v8114
    %v8277 = vpack.c.b16 %v8117, %v8115
    %v8278 = vpack.c.b16 %v8120, %v8118
    %v8279 = vpack.c.b16 %v8121, %v8119
    %v8280 = vpack.c.b16 %v8124, %v8122
    %v8281 = vpack.c.b16 %v8125, %v8123
    %v8282 = vpack.c.b16 %v8128, %v8126
    %v8283 = vpack.c.b16 %v8129, %v8127
    %v8284 = vpack.c.b16 %v8132, %v8130
    %v8285 = vpack.c.b16 %v8133, %v8131
    %v8286 = vpack.c.b16 %v8136, %v8134
    %v8287 = vpack.c.b16 %v8137, %v8135
    %v8288 = vpack.c.b16 %v8140, %v8138
    %v8289 = vpack.c.b16 %v8141, %v8139
    %v8290 = vpack.c.b16 %v8144, %v8142
    %v8291 = vpack.c.b16 %v8145, %v8143
    %v8292 = vpack.c.b16 %v8148, %v8146
    %v8293 = vpack.c.b16 %v8149, %v8147
    %v8294 = vpack.c.b16 %v8152, %v8150
    %v8295 = vpack.c.b16 %v8153, %v8151
    %v8296 = vpack.c.b16 %v8156, %v8154
    %v8297 = vpack.c.b16 %v8157, %v8155
    %v8298 = vpack.c.b16 %v8160, %v8158
    %v8299 = vpack.c.b16 %v8161, %v8159
    %v8300 = vpack.c.b16 %v8164, %v8162
    %v8301 = vpack.c.b16 %v8165, %v8163
    %v8302 = vpack.c.b16 %v8168, %v8166
    %v8303 = vpack.c.b16 %v8169, %v8167
    %v8304 = vpack.c.b16 %v8172, %v8170
    %v8305 = vpack.c.b16 %v8173, %v8171
    %v8306 = vpack.c.b16 %v8176, %v8174
    %v8307 = vpack.c.b16 %v8177, %v8175
    %v8308 = vpack.c.b16 %v8180, %v8178
    %v8309 = vpack.c.b16 %v8181, %v8179
    %v8310 = vpack.c.b16 %v8184, %v8182
    %v8311 = vpack.c.b16 %v8185, %v8183
    %v8312 = vpack.c.b16 %v8188, %v8186
    %v8313 = vpack.c.b16 %v8189, %v8187
    %v8314 = vpack.c.b16 %v8192, %v8190
    %v8315 = vpack.c.b16 %v8193, %v8191
    %v8316 = vpack.c.b16 %v8196, %v8194
    %v8317 = vpack.c.b16 %v8197, %v8195
    %v8318 = vpack.c.b16 %v8200, %v8198
    %v8319 = vpack.c.b16 %v8201, %v8199
    %v8320 = vpack.c.b16 %v8204, %v8202
    %v8321 = vpack.c.b16 %v8205, %v8203
    %v8322 = vpack.c.b16 %v8208, %v8206
    %v8323 = vpack.c.b16 %v8209, %v8207
    %v8324 = vpack.c.b16 %v8212, %v8210
    %v8325 = vpack.c.b16 %v8213, %v8211
    %8438 = vmatprep.subr.bf16.mxu0 %v8229
    %8439 = vmatpush1.bf16.msra.mxu0 %v8228
    %8440 = vmatprep.subr.bf16.mxu0 %v8227
    %8441 = vmatpush1.bf16.msra.mxu0 %v8226
    %8442 = vmatprep.subr.bf16.mxu0 %v8225
    %8443 = vmatpush1.bf16.msra.mxu0 %v8224
    %8444 = vmatprep.subr.bf16.mxu0 %v8223
    %8445 = vmatpush1.bf16.msra.mxu0 %v8222
    %8446 = vmatprep.subr.bf16.mxu0 %v8221
    %8447 = vmatpush1.bf16.msra.mxu0 %v8220
    %8448 = vmatprep.subr.bf16.mxu0 %v8219
    %8449 = vmatpush1.bf16.msra.mxu0 %v8218
    %8450 = vmatprep.subr.bf16.mxu0 %v8217
    %8451 = vmatpush1.bf16.msra.mxu0 %v8216
    %8452 = vmatprep.subr.bf16.mxu0 %v8215
    %8453 = vmatpush1.bf16.msra.mxu0 %v8214
    %8454 = vmatprep.subr.bf16.mxu0 %v8245
    %8455 = vmatpush2.bf16.msra.mxu0 %v8244
    %8456 = vmatprep.subr.bf16.mxu0 %v8243
    %8457 = vmatpush2.bf16.msra.mxu0 %v8242
    %8458 = vmatprep.subr.bf16.mxu0 %v8241
    %8459 = vmatpush2.bf16.msra.mxu0 %v8240
    %8460 = vmatprep.subr.bf16.mxu0 %v8239
    %8461 = vmatpush2.bf16.msra.mxu0 %v8238
    %8462 = vmatprep.subr.bf16.mxu0 %v8237
    %8463 = vmatpush2.bf16.msra.mxu0 %v8236
    %8464 = vmatprep.subr.bf16.mxu0 %v8235
    %8465 = vmatpush2.bf16.msra.mxu0 %v8234
    %8466 = vmatprep.subr.bf16.mxu0 %v8233
    %8467 = vmatpush2.bf16.msra.mxu0 %v8232
    %8468 = vmatprep.subr.bf16.mxu0 %v8231
    %8469 = vmatpush2.bf16.msra.mxu0 %v8230
    %8470 = vmatprep.mubr.bf16.mxu0 %v7851
    %8471 = vmatmul.mubr.bf16.gmra.mxu0 %v7850
    %v8472 = vpop.f32.mrf.mxu0
    %v8473 = vadd.f32 0.0, %v8472
    %v8474 = vpop.f32.mrf.mxu0
    %v8475 = vadd.f32 0.0, %v8474
    %v8476 = vpop.f32.mrf.mxu0
    %v8477 = vadd.f32 0.0, %v8476
    %v8478 = vpop.f32.mrf.mxu0
    %v8479 = vadd.f32 0.0, %v8478
    %8480 = vmatprep.mubr.bf16.mxu0 %v7858
    %8481 = vmatmul.mubr.bf16.gmra.mxu0 %v7857
    %v8482 = vpop.f32.mrf.mxu0
    %v8483 = vadd.f32 0.0, %v8482
    %v8484 = vpop.f32.mrf.mxu0
    %v8485 = vadd.f32 0.0, %v8484
    %v8486 = vpop.f32.mrf.mxu0
    %v8487 = vadd.f32 0.0, %v8486
    %v8488 = vpop.f32.mrf.mxu0
    %v8489 = vadd.f32 0.0, %v8488
    %8490 = vdwg.mxu0
    %8491 = vmatprep.subr.bf16.mxu0 %v8261
    %8492 = vmatpush1.bf16.msra.mxu0 %v8260
    %8493 = vmatprep.subr.bf16.mxu0 %v8259
    %8494 = vmatpush1.bf16.msra.mxu0 %v8258
    %8495 = vmatprep.subr.bf16.mxu0 %v8257
    %8496 = vmatpush1.bf16.msra.mxu0 %v8256
    %8497 = vmatprep.subr.bf16.mxu0 %v8255
    %8498 = vmatpush1.bf16.msra.mxu0 %v8254
    %8499 = vmatprep.subr.bf16.mxu0 %v8253
    %8500 = vmatpush1.bf16.msra.mxu0 %v8252
    %8501 = vmatprep.subr.bf16.mxu0 %v8251
    %8502 = vmatpush1.bf16.msra.mxu0 %v8250
    %8503 = vmatprep.subr.bf16.mxu0 %v8249
    %8504 = vmatpush1.bf16.msra.mxu0 %v8248
    %8505 = vmatprep.subr.bf16.mxu0 %v8247
    %8506 = vmatpush1.bf16.msra.mxu0 %v8246
    %8507 = vmatprep.subr.bf16.mxu0 %v8277
    %8508 = vmatpush2.bf16.msra.mxu0 %v8276
    %8509 = vmatprep.subr.bf16.mxu0 %v8275
    %8510 = vmatpush2.bf16.msra.mxu0 %v8274
    %8511 = vmatprep.subr.bf16.mxu0 %v8273
    %8512 = vmatpush2.bf16.msra.mxu0 %v8272
    %8513 = vmatprep.subr.bf16.mxu0 %v8271
    %8514 = vmatpush2.bf16.msra.mxu0 %v8270
    %8515 = vmatprep.subr.bf16.mxu0 %v8269
    %8516 = vmatpush2.bf16.msra.mxu0 %v8268
    %8517 = vmatprep.subr.bf16.mxu0 %v8267
    %8518 = vmatpush2.bf16.msra.mxu0 %v8266
    %8519 = vmatprep.subr.bf16.mxu0 %v8265
    %8520 = vmatpush2.bf16.msra.mxu0 %v8264
    %8521 = vmatprep.subr.bf16.mxu0 %v8263
    %8522 = vmatpush2.bf16.msra.mxu0 %v8262
    %8523 = vmatprep.mubr.bf16.mxu0 %v7853
    %8524 = vmatmul.mubr.bf16.gmra.mxu0 %v7852
    %v8525 = vpop.f32.mrf.mxu0
    %v8526 = vadd.f32 %v8473, %v8525
    %v8527 = vpop.f32.mrf.mxu0
    %v8528 = vadd.f32 %v8475, %v8527
    %v8529 = vpop.f32.mrf.mxu0
    %v8530 = vadd.f32 %v8477, %v8529
    %v8531 = vpop.f32.mrf.mxu0
    %v8532 = vadd.f32 %v8479, %v8531
    %8533 = vmatprep.mubr.bf16.mxu0 %v7860
    %8534 = vmatmul.mubr.bf16.gmra.mxu0 %v7859
    %v8535 = vpop.f32.mrf.mxu0
    %v8536 = vadd.f32 %v8483, %v8535
    %v8537 = vpop.f32.mrf.mxu0
    %v8538 = vadd.f32 %v8485, %v8537
    %v8539 = vpop.f32.mrf.mxu0
    %v8540 = vadd.f32 %v8487, %v8539
    %v8541 = vpop.f32.mrf.mxu0
    %v8542 = vadd.f32 %v8489, %v8541
    %8543 = vdwg.mxu0
    %8544 = vmatprep.subr.bf16.mxu0 %v8293
    %8545 = vmatpush1.bf16.msra.mxu0 %v8292
    %8546 = vmatprep.subr.bf16.mxu0 %v8291
    %8547 = vmatpush1.bf16.msra.mxu0 %v8290
    %8548 = vmatprep.subr.bf16.mxu0 %v8289
    %8549 = vmatpush1.bf16.msra.mxu0 %v8288
    %8550 = vmatprep.subr.bf16.mxu0 %v8287
    %8551 = vmatpush1.bf16.msra.mxu0 %v8286
    %8552 = vmatprep.subr.bf16.mxu0 %v8285
    %8553 = vmatpush1.bf16.msra.mxu0 %v8284
    %8554 = vmatprep.subr.bf16.mxu0 %v8283
    %8555 = vmatpush1.bf16.msra.mxu0 %v8282
    %8556 = vmatprep.subr.bf16.mxu0 %v8281
    %8557 = vmatpush1.bf16.msra.mxu0 %v8280
    %8558 = vmatprep.subr.bf16.mxu0 %v8279
    %8559 = vmatpush1.bf16.msra.mxu0 %v8278
    %8560 = vmatprep.subr.bf16.mxu0 %v8309
    %8561 = vmatpush2.bf16.msra.mxu0 %v8308
    %8562 = vmatprep.subr.bf16.mxu0 %v8307
    %8563 = vmatpush2.bf16.msra.mxu0 %v8306
    %8564 = vmatprep.subr.bf16.mxu0 %v8305
    %8565 = vmatpush2.bf16.msra.mxu0 %v8304
    %8566 = vmatprep.subr.bf16.mxu0 %v8303
    %8567 = vmatpush2.bf16.msra.mxu0 %v8302
    %8568 = vmatprep.subr.bf16.mxu0 %v8301
    %8569 = vmatpush2.bf16.msra.mxu0 %v8300
    %8570 = vmatprep.subr.bf16.mxu0 %v8299
    %8571 = vmatpush2.bf16.msra.mxu0 %v8298
    %8572 = vmatprep.subr.bf16.mxu0 %v8297
    %8573 = vmatpush2.bf16.msra.mxu0 %v8296
    %8574 = vmatprep.subr.bf16.mxu0 %v8295
    %8575 = vmatpush2.bf16.msra.mxu0 %v8294
    %8576 = vmatprep.mubr.bf16.mxu0 %v7855
    %8577 = vmatmul.mubr.bf16.gmra.mxu0 %v7854
    %v8578 = vpop.f32.mrf.mxu0
    %v8579 = vadd.f32 %v8526, %v8578
    %v8580 = vpop.f32.mrf.mxu0
    %v8581 = vadd.f32 %v8528, %v8580
    %v8582 = vpop.f32.mrf.mxu0
    %v8583 = vadd.f32 %v8530, %v8582
    %v8584 = vpop.f32.mrf.mxu0
    %v8585 = vadd.f32 %v8532, %v8584
    %8586 = vmatprep.mubr.bf16.mxu0 %v7862
    %8587 = vmatmul.mubr.bf16.gmra.mxu0 %v7861
    %v8588 = vpop.f32.mrf.mxu0
    %v8589 = vadd.f32 %v8536, %v8588
    %v8590 = vpop.f32.mrf.mxu0
    %v8591 = vadd.f32 %v8538, %v8590
    %v8592 = vpop.f32.mrf.mxu0
    %v8593 = vadd.f32 %v8540, %v8592
    %v8594 = vpop.f32.mrf.mxu0
    %v8595 = vadd.f32 %v8542, %v8594
    %8596 = vdwg.mxu0
    %8597 = vmatprep.subr.bf16.mxu0 %v8325
    %8598 = vmatpush1.bf16.msra.mxu0 %v8324
    %8599 = vmatprep.subr.bf16.mxu0 %v8323
    %8600 = vmatpush1.bf16.msra.mxu0 %v8322
    %8601 = vmatprep.subr.bf16.mxu0 %v8321
    %8602 = vmatpush1.bf16.msra.mxu0 %v8320
    %8603 = vmatprep.subr.bf16.mxu0 %v8319
    %8604 = vmatpush1.bf16.msra.mxu0 %v8318
    %8605 = vmatprep.subr.bf16.mxu0 %v8317
    %8606 = vmatpush1.bf16.msra.mxu0 %v8316
    %8607 = vmatprep.subr.bf16.mxu0 %v8315
    %8608 = vmatpush1.bf16.msra.mxu0 %v8314
    %8609 = vmatprep.subr.bf16.mxu0 %v8313
    %8610 = vmatpush1.bf16.msra.mxu0 %v8312
    %8611 = vmatprep.subr.bf16.mxu0 %v8311
    %8612 = vmatpush1.bf16.msra.mxu0 %v8310
    %8613 = vmatprep.subr.bf16.mxu0 0
    %8614 = vmatpush2.bf16.msra.mxu0 0
    %8615 = vmatprep.subr.bf16.mxu0 0
    %8616 = vmatpush2.bf16.msra.mxu0 0
    %8617 = vmatprep.subr.bf16.mxu0 0
    %8618 = vmatpush2.bf16.msra.mxu0 0
    %8619 = vmatprep.subr.bf16.mxu0 0
    %8620 = vmatpush2.bf16.msra.mxu0 0
    %8621 = vmatprep.subr.bf16.mxu0 0
    %8622 = vmatpush2.bf16.msra.mxu0 0
    %8623 = vmatprep.subr.bf16.mxu0 0
    %8624 = vmatpush2.bf16.msra.mxu0 0
    %8625 = vmatprep.subr.bf16.mxu0 0
    %8626 = vmatpush2.bf16.msra.mxu0 0
    %8627 = vmatprep.subr.bf16.mxu0 0
    %8628 = vmatpush2.bf16.msra.mxu0 0
    %8629 = vmatprep.mubr.bf16.mxu0 0
    %8630 = vmatmul.mubr.bf16.gmra.mxu0 %v7856
    %v8631 = vpop.f32.mrf.mxu0
    %v8632 = vadd.f32 %v8579, %v8631
    %v8633 = vpop.f32.mrf.mxu0
    %v8634 = vadd.f32 %v8581, %v8633
    %v8635 = vpop.f32.mrf.mxu0
    %v8636 = vadd.f32 %v8583, %v8635
    %v8637 = vpop.f32.mrf.mxu0
    %v8638 = vadd.f32 %v8585, %v8637
    %8639 = vmatprep.mubr.bf16.mxu0 0
    %8640 = vmatmul.mubr.bf16.gmra.mxu0 %v7863
    %v8641 = vpop.f32.mrf.mxu0
    %v8642 = vadd.f32 %v8589, %v8641
    %v8643 = vpop.f32.mrf.mxu0
    %v8644 = vadd.f32 %v8591, %v8643
    %v8645 = vpop.f32.mrf.mxu0
    %v8646 = vadd.f32 %v8593, %v8645
    %v8647 = vpop.f32.mrf.mxu0
    %v8648 = vadd.f32 %v8595, %v8647
    %8649 = vdwg.mxu0
    %s8650 = scalar_lea.vmem [#allocation7], 64
    %8651 = vst [vmem:[%s8650] sm:$0xff] %v8632
    %8652 = vst [vmem:[%s8650 + $0x8] sm:$0xff] %v8634
    %8653 = vst [vmem:[%s8650 + $0x10] sm:$0xff] %v8636
    %8654 = vst [vmem:[%s8650 + $0x18] sm:$0xff] %v8638
    %8655 = vst [vmem:[%s8650 + $0x20] sm:$0xff] %v8642
    %8656 = vst [vmem:[%s8650 + $0x28] sm:$0xff] %v8644
    %8657 = vst [vmem:[%s8650 + $0x30] sm:$0xff] %v8646
    %8658 = vst [vmem:[%s8650 + $0x38] sm:$0xff] %v8648
    // Predicated region
    $region46: #{start_module_forward.1} parent=1 // pred_check
      _
    $region47: #{start_module_forward.1} parent=1 // pred_check_branch
      %8660 = sbr.rel (0) target = $region49
    $region48: #{start_module_forward.1} parent=1 // pred_region
      %s8662 = ssub.s32 2048, 2048
      %8663 = vsyncadd [#allocation6], %s8662
      %s8664 = sshll.u32 [#allocation7], 4
      %s8665 = int_to_ptr.vmem [resolvable:$true] %s8664
      %8670 = dma.vmem_to_hbm [thread:$0]  %s8665, 2048, %s10, [#allocation6], 256, 256, 16
    $region49: #{start_module_forward.1} parent=1 // pred_fallthru
      _
    // Predicated region
    $region50: #{start_module_forward.1} parent=1 // pred_check
      _
    $region51: #{start_module_forward.1} parent=1 // pred_check_branch
      %8672 = sbr.rel (0) target = $region53
    $region52: #{start_module_forward.1} parent=1 // pred_region
      %8673 = dma.done [#allocation6], 2048
    $region53: #{start_module_forward.1} parent=1 // pred_fallthru
      _
    %8674 = vsyncpa [#allocation5], 1
    %8675 = vsyncpa [#allocation6], 1

</llo_original>
